<compile_context>
chip_gen: v7x
topology: tpu7x:2x2x1
jax: 0.10.0
libtpu: 0.0.40
codegen_flags: <defaults>
</compile_context>

<pallas_src>
import functools

import jax
import jax.numpy as jnp
from jax.experimental import pallas as pl
from jax.experimental.pallas import tpu as pltpu

D = 300          # embedding dim (fixed by the module)
Co = 100         # conv output channels
C = 3            # number of classes
Ks = (3, 4, 5)
KMAX = max(Ks)   # 5
NB = len(Ks)     # 3

Dp = 384         # D zero-padded to a lane-aligned multiple of 128
Cop = 128        # Co zero-padded to 128 (2*Cop = 256 fills an MXU column tile)
PADL = KMAX - 2  # 3: max conv padding; features padded once by PADL on the left


def _round8(n):
    return (n + 7) // 8 * 8


# ---------------- fused Pallas kernel ----------------

def gcae_fused_kernel(xf_ref, af_ref,
                      wa_ref, ba_ref, faw_ref, fab_ref,
                      wkf_ref, bkf_ref, fc3w_ref, fc3b_ref,
                      out_ref, *, B, L, La, Lp, Lap):
    Mx = B * Lp            # 8-aligned flattened feature rows
    Ma = B * Lap           # 8-aligned flattened aspect rows

    # ---- aspect branch: Conv1d(K=3, pad=1) + ReLU + max-pool over length ----
    acc_a = jnp.zeros((Ma, Cop), jnp.float32)
    for k in range(3):
        acc_a = acc_a + jnp.dot(af_ref[pl.ds(k, Ma), :], wa_ref[k],
                                preferred_element_type=jnp.float32)
    a_act = jnp.maximum(acc_a.reshape(B, Lap, Cop) + ba_ref[...], 0.0)
    row_a = jax.lax.broadcasted_iota(jnp.int32, (Lap, 1), 0)
    a_act = jnp.where(row_a < La, a_act, 0.0)        # 0-mask is safe post-ReLU
    aspect_pooled = jnp.max(a_act, axis=1)           # (B, Cop)

    # fc_aspect gate: aspect_pooled @ W_fa^T + b_fa  (padded channels stay 0)
    gate = jnp.dot(aspect_pooled.astype(jnp.bfloat16), faw_ref[...],
                   preferred_element_type=jnp.float32) + fab_ref[...]   # (B, Cop)
    gate_b = gate[:, None, :]                        # single broadcast, reused 3x

    # ---- gated branches: ONE 5-tap shifted matmul of width 6*Cop = 768 ----
    # Branch K occupies columns [(K-3)*2*Cop, (K-2)*2*Cop) and taps (5-K)..4,
    # so every branch's conv output position j lands at row b*Lp + j.
    acc = jnp.zeros((Mx, 2 * Cop * NB), jnp.float32)
    for k in range(KMAX):
        acc = acc + jnp.dot(xf_ref[pl.ds(k, Mx), :], wkf_ref[k],
                            preferred_element_type=jnp.float32)
    z = acc.reshape(B, Lp, 2 * Cop * NB) + bkf_ref[...]
    row = jax.lax.broadcasted_iota(jnp.int32, (Lp, 1), 0)

    feats = []
    for bi, K in enumerate(Ks):
        c0 = bi * 2 * Cop
        c1 = jnp.tanh(z[:, :, c0:c0 + Cop])
        c2 = jnp.maximum(z[:, :, c0 + Cop:c0 + 2 * Cop] + gate_b, 0.0)
        # -inf mask: c1*c2 can be negative, 0 would corrupt the max.
        prod = jnp.where(row < (L + K - 3), c1 * c2, -jnp.inf)
        feats.append(jnp.max(prod, axis=1))          # (B, Cop)

    x_cat = jnp.concatenate(feats, axis=1).astype(jnp.bfloat16)   # (B, 3*Cop)
    # Dropout(p=0.2) is identity at inference.
    # TODO(synk): training-mode dropout mask not implemented.
    out_ref[...] = jnp.dot(x_cat, fc3w_ref[...],
                           preferred_element_type=jnp.float32) + fc3b_ref[...]


def _full_spec(shape):
    zeros = (0,) * len(shape)
    return pl.BlockSpec(shape, lambda i, z=zeros: z)


# ---------------- one-time parameter layout preparation ----------------

def prepare_params(params):
    """Hoisted layout prep: transposes, Co->Cop / D->Dp zero pad, tap placement,
    w1|w2 concat across the three K branches, bf16 casts."""
    wdt = jnp.bfloat16

    def conv_to_kdc(w):                       # (Co, D, K) -> (K, Dp, Cop), f32
        co, d, k = w.shape
        m = jnp.transpose(w, (2, 1, 0))
        return jnp.pad(m, ((0, 0), (0, Dp - d), (0, Cop - co)))

    def pad_bias(b):                          # (n,) -> (1, Cop), f32
        return jnp.pad(b, (0, Cop - b.shape[0])).reshape(1, Cop).astype(jnp.float32)

    prep = {}
    prep["embed_p"] = jnp.pad(params["embed"], ((0, 0), (0, Dp - D))).astype(wdt)

    # aspect conv (convs3)
    prep["wa"] = conv_to_kdc(params["w3"][0]).astype(wdt)
    prep["ba"] = pad_bias(params["b3"][0])

    # fc_aspect: PyTorch Linear -> x @ W.T + b
    faw = jnp.transpose(params["fa_w"])                                # (in, out)
    prep["faw"] = jnp.pad(faw, ((0, Cop - faw.shape[0]),
                                (0, Cop - faw.shape[1]))).astype(wdt)
    prep["fab"] = pad_bias(params["fa_b"])

    # fused gated-branch weight: (KMAX, Dp, NB*2*Cop); branch K at taps (KMAX-K)..KMAX-1
    wkf = jnp.zeros((KMAX, Dp, 2 * Cop * NB), jnp.float32)
    bkf_parts = []
    for i, K in enumerate(Ks):
        w1 = conv_to_kdc(params["w1"][i])
        w2 = conv_to_kdc(params["w2"][i])
        wk = jnp.concatenate([w1, w2], axis=-1)                        # (K, Dp, 2*Cop)
        c0 = i * 2 * Cop
        wkf = wkf.at[KMAX - K:, :, c0:c0 + 2 * Cop].set(wk)
        bkf_parts.append(jnp.concatenate([pad_bias(params["b1"][i]),
                                          pad_bias(params["b2"][i])], axis=-1))
    prep["wkf"] = wkf.astype(wdt)
    prep["bkf"] = jnp.concatenate(bkf_parts, axis=-1)                  # (1, NB*2*Cop) f32

    # fc3: (C, 3*Co) -> (3*Cop, Cop); zero rows for padded channels, zero cols >= C
    fc3wT = jnp.transpose(params["fc3_w"]).reshape(NB, Co, C)
    fc3wT = jnp.pad(fc3wT, ((0, 0), (0, Cop - Co), (0, Cop - C)))
    prep["fc3w"] = fc3wT.reshape(NB * Cop, Cop).astype(wdt)
    prep["fc3b"] = jnp.pad(params["fc3_b"], (0, Cop - C)).reshape(1, Cop).astype(jnp.float32)
    return prep


# ---------------- forward ----------------

def gcae_pallas_forward(prep, feat_ids, aspect_ids):
    B, L = feat_ids.shape
    La = aspect_ids.shape[1]
    Lp = _round8(L + 2 * PADL)     # 8-aligned rows per feature sample (>= L+6)
    Lap = _round8(La + 2)          # 8-aligned rows per aspect sample (>= La+2)

    # Embedding lookups (glue). embed_p is already D->Dp padded and bf16.
    feature = jnp.take(prep["embed_p"], feat_ids, axis=0)              # (B, L, Dp)
    aspect_v = jnp.take(prep["embed_p"], aspect_ids, axis=0)           # (B, La, Dp)
    xf = jnp.pad(feature, ((0, 0), (PADL, Lp - L - PADL), (0, 0))).reshape(B * Lp, Dp)
    af = jnp.pad(aspect_v, ((0, 0), (1, Lap - La - 1), (0, 0))).reshape(B * Lap, Dp)
    # extra zero rows so the k-shifted (length Mx / Ma) slices stay in-bounds
    xf = jnp.pad(xf, ((0, 8), (0, 0)))
    af = jnp.pad(af, ((0, 8), (0, 0)))

    args = (xf, af,
            prep["wa"], prep["ba"], prep["faw"], prep["fab"],
            prep["wkf"], prep["bkf"], prep["fc3w"], prep["fc3b"])

    out = pl.pallas_call(
        functools.partial(gcae_fused_kernel, B=B, L=L, La=La, Lp=Lp, Lap=Lap),
        out_shape=jax.ShapeDtypeStruct((B, Cop), jnp.float32),
        grid=(1,),
        in_specs=[_full_spec(a.shape) for a in args],
        out_specs=_full_spec((B, Cop)),
        compiler_params=pltpu.CompilerParams(
            dimension_semantics=("arbitrary",),
            vmem_limit_bytes=48 * 1024 * 1024),
    )(*args)
    return out[:, :C]


# ---------------- params / reference ----------------

def init_params(key, vocab):
    keys = jax.random.split(key, 16)
    p = {}
    p["embed"] = jax.random.normal(keys[0], (vocab, D), jnp.float32) * 0.1
    p["w1"] = [jax.random.normal(keys[1 + i], (Co, D, K), jnp.float32) * 0.05
               for i, K in enumerate(Ks)]
    p["b1"] = [jnp.full((Co,), 0.01 * (i + 1), jnp.float32) for i in range(len(Ks))]
    p["w2"] = [jax.random.normal(keys[4 + i], (Co, D, K), jnp.float32) * 0.05
               for i, K in enumerate(Ks)]
    p["b2"] = [jnp.full((Co,), -0.01 * (i + 1), jnp.float32) for i in range(len(Ks))]
    p["w3"] = [jax.random.normal(keys[7], (Co, D, 3), jnp.float32) * 0.05]
    p["b3"] = [jnp.full((Co,), 0.02, jnp.float32)]
    p["fa_w"] = jax.random.normal(keys[8], (Co, 100), jnp.float32) * 0.05      # (out, in)
    p["fa_b"] = jnp.full((Co,), 0.005, jnp.float32)
    p["fc3_w"] = jax.random.normal(keys[9], (C, len(Ks) * Co), jnp.float32) * 0.05
    p["fc3_b"] = jnp.zeros((C,), jnp.float32)
    return p


def ref_forward(params, feat_ids, aspect_ids):
    # Pure-JAX f32 reference (XLA conv) for correctness check.
    feature = jnp.take(params["embed"], feat_ids, axis=0)
    aspect_v = jnp.take(params["embed"], aspect_ids, axis=0)

    def conv1d(x_bld, w, b, P):
        out = jax.lax.conv_general_dilated(
            jnp.transpose(x_bld, (0, 2, 1)), w, window_strides=(1,),
            padding=[(P, P)], dimension_numbers=("NCH", "OIH", "NCH"))
        return jnp.transpose(out, (0, 2, 1)) + b[None, None, :]

    a = jax.nn.relu(conv1d(aspect_v, params["w3"][0], params["b3"][0], 1))
    aspect_pooled = jnp.max(a, axis=1)
    gate = aspect_pooled @ params["fa_w"].T + params["fa_b"]
    feats = []
    for i, K in enumerate(Ks):
        P = K - 2
        c1 = jnp.tanh(conv1d(feature, params["w1"][i], params["b1"][i], P))
        c2 = jax.nn.relu(conv1d(feature, params["w2"][i], params["b2"][i], P)
                         + gate[:, None, :])
        feats.append(jnp.max(c1 * c2, axis=1))
    x = jnp.concatenate(feats, axis=1)
    return x @ params["fc3_w"].T + params["fc3_b"]


if __name__ == "__main__":
    B, L, La, V = 2, 16, 5, 50
    key = jax.random.PRNGKey(0)
    k_feat, k_asp = jax.random.split(key)
    feat_ids = jax.random.randint(k_feat, (B, L), 0, V, dtype=jnp.int32)
    aspect_ids = jax.random.randint(k_asp, (B, La), 0, V, dtype=jnp.int32)
    params = init_params(jax.random.PRNGKey(42), V)
    prep = prepare_params(params)          # one-time layout / bf16 prep (hoisted)

    logit = jax.jit(gcae_pallas_forward)(prep, feat_ids, aspect_ids)
    logit = jax.block_until_ready(logit)
    ref = ref_forward(params, feat_ids, aspect_ids)

    assert logit.shape == (B, C), logit.shape
    # bf16 operands with f32 accumulation: tolerance loosened vs. the pure-f32 path.
    assert jnp.allclose(logit, ref, atol=2e-2, rtol=2e-2), (logit, ref)
    print("KERNEL_OK")
</pallas_src>

<mosaic_0001>
module attributes {stable_mosaic.version = 11 : i64} {
  func.func @gcae_fused_kernel(%arg0: i32, %arg1: memref<56x384xbf16, #tpu.memory_space<vmem>>, %arg2: memref<24x384xbf16, #tpu.memory_space<vmem>>, %arg3: memref<3x384x128xbf16, #tpu.memory_space<vmem>>, %arg4: memref<1x128xf32, #tpu.memory_space<vmem>>, %arg5: memref<128x128xbf16, #tpu.memory_space<vmem>>, %arg6: memref<1x128xf32, #tpu.memory_space<vmem>>, %arg7: memref<5x384x768xbf16, #tpu.memory_space<vmem>>, %arg8: memref<1x768xf32, #tpu.memory_space<vmem>>, %arg9: memref<384x128xbf16, #tpu.memory_space<vmem>>, %arg10: memref<1x128xf32, #tpu.memory_space<vmem>>, %arg11: memref<2x128xf32, #tpu.memory_space<vmem>>) attributes {dimension_semantics = [#tpu.dimension_semantics<arbitrary>], iteration_bounds = array<i64: 1>, scalar_prefetch = 0 : i64, scratch_operands = 0 : i64, tpu.core_type = #tpu.core_type<tc>, window_params = [{pipeline_mode = #tpu.pipeline_mode<synchronous>, transform_indices = @transform_0, window_bounds = array<i64: 56, 384>}, {pipeline_mode = #tpu.pipeline_mode<synchronous>, transform_indices = @transform_1, window_bounds = array<i64: 24, 384>}, {pipeline_mode = #tpu.pipeline_mode<synchronous>, transform_indices = @transform_2, window_bounds = array<i64: 3, 384, 128>}, {pipeline_mode = #tpu.pipeline_mode<synchronous>, transform_indices = @transform_3, window_bounds = array<i64: 1, 128>}, {pipeline_mode = #tpu.pipeline_mode<synchronous>, transform_indices = @transform_4, window_bounds = array<i64: 128, 128>}, {pipeline_mode = #tpu.pipeline_mode<synchronous>, transform_indices = @transform_5, window_bounds = array<i64: 1, 128>}, {pipeline_mode = #tpu.pipeline_mode<synchronous>, transform_indices = @transform_6, window_bounds = array<i64: 5, 384, 768>}, {pipeline_mode = #tpu.pipeline_mode<synchronous>, transform_indices = @transform_7, window_bounds = array<i64: 1, 768>}, {pipeline_mode = #tpu.pipeline_mode<synchronous>, transform_indices = @transform_8, window_bounds = array<i64: 384, 128>}, {pipeline_mode = #tpu.pipeline_mode<synchronous>, transform_indices = @transform_9, window_bounds = array<i64: 1, 128>}, {pipeline_mode = #tpu.pipeline_mode<synchronous>, transform_indices = @transform_10, window_bounds = array<i64: 2, 128>}]} {
    %cst = arith.constant 0.000000e+00 : f32
    %0 = vector.broadcast %cst : f32 to vector<16x128xf32>
    %c0 = arith.constant 0 : index
    %c0_0 = arith.constant 0 : index
    %1 = vector.load %arg2[%c0, %c0_0] : memref<24x384xbf16, #tpu.memory_space<vmem>>, vector<16x384xbf16>
    %c0_1 = arith.constant 0 : index
    %c0_2 = arith.constant 0 : index
    %c0_3 = arith.constant 0 : index
    %2 = vector.load %arg3[%c0_1, %c0_2, %c0_3] : memref<3x384x128xbf16, #tpu.memory_space<vmem>>, vector<1x384x128xbf16>
    %3 = vector.shape_cast %2 : vector<1x384x128xbf16> to vector<384x128xbf16>
    %cst_4 = arith.constant dense<0.000000e+00> : vector<16x128xf32>
    %4 = tpu.matmul %1, %3, %cst_4 {dimension_numbers = #tpu.dot_dimension_numbers<[1], [0], [0], [1], [0, 0, 1, 1], [], []>} : vector<16x384xbf16>, vector<384x128xbf16>, vector<16x128xf32> -> vector<16x128xf32>
    %5 = arith.addf %0, %4 : vector<16x128xf32>
    %c1 = arith.constant 1 : index
    %c0_5 = arith.constant 0 : index
    %6 = vector.load %arg2[%c1, %c0_5] : memref<24x384xbf16, #tpu.memory_space<vmem>>, vector<16x384xbf16>
    %c1_6 = arith.constant 1 : index
    %c0_7 = arith.constant 0 : index
    %c0_8 = arith.constant 0 : index
    %7 = vector.load %arg3[%c1_6, %c0_7, %c0_8] : memref<3x384x128xbf16, #tpu.memory_space<vmem>>, vector<1x384x128xbf16>
    %8 = vector.shape_cast %7 : vector<1x384x128xbf16> to vector<384x128xbf16>
    %cst_9 = arith.constant dense<0.000000e+00> : vector<16x128xf32>
    %9 = tpu.matmul %6, %8, %cst_9 {dimension_numbers = #tpu.dot_dimension_numbers<[1], [0], [0], [1], [0, 0, 1, 1], [], []>} : vector<16x384xbf16>, vector<384x128xbf16>, vector<16x128xf32> -> vector<16x128xf32>
    %10 = arith.addf %5, %9 : vector<16x128xf32>
    %c2 = arith.constant 2 : index
    %c0_10 = arith.constant 0 : index
    %11 = vector.load %arg2[%c2, %c0_10] : memref<24x384xbf16, #tpu.memory_space<vmem>>, vector<16x384xbf16>
    %c2_11 = arith.constant 2 : index
    %c0_12 = arith.constant 0 : index
    %c0_13 = arith.constant 0 : index
    %12 = vector.load %arg3[%c2_11, %c0_12, %c0_13] : memref<3x384x128xbf16, #tpu.memory_space<vmem>>, vector<1x384x128xbf16>
    %13 = vector.shape_cast %12 : vector<1x384x128xbf16> to vector<384x128xbf16>
    %cst_14 = arith.constant dense<0.000000e+00> : vector<16x128xf32>
    %14 = tpu.matmul %11, %13, %cst_14 {dimension_numbers = #tpu.dot_dimension_numbers<[1], [0], [0], [1], [0, 0, 1, 1], [], []>} : vector<16x384xbf16>, vector<384x128xbf16>, vector<16x128xf32> -> vector<16x128xf32>
    %15 = arith.addf %10, %14 : vector<16x128xf32>
    %16 = vector.shape_cast %15 : vector<16x128xf32> to vector<2x8x128xf32>
    %c0_15 = arith.constant 0 : index
    %c0_16 = arith.constant 0 : index
    %17 = vector.load %arg4[%c0_15, %c0_16] : memref<1x128xf32, #tpu.memory_space<vmem>>, vector<1x128xf32>
    %18 = vector.shape_cast %17 : vector<1x128xf32> to vector<1x1x128xf32>
    %19 = vector.broadcast %18 : vector<1x1x128xf32> to vector<2x8x128xf32>
    %20 = arith.addf %16, %19 : vector<2x8x128xf32>
    %cst_17 = arith.constant 0.000000e+00 : f32
    %21 = vector.broadcast %cst_17 : f32 to vector<2x8x128xf32>
    %22 = arith.maximumf %20, %21 : vector<2x8x128xf32>
    %23 = tpu.iota {dimensions = array<i32: 0>} : vector<8x1xi32>
    %c5_i32 = arith.constant 5 : i32
    %24 = vector.broadcast %c5_i32 : i32 to vector<8x1xi32>
    %25 = arith.cmpi slt, %23, %24 : vector<8x1xi32>
    %cst_18 = arith.constant 0.000000e+00 : f32
    %26 = vector.shape_cast %25 : vector<8x1xi1> to vector<1x8x1xi1>
    %27 = vector.broadcast %26 : vector<1x8x1xi1> to vector<2x8x128xi1>
    %28 = vector.broadcast %cst_18 : f32 to vector<2x8x128xf32>
    %29 = arith.select %27, %22, %28 : vector<2x8x128xi1>, vector<2x8x128xf32>
    %cst_19 = arith.constant dense<0xFF800000> : vector<2x128xf32>
    %30 = vector.multi_reduction <maximumf>, %29, %cst_19 [1] : vector<2x8x128xf32> to vector<2x128xf32>
    %31 = arith.truncf %30 : vector<2x128xf32> to vector<2x128xbf16>
    %c0_20 = arith.constant 0 : index
    %c0_21 = arith.constant 0 : index
    %32 = vector.load %arg5[%c0_20, %c0_21] : memref<128x128xbf16, #tpu.memory_space<vmem>>, vector<128x128xbf16>
    %cst_22 = arith.constant dense<0.000000e+00> : vector<2x128xf32>
    %33 = tpu.matmul %31, %32, %cst_22 {dimension_numbers = #tpu.dot_dimension_numbers<[1], [0], [0], [1], [0, 0, 1, 1], [], []>} : vector<2x128xbf16>, vector<128x128xbf16>, vector<2x128xf32> -> vector<2x128xf32>
    %c0_23 = arith.constant 0 : index
    %c0_24 = arith.constant 0 : index
    %34 = vector.load %arg6[%c0_23, %c0_24] : memref<1x128xf32, #tpu.memory_space<vmem>>, vector<1x128xf32>
    %35 = vector.broadcast %34 : vector<1x128xf32> to vector<2x128xf32>
    %36 = arith.addf %33, %35 : vector<2x128xf32>
    %37 = vector.shape_cast %36 : vector<2x128xf32> to vector<2x1x128xf32>
    %cst_25 = arith.constant 0.000000e+00 : f32
    %38 = vector.broadcast %cst_25 : f32 to vector<48x768xf32>
    %c0_26 = arith.constant 0 : index
    %c0_27 = arith.constant 0 : index
    %39 = vector.load %arg1[%c0_26, %c0_27] : memref<56x384xbf16, #tpu.memory_space<vmem>>, vector<48x384xbf16>
    %c0_28 = arith.constant 0 : index
    %c0_29 = arith.constant 0 : index
    %c0_30 = arith.constant 0 : index
    %40 = vector.load %arg7[%c0_28, %c0_29, %c0_30] : memref<5x384x768xbf16, #tpu.memory_space<vmem>>, vector<1x384x768xbf16>
    %41 = vector.shape_cast %40 : vector<1x384x768xbf16> to vector<384x768xbf16>
    %cst_31 = arith.constant dense<0.000000e+00> : vector<48x768xf32>
    %42 = tpu.matmul %39, %41, %cst_31 {dimension_numbers = #tpu.dot_dimension_numbers<[1], [0], [0], [1], [0, 0, 1, 1], [], []>} : vector<48x384xbf16>, vector<384x768xbf16>, vector<48x768xf32> -> vector<48x768xf32>
    %43 = arith.addf %38, %42 : vector<48x768xf32>
    %c1_32 = arith.constant 1 : index
    %c0_33 = arith.constant 0 : index
    %44 = vector.load %arg1[%c1_32, %c0_33] : memref<56x384xbf16, #tpu.memory_space<vmem>>, vector<48x384xbf16>
    %c1_34 = arith.constant 1 : index
    %c0_35 = arith.constant 0 : index
    %c0_36 = arith.constant 0 : index
    %45 = vector.load %arg7[%c1_34, %c0_35, %c0_36] : memref<5x384x768xbf16, #tpu.memory_space<vmem>>, vector<1x384x768xbf16>
    %46 = vector.shape_cast %45 : vector<1x384x768xbf16> to vector<384x768xbf16>
    %cst_37 = arith.constant dense<0.000000e+00> : vector<48x768xf32>
    %47 = tpu.matmul %44, %46, %cst_37 {dimension_numbers = #tpu.dot_dimension_numbers<[1], [0], [0], [1], [0, 0, 1, 1], [], []>} : vector<48x384xbf16>, vector<384x768xbf16>, vector<48x768xf32> -> vector<48x768xf32>
    %48 = arith.addf %43, %47 : vector<48x768xf32>
    %c2_38 = arith.constant 2 : index
    %c0_39 = arith.constant 0 : index
    %49 = vector.load %arg1[%c2_38, %c0_39] : memref<56x384xbf16, #tpu.memory_space<vmem>>, vector<48x384xbf16>
    %c2_40 = arith.constant 2 : index
    %c0_41 = arith.constant 0 : index
    %c0_42 = arith.constant 0 : index
    %50 = vector.load %arg7[%c2_40, %c0_41, %c0_42] : memref<5x384x768xbf16, #tpu.memory_space<vmem>>, vector<1x384x768xbf16>
    %51 = vector.shape_cast %50 : vector<1x384x768xbf16> to vector<384x768xbf16>
    %cst_43 = arith.constant dense<0.000000e+00> : vector<48x768xf32>
    %52 = tpu.matmul %49, %51, %cst_43 {dimension_numbers = #tpu.dot_dimension_numbers<[1], [0], [0], [1], [0, 0, 1, 1], [], []>} : vector<48x384xbf16>, vector<384x768xbf16>, vector<48x768xf32> -> vector<48x768xf32>
    %53 = arith.addf %48, %52 : vector<48x768xf32>
    %c3 = arith.constant 3 : index
    %c0_44 = arith.constant 0 : index
    %54 = vector.load %arg1[%c3, %c0_44] : memref<56x384xbf16, #tpu.memory_space<vmem>>, vector<48x384xbf16>
    %c3_45 = arith.constant 3 : index
    %c0_46 = arith.constant 0 : index
    %c0_47 = arith.constant 0 : index
    %55 = vector.load %arg7[%c3_45, %c0_46, %c0_47] : memref<5x384x768xbf16, #tpu.memory_space<vmem>>, vector<1x384x768xbf16>
    %56 = vector.shape_cast %55 : vector<1x384x768xbf16> to vector<384x768xbf16>
    %cst_48 = arith.constant dense<0.000000e+00> : vector<48x768xf32>
    %57 = tpu.matmul %54, %56, %cst_48 {dimension_numbers = #tpu.dot_dimension_numbers<[1], [0], [0], [1], [0, 0, 1, 1], [], []>} : vector<48x384xbf16>, vector<384x768xbf16>, vector<48x768xf32> -> vector<48x768xf32>
    %58 = arith.addf %53, %57 : vector<48x768xf32>
    %c4 = arith.constant 4 : index
    %c0_49 = arith.constant 0 : index
    %59 = vector.load %arg1[%c4, %c0_49] : memref<56x384xbf16, #tpu.memory_space<vmem>>, vector<48x384xbf16>
    %c4_50 = arith.constant 4 : index
    %c0_51 = arith.constant 0 : index
    %c0_52 = arith.constant 0 : index
    %60 = vector.load %arg7[%c4_50, %c0_51, %c0_52] : memref<5x384x768xbf16, #tpu.memory_space<vmem>>, vector<1x384x768xbf16>
    %61 = vector.shape_cast %60 : vector<1x384x768xbf16> to vector<384x768xbf16>
    %cst_53 = arith.constant dense<0.000000e+00> : vector<48x768xf32>
    %62 = tpu.matmul %59, %61, %cst_53 {dimension_numbers = #tpu.dot_dimension_numbers<[1], [0], [0], [1], [0, 0, 1, 1], [], []>} : vector<48x384xbf16>, vector<384x768xbf16>, vector<48x768xf32> -> vector<48x768xf32>
    %63 = arith.addf %58, %62 : vector<48x768xf32>
    %64 = vector.shape_cast %63 : vector<48x768xf32> to vector<2x24x768xf32>
    %c0_54 = arith.constant 0 : index
    %c0_55 = arith.constant 0 : index
    %65 = vector.load %arg8[%c0_54, %c0_55] : memref<1x768xf32, #tpu.memory_space<vmem>>, vector<1x768xf32>
    %66 = vector.shape_cast %65 : vector<1x768xf32> to vector<1x1x768xf32>
    %67 = vector.broadcast %66 : vector<1x1x768xf32> to vector<2x24x768xf32>
    %68 = arith.addf %64, %67 : vector<2x24x768xf32>
    %69 = tpu.iota {dimensions = array<i32: 0>} : vector<24x1xi32>
    %70 = vector.extract_strided_slice %68 {offsets = [0, 0, 0], sizes = [2, 24, 128], strides = [1, 1, 1]} : vector<2x24x768xf32> to vector<2x24x128xf32>
    %71 = math.tanh %70 : vector<2x24x128xf32>
    %72 = vector.extract_strided_slice %68 {offsets = [0, 0, 128], sizes = [2, 24, 128], strides = [1, 1, 1]} : vector<2x24x768xf32> to vector<2x24x128xf32>
    %73 = vector.broadcast %37 : vector<2x1x128xf32> to vector<2x24x128xf32>
    %74 = arith.addf %72, %73 : vector<2x24x128xf32>
    %cst_56 = arith.constant 0.000000e+00 : f32
    %75 = vector.broadcast %cst_56 : f32 to vector<2x24x128xf32>
    %76 = arith.maximumf %74, %75 : vector<2x24x128xf32>
    %c16_i32 = arith.constant 16 : i32
    %77 = vector.broadcast %c16_i32 : i32 to vector<24x1xi32>
    %78 = arith.cmpi slt, %69, %77 : vector<24x1xi32>
    %79 = arith.mulf %71, %76 : vector<2x24x128xf32>
    %cst_57 = arith.constant 0xFF800000 : f32
    %80 = vector.shape_cast %78 : vector<24x1xi1> to vector<1x24x1xi1>
    %81 = vector.broadcast %80 : vector<1x24x1xi1> to vector<2x24x128xi1>
    %82 = vector.broadcast %cst_57 : f32 to vector<2x24x128xf32>
    %83 = arith.select %81, %79, %82 : vector<2x24x128xi1>, vector<2x24x128xf32>
    %cst_58 = arith.constant dense<0xFF800000> : vector<2x128xf32>
    %84 = vector.multi_reduction <maximumf>, %83, %cst_58 [1] : vector<2x24x128xf32> to vector<2x128xf32>
    %85 = vector.extract_strided_slice %68 {offsets = [0, 0, 256], sizes = [2, 24, 128], strides = [1, 1, 1]} : vector<2x24x768xf32> to vector<2x24x128xf32>
    %86 = math.tanh %85 : vector<2x24x128xf32>
    %87 = vector.extract_strided_slice %68 {offsets = [0, 0, 384], sizes = [2, 24, 128], strides = [1, 1, 1]} : vector<2x24x768xf32> to vector<2x24x128xf32>
    %88 = vector.broadcast %37 : vector<2x1x128xf32> to vector<2x24x128xf32>
    %89 = arith.addf %87, %88 : vector<2x24x128xf32>
    %cst_59 = arith.constant 0.000000e+00 : f32
    %90 = vector.broadcast %cst_59 : f32 to vector<2x24x128xf32>
    %91 = arith.maximumf %89, %90 : vector<2x24x128xf32>
    %c17_i32 = arith.constant 17 : i32
    %92 = vector.broadcast %c17_i32 : i32 to vector<24x1xi32>
    %93 = arith.cmpi slt, %69, %92 : vector<24x1xi32>
    %94 = arith.mulf %86, %91 : vector<2x24x128xf32>
    %cst_60 = arith.constant 0xFF800000 : f32
    %95 = vector.shape_cast %93 : vector<24x1xi1> to vector<1x24x1xi1>
    %96 = vector.broadcast %95 : vector<1x24x1xi1> to vector<2x24x128xi1>
    %97 = vector.broadcast %cst_60 : f32 to vector<2x24x128xf32>
    %98 = arith.select %96, %94, %97 : vector<2x24x128xi1>, vector<2x24x128xf32>
    %cst_61 = arith.constant dense<0xFF800000> : vector<2x128xf32>
    %99 = vector.multi_reduction <maximumf>, %98, %cst_61 [1] : vector<2x24x128xf32> to vector<2x128xf32>
    %100 = vector.extract_strided_slice %68 {offsets = [0, 0, 512], sizes = [2, 24, 128], strides = [1, 1, 1]} : vector<2x24x768xf32> to vector<2x24x128xf32>
    %101 = math.tanh %100 : vector<2x24x128xf32>
    %102 = vector.extract_strided_slice %68 {offsets = [0, 0, 640], sizes = [2, 24, 128], strides = [1, 1, 1]} : vector<2x24x768xf32> to vector<2x24x128xf32>
    %103 = vector.broadcast %37 : vector<2x1x128xf32> to vector<2x24x128xf32>
    %104 = arith.addf %102, %103 : vector<2x24x128xf32>
    %cst_62 = arith.constant 0.000000e+00 : f32
    %105 = vector.broadcast %cst_62 : f32 to vector<2x24x128xf32>
    %106 = arith.maximumf %104, %105 : vector<2x24x128xf32>
    %c18_i32 = arith.constant 18 : i32
    %107 = vector.broadcast %c18_i32 : i32 to vector<24x1xi32>
    %108 = arith.cmpi slt, %69, %107 : vector<24x1xi32>
    %109 = arith.mulf %101, %106 : vector<2x24x128xf32>
    %cst_63 = arith.constant 0xFF800000 : f32
    %110 = vector.shape_cast %108 : vector<24x1xi1> to vector<1x24x1xi1>
    %111 = vector.broadcast %110 : vector<1x24x1xi1> to vector<2x24x128xi1>
    %112 = vector.broadcast %cst_63 : f32 to vector<2x24x128xf32>
    %113 = arith.select %111, %109, %112 : vector<2x24x128xi1>, vector<2x24x128xf32>
    %cst_64 = arith.constant dense<0xFF800000> : vector<2x128xf32>
    %114 = vector.multi_reduction <maximumf>, %113, %cst_64 [1] : vector<2x24x128xf32> to vector<2x128xf32>
    %115 = tpu.concatenate %84, %99, %114 in 1 : vector<2x128xf32>, vector<2x128xf32>, vector<2x128xf32> -> vector<2x384xf32>
    %116 = arith.truncf %115 : vector<2x384xf32> to vector<2x384xbf16>
    %c0_65 = arith.constant 0 : index
    %c0_66 = arith.constant 0 : index
    %117 = vector.load %arg9[%c0_65, %c0_66] : memref<384x128xbf16, #tpu.memory_space<vmem>>, vector<384x128xbf16>
    %cst_67 = arith.constant dense<0.000000e+00> : vector<2x128xf32>
    %118 = tpu.matmul %116, %117, %cst_67 {dimension_numbers = #tpu.dot_dimension_numbers<[1], [0], [0], [1], [0, 0, 1, 1], [], []>} : vector<2x384xbf16>, vector<384x128xbf16>, vector<2x128xf32> -> vector<2x128xf32>
    %c0_68 = arith.constant 0 : index
    %c0_69 = arith.constant 0 : index
    %119 = vector.load %arg10[%c0_68, %c0_69] : memref<1x128xf32, #tpu.memory_space<vmem>>, vector<1x128xf32>
    %120 = vector.broadcast %119 : vector<1x128xf32> to vector<2x128xf32>
    %121 = arith.addf %118, %120 : vector<2x128xf32>
    %c0_70 = arith.constant 0 : index
    %c0_71 = arith.constant 0 : index
    %122 = vector.load %arg11[%c0_70, %c0_71] : memref<2x128xf32, #tpu.memory_space<vmem>>, vector<2x128xf32>
    tpu.vector_store %arg11[%c0_70, %c0_71], %121 {strides = array<i32>} : memref<2x128xf32, #tpu.memory_space<vmem>>, vector<2x128xf32>,
    return
  }
  func.func @transform_0(%arg0: i32) -> (i32, i32) {
    %c0_i32 = arith.constant 0 : i32
    %c0_i32_0 = arith.constant 0 : i32
    %c0_i32_1 = arith.constant 0 : i32
    return %c0_i32, %c0_i32_0 : i32, i32
  }
  func.func @transform_1(%arg0: i32) -> (i32, i32) {
    %c0_i32 = arith.constant 0 : i32
    %c0_i32_0 = arith.constant 0 : i32
    %c0_i32_1 = arith.constant 0 : i32
    return %c0_i32, %c0_i32_0 : i32, i32
  }
  func.func @transform_2(%arg0: i32) -> (i32, i32, i32) {
    %c0_i32 = arith.constant 0 : i32
    %c0_i32_0 = arith.constant 0 : i32
    %c0_i32_1 = arith.constant 0 : i32
    %c0_i32_2 = arith.constant 0 : i32
    return %c0_i32, %c0_i32_0, %c0_i32_1 : i32, i32, i32
  }
  func.func @transform_3(%arg0: i32) -> (i32, i32) {
    %c0_i32 = arith.constant 0 : i32
    %c0_i32_0 = arith.constant 0 : i32
    %c0_i32_1 = arith.constant 0 : i32
    return %c0_i32, %c0_i32_0 : i32, i32
  }
  func.func @transform_4(%arg0: i32) -> (i32, i32) {
    %c0_i32 = arith.constant 0 : i32
    %c0_i32_0 = arith.constant 0 : i32
    %c0_i32_1 = arith.constant 0 : i32
    return %c0_i32, %c0_i32_0 : i32, i32
  }
  func.func @transform_5(%arg0: i32) -> (i32, i32) {
    %c0_i32 = arith.constant 0 : i32
    %c0_i32_0 = arith.constant 0 : i32
    %c0_i32_1 = arith.constant 0 : i32
    return %c0_i32, %c0_i32_0 : i32, i32
  }
  func.func @transform_6(%arg0: i32) -> (i32, i32, i32) {
    %c0_i32 = arith.constant 0 : i32
    %c0_i32_0 = arith.constant 0 : i32
    %c0_i32_1 = arith.constant 0 : i32
    %c0_i32_2 = arith.constant 0 : i32
    return %c0_i32, %c0_i32_0, %c0_i32_1 : i32, i32, i32
  }
  func.func @transform_7(%arg0: i32) -> (i32, i32) {
    %c0_i32 = arith.constant 0 : i32
    %c0_i32_0 = arith.constant 0 : i32
    %c0_i32_1 = arith.constant 0 : i32
    return %c0_i32, %c0_i32_0 : i32, i32
  }
  func.func @transform_8(%arg0: i32) -> (i32, i32) {
    %c0_i32 = arith.constant 0 : i32
    %c0_i32_0 = arith.constant 0 : i32
    %c0_i32_1 = arith.constant 0 : i32
    return %c0_i32, %c0_i32_0 : i32, i32
  }
  func.func @transform_9(%arg0: i32) -> (i32, i32) {
    %c0_i32 = arith.constant 0 : i32
    %c0_i32_0 = arith.constant 0 : i32
    %c0_i32_1 = arith.constant 0 : i32
    return %c0_i32, %c0_i32_0 : i32, i32
  }
  func.func @transform_10(%arg0: i32) -> (i32, i32) {
    %c0_i32 = arith.constant 0 : i32
    %c0_i32_0 = arith.constant 0 : i32
    %c0_i32_1 = arith.constant 0 : i32
    return %c0_i32, %c0_i32_0 : i32, i32
  }
}

</mosaic_0001>

<llo_original>
// kernel: gcae_pallas_forward.1
$region0: #{gcae_pallas_forward.1}
  #allocation0 [shape = 'u32[]', space=smem, size = 0x4, offset = 0x4, fixed_abs, tag = 'smem constant byte address 0x4 - core index']
  #allocation1 [shape = 'u32[144,128]{1,0:T(1,128)}', space=vmem, size = 0x12000, scoped, tag = 'internal scratch']
  %s0 = inlined_call_operand.vmem [shape: bf16[56,384], index: 0, kind: input, shape index: {}]
  %s1 = inlined_call_operand.vmem [shape: bf16[24,384], index: 1, kind: input, shape index: {}]
  %s2 = inlined_call_operand.hbm [shape: bf16[3,384,128], index: 2, kind: input, shape index: {}]
  %s3 = inlined_call_operand.hbm [shape: f32[1,128], index: 3, kind: input, shape index: {}]
  %s4 = inlined_call_operand.hbm [shape: bf16[128,128], index: 4, kind: input, shape index: {}]
  %s5 = inlined_call_operand.hbm [shape: f32[1,128], index: 5, kind: input, shape index: {}]
  %s6 = inlined_call_operand.hbm [shape: bf16[5,384,768], index: 6, kind: input, shape index: {}]
  %s7 = inlined_call_operand.hbm [shape: f32[1,768], index: 7, kind: input, shape index: {}]
  %s8 = inlined_call_operand.hbm [shape: bf16[384,128], index: 8, kind: input, shape index: {}]
  %s9 = inlined_call_operand.hbm [shape: f32[1,128], index: 9, kind: input, shape index: {}]
  %s10 = inlined_call_operand.hbm [shape: f32[2,128], index: 10, kind: output, shape index: {}]
  %s11 = sld [smem:[#allocation0]]
  $region82: #{gcae_pallas_forward.1} parent=0
    _
  %s13 = ssub.s32 1, %s11
  %s14 = scalar_select 0, %s13, %s11
  $region1: #{gcae_pallas_forward.1} parent=0
    #allocation2 [shape = 'u8[294912]{0}', space=vmem, size = 0x48000, scoped, tag = 'input window, operand 2, single buffered']
    #allocation3 [shape = 's32[1]{0}', space=sflag, size = 0x4, scoped, tag = 'scoped memory for gcae_pallas_forward.1']
    #allocation4 [shape = 's32[1]{0}', space=sflag, size = 0x4, scoped, tag = 'scoped memory for gcae_pallas_forward.1']
    #allocation5 [shape = 'u8[512]{0}', space=vmem, size = 0x400, scoped, tag = 'input window, operand 3, single buffered']
    #allocation6 [shape = 's32[1]{0}', space=sflag, size = 0x4, scoped, tag = 'scoped memory for gcae_pallas_forward.1']
    #allocation7 [shape = 'u8[32768]{0}', space=vmem, size = 0x8000, scoped, tag = 'input window, operand 4, single buffered']
    #allocation8 [shape = 'u8[512]{0}', space=vmem, size = 0x400, scoped, tag = 'input window, operand 5, single buffered']
    #allocation9 [shape = 's32[1]{0}', space=sflag, size = 0x4, scoped, tag = 'scoped memory for gcae_pallas_forward.1']
    #allocation10 [shape = 'u8[2949120]{0}', space=vmem, size = 0x2d0000, scoped, tag = 'input window, operand 6, single buffered']
    #allocation11 [shape = 'u8[3072]{0}', space=vmem, size = 0xc00, scoped, tag = 'input window, operand 7, single buffered']
    #allocation12 [shape = 's32[1]{0}', space=sflag, size = 0x4, scoped, tag = 'scoped memory for gcae_pallas_forward.1']
    #allocation13 [shape = 'u8[98304]{0}', space=vmem, size = 0x18000, scoped, tag = 'input window, operand 8, single buffered']
    #allocation14 [shape = 'u8[512]{0}', space=vmem, size = 0x400, scoped, tag = 'input window, operand 9, single buffered']
    #allocation15 [shape = 's32[1]{0}', space=sflag, size = 0x4, scoped, tag = 'scoped memory for gcae_pallas_forward.1']
    #allocation16 [shape = 'u8[1024]{0}', space=vmem, size = 0x400, scoped, tag = 'output window, operand 0, single buffered']
    %15 = vsyncpa [#allocation3], 0
    %16 = vsyncpa [#allocation6], 0
    %17 = vsyncpa [#allocation9], 0
    %18 = vsyncpa [#allocation12], 0
    %19 = vsyncpa [#allocation15], 0
    %20 = vsyncpa [#allocation4], 0
    // Predicated region
    $region2: #{gcae_pallas_forward.1} parent=1 // pred_check
      _
    $region3: #{gcae_pallas_forward.1} parent=1 // pred_check_branch
      %22 = sbr.rel (0) target = $region5
    $region4: #{gcae_pallas_forward.1} parent=1 // pred_region
      _
    $region5: #{gcae_pallas_forward.1} parent=1 // pred_fallthru
      _
    // Predicated region
    $region6: #{gcae_pallas_forward.1} parent=1 // pred_check
      _
    $region7: #{gcae_pallas_forward.1} parent=1 // pred_check_branch
      %24 = sbr.rel (0) target = $region9
    $region8: #{gcae_pallas_forward.1} parent=1 // pred_region
      _
    $region9: #{gcae_pallas_forward.1} parent=1 // pred_fallthru
      _
    // Predicated region
    $region10: #{gcae_pallas_forward.1} parent=1 // pred_check
      _
    $region11: #{gcae_pallas_forward.1} parent=1 // pred_check_branch
      %26 = sbr.rel (0) target = $region13
    $region12: #{gcae_pallas_forward.1} parent=1 // pred_region
      %s28 = ssub.s32 9216, 9216
      %29 = vsyncadd [#allocation3], %s28
      %s30 = sshll.u32 [#allocation2], 4
      %s31 = int_to_ptr.vmem [resolvable:$true] %s30
      %36 = dma.hbm_to_vmem [thread:$0]  %s2, 9216, %s31, [#allocation3], 64, 64, 4
    $region13: #{gcae_pallas_forward.1} parent=1 // pred_fallthru
      _
    // Predicated region
    $region14: #{gcae_pallas_forward.1} parent=1 // pred_check
      _
    $region15: #{gcae_pallas_forward.1} parent=1 // pred_check_branch
      %38 = sbr.rel (0) target = $region17
    $region16: #{gcae_pallas_forward.1} parent=1 // pred_region
      %s40 = ssub.s32 16, 16
      %41 = vsyncadd [#allocation6], %s40
      %s43 = sshll.u32 [#allocation5], 4
      %s44 = int_to_ptr.vmem [resolvable:$true] %s43
      %46 = dma.hbm_to_vmem [thread:$0]  %s3, 16, %s44, [#allocation6]
    $region17: #{gcae_pallas_forward.1} parent=1 // pred_fallthru
      _
    // Predicated region
    $region18: #{gcae_pallas_forward.1} parent=1 // pred_check
      _
    $region19: #{gcae_pallas_forward.1} parent=1 // pred_check_branch
      %48 = sbr.rel (0) target = $region21
    $region20: #{gcae_pallas_forward.1} parent=1 // pred_region
      %s50 = ssub.s32 1024, 1024
      %51 = vsyncadd [#allocation6], %s50
      %s52 = sshll.u32 [#allocation7], 4
      %s53 = int_to_ptr.vmem [resolvable:$true] %s52
      %58 = dma.hbm_to_vmem [thread:$0]  %s4, 1024, %s53, [#allocation6], 64, 64, 4
    $region21: #{gcae_pallas_forward.1} parent=1 // pred_fallthru
      _
    // Predicated region
    $region22: #{gcae_pallas_forward.1} parent=1 // pred_check
      _
    $region23: #{gcae_pallas_forward.1} parent=1 // pred_check_branch
      %60 = sbr.rel (0) target = $region25
    $region24: #{gcae_pallas_forward.1} parent=1 // pred_region
      %s62 = ssub.s32 16, 16
      %63 = vsyncadd [#allocation9], %s62
      %s65 = sshll.u32 [#allocation8], 4
      %s66 = int_to_ptr.vmem [resolvable:$true] %s65
      %68 = dma.hbm_to_vmem [thread:$0]  %s5, 16, %s66, [#allocation9]
    $region25: #{gcae_pallas_forward.1} parent=1 // pred_fallthru
      _
    // Predicated region
    $region26: #{gcae_pallas_forward.1} parent=1 // pred_check
      _
    $region27: #{gcae_pallas_forward.1} parent=1 // pred_check_branch
      %70 = sbr.rel (0) target = $region29
    $region28: #{gcae_pallas_forward.1} parent=1 // pred_region
      %s72 = ssub.s32 92160, 92160
      %73 = vsyncadd [#allocation9], %s72
      %s74 = sshll.u32 [#allocation10], 4
      %s75 = int_to_ptr.vmem [resolvable:$true] %s74
      %80 = dma.hbm_to_vmem [thread:$0]  %s6, 92160, %s75, [#allocation9], 384, 384, 24
    $region29: #{gcae_pallas_forward.1} parent=1 // pred_fallthru
      _
    // Predicated region
    $region30: #{gcae_pallas_forward.1} parent=1 // pred_check
      _
    $region31: #{gcae_pallas_forward.1} parent=1 // pred_check_branch
      %82 = sbr.rel (0) target = $region33
    $region32: #{gcae_pallas_forward.1} parent=1 // pred_region
      %s84 = ssub.s32 96, 96
      %85 = vsyncadd [#allocation12], %s84
      %s87 = sshll.u32 [#allocation11], 4
      %s88 = int_to_ptr.vmem [resolvable:$true] %s87
      %90 = dma.hbm_to_vmem [thread:$0]  %s7, 96, %s88, [#allocation12]
    $region33: #{gcae_pallas_forward.1} parent=1 // pred_fallthru
      _
    // Predicated region
    $region34: #{gcae_pallas_forward.1} parent=1 // pred_check
      _
    $region35: #{gcae_pallas_forward.1} parent=1 // pred_check_branch
      %92 = sbr.rel (0) target = $region37
    $region36: #{gcae_pallas_forward.1} parent=1 // pred_region
      %s94 = ssub.s32 3072, 3072
      %95 = vsyncadd [#allocation12], %s94
      %s96 = sshll.u32 [#allocation13], 4
      %s97 = int_to_ptr.vmem [resolvable:$true] %s96
      %102 = dma.hbm_to_vmem [thread:$0]  %s8, 3072, %s97, [#allocation12], 64, 64, 4
    $region37: #{gcae_pallas_forward.1} parent=1 // pred_fallthru
      _
    // Predicated region
    $region38: #{gcae_pallas_forward.1} parent=1 // pred_check
      _
    $region39: #{gcae_pallas_forward.1} parent=1 // pred_check_branch
      %104 = sbr.rel (0) target = $region41
    $region40: #{gcae_pallas_forward.1} parent=1 // pred_region
      %s106 = ssub.s32 16, 16
      %107 = vsyncadd [#allocation15], %s106
      %s109 = sshll.u32 [#allocation14], 4
      %s110 = int_to_ptr.vmem [resolvable:$true] %s109
      %112 = dma.hbm_to_vmem [thread:$0]  %s9, 16, %s110, [#allocation15]
    $region41: #{gcae_pallas_forward.1} parent=1 // pred_fallthru
      _
    // Predicated region
    $region42: #{gcae_pallas_forward.1} parent=1 // pred_check
      _
    $region43: #{gcae_pallas_forward.1} parent=1 // pred_check_branch
      %114 = sbr.rel (0) target = $region45
    $region44: #{gcae_pallas_forward.1} parent=1 // pred_region
      %115 = dma.done [#allocation3], 9216
    $region45: #{gcae_pallas_forward.1} parent=1 // pred_fallthru
      _
    // Predicated region
    $region46: #{gcae_pallas_forward.1} parent=1 // pred_check
      _
    $region47: #{gcae_pallas_forward.1} parent=1 // pred_check_branch
      %117 = sbr.rel (0) target = $region49
    $region48: #{gcae_pallas_forward.1} parent=1 // pred_region
      %118 = dma.done [#allocation6], 16
    $region49: #{gcae_pallas_forward.1} parent=1 // pred_fallthru
      _
    // Predicated region
    $region50: #{gcae_pallas_forward.1} parent=1 // pred_check
      _
    $region51: #{gcae_pallas_forward.1} parent=1 // pred_check_branch
      %120 = sbr.rel (0) target = $region53
    $region52: #{gcae_pallas_forward.1} parent=1 // pred_region
      %121 = dma.done [#allocation6], 1024
    $region53: #{gcae_pallas_forward.1} parent=1 // pred_fallthru
      _
    // Predicated region
    $region54: #{gcae_pallas_forward.1} parent=1 // pred_check
      _
    $region55: #{gcae_pallas_forward.1} parent=1 // pred_check_branch
      %123 = sbr.rel (0) target = $region57
    $region56: #{gcae_pallas_forward.1} parent=1 // pred_region
      %124 = dma.done [#allocation9], 16
    $region57: #{gcae_pallas_forward.1} parent=1 // pred_fallthru
      _
    // Predicated region
    $region58: #{gcae_pallas_forward.1} parent=1 // pred_check
      _
    $region59: #{gcae_pallas_forward.1} parent=1 // pred_check_branch
      %126 = sbr.rel (0) target = $region61
    $region60: #{gcae_pallas_forward.1} parent=1 // pred_region
      %127 = dma.done [#allocation9], 92160
    $region61: #{gcae_pallas_forward.1} parent=1 // pred_fallthru
      _
    // Predicated region
    $region62: #{gcae_pallas_forward.1} parent=1 // pred_check
      _
    $region63: #{gcae_pallas_forward.1} parent=1 // pred_check_branch
      %129 = sbr.rel (0) target = $region65
    $region64: #{gcae_pallas_forward.1} parent=1 // pred_region
      %130 = dma.done [#allocation12], 96
    $region65: #{gcae_pallas_forward.1} parent=1 // pred_fallthru
      _
    // Predicated region
    $region66: #{gcae_pallas_forward.1} parent=1 // pred_check
      _
    $region67: #{gcae_pallas_forward.1} parent=1 // pred_check_branch
      %132 = sbr.rel (0) target = $region69
    $region68: #{gcae_pallas_forward.1} parent=1 // pred_region
      %133 = dma.done [#allocation12], 3072
    $region69: #{gcae_pallas_forward.1} parent=1 // pred_fallthru
      _
    // Predicated region
    $region70: #{gcae_pallas_forward.1} parent=1 // pred_check
      _
    $region71: #{gcae_pallas_forward.1} parent=1 // pred_check_branch
      %135 = sbr.rel (0) target = $region73
    $region72: #{gcae_pallas_forward.1} parent=1 // pred_region
      %136 = dma.done [#allocation15], 16
    $region73: #{gcae_pallas_forward.1} parent=1 // pred_fallthru
      _
    %v138 = vld [vmem:[%s1] sm:$0xff]
    %v139 = vld [vmem:[%s1 + $0x8] sm:$0xf]
    %v140 = vld [vmem:[%s1 + $0xc] sm:$0xff]
    %v141 = vld [vmem:[%s1 + $0x14] sm:$0xf]
    %v142 = vld [vmem:[#allocation2] sm:$0xf]
    %v143 = vld [vmem:[#allocation2 + $0x4] sm:$0xf]
    %v144 = vld [vmem:[#allocation2 + $0x8] sm:$0xf]
    %v145 = vld [vmem:[#allocation2 + $0xc] sm:$0xf]
    %v146 = vld [vmem:[#allocation2 + $0x10] sm:$0xf]
    %v147 = vld [vmem:[#allocation2 + $0x14] sm:$0xf]
    %v148 = vld [vmem:[#allocation2 + $0x18] sm:$0xf]
    %v149 = vld [vmem:[#allocation2 + $0x1c] sm:$0xf]
    %v150 = vld [vmem:[#allocation2 + $0x20] sm:$0xf]
    %v151 = vld [vmem:[#allocation2 + $0x24] sm:$0xf]
    %v152 = vld [vmem:[#allocation2 + $0x28] sm:$0xf]
    %v153 = vld [vmem:[#allocation2 + $0x2c] sm:$0xf]
    %v154 = vld [vmem:[#allocation2 + $0x30] sm:$0xf]
    %v155 = vld [vmem:[#allocation2 + $0x34] sm:$0xf]
    %v156 = vld [vmem:[#allocation2 + $0x38] sm:$0xf]
    %v157 = vld [vmem:[#allocation2 + $0x3c] sm:$0xf]
    %v158 = vld [vmem:[#allocation2 + $0x40] sm:$0xf]
    %v159 = vld [vmem:[#allocation2 + $0x44] sm:$0xf]
    %v160 = vld [vmem:[#allocation2 + $0x48] sm:$0xf]
    %v161 = vld [vmem:[#allocation2 + $0x4c] sm:$0xf]
    %v162 = vld [vmem:[#allocation2 + $0x50] sm:$0xf]
    %v163 = vld [vmem:[#allocation2 + $0x54] sm:$0xf]
    %v164 = vld [vmem:[#allocation2 + $0x58] sm:$0xf]
    %v165 = vld [vmem:[#allocation2 + $0x5c] sm:$0xf]
    %v166 = vld [vmem:[#allocation2 + $0x60] sm:$0xf]
    %v167 = vld [vmem:[#allocation2 + $0x64] sm:$0xf]
    %v168 = vld [vmem:[#allocation2 + $0x68] sm:$0xf]
    %v169 = vld [vmem:[#allocation2 + $0x6c] sm:$0xf]
    %v170 = vld [vmem:[#allocation2 + $0x70] sm:$0xf]
    %v171 = vld [vmem:[#allocation2 + $0x74] sm:$0xf]
    %v172 = vld [vmem:[#allocation2 + $0x78] sm:$0xf]
    %v173 = vld [vmem:[#allocation2 + $0x7c] sm:$0xf]
    %v174 = vld [vmem:[#allocation2 + $0x80] sm:$0xf]
    %v175 = vld [vmem:[#allocation2 + $0x84] sm:$0xf]
    %v176 = vld [vmem:[#allocation2 + $0x88] sm:$0xf]
    %v177 = vld [vmem:[#allocation2 + $0x8c] sm:$0xf]
    %v178 = vld [vmem:[#allocation2 + $0x90] sm:$0xf]
    %v179 = vld [vmem:[#allocation2 + $0x94] sm:$0xf]
    %v180 = vld [vmem:[#allocation2 + $0x98] sm:$0xf]
    %v181 = vld [vmem:[#allocation2 + $0x9c] sm:$0xf]
    %v182 = vld [vmem:[#allocation2 + $0xa0] sm:$0xf]
    %v183 = vld [vmem:[#allocation2 + $0xa4] sm:$0xf]
    %v184 = vld [vmem:[#allocation2 + $0xa8] sm:$0xf]
    %v185 = vld [vmem:[#allocation2 + $0xac] sm:$0xf]
    %v186 = vld [vmem:[#allocation2 + $0xb0] sm:$0xf]
    %v187 = vld [vmem:[#allocation2 + $0xb4] sm:$0xf]
    %v188 = vld [vmem:[#allocation2 + $0xb8] sm:$0xf]
    %v189 = vld [vmem:[#allocation2 + $0xbc] sm:$0xf]
    %v190 = vld [vmem:[%s1] sm:$0xff]
    %v191 = vld [vmem:[%s1 + $0x8] sm:$0xf]
    %v192 = vld [vmem:[%s1 + $0xc] sm:$0xff]
    %v193 = vld [vmem:[%s1 + $0x14] sm:$0xf]
    %v194 = vld [vmem:[%s1 + $0x18] sm:$0x11]
    %v195 = vld [vmem:[%s1 + $0x20] sm:$0x1]
    %s196 = scalar_lea.vmem [#allocation2], 192
    %v197 = vld [vmem:[%s196] sm:$0xf]
    %v198 = vld [vmem:[%s196 + $0x4] sm:$0xf]
    %v199 = vld [vmem:[%s196 + $0x8] sm:$0xf]
    %v200 = vld [vmem:[%s196 + $0xc] sm:$0xf]
    %v201 = vld [vmem:[%s196 + $0x10] sm:$0xf]
    %v202 = vld [vmem:[%s196 + $0x14] sm:$0xf]
    %v203 = vld [vmem:[%s196 + $0x18] sm:$0xf]
    %v204 = vld [vmem:[%s196 + $0x1c] sm:$0xf]
    %v205 = vld [vmem:[%s196 + $0x20] sm:$0xf]
    %v206 = vld [vmem:[%s196 + $0x24] sm:$0xf]
    %v207 = vld [vmem:[%s196 + $0x28] sm:$0xf]
    %v208 = vld [vmem:[%s196 + $0x2c] sm:$0xf]
    %v209 = vld [vmem:[%s196 + $0x30] sm:$0xf]
    %v210 = vld [vmem:[%s196 + $0x34] sm:$0xf]
    %v211 = vld [vmem:[%s196 + $0x38] sm:$0xf]
    %v212 = vld [vmem:[%s196 + $0x3c] sm:$0xf]
    %v213 = vld [vmem:[%s196 + $0x40] sm:$0xf]
    %v214 = vld [vmem:[%s196 + $0x44] sm:$0xf]
    %v215 = vld [vmem:[%s196 + $0x48] sm:$0xf]
    %v216 = vld [vmem:[%s196 + $0x4c] sm:$0xf]
    %v217 = vld [vmem:[%s196 + $0x50] sm:$0xf]
    %v218 = vld [vmem:[%s196 + $0x54] sm:$0xf]
    %v219 = vld [vmem:[%s196 + $0x58] sm:$0xf]
    %v220 = vld [vmem:[%s196 + $0x5c] sm:$0xf]
    %v221 = vld [vmem:[%s196 + $0x60] sm:$0xf]
    %v222 = vld [vmem:[%s196 + $0x64] sm:$0xf]
    %v223 = vld [vmem:[%s196 + $0x68] sm:$0xf]
    %v224 = vld [vmem:[%s196 + $0x6c] sm:$0xf]
    %v225 = vld [vmem:[%s196 + $0x70] sm:$0xf]
    %v226 = vld [vmem:[%s196 + $0x74] sm:$0xf]
    %v227 = vld [vmem:[%s196 + $0x78] sm:$0xf]
    %v228 = vld [vmem:[%s196 + $0x7c] sm:$0xf]
    %v229 = vld [vmem:[%s196 + $0x80] sm:$0xf]
    %v230 = vld [vmem:[%s196 + $0x84] sm:$0xf]
    %v231 = vld [vmem:[%s196 + $0x88] sm:$0xf]
    %v232 = vld [vmem:[%s196 + $0x8c] sm:$0xf]
    %v233 = vld [vmem:[%s196 + $0x90] sm:$0xf]
    %v234 = vld [vmem:[%s196 + $0x94] sm:$0xf]
    %v235 = vld [vmem:[%s196 + $0x98] sm:$0xf]
    %v236 = vld [vmem:[%s196 + $0x9c] sm:$0xf]
    %v237 = vld [vmem:[%s196 + $0xa0] sm:$0xf]
    %v238 = vld [vmem:[%s196 + $0xa4] sm:$0xf]
    %v239 = vld [vmem:[%s196 + $0xa8] sm:$0xf]
    %v240 = vld [vmem:[%s196 + $0xac] sm:$0xf]
    %v241 = vld [vmem:[%s196 + $0xb0] sm:$0xf]
    %v242 = vld [vmem:[%s196 + $0xb4] sm:$0xf]
    %v243 = vld [vmem:[%s196 + $0xb8] sm:$0xf]
    %v244 = vld [vmem:[%s196 + $0xbc] sm:$0xf]
    %v251 = vunpack.c.l.b16 %v190
    %v252 = vunpack.c.h.b16 %v190
    %v253 = vunpack.c.l.b16 %v191
    %v254 = vunpack.c.l.b16 %v192
    %v255 = vunpack.c.h.b16 %v192
    %v256 = vunpack.c.l.b16 %v193
    %v257 = vunpack.c.l.b16 %v194
    %v258 = vunpack.c.h.b16 %v194
    %v259 = vunpack.c.l.b16 %v195
    %v260 = vpack.c.b16 %v254, %v251
    %v261 = vpack.c.b16 %v255, %v252
    %v262 = vpack.c.b16 %v256, %v253
    %v263 = vpack.c.b16 %v257, %v257
    %v264 = vpack.c.b16 %v258, %v258
    %v265 = vpack.c.b16 %v259, %v259
    %vm266 = vsmask.f32 7424
    %v268 = vshrl.u32 %v260, 16
    %v270 = vshll.u32 %v260, 16
    %v272 = vrot.slane %v270, 1
    %v273 = vor.u32 %v268, %v272
    %v275 = vshll.u32 %v263, 16
    %v277 = vrot.slane %v275, 1
    %v278 = vsel %vm266, %v273, %v277
    %v280 = vshrl.u32 %v261, 16
    %v282 = vshll.u32 %v261, 16
    %v284 = vrot.slane %v282, 1
    %v285 = vor.u32 %v280, %v284
    %v287 = vshll.u32 %v264, 16
    %v289 = vrot.slane %v287, 1
    %v290 = vsel %vm266, %v285, %v289
    %v292 = vshrl.u32 %v262, 16
    %v294 = vshll.u32 %v262, 16
    %v296 = vrot.slane %v294, 1
    %v297 = vor.u32 %v292, %v296
    %v299 = vshll.u32 %v265, 16
    %v301 = vrot.slane %v299, 1
    %v302 = vsel %vm266, %v297, %v301
    %v354 = vunpack.c.l.b16 %v197
    %v355 = vunpack.c.l.b16 %v198
    %v356 = vunpack.c.l.b16 %v199
    %v357 = vunpack.c.l.b16 %v200
    %v358 = vunpack.c.l.b16 %v201
    %v359 = vunpack.c.l.b16 %v202
    %v360 = vunpack.c.l.b16 %v203
    %v361 = vunpack.c.l.b16 %v204
    %v362 = vunpack.c.l.b16 %v205
    %v363 = vunpack.c.l.b16 %v206
    %v364 = vunpack.c.l.b16 %v207
    %v365 = vunpack.c.l.b16 %v208
    %v366 = vunpack.c.l.b16 %v209
    %v367 = vunpack.c.l.b16 %v210
    %v368 = vunpack.c.l.b16 %v211
    %v369 = vunpack.c.l.b16 %v212
    %v370 = vunpack.c.l.b16 %v213
    %v371 = vunpack.c.l.b16 %v214
    %v372 = vunpack.c.l.b16 %v215
    %v373 = vunpack.c.l.b16 %v216
    %v374 = vunpack.c.l.b16 %v217
    %v375 = vunpack.c.l.b16 %v218
    %v376 = vunpack.c.l.b16 %v219
    %v377 = vunpack.c.l.b16 %v220
    %v378 = vunpack.c.l.b16 %v221
    %v379 = vunpack.c.l.b16 %v222
    %v380 = vunpack.c.l.b16 %v223
    %v381 = vunpack.c.l.b16 %v224
    %v382 = vunpack.c.l.b16 %v225
    %v383 = vunpack.c.l.b16 %v226
    %v384 = vunpack.c.l.b16 %v227
    %v385 = vunpack.c.l.b16 %v228
    %v386 = vunpack.c.l.b16 %v229
    %v387 = vunpack.c.l.b16 %v230
    %v388 = vunpack.c.l.b16 %v231
    %v389 = vunpack.c.l.b16 %v232
    %v390 = vunpack.c.l.b16 %v233
    %v391 = vunpack.c.l.b16 %v234
    %v392 = vunpack.c.l.b16 %v235
    %v393 = vunpack.c.l.b16 %v236
    %v394 = vunpack.c.l.b16 %v237
    %v395 = vunpack.c.l.b16 %v238
    %v396 = vunpack.c.l.b16 %v239
    %v397 = vunpack.c.l.b16 %v240
    %v398 = vunpack.c.l.b16 %v241
    %v399 = vunpack.c.l.b16 %v242
    %v400 = vunpack.c.l.b16 %v243
    %v401 = vunpack.c.l.b16 %v244
    %v402 = vpack.c.b16 %v355, %v354
    %v403 = vpack.c.b16 %v357, %v356
    %v404 = vpack.c.b16 %v359, %v358
    %v405 = vpack.c.b16 %v361, %v360
    %v406 = vpack.c.b16 %v363, %v362
    %v407 = vpack.c.b16 %v365, %v364
    %v408 = vpack.c.b16 %v367, %v366
    %v409 = vpack.c.b16 %v369, %v368
    %v410 = vpack.c.b16 %v371, %v370
    %v411 = vpack.c.b16 %v373, %v372
    %v412 = vpack.c.b16 %v375, %v374
    %v413 = vpack.c.b16 %v377, %v376
    %v414 = vpack.c.b16 %v379, %v378
    %v415 = vpack.c.b16 %v381, %v380
    %v416 = vpack.c.b16 %v383, %v382
    %v417 = vpack.c.b16 %v385, %v384
    %v418 = vpack.c.b16 %v387, %v386
    %v419 = vpack.c.b16 %v389, %v388
    %v420 = vpack.c.b16 %v391, %v390
    %v421 = vpack.c.b16 %v393, %v392
    %v422 = vpack.c.b16 %v395, %v394
    %v423 = vpack.c.b16 %v397, %v396
    %v424 = vpack.c.b16 %v399, %v398
    %v425 = vpack.c.b16 %v401, %v400
    %450 = vmatprep.subr.bf16.mxu0 0
    %451 = vmatpush1.bf16.msra.mxu0 %v402
    %452 = vmatprep.subr.bf16.mxu0 0
    %453 = vmatpush1.bf16.msra.mxu0 %v403
    %454 = vmatprep.subr.bf16.mxu0 0
    %455 = vmatpush1.bf16.msra.mxu0 %v404
    %456 = vmatprep.subr.bf16.mxu0 0
    %457 = vmatpush1.bf16.msra.mxu0 %v405
    %458 = vmatprep.subr.bf16.mxu0 0
    %459 = vmatpush1.bf16.msra.mxu0 %v406
    %460 = vmatprep.subr.bf16.mxu0 0
    %461 = vmatpush1.bf16.msra.mxu0 %v407
    %462 = vmatprep.subr.bf16.mxu0 0
    %463 = vmatpush1.bf16.msra.mxu0 %v408
    %464 = vmatprep.subr.bf16.mxu0 0
    %465 = vmatpush1.bf16.msra.mxu0 %v409
    %466 = vmatprep.subr.bf16.mxu0 0
    %467 = vmatpush1.bf16.msra.mxu0 %v410
    %468 = vmatprep.subr.bf16.mxu0 0
    %469 = vmatpush1.bf16.msra.mxu0 %v411
    %470 = vmatprep.subr.bf16.mxu0 0
    %471 = vmatpush1.bf16.msra.mxu0 %v412
    %472 = vmatprep.subr.bf16.mxu0 0
    %473 = vmatpush1.bf16.msra.mxu0 %v413
    %474 = vmatprep.subr.bf16.mxu0 0
    %475 = vmatpush1.bf16.msra.mxu0 %v414
    %476 = vmatprep.subr.bf16.mxu0 0
    %477 = vmatpush1.bf16.msra.mxu0 %v415
    %478 = vmatprep.subr.bf16.mxu0 0
    %479 = vmatpush1.bf16.msra.mxu0 %v416
    %480 = vmatprep.subr.bf16.mxu0 0
    %481 = vmatpush1.bf16.msra.mxu0 %v417
    %482 = vmatprep.mubr.bf16.mxu0 %v290
    %483 = vmatmul.mubr.bf16.gmra.mrb[0].mxu0 %v278
    %v484 = vpop.f32.mrb[0].mxu0
    %v485 = vadd.f32 0.0, %v484
    %v486 = vpop.f32.mrb[0].mxu0
    %v487 = vpop.f32.mrb[0].mxu0
    %v488 = vadd.f32 0.0, %v487
    %v489 = vpop.f32.mrb[0].mxu0
    %490 = vdwg.mxu0
    %491 = vmatprep.subr.bf16.mxu0 0
    %492 = vmatpush1.bf16.msra.mxu0 %v418
    %493 = vmatprep.subr.bf16.mxu0 0
    %494 = vmatpush1.bf16.msra.mxu0 %v419
    %495 = vmatprep.subr.bf16.mxu0 0
    %496 = vmatpush1.bf16.msra.mxu0 %v420
    %497 = vmatprep.subr.bf16.mxu0 0
    %498 = vmatpush1.bf16.msra.mxu0 %v421
    %499 = vmatprep.subr.bf16.mxu0 0
    %500 = vmatpush1.bf16.msra.mxu0 %v422
    %501 = vmatprep.subr.bf16.mxu0 0
    %502 = vmatpush1.bf16.msra.mxu0 %v423
    %503 = vmatprep.subr.bf16.mxu0 0
    %504 = vmatpush1.bf16.msra.mxu0 %v424
    %505 = vmatprep.subr.bf16.mxu0 0
    %506 = vmatpush1.bf16.msra.mxu0 %v425
    %507 = vmatprep.subr.bf16.mxu0 0
    %508 = vmatpush1.bf16.msra.mxu0 0
    %509 = vmatprep.subr.bf16.mxu0 0
    %510 = vmatpush1.bf16.msra.mxu0 0
    %511 = vmatprep.subr.bf16.mxu0 0
    %512 = vmatpush1.bf16.msra.mxu0 0
    %513 = vmatprep.subr.bf16.mxu0 0
    %514 = vmatpush1.bf16.msra.mxu0 0
    %515 = vmatprep.subr.bf16.mxu0 0
    %516 = vmatpush1.bf16.msra.mxu0 0
    %517 = vmatprep.subr.bf16.mxu0 0
    %518 = vmatpush1.bf16.msra.mxu0 0
    %519 = vmatprep.subr.bf16.mxu0 0
    %520 = vmatpush1.bf16.msra.mxu0 0
    %521 = vmatprep.subr.bf16.mxu0 0
    %522 = vmatpush1.bf16.msra.mxu0 0
    %523 = vmatprep.mubr.bf16.mxu0 0
    %524 = vmatmul.mubr.bf16.gmra.mrb[0].mxu0 %v302
    %v525 = vpop.f32.mrb[0].mxu0
    %v526 = vadd.f32 %v485, %v525
    %v527 = vpop.f32.mrb[0].mxu0
    %v528 = vpop.f32.mrb[0].mxu0
    %v529 = vadd.f32 %v488, %v528
    %v530 = vpop.f32.mrb[0].mxu0
    %531 = vdwg.mxu0
    %v536 = vunpack.c.l.b16 %v138
    %v537 = vunpack.c.h.b16 %v138
    %v538 = vunpack.c.l.b16 %v139
    %v539 = vunpack.c.l.b16 %v140
    %v540 = vunpack.c.h.b16 %v140
    %v541 = vunpack.c.l.b16 %v141
    %v542 = vpack.c.b16 %v539, %v536
    %v543 = vpack.c.b16 %v540, %v537
    %v544 = vpack.c.b16 %v541, %v538
    %v596 = vunpack.c.l.b16 %v142
    %v597 = vunpack.c.l.b16 %v143
    %v598 = vunpack.c.l.b16 %v144
    %v599 = vunpack.c.l.b16 %v145
    %v600 = vunpack.c.l.b16 %v146
    %v601 = vunpack.c.l.b16 %v147
    %v602 = vunpack.c.l.b16 %v148
    %v603 = vunpack.c.l.b16 %v149
    %v604 = vunpack.c.l.b16 %v150
    %v605 = vunpack.c.l.b16 %v151
    %v606 = vunpack.c.l.b16 %v152
    %v607 = vunpack.c.l.b16 %v153
    %v608 = vunpack.c.l.b16 %v154
    %v609 = vunpack.c.l.b16 %v155
    %v610 = vunpack.c.l.b16 %v156
    %v611 = vunpack.c.l.b16 %v157
    %v612 = vunpack.c.l.b16 %v158
    %v613 = vunpack.c.l.b16 %v159
    %v614 = vunpack.c.l.b16 %v160
    %v615 = vunpack.c.l.b16 %v161
    %v616 = vunpack.c.l.b16 %v162
    %v617 = vunpack.c.l.b16 %v163
    %v618 = vunpack.c.l.b16 %v164
    %v619 = vunpack.c.l.b16 %v165
    %v620 = vunpack.c.l.b16 %v166
    %v621 = vunpack.c.l.b16 %v167
    %v622 = vunpack.c.l.b16 %v168
    %v623 = vunpack.c.l.b16 %v169
    %v624 = vunpack.c.l.b16 %v170
    %v625 = vunpack.c.l.b16 %v171
    %v626 = vunpack.c.l.b16 %v172
    %v627 = vunpack.c.l.b16 %v173
    %v628 = vunpack.c.l.b16 %v174
    %v629 = vunpack.c.l.b16 %v175
    %v630 = vunpack.c.l.b16 %v176
    %v631 = vunpack.c.l.b16 %v177
    %v632 = vunpack.c.l.b16 %v178
    %v633 = vunpack.c.l.b16 %v179
    %v634 = vunpack.c.l.b16 %v180
    %v635 = vunpack.c.l.b16 %v181
    %v636 = vunpack.c.l.b16 %v182
    %v637 = vunpack.c.l.b16 %v183
    %v638 = vunpack.c.l.b16 %v184
    %v639 = vunpack.c.l.b16 %v185
    %v640 = vunpack.c.l.b16 %v186
    %v641 = vunpack.c.l.b16 %v187
    %v642 = vunpack.c.l.b16 %v188
    %v643 = vunpack.c.l.b16 %v189
    %v644 = vpack.c.b16 %v597, %v596
    %v645 = vpack.c.b16 %v599, %v598
    %v646 = vpack.c.b16 %v601, %v600
    %v647 = vpack.c.b16 %v603, %v602
    %v648 = vpack.c.b16 %v605, %v604
    %v649 = vpack.c.b16 %v607, %v606
    %v650 = vpack.c.b16 %v609, %v608
    %v651 = vpack.c.b16 %v611, %v610
    %v652 = vpack.c.b16 %v613, %v612
    %v653 = vpack.c.b16 %v615, %v614
    %v654 = vpack.c.b16 %v617, %v616
    %v655 = vpack.c.b16 %v619, %v618
    %v656 = vpack.c.b16 %v621, %v620
    %v657 = vpack.c.b16 %v623, %v622
    %v658 = vpack.c.b16 %v625, %v624
    %v659 = vpack.c.b16 %v627, %v626
    %v660 = vpack.c.b16 %v629, %v628
    %v661 = vpack.c.b16 %v631, %v630
    %v662 = vpack.c.b16 %v633, %v632
    %v663 = vpack.c.b16 %v635, %v634
    %v664 = vpack.c.b16 %v637, %v636
    %v665 = vpack.c.b16 %v639, %v638
    %v666 = vpack.c.b16 %v641, %v640
    %v667 = vpack.c.b16 %v643, %v642
    %692 = vmatprep.subr.bf16.mxu0 0
    %693 = vmatpush1.bf16.msra.mxu0 %v644
    %694 = vmatprep.subr.bf16.mxu0 0
    %695 = vmatpush1.bf16.msra.mxu0 %v645
    %696 = vmatprep.subr.bf16.mxu0 0
    %697 = vmatpush1.bf16.msra.mxu0 %v646
    %698 = vmatprep.subr.bf16.mxu0 0
    %699 = vmatpush1.bf16.msra.mxu0 %v647
    %700 = vmatprep.subr.bf16.mxu0 0
    %701 = vmatpush1.bf16.msra.mxu0 %v648
    %702 = vmatprep.subr.bf16.mxu0 0
    %703 = vmatpush1.bf16.msra.mxu0 %v649
    %704 = vmatprep.subr.bf16.mxu0 0
    %705 = vmatpush1.bf16.msra.mxu0 %v650
    %706 = vmatprep.subr.bf16.mxu0 0
    %707 = vmatpush1.bf16.msra.mxu0 %v651
    %708 = vmatprep.subr.bf16.mxu0 0
    %709 = vmatpush1.bf16.msra.mxu0 %v652
    %710 = vmatprep.subr.bf16.mxu0 0
    %711 = vmatpush1.bf16.msra.mxu0 %v653
    %712 = vmatprep.subr.bf16.mxu0 0
    %713 = vmatpush1.bf16.msra.mxu0 %v654
    %714 = vmatprep.subr.bf16.mxu0 0
    %715 = vmatpush1.bf16.msra.mxu0 %v655
    %716 = vmatprep.subr.bf16.mxu0 0
    %717 = vmatpush1.bf16.msra.mxu0 %v656
    %718 = vmatprep.subr.bf16.mxu0 0
    %719 = vmatpush1.bf16.msra.mxu0 %v657
    %720 = vmatprep.subr.bf16.mxu0 0
    %721 = vmatpush1.bf16.msra.mxu0 %v658
    %722 = vmatprep.subr.bf16.mxu0 0
    %723 = vmatpush1.bf16.msra.mxu0 %v659
    %724 = vmatprep.mubr.bf16.mxu0 %v543
    %725 = vmatmul.mubr.bf16.gmra.mrb[0].mxu0 %v542
    %v726 = vpop.f32.mrb[0].mxu0
    %v727 = vadd.f32 %v526, %v726
    %v728 = vpop.f32.mrb[0].mxu0
    %v729 = vpop.f32.mrb[0].mxu0
    %v730 = vadd.f32 %v529, %v729
    %v731 = vpop.f32.mrb[0].mxu0
    %732 = vdwg.mxu0
    %733 = vmatprep.subr.bf16.mxu0 0
    %734 = vmatpush1.bf16.msra.mxu0 %v660
    %735 = vmatprep.subr.bf16.mxu0 0
    %736 = vmatpush1.bf16.msra.mxu0 %v661
    %737 = vmatprep.subr.bf16.mxu0 0
    %738 = vmatpush1.bf16.msra.mxu0 %v662
    %739 = vmatprep.subr.bf16.mxu0 0
    %740 = vmatpush1.bf16.msra.mxu0 %v663
    %741 = vmatprep.subr.bf16.mxu0 0
    %742 = vmatpush1.bf16.msra.mxu0 %v664
    %743 = vmatprep.subr.bf16.mxu0 0
    %744 = vmatpush1.bf16.msra.mxu0 %v665
    %745 = vmatprep.subr.bf16.mxu0 0
    %746 = vmatpush1.bf16.msra.mxu0 %v666
    %747 = vmatprep.subr.bf16.mxu0 0
    %748 = vmatpush1.bf16.msra.mxu0 %v667
    %749 = vmatprep.subr.bf16.mxu0 0
    %750 = vmatpush1.bf16.msra.mxu0 0
    %751 = vmatprep.subr.bf16.mxu0 0
    %752 = vmatpush1.bf16.msra.mxu0 0
    %753 = vmatprep.subr.bf16.mxu0 0
    %754 = vmatpush1.bf16.msra.mxu0 0
    %755 = vmatprep.subr.bf16.mxu0 0
    %756 = vmatpush1.bf16.msra.mxu0 0
    %757 = vmatprep.subr.bf16.mxu0 0
    %758 = vmatpush1.bf16.msra.mxu0 0
    %759 = vmatprep.subr.bf16.mxu0 0
    %760 = vmatpush1.bf16.msra.mxu0 0
    %761 = vmatprep.subr.bf16.mxu0 0
    %762 = vmatpush1.bf16.msra.mxu0 0
    %763 = vmatprep.subr.bf16.mxu0 0
    %764 = vmatpush1.bf16.msra.mxu0 0
    %765 = vmatprep.mubr.bf16.mxu0 0
    %766 = vmatmul.mubr.bf16.gmra.mrb[0].mxu0 %v544
    %v767 = vpop.f32.mrb[0].mxu0
    %v768 = vadd.f32 %v727, %v767
    %v769 = vpop.f32.mrb[0].mxu0
    %v770 = vpop.f32.mrb[0].mxu0
    %v771 = vadd.f32 %v730, %v770
    %v772 = vpop.f32.mrb[0].mxu0
    %773 = vdwg.mxu0
    %v774 = vld [vmem:[%s1] sm:$0xee]
    %v775 = vld [vmem:[%s1 + $0x8] sm:$0xe]
    %s776 = scalar_lea.vmem [#allocation2], 384
    %v777 = vld [vmem:[%s776] sm:$0xf]
    %v778 = vld [vmem:[%s776 + $0x4] sm:$0xf]
    %v779 = vld [vmem:[%s776 + $0x8] sm:$0xf]
    %v780 = vld [vmem:[%s776 + $0xc] sm:$0xf]
    %v781 = vld [vmem:[%s776 + $0x10] sm:$0xf]
    %v782 = vld [vmem:[%s776 + $0x14] sm:$0xf]
    %v783 = vld [vmem:[%s776 + $0x18] sm:$0xf]
    %v784 = vld [vmem:[%s776 + $0x1c] sm:$0xf]
    %v785 = vld [vmem:[%s776 + $0x20] sm:$0xf]
    %v786 = vld [vmem:[%s776 + $0x24] sm:$0xf]
    %v787 = vld [vmem:[%s776 + $0x28] sm:$0xf]
    %v788 = vld [vmem:[%s776 + $0x2c] sm:$0xf]
    %v789 = vld [vmem:[%s776 + $0x30] sm:$0xf]
    %v790 = vld [vmem:[%s776 + $0x34] sm:$0xf]
    %v791 = vld [vmem:[%s776 + $0x38] sm:$0xf]
    %v792 = vld [vmem:[%s776 + $0x3c] sm:$0xf]
    %v793 = vld [vmem:[%s776 + $0x40] sm:$0xf]
    %v794 = vld [vmem:[%s776 + $0x44] sm:$0xf]
    %v795 = vld [vmem:[%s776 + $0x48] sm:$0xf]
    %v796 = vld [vmem:[%s776 + $0x4c] sm:$0xf]
    %v797 = vld [vmem:[%s776 + $0x50] sm:$0xf]
    %v798 = vld [vmem:[%s776 + $0x54] sm:$0xf]
    %v799 = vld [vmem:[%s776 + $0x58] sm:$0xf]
    %v800 = vld [vmem:[%s776 + $0x5c] sm:$0xf]
    %v801 = vld [vmem:[%s776 + $0x60] sm:$0xf]
    %v802 = vld [vmem:[%s776 + $0x64] sm:$0xf]
    %v803 = vld [vmem:[%s776 + $0x68] sm:$0xf]
    %v804 = vld [vmem:[%s776 + $0x6c] sm:$0xf]
    %v805 = vld [vmem:[%s776 + $0x70] sm:$0xf]
    %v806 = vld [vmem:[%s776 + $0x74] sm:$0xf]
    %v807 = vld [vmem:[%s776 + $0x78] sm:$0xf]
    %v808 = vld [vmem:[%s776 + $0x7c] sm:$0xf]
    %v809 = vld [vmem:[%s776 + $0x80] sm:$0xf]
    %v810 = vld [vmem:[%s776 + $0x84] sm:$0xf]
    %v811 = vld [vmem:[%s776 + $0x88] sm:$0xf]
    %v812 = vld [vmem:[%s776 + $0x8c] sm:$0xf]
    %v813 = vld [vmem:[%s776 + $0x90] sm:$0xf]
    %v814 = vld [vmem:[%s776 + $0x94] sm:$0xf]
    %v815 = vld [vmem:[%s776 + $0x98] sm:$0xf]
    %v816 = vld [vmem:[%s776 + $0x9c] sm:$0xf]
    %v817 = vld [vmem:[%s776 + $0xa0] sm:$0xf]
    %v818 = vld [vmem:[%s776 + $0xa4] sm:$0xf]
    %v819 = vld [vmem:[%s776 + $0xa8] sm:$0xf]
    %v820 = vld [vmem:[%s776 + $0xac] sm:$0xf]
    %v821 = vld [vmem:[%s776 + $0xb0] sm:$0xf]
    %v822 = vld [vmem:[%s776 + $0xb4] sm:$0xf]
    %v823 = vld [vmem:[%s776 + $0xb8] sm:$0xf]
    %v824 = vld [vmem:[%s776 + $0xbc] sm:$0xf]
    %v827 = vunpack.c.l.b16 %v774
    %v828 = vunpack.c.h.b16 %v774
    %v829 = vunpack.c.l.b16 %v775
    %v830 = vpack.c.b16 %v254, %v827
    %v831 = vpack.c.b16 %v255, %v828
    %v832 = vpack.c.b16 %v256, %v829
    %vm833 = vcmask 1046528
    %v834 = vrot.slane %v830, 1
    %v835 = vrot.slane %v263, 1
    %v836 = vsel %vm833, %v834, %v835
    %v837 = vrot.slane %v831, 1
    %v838 = vrot.slane %v264, 1
    %v839 = vsel %vm833, %v837, %v838
    %v840 = vrot.slane %v832, 1
    %v841 = vrot.slane %v265, 1
    %v842 = vsel %vm833, %v840, %v841
    %v894 = vunpack.c.l.b16 %v777
    %v895 = vunpack.c.l.b16 %v778
    %v896 = vunpack.c.l.b16 %v779
    %v897 = vunpack.c.l.b16 %v780
    %v898 = vunpack.c.l.b16 %v781
    %v899 = vunpack.c.l.b16 %v782
    %v900 = vunpack.c.l.b16 %v783
    %v901 = vunpack.c.l.b16 %v784
    %v902 = vunpack.c.l.b16 %v785
    %v903 = vunpack.c.l.b16 %v786
    %v904 = vunpack.c.l.b16 %v787
    %v905 = vunpack.c.l.b16 %v788
    %v906 = vunpack.c.l.b16 %v789
    %v907 = vunpack.c.l.b16 %v790
    %v908 = vunpack.c.l.b16 %v791
    %v909 = vunpack.c.l.b16 %v792
    %v910 = vunpack.c.l.b16 %v793
    %v911 = vunpack.c.l.b16 %v794
    %v912 = vunpack.c.l.b16 %v795
    %v913 = vunpack.c.l.b16 %v796
    %v914 = vunpack.c.l.b16 %v797
    %v915 = vunpack.c.l.b16 %v798
    %v916 = vunpack.c.l.b16 %v799
    %v917 = vunpack.c.l.b16 %v800
    %v918 = vunpack.c.l.b16 %v801
    %v919 = vunpack.c.l.b16 %v802
    %v920 = vunpack.c.l.b16 %v803
    %v921 = vunpack.c.l.b16 %v804
    %v922 = vunpack.c.l.b16 %v805
    %v923 = vunpack.c.l.b16 %v806
    %v924 = vunpack.c.l.b16 %v807
    %v925 = vunpack.c.l.b16 %v808
    %v926 = vunpack.c.l.b16 %v809
    %v927 = vunpack.c.l.b16 %v810
    %v928 = vunpack.c.l.b16 %v811
    %v929 = vunpack.c.l.b16 %v812
    %v930 = vunpack.c.l.b16 %v813
    %v931 = vunpack.c.l.b16 %v814
    %v932 = vunpack.c.l.b16 %v815
    %v933 = vunpack.c.l.b16 %v816
    %v934 = vunpack.c.l.b16 %v817
    %v935 = vunpack.c.l.b16 %v818
    %v936 = vunpack.c.l.b16 %v819
    %v937 = vunpack.c.l.b16 %v820
    %v938 = vunpack.c.l.b16 %v821
    %v939 = vunpack.c.l.b16 %v822
    %v940 = vunpack.c.l.b16 %v823
    %v941 = vunpack.c.l.b16 %v824
    %v942 = vpack.c.b16 %v895, %v894
    %v943 = vpack.c.b16 %v897, %v896
    %v944 = vpack.c.b16 %v899, %v898
    %v945 = vpack.c.b16 %v901, %v900
    %v946 = vpack.c.b16 %v903, %v902
    %v947 = vpack.c.b16 %v905, %v904
    %v948 = vpack.c.b16 %v907, %v906
    %v949 = vpack.c.b16 %v909, %v908
    %v950 = vpack.c.b16 %v911, %v910
    %v951 = vpack.c.b16 %v913, %v912
    %v952 = vpack.c.b16 %v915, %v914
    %v953 = vpack.c.b16 %v917, %v916
    %v954 = vpack.c.b16 %v919, %v918
    %v955 = vpack.c.b16 %v921, %v920
    %v956 = vpack.c.b16 %v923, %v922
    %v957 = vpack.c.b16 %v925, %v924
    %v958 = vpack.c.b16 %v927, %v926
    %v959 = vpack.c.b16 %v929, %v928
    %v960 = vpack.c.b16 %v931, %v930
    %v961 = vpack.c.b16 %v933, %v932
    %v962 = vpack.c.b16 %v935, %v934
    %v963 = vpack.c.b16 %v937, %v936
    %v964 = vpack.c.b16 %v939, %v938
    %v965 = vpack.c.b16 %v941, %v940
    %990 = vmatprep.subr.bf16.mxu0 0
    %991 = vmatpush1.bf16.msra.mxu0 %v942
    %992 = vmatprep.subr.bf16.mxu0 0
    %993 = vmatpush1.bf16.msra.mxu0 %v943
    %994 = vmatprep.subr.bf16.mxu0 0
    %995 = vmatpush1.bf16.msra.mxu0 %v944
    %996 = vmatprep.subr.bf16.mxu0 0
    %997 = vmatpush1.bf16.msra.mxu0 %v945
    %998 = vmatprep.subr.bf16.mxu0 0
    %999 = vmatpush1.bf16.msra.mxu0 %v946
    %1000 = vmatprep.subr.bf16.mxu0 0
    %1001 = vmatpush1.bf16.msra.mxu0 %v947
    %1002 = vmatprep.subr.bf16.mxu0 0
    %1003 = vmatpush1.bf16.msra.mxu0 %v948
    %1004 = vmatprep.subr.bf16.mxu0 0
    %1005 = vmatpush1.bf16.msra.mxu0 %v949
    %1006 = vmatprep.subr.bf16.mxu0 0
    %1007 = vmatpush1.bf16.msra.mxu0 %v950
    %1008 = vmatprep.subr.bf16.mxu0 0
    %1009 = vmatpush1.bf16.msra.mxu0 %v951
    %1010 = vmatprep.subr.bf16.mxu0 0
    %1011 = vmatpush1.bf16.msra.mxu0 %v952
    %1012 = vmatprep.subr.bf16.mxu0 0
    %1013 = vmatpush1.bf16.msra.mxu0 %v953
    %1014 = vmatprep.subr.bf16.mxu0 0
    %1015 = vmatpush1.bf16.msra.mxu0 %v954
    %1016 = vmatprep.subr.bf16.mxu0 0
    %1017 = vmatpush1.bf16.msra.mxu0 %v955
    %1018 = vmatprep.subr.bf16.mxu0 0
    %1019 = vmatpush1.bf16.msra.mxu0 %v956
    %1020 = vmatprep.subr.bf16.mxu0 0
    %1021 = vmatpush1.bf16.msra.mxu0 %v957
    %1022 = vmatprep.mubr.bf16.mxu0 %v839
    %1023 = vmatmul.mubr.bf16.gmra.mrb[0].mxu0 %v836
    %v1024 = vpop.f32.mrb[0].mxu0
    %v1025 = vadd.f32 0.0, %v1024
    %v1026 = vpop.f32.mrb[0].mxu0
    %v1027 = vpop.f32.mrb[0].mxu0
    %v1028 = vadd.f32 0.0, %v1027
    %v1029 = vpop.f32.mrb[0].mxu0
    %1030 = vdwg.mxu0
    %1031 = vmatprep.subr.bf16.mxu0 0
    %1032 = vmatpush1.bf16.msra.mxu0 %v958
    %1033 = vmatprep.subr.bf16.mxu0 0
    %1034 = vmatpush1.bf16.msra.mxu0 %v959
    %1035 = vmatprep.subr.bf16.mxu0 0
    %1036 = vmatpush1.bf16.msra.mxu0 %v960
    %1037 = vmatprep.subr.bf16.mxu0 0
    %1038 = vmatpush1.bf16.msra.mxu0 %v961
    %1039 = vmatprep.subr.bf16.mxu0 0
    %1040 = vmatpush1.bf16.msra.mxu0 %v962
    %1041 = vmatprep.subr.bf16.mxu0 0
    %1042 = vmatpush1.bf16.msra.mxu0 %v963
    %1043 = vmatprep.subr.bf16.mxu0 0
    %1044 = vmatpush1.bf16.msra.mxu0 %v964
    %1045 = vmatprep.subr.bf16.mxu0 0
    %1046 = vmatpush1.bf16.msra.mxu0 %v965
    %1047 = vmatprep.subr.bf16.mxu0 0
    %1048 = vmatpush1.bf16.msra.mxu0 0
    %1049 = vmatprep.subr.bf16.mxu0 0
    %1050 = vmatpush1.bf16.msra.mxu0 0
    %1051 = vmatprep.subr.bf16.mxu0 0
    %1052 = vmatpush1.bf16.msra.mxu0 0
    %1053 = vmatprep.subr.bf16.mxu0 0
    %1054 = vmatpush1.bf16.msra.mxu0 0
    %1055 = vmatprep.subr.bf16.mxu0 0
    %1056 = vmatpush1.bf16.msra.mxu0 0
    %1057 = vmatprep.subr.bf16.mxu0 0
    %1058 = vmatpush1.bf16.msra.mxu0 0
    %1059 = vmatprep.subr.bf16.mxu0 0
    %1060 = vmatpush1.bf16.msra.mxu0 0
    %1061 = vmatprep.subr.bf16.mxu0 0
    %1062 = vmatpush1.bf16.msra.mxu0 0
    %1063 = vmatprep.mubr.bf16.mxu0 0
    %1064 = vmatmul.mubr.bf16.gmra.mrb[0].mxu0 %v842
    %v1065 = vpop.f32.mrb[0].mxu0
    %v1066 = vadd.f32 %v1025, %v1065
    %v1067 = vpop.f32.mrb[0].mxu0
    %v1068 = vpop.f32.mrb[0].mxu0
    %v1069 = vadd.f32 %v1028, %v1068
    %v1070 = vpop.f32.mrb[0].mxu0
    %1071 = vdwg.mxu0
    %v1072 = vadd.f32 %v768, %v1066
    %v1073 = vadd.f32 %v771, %v1069
    %v1074 = vld [vmem:[#allocation5] sm:$0x1]
    %v1076 = vlaneseq
    %v1077 = vshrl.u32 %v1076, 7
    %v1078 = vsub.s32 0, %v1077
    %v1079 = vrot.slane %v1074, %v1078
    %v1081 = vadd.f32 %v1072, %v1079
    %v1082 = vadd.f32 %v1073, %v1079
    %v1083 = vmax.f32 %v1081, 0.0
    %v1084 = vmax.f32 %v1082, 0.0
    %v1085 = vlaneseq
    %v1086 = vshrl.u32 %v1085, 7
    %vm1087 = vcmp.lt.s32.totalorder %v1086, 5
    %v1088 = vsel %vm1087, 1, 0
    %vm1089 = vcmp.eq.s32.totalorder %v1088, 1
    %v1090 = vsel %vm1089, %v1083, 0.0
    %v1091 = vsel %vm1089, %v1084, 0.0
    %v1092 = vrot.slane %v1090, 4
    %v1093 = vmax.f32 %v1090, %v1092
    %v1094 = vrot.slane %v1093, 2
    %v1095 = vmax.f32 %v1093, %v1094
    %v1096 = vrot.slane %v1095, 1
    %v1097 = vmax.f32 %v1095, %v1096
    %v1098 = vrot.slane %v1091, 4
    %v1099 = vmax.f32 %v1091, %v1098
    %v1100 = vrot.slane %v1099, 2
    %v1101 = vmax.f32 %v1099, %v1100
    %v1102 = vrot.slane %v1101, 1
    %v1103 = vmax.f32 %v1101, %v1102
    %v1104 = vpack.c.bf16 %v1097, %v1097
    %v1105 = vpack.c.bf16 %v1103, %v1103
    %v1106 = vld [vmem:[#allocation7] sm:$0xf]
    %v1107 = vld [vmem:[#allocation7 + $0x4] sm:$0xf]
    %v1108 = vld [vmem:[#allocation7 + $0x8] sm:$0xf]
    %v1109 = vld [vmem:[#allocation7 + $0xc] sm:$0xf]
    %v1110 = vld [vmem:[#allocation7 + $0x10] sm:$0xf]
    %v1111 = vld [vmem:[#allocation7 + $0x14] sm:$0xf]
    %v1112 = vld [vmem:[#allocation7 + $0x18] sm:$0xf]
    %v1113 = vld [vmem:[#allocation7 + $0x1c] sm:$0xf]
    %v1114 = vld [vmem:[#allocation7 + $0x20] sm:$0xf]
    %v1115 = vld [vmem:[#allocation7 + $0x24] sm:$0xf]
    %v1116 = vld [vmem:[#allocation7 + $0x28] sm:$0xf]
    %v1117 = vld [vmem:[#allocation7 + $0x2c] sm:$0xf]
    %v1118 = vld [vmem:[#allocation7 + $0x30] sm:$0xf]
    %v1119 = vld [vmem:[#allocation7 + $0x34] sm:$0xf]
    %v1120 = vld [vmem:[#allocation7 + $0x38] sm:$0xf]
    %v1121 = vld [vmem:[#allocation7 + $0x3c] sm:$0xf]
    %v1122 = vld [vmem:[#allocation8] sm:$0x1]
    %v1124 = vlaneseq
    %v1125 = vshrl.u32 %v1124, 7
    %v1126 = vsub.s32 0, %v1125
    %v1127 = vrot.slane %v1122, %v1126
    %v1131 = vunpack.c.l.b16 %v1104
    %v1132 = vunpack.c.l.b16 %v1105
    %vm1133 = vcmask 1041409
    %v1134 = vsel %vm1133, %v1132, %v1131
    %v1135 = vpack.c.b16 %v1134, %v1134
    %v1153 = vunpack.c.l.b16 %v1106
    %v1154 = vunpack.c.l.b16 %v1107
    %v1155 = vunpack.c.l.b16 %v1108
    %v1156 = vunpack.c.l.b16 %v1109
    %v1157 = vunpack.c.l.b16 %v1110
    %v1158 = vunpack.c.l.b16 %v1111
    %v1159 = vunpack.c.l.b16 %v1112
    %v1160 = vunpack.c.l.b16 %v1113
    %v1161 = vunpack.c.l.b16 %v1114
    %v1162 = vunpack.c.l.b16 %v1115
    %v1163 = vunpack.c.l.b16 %v1116
    %v1164 = vunpack.c.l.b16 %v1117
    %v1165 = vunpack.c.l.b16 %v1118
    %v1166 = vunpack.c.l.b16 %v1119
    %v1167 = vunpack.c.l.b16 %v1120
    %v1168 = vunpack.c.l.b16 %v1121
    %v1169 = vpack.c.b16 %v1154, %v1153
    %v1170 = vpack.c.b16 %v1156, %v1155
    %v1171 = vpack.c.b16 %v1158, %v1157
    %v1172 = vpack.c.b16 %v1160, %v1159
    %v1173 = vpack.c.b16 %v1162, %v1161
    %v1174 = vpack.c.b16 %v1164, %v1163
    %v1175 = vpack.c.b16 %v1166, %v1165
    %v1176 = vpack.c.b16 %v1168, %v1167
    %1185 = vmatprep.subr.bf16.mxu0 0
    %1186 = vmatpush1.bf16.msra.mxu0 %v1169
    %1187 = vmatprep.subr.bf16.mxu0 0
    %1188 = vmatpush1.bf16.msra.mxu0 %v1170
    %1189 = vmatprep.subr.bf16.mxu0 0
    %1190 = vmatpush1.bf16.msra.mxu0 %v1171
    %1191 = vmatprep.subr.bf16.mxu0 0
    %1192 = vmatpush1.bf16.msra.mxu0 %v1172
    %1193 = vmatprep.subr.bf16.mxu0 0
    %1194 = vmatpush1.bf16.msra.mxu0 %v1173
    %1195 = vmatprep.subr.bf16.mxu0 0
    %1196 = vmatpush1.bf16.msra.mxu0 %v1174
    %1197 = vmatprep.subr.bf16.mxu0 0
    %1198 = vmatpush1.bf16.msra.mxu0 %v1175
    %1199 = vmatprep.subr.bf16.mxu0 0
    %1200 = vmatpush1.bf16.msra.mxu0 %v1176
    %1201 = vmatprep.subr.bf16.mxu0 0
    %1202 = vmatpush1.bf16.msra.mxu0 0
    %1203 = vmatprep.subr.bf16.mxu0 0
    %1204 = vmatpush1.bf16.msra.mxu0 0
    %1205 = vmatprep.subr.bf16.mxu0 0
    %1206 = vmatpush1.bf16.msra.mxu0 0
    %1207 = vmatprep.subr.bf16.mxu0 0
    %1208 = vmatpush1.bf16.msra.mxu0 0
    %1209 = vmatprep.subr.bf16.mxu0 0
    %1210 = vmatpush1.bf16.msra.mxu0 0
    %1211 = vmatprep.subr.bf16.mxu0 0
    %1212 = vmatpush1.bf16.msra.mxu0 0
    %1213 = vmatprep.subr.bf16.mxu0 0
    %1214 = vmatpush1.bf16.msra.mxu0 0
    %1215 = vmatprep.subr.bf16.mxu0 0
    %1216 = vmatpush1.bf16.msra.mxu0 0
    %1217 = vmatprep.mubr.bf16.mxu0 0
    %1218 = vmatmul.mubr.bf16.gmra.mrb[0].mxu0 %v1135
    %v1219 = vpop.f32.mrb[0].mxu0
    %v1220 = vadd.f32 %v1127, %v1219
    %v1221 = vpop.f32.mrb[0].mxu0
    %v1222 = vpop.f32.mrb[0].mxu0
    %v1223 = vpop.f32.mrb[0].mxu0
    %1224 = vdwg.mxu0
    %v1227 = vunpack.c.l.s4 1966171168
    %v1228 = vunpack.c.0.s8 %v1227
    %v1229 = vlaneseq
    %v1230 = vshrl.u32 %v1229, 7
    %v1231 = vsub.s32 %v1228, %v1230
    %v1232 = vrot.slane %v1220, %v1231
    %v1233 = vcombine.high %v1232, %v1232
    %v1235 = vunpack.c.l.s4 1966171168
    %v1236 = vunpack.c.0.s8 %v1235
    %v1237 = vlaneseq
    %v1238 = vshrl.u32 %v1237, 7
    %v1239 = vsub.s32 %v1236, %v1238
    %v1240 = vrot.slane %v1232, %v1239
    %v1242 = vunpack.c.l.s4 1966171168
    %v1243 = vunpack.c.0.s8 %v1242
    %v1244 = vlaneseq
    %v1245 = vshrl.u32 %v1244, 7
    %v1246 = vsub.s32 %v1243, %v1245
    %v1247 = vrot.slane %v1233, %v1246
    %v1248 = vld [vmem:[%s0] sm:$0xff]
    %v1249 = vld [vmem:[%s0 + $0x8] sm:$0xf]
    %v1250 = vld [vmem:[%s0 + $0xc] sm:$0xff]
    %v1251 = vld [vmem:[%s0 + $0x14] sm:$0xf]
    %v1252 = vld [vmem:[%s0 + $0x18] sm:$0xff]
    %v1253 = vld [vmem:[%s0 + $0x20] sm:$0xf]
    %v1254 = vld [vmem:[%s0 + $0x24] sm:$0xff]
    %v1255 = vld [vmem:[%s0 + $0x2c] sm:$0xf]
    %v1256 = vld [vmem:[%s0 + $0x30] sm:$0xff]
    %v1257 = vld [vmem:[%s0 + $0x38] sm:$0xf]
    %v1258 = vld [vmem:[%s0 + $0x3c] sm:$0xff]
    %v1259 = vld [vmem:[%s0 + $0x44] sm:$0xf]
    %v1260 = vld [vmem:[#allocation10] sm:$0xff]
    %v1261 = vld [vmem:[#allocation10 + $0x8] sm:$0xff]
    %v1262 = vld [vmem:[#allocation10 + $0x10] sm:$0xff]
    %v1263 = vld [vmem:[#allocation10 + $0x18] sm:$0xff]
    %v1264 = vld [vmem:[#allocation10 + $0x20] sm:$0xff]
    %v1265 = vld [vmem:[#allocation10 + $0x28] sm:$0xff]
    %v1266 = vld [vmem:[#allocation10 + $0x30] sm:$0xff]
    %v1267 = vld [vmem:[#allocation10 + $0x38] sm:$0xff]
    %v1268 = vld [vmem:[#allocation10 + $0x40] sm:$0xff]
    %v1269 = vld [vmem:[#allocation10 + $0x48] sm:$0xff]
    %v1270 = vld [vmem:[#allocation10 + $0x50] sm:$0xff]
    %v1271 = vld [vmem:[#allocation10 + $0x58] sm:$0xff]
    %v1272 = vld [vmem:[#allocation10 + $0x60] sm:$0xff]
    %v1273 = vld [vmem:[#allocation10 + $0x68] sm:$0xff]
    %v1274 = vld [vmem:[#allocation10 + $0x70] sm:$0xff]
    %v1275 = vld [vmem:[#allocation10 + $0x78] sm:$0xff]
    %v1276 = vld [vmem:[#allocation10 + $0x80] sm:$0xff]
    %v1277 = vld [vmem:[#allocation10 + $0x88] sm:$0xff]
    %v1278 = vld [vmem:[#allocation10 + $0x90] sm:$0xff]
    %v1279 = vld [vmem:[#allocation10 + $0x98] sm:$0xff]
    %v1280 = vld [vmem:[#allocation10 + $0xa0] sm:$0xff]
    %v1281 = vld [vmem:[#allocation10 + $0xa8] sm:$0xff]
    %v1282 = vld [vmem:[#allocation10 + $0xb0] sm:$0xff]
    %v1283 = vld [vmem:[#allocation10 + $0xb8] sm:$0xff]
    %v1284 = vld [vmem:[#allocation10 + $0xc0] sm:$0xff]
    %v1285 = vld [vmem:[#allocation10 + $0xc8] sm:$0xff]
    %v1286 = vld [vmem:[#allocation10 + $0xd0] sm:$0xff]
    %v1287 = vld [vmem:[#allocation10 + $0xd8] sm:$0xff]
    %v1288 = vld [vmem:[#allocation10 + $0xe0] sm:$0xff]
    %v1289 = vld [vmem:[#allocation10 + $0xe8] sm:$0xff]
    %v1290 = vld [vmem:[#allocation10 + $0xf0] sm:$0xff]
    %v1291 = vld [vmem:[#allocation10 + $0xf8] sm:$0xff]
    %v1292 = vld [vmem:[#allocation10 + $0x100] sm:$0xff]
    %v1293 = vld [vmem:[#allocation10 + $0x108] sm:$0xff]
    %v1294 = vld [vmem:[#allocation10 + $0x110] sm:$0xff]
    %v1295 = vld [vmem:[#allocation10 + $0x118] sm:$0xff]
    %v1296 = vld [vmem:[#allocation10 + $0x120] sm:$0xff]
    %v1297 = vld [vmem:[#allocation10 + $0x128] sm:$0xff]
    %v1298 = vld [vmem:[#allocation10 + $0x130] sm:$0xff]
    %v1299 = vld [vmem:[#allocation10 + $0x138] sm:$0xff]
    %v1300 = vld [vmem:[#allocation10 + $0x140] sm:$0xff]
    %v1301 = vld [vmem:[#allocation10 + $0x148] sm:$0xff]
    %v1302 = vld [vmem:[#allocation10 + $0x150] sm:$0xff]
    %v1303 = vld [vmem:[#allocation10 + $0x158] sm:$0xff]
    %v1304 = vld [vmem:[#allocation10 + $0x160] sm:$0xff]
    %v1305 = vld [vmem:[#allocation10 + $0x168] sm:$0xff]
    %v1306 = vld [vmem:[#allocation10 + $0x170] sm:$0xff]
    %v1307 = vld [vmem:[#allocation10 + $0x178] sm:$0xff]
    %v1308 = vld [vmem:[#allocation10 + $0x180] sm:$0xff]
    %v1309 = vld [vmem:[#allocation10 + $0x188] sm:$0xff]
    %v1310 = vld [vmem:[#allocation10 + $0x190] sm:$0xff]
    %v1311 = vld [vmem:[#allocation10 + $0x198] sm:$0xff]
    %v1312 = vld [vmem:[#allocation10 + $0x1a0] sm:$0xff]
    %v1313 = vld [vmem:[#allocation10 + $0x1a8] sm:$0xff]
    %v1314 = vld [vmem:[#allocation10 + $0x1b0] sm:$0xff]
    %v1315 = vld [vmem:[#allocation10 + $0x1b8] sm:$0xff]
    %v1316 = vld [vmem:[#allocation10 + $0x1c0] sm:$0xff]
    %v1317 = vld [vmem:[#allocation10 + $0x1c8] sm:$0xff]
    %v1318 = vld [vmem:[#allocation10 + $0x1d0] sm:$0xff]
    %v1319 = vld [vmem:[#allocation10 + $0x1d8] sm:$0xff]
    %v1320 = vld [vmem:[#allocation10 + $0x1e0] sm:$0xff]
    %v1321 = vld [vmem:[#allocation10 + $0x1e8] sm:$0xff]
    %v1322 = vld [vmem:[#allocation10 + $0x1f0] sm:$0xff]
    %v1323 = vld [vmem:[#allocation10 + $0x1f8] sm:$0xff]
    %v1324 = vld [vmem:[#allocation10 + $0x200] sm:$0xff]
    %v1325 = vld [vmem:[#allocation10 + $0x208] sm:$0xff]
    %v1326 = vld [vmem:[#allocation10 + $0x210] sm:$0xff]
    %v1327 = vld [vmem:[#allocation10 + $0x218] sm:$0xff]
    %v1328 = vld [vmem:[#allocation10 + $0x220] sm:$0xff]
    %v1329 = vld [vmem:[#allocation10 + $0x228] sm:$0xff]
    %v1330 = vld [vmem:[#allocation10 + $0x230] sm:$0xff]
    %v1331 = vld [vmem:[#allocation10 + $0x238] sm:$0xff]
    %v1332 = vld [vmem:[#allocation10 + $0x240] sm:$0xff]
    %v1333 = vld [vmem:[#allocation10 + $0x248] sm:$0xff]
    %v1334 = vld [vmem:[#allocation10 + $0x250] sm:$0xff]
    %v1335 = vld [vmem:[#allocation10 + $0x258] sm:$0xff]
    %v1336 = vld [vmem:[#allocation10 + $0x260] sm:$0xff]
    %v1337 = vld [vmem:[#allocation10 + $0x268] sm:$0xff]
    %v1338 = vld [vmem:[#allocation10 + $0x270] sm:$0xff]
    %v1339 = vld [vmem:[#allocation10 + $0x278] sm:$0xff]
    %v1340 = vld [vmem:[#allocation10 + $0x280] sm:$0xff]
    %v1341 = vld [vmem:[#allocation10 + $0x288] sm:$0xff]
    %v1342 = vld [vmem:[#allocation10 + $0x290] sm:$0xff]
    %v1343 = vld [vmem:[#allocation10 + $0x298] sm:$0xff]
    %v1344 = vld [vmem:[#allocation10 + $0x2a0] sm:$0xff]
    %v1345 = vld [vmem:[#allocation10 + $0x2a8] sm:$0xff]
    %v1346 = vld [vmem:[#allocation10 + $0x2b0] sm:$0xff]
    %v1347 = vld [vmem:[#allocation10 + $0x2b8] sm:$0xff]
    %v1348 = vld [vmem:[#allocation10 + $0x2c0] sm:$0xff]
    %v1349 = vld [vmem:[#allocation10 + $0x2c8] sm:$0xff]
    %v1350 = vld [vmem:[#allocation10 + $0x2d0] sm:$0xff]
    %v1351 = vld [vmem:[#allocation10 + $0x2d8] sm:$0xff]
    %v1352 = vld [vmem:[#allocation10 + $0x2e0] sm:$0xff]
    %v1353 = vld [vmem:[#allocation10 + $0x2e8] sm:$0xff]
    %v1354 = vld [vmem:[#allocation10 + $0x2f0] sm:$0xff]
    %v1355 = vld [vmem:[#allocation10 + $0x2f8] sm:$0xff]
    %v1356 = vld [vmem:[#allocation10 + $0x300] sm:$0xff]
    %v1357 = vld [vmem:[#allocation10 + $0x308] sm:$0xff]
    %v1358 = vld [vmem:[#allocation10 + $0x310] sm:$0xff]
    %v1359 = vld [vmem:[#allocation10 + $0x318] sm:$0xff]
    %v1360 = vld [vmem:[#allocation10 + $0x320] sm:$0xff]
    %v1361 = vld [vmem:[#allocation10 + $0x328] sm:$0xff]
    %v1362 = vld [vmem:[#allocation10 + $0x330] sm:$0xff]
    %v1363 = vld [vmem:[#allocation10 + $0x338] sm:$0xff]
    %v1364 = vld [vmem:[#allocation10 + $0x340] sm:$0xff]
    %v1365 = vld [vmem:[#allocation10 + $0x348] sm:$0xff]
    %v1366 = vld [vmem:[#allocation10 + $0x350] sm:$0xff]
    %v1367 = vld [vmem:[#allocation10 + $0x358] sm:$0xff]
    %v1368 = vld [vmem:[#allocation10 + $0x360] sm:$0xff]
    %v1369 = vld [vmem:[#allocation10 + $0x368] sm:$0xff]
    %v1370 = vld [vmem:[#allocation10 + $0x370] sm:$0xff]
    %v1371 = vld [vmem:[#allocation10 + $0x378] sm:$0xff]
    %v1372 = vld [vmem:[#allocation10 + $0x380] sm:$0xff]
    %v1373 = vld [vmem:[#allocation10 + $0x388] sm:$0xff]
    %v1374 = vld [vmem:[#allocation10 + $0x390] sm:$0xff]
    %v1375 = vld [vmem:[#allocation10 + $0x398] sm:$0xff]
    %v1376 = vld [vmem:[#allocation10 + $0x3a0] sm:$0xff]
    %v1377 = vld [vmem:[#allocation10 + $0x3a8] sm:$0xff]
    %v1378 = vld [vmem:[#allocation10 + $0x3b0] sm:$0xff]
    %v1379 = vld [vmem:[#allocation10 + $0x3b8] sm:$0xff]
    %v1380 = vld [vmem:[#allocation10 + $0x3c0] sm:$0xff]
    %v1381 = vld [vmem:[#allocation10 + $0x3c8] sm:$0xff]
    %v1382 = vld [vmem:[#allocation10 + $0x3d0] sm:$0xff]
    %v1383 = vld [vmem:[#allocation10 + $0x3d8] sm:$0xff]
    %v1384 = vld [vmem:[#allocation10 + $0x3e0] sm:$0xff]
    %v1385 = vld [vmem:[#allocation10 + $0x3e8] sm:$0xff]
    %v1386 = vld [vmem:[#allocation10 + $0x3f0] sm:$0xff]
    %v1387 = vld [vmem:[#allocation10 + $0x3f8] sm:$0xff]
    %v1388 = vld [vmem:[#allocation10 + $0x400] sm:$0xff]
    %v1389 = vld [vmem:[#allocation10 + $0x408] sm:$0xff]
    %v1390 = vld [vmem:[#allocation10 + $0x410] sm:$0xff]
    %v1391 = vld [vmem:[#allocation10 + $0x418] sm:$0xff]
    %v1392 = vld [vmem:[#allocation10 + $0x420] sm:$0xff]
    %v1393 = vld [vmem:[#allocation10 + $0x428] sm:$0xff]
    %v1394 = vld [vmem:[#allocation10 + $0x430] sm:$0xff]
    %v1395 = vld [vmem:[#allocation10 + $0x438] sm:$0xff]
    %v1396 = vld [vmem:[#allocation10 + $0x440] sm:$0xff]
    %v1397 = vld [vmem:[#allocation10 + $0x448] sm:$0xff]
    %v1398 = vld [vmem:[#allocation10 + $0x450] sm:$0xff]
    %v1399 = vld [vmem:[#allocation10 + $0x458] sm:$0xff]
    %v1400 = vld [vmem:[#allocation10 + $0x460] sm:$0xff]
    %v1401 = vld [vmem:[#allocation10 + $0x468] sm:$0xff]
    %v1402 = vld [vmem:[#allocation10 + $0x470] sm:$0xff]
    %v1403 = vld [vmem:[#allocation10 + $0x478] sm:$0xff]
    %v1404 = vld [vmem:[%s0] sm:$0xff]
    %v1405 = vld [vmem:[%s0 + $0x8] sm:$0xf]
    %v1406 = vld [vmem:[%s0 + $0xc] sm:$0xff]
    %v1407 = vld [vmem:[%s0 + $0x14] sm:$0xf]
    %v1408 = vld [vmem:[%s0 + $0x18] sm:$0xff]
    %v1409 = vld [vmem:[%s0 + $0x20] sm:$0xf]
    %v1410 = vld [vmem:[%s0 + $0x24] sm:$0xff]
    %v1411 = vld [vmem:[%s0 + $0x2c] sm:$0xf]
    %v1412 = vld [vmem:[%s0 + $0x30] sm:$0xff]
    %v1413 = vld [vmem:[%s0 + $0x38] sm:$0xf]
    %v1414 = vld [vmem:[%s0 + $0x3c] sm:$0xff]
    %v1415 = vld [vmem:[%s0 + $0x44] sm:$0xf]
    %v1416 = vld [vmem:[%s0 + $0x48] sm:$0x11]
    %v1417 = vld [vmem:[%s0 + $0x50] sm:$0x1]
    %s1418 = scalar_lea.vmem [#allocation10], 1152
    %v1419 = vld [vmem:[%s1418] sm:$0xff]
    %v1420 = vld [vmem:[%s1418 + $0x8] sm:$0xff]
    %v1421 = vld [vmem:[%s1418 + $0x10] sm:$0xff]
    %v1422 = vld [vmem:[%s1418 + $0x18] sm:$0xff]
    %v1423 = vld [vmem:[%s1418 + $0x20] sm:$0xff]
    %v1424 = vld [vmem:[%s1418 + $0x28] sm:$0xff]
    %v1425 = vld [vmem:[%s1418 + $0x30] sm:$0xff]
    %v1426 = vld [vmem:[%s1418 + $0x38] sm:$0xff]
    %v1427 = vld [vmem:[%s1418 + $0x40] sm:$0xff]
    %v1428 = vld [vmem:[%s1418 + $0x48] sm:$0xff]
    %v1429 = vld [vmem:[%s1418 + $0x50] sm:$0xff]
    %v1430 = vld [vmem:[%s1418 + $0x58] sm:$0xff]
    %v1431 = vld [vmem:[%s1418 + $0x60] sm:$0xff]
    %v1432 = vld [vmem:[%s1418 + $0x68] sm:$0xff]
    %v1433 = vld [vmem:[%s1418 + $0x70] sm:$0xff]
    %v1434 = vld [vmem:[%s1418 + $0x78] sm:$0xff]
    %v1435 = vld [vmem:[%s1418 + $0x80] sm:$0xff]
    %v1436 = vld [vmem:[%s1418 + $0x88] sm:$0xff]
    %v1437 = vld [vmem:[%s1418 + $0x90] sm:$0xff]
    %v1438 = vld [vmem:[%s1418 + $0x98] sm:$0xff]
    %v1439 = vld [vmem:[%s1418 + $0xa0] sm:$0xff]
    %v1440 = vld [vmem:[%s1418 + $0xa8] sm:$0xff]
    %v1441 = vld [vmem:[%s1418 + $0xb0] sm:$0xff]
    %v1442 = vld [vmem:[%s1418 + $0xb8] sm:$0xff]
    %v1443 = vld [vmem:[%s1418 + $0xc0] sm:$0xff]
    %v1444 = vld [vmem:[%s1418 + $0xc8] sm:$0xff]
    %v1445 = vld [vmem:[%s1418 + $0xd0] sm:$0xff]
    %v1446 = vld [vmem:[%s1418 + $0xd8] sm:$0xff]
    %v1447 = vld [vmem:[%s1418 + $0xe0] sm:$0xff]
    %v1448 = vld [vmem:[%s1418 + $0xe8] sm:$0xff]
    %v1449 = vld [vmem:[%s1418 + $0xf0] sm:$0xff]
    %v1450 = vld [vmem:[%s1418 + $0xf8] sm:$0xff]
    %v1451 = vld [vmem:[%s1418 + $0x100] sm:$0xff]
    %v1452 = vld [vmem:[%s1418 + $0x108] sm:$0xff]
    %v1453 = vld [vmem:[%s1418 + $0x110] sm:$0xff]
    %v1454 = vld [vmem:[%s1418 + $0x118] sm:$0xff]
    %v1455 = vld [vmem:[%s1418 + $0x120] sm:$0xff]
    %v1456 = vld [vmem:[%s1418 + $0x128] sm:$0xff]
    %v1457 = vld [vmem:[%s1418 + $0x130] sm:$0xff]
    %v1458 = vld [vmem:[%s1418 + $0x138] sm:$0xff]
    %v1459 = vld [vmem:[%s1418 + $0x140] sm:$0xff]
    %v1460 = vld [vmem:[%s1418 + $0x148] sm:$0xff]
    %v1461 = vld [vmem:[%s1418 + $0x150] sm:$0xff]
    %v1462 = vld [vmem:[%s1418 + $0x158] sm:$0xff]
    %v1463 = vld [vmem:[%s1418 + $0x160] sm:$0xff]
    %v1464 = vld [vmem:[%s1418 + $0x168] sm:$0xff]
    %v1465 = vld [vmem:[%s1418 + $0x170] sm:$0xff]
    %v1466 = vld [vmem:[%s1418 + $0x178] sm:$0xff]
    %v1467 = vld [vmem:[%s1418 + $0x180] sm:$0xff]
    %v1468 = vld [vmem:[%s1418 + $0x188] sm:$0xff]
    %v1469 = vld [vmem:[%s1418 + $0x190] sm:$0xff]
    %v1470 = vld [vmem:[%s1418 + $0x198] sm:$0xff]
    %v1471 = vld [vmem:[%s1418 + $0x1a0] sm:$0xff]
    %v1472 = vld [vmem:[%s1418 + $0x1a8] sm:$0xff]
    %v1473 = vld [vmem:[%s1418 + $0x1b0] sm:$0xff]
    %v1474 = vld [vmem:[%s1418 + $0x1b8] sm:$0xff]
    %v1475 = vld [vmem:[%s1418 + $0x1c0] sm:$0xff]
    %v1476 = vld [vmem:[%s1418 + $0x1c8] sm:$0xff]
    %v1477 = vld [vmem:[%s1418 + $0x1d0] sm:$0xff]
    %v1478 = vld [vmem:[%s1418 + $0x1d8] sm:$0xff]
    %v1479 = vld [vmem:[%s1418 + $0x1e0] sm:$0xff]
    %v1480 = vld [vmem:[%s1418 + $0x1e8] sm:$0xff]
    %v1481 = vld [vmem:[%s1418 + $0x1f0] sm:$0xff]
    %v1482 = vld [vmem:[%s1418 + $0x1f8] sm:$0xff]
    %v1483 = vld [vmem:[%s1418 + $0x200] sm:$0xff]
    %v1484 = vld [vmem:[%s1418 + $0x208] sm:$0xff]
    %v1485 = vld [vmem:[%s1418 + $0x210] sm:$0xff]
    %v1486 = vld [vmem:[%s1418 + $0x218] sm:$0xff]
    %v1487 = vld [vmem:[%s1418 + $0x220] sm:$0xff]
    %v1488 = vld [vmem:[%s1418 + $0x228] sm:$0xff]
    %v1489 = vld [vmem:[%s1418 + $0x230] sm:$0xff]
    %v1490 = vld [vmem:[%s1418 + $0x238] sm:$0xff]
    %v1491 = vld [vmem:[%s1418 + $0x240] sm:$0xff]
    %v1492 = vld [vmem:[%s1418 + $0x248] sm:$0xff]
    %v1493 = vld [vmem:[%s1418 + $0x250] sm:$0xff]
    %v1494 = vld [vmem:[%s1418 + $0x258] sm:$0xff]
    %v1495 = vld [vmem:[%s1418 + $0x260] sm:$0xff]
    %v1496 = vld [vmem:[%s1418 + $0x268] sm:$0xff]
    %v1497 = vld [vmem:[%s1418 + $0x270] sm:$0xff]
    %v1498 = vld [vmem:[%s1418 + $0x278] sm:$0xff]
    %v1499 = vld [vmem:[%s1418 + $0x280] sm:$0xff]
    %v1500 = vld [vmem:[%s1418 + $0x288] sm:$0xff]
    %v1501 = vld [vmem:[%s1418 + $0x290] sm:$0xff]
    %v1502 = vld [vmem:[%s1418 + $0x298] sm:$0xff]
    %v1503 = vld [vmem:[%s1418 + $0x2a0] sm:$0xff]
    %v1504 = vld [vmem:[%s1418 + $0x2a8] sm:$0xff]
    %v1505 = vld [vmem:[%s1418 + $0x2b0] sm:$0xff]
    %v1506 = vld [vmem:[%s1418 + $0x2b8] sm:$0xff]
    %v1507 = vld [vmem:[%s1418 + $0x2c0] sm:$0xff]
    %v1508 = vld [vmem:[%s1418 + $0x2c8] sm:$0xff]
    %v1509 = vld [vmem:[%s1418 + $0x2d0] sm:$0xff]
    %v1510 = vld [vmem:[%s1418 + $0x2d8] sm:$0xff]
    %v1511 = vld [vmem:[%s1418 + $0x2e0] sm:$0xff]
    %v1512 = vld [vmem:[%s1418 + $0x2e8] sm:$0xff]
    %v1513 = vld [vmem:[%s1418 + $0x2f0] sm:$0xff]
    %v1514 = vld [vmem:[%s1418 + $0x2f8] sm:$0xff]
    %v1515 = vld [vmem:[%s1418 + $0x300] sm:$0xff]
    %v1516 = vld [vmem:[%s1418 + $0x308] sm:$0xff]
    %v1517 = vld [vmem:[%s1418 + $0x310] sm:$0xff]
    %v1518 = vld [vmem:[%s1418 + $0x318] sm:$0xff]
    %v1519 = vld [vmem:[%s1418 + $0x320] sm:$0xff]
    %v1520 = vld [vmem:[%s1418 + $0x328] sm:$0xff]
    %v1521 = vld [vmem:[%s1418 + $0x330] sm:$0xff]
    %v1522 = vld [vmem:[%s1418 + $0x338] sm:$0xff]
    %v1523 = vld [vmem:[%s1418 + $0x340] sm:$0xff]
    %v1524 = vld [vmem:[%s1418 + $0x348] sm:$0xff]
    %v1525 = vld [vmem:[%s1418 + $0x350] sm:$0xff]
    %v1526 = vld [vmem:[%s1418 + $0x358] sm:$0xff]
    %v1527 = vld [vmem:[%s1418 + $0x360] sm:$0xff]
    %v1528 = vld [vmem:[%s1418 + $0x368] sm:$0xff]
    %v1529 = vld [vmem:[%s1418 + $0x370] sm:$0xff]
    %v1530 = vld [vmem:[%s1418 + $0x378] sm:$0xff]
    %v1531 = vld [vmem:[%s1418 + $0x380] sm:$0xff]
    %v1532 = vld [vmem:[%s1418 + $0x388] sm:$0xff]
    %v1533 = vld [vmem:[%s1418 + $0x390] sm:$0xff]
    %v1534 = vld [vmem:[%s1418 + $0x398] sm:$0xff]
    %v1535 = vld [vmem:[%s1418 + $0x3a0] sm:$0xff]
    %v1536 = vld [vmem:[%s1418 + $0x3a8] sm:$0xff]
    %v1537 = vld [vmem:[%s1418 + $0x3b0] sm:$0xff]
    %v1538 = vld [vmem:[%s1418 + $0x3b8] sm:$0xff]
    %v1539 = vld [vmem:[%s1418 + $0x3c0] sm:$0xff]
    %v1540 = vld [vmem:[%s1418 + $0x3c8] sm:$0xff]
    %v1541 = vld [vmem:[%s1418 + $0x3d0] sm:$0xff]
    %v1542 = vld [vmem:[%s1418 + $0x3d8] sm:$0xff]
    %v1543 = vld [vmem:[%s1418 + $0x3e0] sm:$0xff]
    %v1544 = vld [vmem:[%s1418 + $0x3e8] sm:$0xff]
    %v1545 = vld [vmem:[%s1418 + $0x3f0] sm:$0xff]
    %v1546 = vld [vmem:[%s1418 + $0x3f8] sm:$0xff]
    %v1547 = vld [vmem:[%s1418 + $0x400] sm:$0xff]
    %v1548 = vld [vmem:[%s1418 + $0x408] sm:$0xff]
    %v1549 = vld [vmem:[%s1418 + $0x410] sm:$0xff]
    %v1550 = vld [vmem:[%s1418 + $0x418] sm:$0xff]
    %v1551 = vld [vmem:[%s1418 + $0x420] sm:$0xff]
    %v1552 = vld [vmem:[%s1418 + $0x428] sm:$0xff]
    %v1553 = vld [vmem:[%s1418 + $0x430] sm:$0xff]
    %v1554 = vld [vmem:[%s1418 + $0x438] sm:$0xff]
    %v1555 = vld [vmem:[%s1418 + $0x440] sm:$0xff]
    %v1556 = vld [vmem:[%s1418 + $0x448] sm:$0xff]
    %v1557 = vld [vmem:[%s1418 + $0x450] sm:$0xff]
    %v1558 = vld [vmem:[%s1418 + $0x458] sm:$0xff]
    %v1559 = vld [vmem:[%s1418 + $0x460] sm:$0xff]
    %v1560 = vld [vmem:[%s1418 + $0x468] sm:$0xff]
    %v1561 = vld [vmem:[%s1418 + $0x470] sm:$0xff]
    %v1562 = vld [vmem:[%s1418 + $0x478] sm:$0xff]
    %v1577 = vunpack.c.l.b16 %v1404
    %v1578 = vunpack.c.h.b16 %v1404
    %v1579 = vunpack.c.l.b16 %v1405
    %v1580 = vunpack.c.l.b16 %v1406
    %v1581 = vunpack.c.h.b16 %v1406
    %v1582 = vunpack.c.l.b16 %v1407
    %v1583 = vunpack.c.l.b16 %v1408
    %v1584 = vunpack.c.h.b16 %v1408
    %v1585 = vunpack.c.l.b16 %v1409
    %v1586 = vunpack.c.l.b16 %v1410
    %v1587 = vunpack.c.h.b16 %v1410
    %v1588 = vunpack.c.l.b16 %v1411
    %v1589 = vunpack.c.l.b16 %v1412
    %v1590 = vunpack.c.h.b16 %v1412
    %v1591 = vunpack.c.l.b16 %v1413
    %v1592 = vunpack.c.l.b16 %v1414
    %v1593 = vunpack.c.h.b16 %v1414
    %v1594 = vunpack.c.l.b16 %v1415
    %v1595 = vunpack.c.l.b16 %v1416
    %v1596 = vunpack.c.h.b16 %v1416
    %v1597 = vunpack.c.l.b16 %v1417
    %v1598 = vpack.c.b16 %v1580, %v1577
    %v1599 = vpack.c.b16 %v1581, %v1578
    %v1600 = vpack.c.b16 %v1582, %v1579
    %v1601 = vpack.c.b16 %v1586, %v1583
    %v1602 = vpack.c.b16 %v1587, %v1584
    %v1603 = vpack.c.b16 %v1588, %v1585
    %v1604 = vpack.c.b16 %v1592, %v1589
    %v1605 = vpack.c.b16 %v1593, %v1590
    %v1606 = vpack.c.b16 %v1594, %v1591
    %v1607 = vpack.c.b16 %v1595, %v1595
    %v1608 = vpack.c.b16 %v1596, %v1596
    %v1609 = vpack.c.b16 %v1597, %v1597
    %v1611 = vshrl.u32 %v1598, 16
    %v1613 = vshll.u32 %v1598, 16
    %v1615 = vrot.slane %v1613, 1
    %v1616 = vor.u32 %v1611, %v1615
    %v1618 = vshll.u32 %v1601, 16
    %v1620 = vrot.slane %v1618, 1
    %v1621 = vsel %vm266, %v1616, %v1620
    %v1623 = vshrl.u32 %v1599, 16
    %v1625 = vshll.u32 %v1599, 16
    %v1627 = vrot.slane %v1625, 1
    %v1628 = vor.u32 %v1623, %v1627
    %v1630 = vshll.u32 %v1602, 16
    %v1632 = vrot.slane %v1630, 1
    %v1633 = vsel %vm266, %v1628, %v1632
    %v1635 = vshrl.u32 %v1600, 16
    %v1637 = vshll.u32 %v1600, 16
    %v1639 = vrot.slane %v1637, 1
    %v1640 = vor.u32 %v1635, %v1639
    %v1642 = vshll.u32 %v1603, 16
    %v1644 = vrot.slane %v1642, 1
    %v1645 = vsel %vm266, %v1640, %v1644
    %v1646 = vshrl.u32 %v1601, 16
    %v1648 = vor.u32 %v1646, %v1620
    %v1650 = vshll.u32 %v1604, 16
    %v1652 = vrot.slane %v1650, 1
    %v1653 = vsel %vm266, %v1648, %v1652
    %v1654 = vshrl.u32 %v1602, 16
    %v1656 = vor.u32 %v1654, %v1632
    %v1658 = vshll.u32 %v1605, 16
    %v1660 = vrot.slane %v1658, 1
    %v1661 = vsel %vm266, %v1656, %v1660
    %v1662 = vshrl.u32 %v1603, 16
    %v1664 = vor.u32 %v1662, %v1644
    %v1666 = vshll.u32 %v1606, 16
    %v1668 = vrot.slane %v1666, 1
    %v1669 = vsel %vm266, %v1664, %v1668
    %v1670 = vshrl.u32 %v1604, 16
    %v1672 = vor.u32 %v1670, %v1652
    %v1674 = vshll.u32 %v1607, 16
    %v1676 = vrot.slane %v1674, 1
    %v1677 = vsel %vm266, %v1672, %v1676
    %v1678 = vshrl.u32 %v1605, 16
    %v1680 = vor.u32 %v1678, %v1660
    %v1682 = vshll.u32 %v1608, 16
    %v1684 = vrot.slane %v1682, 1
    %v1685 = vsel %vm266, %v1680, %v1684
    %v1686 = vshrl.u32 %v1606, 16
    %v1688 = vor.u32 %v1686, %v1668
    %v1690 = vshll.u32 %v1609, 16
    %v1692 = vrot.slane %v1690, 1
    %v1693 = vsel %vm266, %v1688, %v1692
    %v1847 = vunpack.c.l.b16 %v1419
    %v1848 = vunpack.c.h.b16 %v1419
    %v1849 = vunpack.c.l.b16 %v1420
    %v1850 = vunpack.c.h.b16 %v1420
    %v1851 = vunpack.c.l.b16 %v1421
    %v1852 = vunpack.c.h.b16 %v1421
    %v1853 = vunpack.c.l.b16 %v1422
    %v1854 = vunpack.c.h.b16 %v1422
    %v1855 = vunpack.c.l.b16 %v1423
    %v1856 = vunpack.c.h.b16 %v1423
    %v1857 = vunpack.c.l.b16 %v1424
    %v1858 = vunpack.c.h.b16 %v1424
    %v1859 = vunpack.c.l.b16 %v1425
    %v1860 = vunpack.c.h.b16 %v1425
    %v1861 = vunpack.c.l.b16 %v1426
    %v1862 = vunpack.c.h.b16 %v1426
    %v1863 = vunpack.c.l.b16 %v1427
    %v1864 = vunpack.c.h.b16 %v1427
    %v1865 = vunpack.c.l.b16 %v1428
    %v1866 = vunpack.c.h.b16 %v1428
    %v1867 = vunpack.c.l.b16 %v1429
    %v1868 = vunpack.c.h.b16 %v1429
    %v1869 = vunpack.c.l.b16 %v1430
    %v1870 = vunpack.c.h.b16 %v1430
    %v1871 = vunpack.c.l.b16 %v1431
    %v1872 = vunpack.c.h.b16 %v1431
    %v1873 = vunpack.c.l.b16 %v1432
    %v1874 = vunpack.c.h.b16 %v1432
    %v1875 = vunpack.c.l.b16 %v1433
    %v1876 = vunpack.c.h.b16 %v1433
    %v1877 = vunpack.c.l.b16 %v1434
    %v1878 = vunpack.c.h.b16 %v1434
    %v1879 = vunpack.c.l.b16 %v1435
    %v1880 = vunpack.c.h.b16 %v1435
    %v1881 = vunpack.c.l.b16 %v1436
    %v1882 = vunpack.c.h.b16 %v1436
    %v1883 = vunpack.c.l.b16 %v1437
    %v1884 = vunpack.c.h.b16 %v1437
    %v1885 = vunpack.c.l.b16 %v1438
    %v1886 = vunpack.c.h.b16 %v1438
    %v1887 = vunpack.c.l.b16 %v1439
    %v1888 = vunpack.c.h.b16 %v1439
    %v1889 = vunpack.c.l.b16 %v1440
    %v1890 = vunpack.c.h.b16 %v1440
    %v1891 = vunpack.c.l.b16 %v1441
    %v1892 = vunpack.c.h.b16 %v1441
    %v1893 = vunpack.c.l.b16 %v1442
    %v1894 = vunpack.c.h.b16 %v1442
    %v1895 = vunpack.c.l.b16 %v1443
    %v1896 = vunpack.c.h.b16 %v1443
    %v1897 = vunpack.c.l.b16 %v1444
    %v1898 = vunpack.c.h.b16 %v1444
    %v1899 = vunpack.c.l.b16 %v1445
    %v1900 = vunpack.c.h.b16 %v1445
    %v1901 = vunpack.c.l.b16 %v1446
    %v1902 = vunpack.c.h.b16 %v1446
    %v1903 = vunpack.c.l.b16 %v1447
    %v1904 = vunpack.c.h.b16 %v1447
    %v1905 = vunpack.c.l.b16 %v1448
    %v1906 = vunpack.c.h.b16 %v1448
    %v1907 = vunpack.c.l.b16 %v1449
    %v1908 = vunpack.c.h.b16 %v1449
    %v1909 = vunpack.c.l.b16 %v1450
    %v1910 = vunpack.c.h.b16 %v1450
    %v1911 = vunpack.c.l.b16 %v1451
    %v1912 = vunpack.c.h.b16 %v1451
    %v1913 = vunpack.c.l.b16 %v1452
    %v1914 = vunpack.c.h.b16 %v1452
    %v1915 = vunpack.c.l.b16 %v1453
    %v1916 = vunpack.c.h.b16 %v1453
    %v1917 = vunpack.c.l.b16 %v1454
    %v1918 = vunpack.c.h.b16 %v1454
    %v1919 = vunpack.c.l.b16 %v1455
    %v1920 = vunpack.c.h.b16 %v1455
    %v1921 = vunpack.c.l.b16 %v1456
    %v1922 = vunpack.c.h.b16 %v1456
    %v1923 = vunpack.c.l.b16 %v1457
    %v1924 = vunpack.c.h.b16 %v1457
    %v1925 = vunpack.c.l.b16 %v1458
    %v1926 = vunpack.c.h.b16 %v1458
    %v1927 = vunpack.c.l.b16 %v1459
    %v1928 = vunpack.c.h.b16 %v1459
    %v1929 = vunpack.c.l.b16 %v1460
    %v1930 = vunpack.c.h.b16 %v1460
    %v1931 = vunpack.c.l.b16 %v1461
    %v1932 = vunpack.c.h.b16 %v1461
    %v1933 = vunpack.c.l.b16 %v1462
    %v1934 = vunpack.c.h.b16 %v1462
    %v1935 = vunpack.c.l.b16 %v1463
    %v1936 = vunpack.c.h.b16 %v1463
    %v1937 = vunpack.c.l.b16 %v1464
    %v1938 = vunpack.c.h.b16 %v1464
    %v1939 = vunpack.c.l.b16 %v1465
    %v1940 = vunpack.c.h.b16 %v1465
    %v1941 = vunpack.c.l.b16 %v1466
    %v1942 = vunpack.c.h.b16 %v1466
    %v1943 = vunpack.c.l.b16 %v1467
    %v1944 = vunpack.c.h.b16 %v1467
    %v1945 = vunpack.c.l.b16 %v1468
    %v1946 = vunpack.c.h.b16 %v1468
    %v1947 = vunpack.c.l.b16 %v1469
    %v1948 = vunpack.c.h.b16 %v1469
    %v1949 = vunpack.c.l.b16 %v1470
    %v1950 = vunpack.c.h.b16 %v1470
    %v1951 = vunpack.c.l.b16 %v1471
    %v1952 = vunpack.c.h.b16 %v1471
    %v1953 = vunpack.c.l.b16 %v1472
    %v1954 = vunpack.c.h.b16 %v1472
    %v1955 = vunpack.c.l.b16 %v1473
    %v1956 = vunpack.c.h.b16 %v1473
    %v1957 = vunpack.c.l.b16 %v1474
    %v1958 = vunpack.c.h.b16 %v1474
    %v1959 = vunpack.c.l.b16 %v1475
    %v1960 = vunpack.c.h.b16 %v1475
    %v1961 = vunpack.c.l.b16 %v1476
    %v1962 = vunpack.c.h.b16 %v1476
    %v1963 = vunpack.c.l.b16 %v1477
    %v1964 = vunpack.c.h.b16 %v1477
    %v1965 = vunpack.c.l.b16 %v1478
    %v1966 = vunpack.c.h.b16 %v1478
    %v1967 = vunpack.c.l.b16 %v1479
    %v1968 = vunpack.c.h.b16 %v1479
    %v1969 = vunpack.c.l.b16 %v1480
    %v1970 = vunpack.c.h.b16 %v1480
    %v1971 = vunpack.c.l.b16 %v1481
    %v1972 = vunpack.c.h.b16 %v1481
    %v1973 = vunpack.c.l.b16 %v1482
    %v1974 = vunpack.c.h.b16 %v1482
    %v1975 = vunpack.c.l.b16 %v1483
    %v1976 = vunpack.c.h.b16 %v1483
    %v1977 = vunpack.c.l.b16 %v1484
    %v1978 = vunpack.c.h.b16 %v1484
    %v1979 = vunpack.c.l.b16 %v1485
    %v1980 = vunpack.c.h.b16 %v1485
    %v1981 = vunpack.c.l.b16 %v1486
    %v1982 = vunpack.c.h.b16 %v1486
    %v1983 = vunpack.c.l.b16 %v1487
    %v1984 = vunpack.c.h.b16 %v1487
    %v1985 = vunpack.c.l.b16 %v1488
    %v1986 = vunpack.c.h.b16 %v1488
    %v1987 = vunpack.c.l.b16 %v1489
    %v1988 = vunpack.c.h.b16 %v1489
    %v1989 = vunpack.c.l.b16 %v1490
    %v1990 = vunpack.c.h.b16 %v1490
    %v1991 = vunpack.c.l.b16 %v1491
    %v1992 = vunpack.c.h.b16 %v1491
    %v1993 = vunpack.c.l.b16 %v1492
    %v1994 = vunpack.c.h.b16 %v1492
    %v1995 = vunpack.c.l.b16 %v1493
    %v1996 = vunpack.c.h.b16 %v1493
    %v1997 = vunpack.c.l.b16 %v1494
    %v1998 = vunpack.c.h.b16 %v1494
    %v1999 = vunpack.c.l.b16 %v1495
    %v2000 = vunpack.c.h.b16 %v1495
    %v2001 = vunpack.c.l.b16 %v1496
    %v2002 = vunpack.c.h.b16 %v1496
    %v2003 = vunpack.c.l.b16 %v1497
    %v2004 = vunpack.c.h.b16 %v1497
    %v2005 = vunpack.c.l.b16 %v1498
    %v2006 = vunpack.c.h.b16 %v1498
    %v2007 = vunpack.c.l.b16 %v1499
    %v2008 = vunpack.c.h.b16 %v1499
    %v2009 = vunpack.c.l.b16 %v1500
    %v2010 = vunpack.c.h.b16 %v1500
    %v2011 = vunpack.c.l.b16 %v1501
    %v2012 = vunpack.c.h.b16 %v1501
    %v2013 = vunpack.c.l.b16 %v1502
    %v2014 = vunpack.c.h.b16 %v1502
    %v2015 = vunpack.c.l.b16 %v1503
    %v2016 = vunpack.c.h.b16 %v1503
    %v2017 = vunpack.c.l.b16 %v1504
    %v2018 = vunpack.c.h.b16 %v1504
    %v2019 = vunpack.c.l.b16 %v1505
    %v2020 = vunpack.c.h.b16 %v1505
    %v2021 = vunpack.c.l.b16 %v1506
    %v2022 = vunpack.c.h.b16 %v1506
    %v2023 = vunpack.c.l.b16 %v1507
    %v2024 = vunpack.c.h.b16 %v1507
    %v2025 = vunpack.c.l.b16 %v1508
    %v2026 = vunpack.c.h.b16 %v1508
    %v2027 = vunpack.c.l.b16 %v1509
    %v2028 = vunpack.c.h.b16 %v1509
    %v2029 = vunpack.c.l.b16 %v1510
    %v2030 = vunpack.c.h.b16 %v1510
    %v2031 = vunpack.c.l.b16 %v1511
    %v2032 = vunpack.c.h.b16 %v1511
    %v2033 = vunpack.c.l.b16 %v1512
    %v2034 = vunpack.c.h.b16 %v1512
    %v2035 = vunpack.c.l.b16 %v1513
    %v2036 = vunpack.c.h.b16 %v1513
    %v2037 = vunpack.c.l.b16 %v1514
    %v2038 = vunpack.c.h.b16 %v1514
    %v2039 = vunpack.c.l.b16 %v1515
    %v2040 = vunpack.c.h.b16 %v1515
    %v2041 = vunpack.c.l.b16 %v1516
    %v2042 = vunpack.c.h.b16 %v1516
    %v2043 = vunpack.c.l.b16 %v1517
    %v2044 = vunpack.c.h.b16 %v1517
    %v2045 = vunpack.c.l.b16 %v1518
    %v2046 = vunpack.c.h.b16 %v1518
    %v2047 = vunpack.c.l.b16 %v1519
    %v2048 = vunpack.c.h.b16 %v1519
    %v2049 = vunpack.c.l.b16 %v1520
    %v2050 = vunpack.c.h.b16 %v1520
    %v2051 = vunpack.c.l.b16 %v1521
    %v2052 = vunpack.c.h.b16 %v1521
    %v2053 = vunpack.c.l.b16 %v1522
    %v2054 = vunpack.c.h.b16 %v1522
    %v2055 = vunpack.c.l.b16 %v1523
    %v2056 = vunpack.c.h.b16 %v1523
    %v2057 = vunpack.c.l.b16 %v1524
    %v2058 = vunpack.c.h.b16 %v1524
    %v2059 = vunpack.c.l.b16 %v1525
    %v2060 = vunpack.c.h.b16 %v1525
    %v2061 = vunpack.c.l.b16 %v1526
    %v2062 = vunpack.c.h.b16 %v1526
    %v2063 = vunpack.c.l.b16 %v1527
    %v2064 = vunpack.c.h.b16 %v1527
    %v2065 = vunpack.c.l.b16 %v1528
    %v2066 = vunpack.c.h.b16 %v1528
    %v2067 = vunpack.c.l.b16 %v1529
    %v2068 = vunpack.c.h.b16 %v1529
    %v2069 = vunpack.c.l.b16 %v1530
    %v2070 = vunpack.c.h.b16 %v1530
    %v2071 = vunpack.c.l.b16 %v1531
    %v2072 = vunpack.c.h.b16 %v1531
    %v2073 = vunpack.c.l.b16 %v1532
    %v2074 = vunpack.c.h.b16 %v1532
    %v2075 = vunpack.c.l.b16 %v1533
    %v2076 = vunpack.c.h.b16 %v1533
    %v2077 = vunpack.c.l.b16 %v1534
    %v2078 = vunpack.c.h.b16 %v1534
    %v2079 = vunpack.c.l.b16 %v1535
    %v2080 = vunpack.c.h.b16 %v1535
    %v2081 = vunpack.c.l.b16 %v1536
    %v2082 = vunpack.c.h.b16 %v1536
    %v2083 = vunpack.c.l.b16 %v1537
    %v2084 = vunpack.c.h.b16 %v1537
    %v2085 = vunpack.c.l.b16 %v1538
    %v2086 = vunpack.c.h.b16 %v1538
    %v2087 = vunpack.c.l.b16 %v1539
    %v2088 = vunpack.c.h.b16 %v1539
    %v2089 = vunpack.c.l.b16 %v1540
    %v2090 = vunpack.c.h.b16 %v1540
    %v2091 = vunpack.c.l.b16 %v1541
    %v2092 = vunpack.c.h.b16 %v1541
    %v2093 = vunpack.c.l.b16 %v1542
    %v2094 = vunpack.c.h.b16 %v1542
    %v2095 = vunpack.c.l.b16 %v1543
    %v2096 = vunpack.c.h.b16 %v1543
    %v2097 = vunpack.c.l.b16 %v1544
    %v2098 = vunpack.c.h.b16 %v1544
    %v2099 = vunpack.c.l.b16 %v1545
    %v2100 = vunpack.c.h.b16 %v1545
    %v2101 = vunpack.c.l.b16 %v1546
    %v2102 = vunpack.c.h.b16 %v1546
    %v2103 = vunpack.c.l.b16 %v1547
    %v2104 = vunpack.c.h.b16 %v1547
    %v2105 = vunpack.c.l.b16 %v1548
    %v2106 = vunpack.c.h.b16 %v1548
    %v2107 = vunpack.c.l.b16 %v1549
    %v2108 = vunpack.c.h.b16 %v1549
    %v2109 = vunpack.c.l.b16 %v1550
    %v2110 = vunpack.c.h.b16 %v1550
    %v2111 = vunpack.c.l.b16 %v1551
    %v2112 = vunpack.c.h.b16 %v1551
    %v2113 = vunpack.c.l.b16 %v1552
    %v2114 = vunpack.c.h.b16 %v1552
    %v2115 = vunpack.c.l.b16 %v1553
    %v2116 = vunpack.c.h.b16 %v1553
    %v2117 = vunpack.c.l.b16 %v1554
    %v2118 = vunpack.c.h.b16 %v1554
    %v2119 = vunpack.c.l.b16 %v1555
    %v2120 = vunpack.c.h.b16 %v1555
    %v2121 = vunpack.c.l.b16 %v1556
    %v2122 = vunpack.c.h.b16 %v1556
    %v2123 = vunpack.c.l.b16 %v1557
    %v2124 = vunpack.c.h.b16 %v1557
    %v2125 = vunpack.c.l.b16 %v1558
    %v2126 = vunpack.c.h.b16 %v1558
    %v2127 = vunpack.c.l.b16 %v1559
    %v2128 = vunpack.c.h.b16 %v1559
    %v2129 = vunpack.c.l.b16 %v1560
    %v2130 = vunpack.c.h.b16 %v1560
    %v2131 = vunpack.c.l.b16 %v1561
    %v2132 = vunpack.c.h.b16 %v1561
    %v2133 = vunpack.c.l.b16 %v1562
    %v2134 = vunpack.c.h.b16 %v1562
    %v2135 = vpack.c.b16 %v1853, %v1847
    %v2136 = vpack.c.b16 %v1854, %v1848
    %v2137 = vpack.c.b16 %v1855, %v1849
    %v2138 = vpack.c.b16 %v1856, %v1850
    %v2139 = vpack.c.b16 %v1857, %v1851
    %v2140 = vpack.c.b16 %v1858, %v1852
    %v2141 = vpack.c.b16 %v1865, %v1859
    %v2142 = vpack.c.b16 %v1866, %v1860
    %v2143 = vpack.c.b16 %v1867, %v1861
    %v2144 = vpack.c.b16 %v1868, %v1862
    %v2145 = vpack.c.b16 %v1869, %v1863
    %v2146 = vpack.c.b16 %v1870, %v1864
    %v2147 = vpack.c.b16 %v1877, %v1871
    %v2148 = vpack.c.b16 %v1878, %v1872
    %v2149 = vpack.c.b16 %v1879, %v1873
    %v2150 = vpack.c.b16 %v1880, %v1874
    %v2151 = vpack.c.b16 %v1881, %v1875
    %v2152 = vpack.c.b16 %v1882, %v1876
    %v2153 = vpack.c.b16 %v1889, %v1883
    %v2154 = vpack.c.b16 %v1890, %v1884
    %v2155 = vpack.c.b16 %v1891, %v1885
    %v2156 = vpack.c.b16 %v1892, %v1886
    %v2157 = vpack.c.b16 %v1893, %v1887
    %v2158 = vpack.c.b16 %v1894, %v1888
    %v2159 = vpack.c.b16 %v1901, %v1895
    %v2160 = vpack.c.b16 %v1902, %v1896
    %v2161 = vpack.c.b16 %v1903, %v1897
    %v2162 = vpack.c.b16 %v1904, %v1898
    %v2163 = vpack.c.b16 %v1905, %v1899
    %v2164 = vpack.c.b16 %v1906, %v1900
    %v2165 = vpack.c.b16 %v1913, %v1907
    %v2166 = vpack.c.b16 %v1914, %v1908
    %v2167 = vpack.c.b16 %v1915, %v1909
    %v2168 = vpack.c.b16 %v1916, %v1910
    %v2169 = vpack.c.b16 %v1917, %v1911
    %v2170 = vpack.c.b16 %v1918, %v1912
    %v2171 = vpack.c.b16 %v1925, %v1919
    %v2172 = vpack.c.b16 %v1926, %v1920
    %v2173 = vpack.c.b16 %v1927, %v1921
    %v2174 = vpack.c.b16 %v1928, %v1922
    %v2175 = vpack.c.b16 %v1929, %v1923
    %v2176 = vpack.c.b16 %v1930, %v1924
    %v2177 = vpack.c.b16 %v1937, %v1931
    %v2178 = vpack.c.b16 %v1938, %v1932
    %v2179 = vpack.c.b16 %v1939, %v1933
    %v2180 = vpack.c.b16 %v1940, %v1934
    %v2181 = vpack.c.b16 %v1941, %v1935
    %v2182 = vpack.c.b16 %v1942, %v1936
    %v2183 = vpack.c.b16 %v1949, %v1943
    %v2184 = vpack.c.b16 %v1950, %v1944
    %v2185 = vpack.c.b16 %v1951, %v1945
    %v2186 = vpack.c.b16 %v1952, %v1946
    %v2187 = vpack.c.b16 %v1953, %v1947
    %v2188 = vpack.c.b16 %v1954, %v1948
    %v2189 = vpack.c.b16 %v1961, %v1955
    %v2190 = vpack.c.b16 %v1962, %v1956
    %v2191 = vpack.c.b16 %v1963, %v1957
    %v2192 = vpack.c.b16 %v1964, %v1958
    %v2193 = vpack.c.b16 %v1965, %v1959
    %v2194 = vpack.c.b16 %v1966, %v1960
    %v2195 = vpack.c.b16 %v1973, %v1967
    %v2196 = vpack.c.b16 %v1974, %v1968
    %v2197 = vpack.c.b16 %v1975, %v1969
    %v2198 = vpack.c.b16 %v1976, %v1970
    %v2199 = vpack.c.b16 %v1977, %v1971
    %v2200 = vpack.c.b16 %v1978, %v1972
    %v2201 = vpack.c.b16 %v1985, %v1979
    %v2202 = vpack.c.b16 %v1986, %v1980
    %v2203 = vpack.c.b16 %v1987, %v1981
    %v2204 = vpack.c.b16 %v1988, %v1982
    %v2205 = vpack.c.b16 %v1989, %v1983
    %v2206 = vpack.c.b16 %v1990, %v1984
    %v2207 = vpack.c.b16 %v1997, %v1991
    %v2208 = vpack.c.b16 %v1998, %v1992
    %v2209 = vpack.c.b16 %v1999, %v1993
    %v2210 = vpack.c.b16 %v2000, %v1994
    %v2211 = vpack.c.b16 %v2001, %v1995
    %v2212 = vpack.c.b16 %v2002, %v1996
    %v2213 = vpack.c.b16 %v2009, %v2003
    %v2214 = vpack.c.b16 %v2010, %v2004
    %v2215 = vpack.c.b16 %v2011, %v2005
    %v2216 = vpack.c.b16 %v2012, %v2006
    %v2217 = vpack.c.b16 %v2013, %v2007
    %v2218 = vpack.c.b16 %v2014, %v2008
    %v2219 = vpack.c.b16 %v2021, %v2015
    %v2220 = vpack.c.b16 %v2022, %v2016
    %v2221 = vpack.c.b16 %v2023, %v2017
    %v2222 = vpack.c.b16 %v2024, %v2018
    %v2223 = vpack.c.b16 %v2025, %v2019
    %v2224 = vpack.c.b16 %v2026, %v2020
    %v2225 = vpack.c.b16 %v2033, %v2027
    %v2226 = vpack.c.b16 %v2034, %v2028
    %v2227 = vpack.c.b16 %v2035, %v2029
    %v2228 = vpack.c.b16 %v2036, %v2030
    %v2229 = vpack.c.b16 %v2037, %v2031
    %v2230 = vpack.c.b16 %v2038, %v2032
    %v2231 = vpack.c.b16 %v2045, %v2039
    %v2232 = vpack.c.b16 %v2046, %v2040
    %v2233 = vpack.c.b16 %v2047, %v2041
    %v2234 = vpack.c.b16 %v2048, %v2042
    %v2235 = vpack.c.b16 %v2049, %v2043
    %v2236 = vpack.c.b16 %v2050, %v2044
    %v2237 = vpack.c.b16 %v2057, %v2051
    %v2238 = vpack.c.b16 %v2058, %v2052
    %v2239 = vpack.c.b16 %v2059, %v2053
    %v2240 = vpack.c.b16 %v2060, %v2054
    %v2241 = vpack.c.b16 %v2061, %v2055
    %v2242 = vpack.c.b16 %v2062, %v2056
    %v2243 = vpack.c.b16 %v2069, %v2063
    %v2244 = vpack.c.b16 %v2070, %v2064
    %v2245 = vpack.c.b16 %v2071, %v2065
    %v2246 = vpack.c.b16 %v2072, %v2066
    %v2247 = vpack.c.b16 %v2073, %v2067
    %v2248 = vpack.c.b16 %v2074, %v2068
    %v2249 = vpack.c.b16 %v2081, %v2075
    %v2250 = vpack.c.b16 %v2082, %v2076
    %v2251 = vpack.c.b16 %v2083, %v2077
    %v2252 = vpack.c.b16 %v2084, %v2078
    %v2253 = vpack.c.b16 %v2085, %v2079
    %v2254 = vpack.c.b16 %v2086, %v2080
    %v2255 = vpack.c.b16 %v2093, %v2087
    %v2256 = vpack.c.b16 %v2094, %v2088
    %v2257 = vpack.c.b16 %v2095, %v2089
    %v2258 = vpack.c.b16 %v2096, %v2090
    %v2259 = vpack.c.b16 %v2097, %v2091
    %v2260 = vpack.c.b16 %v2098, %v2092
    %v2261 = vpack.c.b16 %v2105, %v2099
    %v2262 = vpack.c.b16 %v2106, %v2100
    %v2263 = vpack.c.b16 %v2107, %v2101
    %v2264 = vpack.c.b16 %v2108, %v2102
    %v2265 = vpack.c.b16 %v2109, %v2103
    %v2266 = vpack.c.b16 %v2110, %v2104
    %v2267 = vpack.c.b16 %v2117, %v2111
    %v2268 = vpack.c.b16 %v2118, %v2112
    %v2269 = vpack.c.b16 %v2119, %v2113
    %v2270 = vpack.c.b16 %v2120, %v2114
    %v2271 = vpack.c.b16 %v2121, %v2115
    %v2272 = vpack.c.b16 %v2122, %v2116
    %v2273 = vpack.c.b16 %v2129, %v2123
    %v2274 = vpack.c.b16 %v2130, %v2124
    %v2275 = vpack.c.b16 %v2131, %v2125
    %v2276 = vpack.c.b16 %v2132, %v2126
    %v2277 = vpack.c.b16 %v2133, %v2127
    %v2278 = vpack.c.b16 %v2134, %v2128
    %2423 = vmatprep.subr.bf16.mxu0 %v2136
    %2424 = vmatpush1.bf16.msra.mxu0 %v2135
    %2425 = vmatprep.subr.bf16.mxu0 %v2142
    %2426 = vmatpush1.bf16.msra.mxu0 %v2141
    %2427 = vmatprep.subr.bf16.mxu0 %v2148
    %2428 = vmatpush1.bf16.msra.mxu0 %v2147
    %2429 = vmatprep.subr.bf16.mxu0 %v2154
    %2430 = vmatpush1.bf16.msra.mxu0 %v2153
    %2431 = vmatprep.subr.bf16.mxu0 %v2160
    %2432 = vmatpush1.bf16.msra.mxu0 %v2159
    %2433 = vmatprep.subr.bf16.mxu0 %v2166
    %2434 = vmatpush1.bf16.msra.mxu0 %v2165
    %2435 = vmatprep.subr.bf16.mxu0 %v2172
    %2436 = vmatpush1.bf16.msra.mxu0 %v2171
    %2437 = vmatprep.subr.bf16.mxu0 %v2178
    %2438 = vmatpush1.bf16.msra.mxu0 %v2177
    %2439 = vmatprep.subr.bf16.mxu0 %v2184
    %2440 = vmatpush1.bf16.msra.mxu0 %v2183
    %2441 = vmatprep.subr.bf16.mxu0 %v2190
    %2442 = vmatpush1.bf16.msra.mxu0 %v2189
    %2443 = vmatprep.subr.bf16.mxu0 %v2196
    %2444 = vmatpush1.bf16.msra.mxu0 %v2195
    %2445 = vmatprep.subr.bf16.mxu0 %v2202
    %2446 = vmatpush1.bf16.msra.mxu0 %v2201
    %2447 = vmatprep.subr.bf16.mxu0 %v2208
    %2448 = vmatpush1.bf16.msra.mxu0 %v2207
    %2449 = vmatprep.subr.bf16.mxu0 %v2214
    %2450 = vmatpush1.bf16.msra.mxu0 %v2213
    %2451 = vmatprep.subr.bf16.mxu0 %v2220
    %2452 = vmatpush1.bf16.msra.mxu0 %v2219
    %2453 = vmatprep.subr.bf16.mxu0 %v2226
    %2454 = vmatpush1.bf16.msra.mxu0 %v2225
    %2455 = vmatprep.mubr.bf16.mxu0 %v1633
    %2456 = vmatmul.mubr.bf16.gmra.mrb[0].mxu0 %v1621
    %v2457 = vpop.f32.mrb[0].mxu0
    %v2458 = vadd.f32 0.0, %v2457
    %v2459 = vpop.f32.mrb[0].mxu0
    %v2460 = vadd.f32 0.0, %v2459
    %v2461 = vpop.f32.mrb[0].mxu0
    %v2462 = vadd.f32 0.0, %v2461
    %v2463 = vpop.f32.mrb[0].mxu0
    %v2464 = vadd.f32 0.0, %v2463
    %2465 = vmatprep.mubr.bf16.mxu0 %v1661
    %2466 = vmatmul.mubr.bf16.gmra.mrb[0].mxu0 %v1653
    %v2467 = vpop.f32.mrb[0].mxu0
    %v2468 = vadd.f32 0.0, %v2467
    %v2469 = vpop.f32.mrb[0].mxu0
    %v2470 = vadd.f32 0.0, %v2469
    %v2471 = vpop.f32.mrb[0].mxu0
    %v2472 = vadd.f32 0.0, %v2471
    %v2473 = vpop.f32.mrb[0].mxu0
    %v2474 = vadd.f32 0.0, %v2473
    %2475 = vmatprep.mubr.bf16.mxu0 %v1685
    %2476 = vmatmul.mubr.bf16.gmra.mrb[0].mxu0 %v1677
    %v2477 = vpop.f32.mrb[0].mxu0
    %v2478 = vadd.f32 0.0, %v2477
    %v2479 = vpop.f32.mrb[0].mxu0
    %v2480 = vadd.f32 0.0, %v2479
    %v2481 = vpop.f32.mrb[0].mxu0
    %v2482 = vadd.f32 0.0, %v2481
    %v2483 = vpop.f32.mrb[0].mxu0
    %v2484 = vadd.f32 0.0, %v2483
    %2485 = vdwg.mxu0
    %2486 = vmatprep.subr.bf16.mxu0 %v2232
    %2487 = vmatpush1.bf16.msra.mxu0 %v2231
    %2488 = vmatprep.subr.bf16.mxu0 %v2238
    %2489 = vmatpush1.bf16.msra.mxu0 %v2237
    %2490 = vmatprep.subr.bf16.mxu0 %v2244
    %2491 = vmatpush1.bf16.msra.mxu0 %v2243
    %2492 = vmatprep.subr.bf16.mxu0 %v2250
    %2493 = vmatpush1.bf16.msra.mxu0 %v2249
    %2494 = vmatprep.subr.bf16.mxu0 %v2256
    %2495 = vmatpush1.bf16.msra.mxu0 %v2255
    %2496 = vmatprep.subr.bf16.mxu0 %v2262
    %2497 = vmatpush1.bf16.msra.mxu0 %v2261
    %2498 = vmatprep.subr.bf16.mxu0 %v2268
    %2499 = vmatpush1.bf16.msra.mxu0 %v2267
    %2500 = vmatprep.subr.bf16.mxu0 %v2274
    %2501 = vmatpush1.bf16.msra.mxu0 %v2273
    %2502 = vmatprep.subr.bf16.mxu0 0
    %2503 = vmatpush1.bf16.msra.mxu0 0
    %2504 = vmatprep.subr.bf16.mxu0 0
    %2505 = vmatpush1.bf16.msra.mxu0 0
    %2506 = vmatprep.subr.bf16.mxu0 0
    %2507 = vmatpush1.bf16.msra.mxu0 0
    %2508 = vmatprep.subr.bf16.mxu0 0
    %2509 = vmatpush1.bf16.msra.mxu0 0
    %2510 = vmatprep.subr.bf16.mxu0 0
    %2511 = vmatpush1.bf16.msra.mxu0 0
    %2512 = vmatprep.subr.bf16.mxu0 0
    %2513 = vmatpush1.bf16.msra.mxu0 0
    %2514 = vmatprep.subr.bf16.mxu0 0
    %2515 = vmatpush1.bf16.msra.mxu0 0
    %2516 = vmatprep.subr.bf16.mxu0 0
    %2517 = vmatpush1.bf16.msra.mxu0 0
    %2518 = vmatprep.mubr.bf16.mxu0 0
    %2519 = vmatmul.mubr.bf16.gmra.mrb[0].mxu0 %v1645
    %v2520 = vpop.f32.mrb[0].mxu0
    %v2521 = vadd.f32 %v2458, %v2520
    %v2522 = vpop.f32.mrb[0].mxu0
    %v2523 = vadd.f32 %v2460, %v2522
    %v2524 = vpop.f32.mrb[0].mxu0
    %v2525 = vadd.f32 %v2462, %v2524
    %v2526 = vpop.f32.mrb[0].mxu0
    %v2527 = vadd.f32 %v2464, %v2526
    %2528 = vmatprep.mubr.bf16.mxu0 0
    %2529 = vmatmul.mubr.bf16.gmra.mrb[0].mxu0 %v1669
    %v2530 = vpop.f32.mrb[0].mxu0
    %v2531 = vadd.f32 %v2468, %v2530
    %v2532 = vpop.f32.mrb[0].mxu0
    %v2533 = vadd.f32 %v2470, %v2532
    %v2534 = vpop.f32.mrb[0].mxu0
    %v2535 = vadd.f32 %v2472, %v2534
    %v2536 = vpop.f32.mrb[0].mxu0
    %v2537 = vadd.f32 %v2474, %v2536
    %2538 = vmatprep.mubr.bf16.mxu0 0
    %2539 = vmatmul.mubr.bf16.gmra.mrb[0].mxu0 %v1693
    %v2540 = vpop.f32.mrb[0].mxu0
    %v2541 = vadd.f32 %v2478, %v2540
    %v2542 = vpop.f32.mrb[0].mxu0
    %v2543 = vadd.f32 %v2480, %v2542
    %v2544 = vpop.f32.mrb[0].mxu0
    %v2545 = vadd.f32 %v2482, %v2544
    %v2546 = vpop.f32.mrb[0].mxu0
    %v2547 = vadd.f32 %v2484, %v2546
    %2548 = vdwg.mxu0
    %2549 = vmatprep.subr.bf16.mxu0 %v2138
    %2550 = vmatpush1.bf16.msra.mxu0 %v2137
    %2551 = vmatprep.subr.bf16.mxu0 %v2144
    %2552 = vmatpush1.bf16.msra.mxu0 %v2143
    %2553 = vmatprep.subr.bf16.mxu0 %v2150
    %2554 = vmatpush1.bf16.msra.mxu0 %v2149
    %2555 = vmatprep.subr.bf16.mxu0 %v2156
    %2556 = vmatpush1.bf16.msra.mxu0 %v2155
    %2557 = vmatprep.subr.bf16.mxu0 %v2162
    %2558 = vmatpush1.bf16.msra.mxu0 %v2161
    %2559 = vmatprep.subr.bf16.mxu0 %v2168
    %2560 = vmatpush1.bf16.msra.mxu0 %v2167
    %2561 = vmatprep.subr.bf16.mxu0 %v2174
    %2562 = vmatpush1.bf16.msra.mxu0 %v2173
    %2563 = vmatprep.subr.bf16.mxu0 %v2180
    %2564 = vmatpush1.bf16.msra.mxu0 %v2179
    %2565 = vmatprep.subr.bf16.mxu0 %v2186
    %2566 = vmatpush1.bf16.msra.mxu0 %v2185
    %2567 = vmatprep.subr.bf16.mxu0 %v2192
    %2568 = vmatpush1.bf16.msra.mxu0 %v2191
    %2569 = vmatprep.subr.bf16.mxu0 %v2198
    %2570 = vmatpush1.bf16.msra.mxu0 %v2197
    %2571 = vmatprep.subr.bf16.mxu0 %v2204
    %2572 = vmatpush1.bf16.msra.mxu0 %v2203
    %2573 = vmatprep.subr.bf16.mxu0 %v2210
    %2574 = vmatpush1.bf16.msra.mxu0 %v2209
    %2575 = vmatprep.subr.bf16.mxu0 %v2216
    %2576 = vmatpush1.bf16.msra.mxu0 %v2215
    %2577 = vmatprep.subr.bf16.mxu0 %v2222
    %2578 = vmatpush1.bf16.msra.mxu0 %v2221
    %2579 = vmatprep.subr.bf16.mxu0 %v2228
    %2580 = vmatpush1.bf16.msra.mxu0 %v2227
    %2581 = vmatprep.mubr.bf16.mxu0 %v1633
    %2582 = vmatmul.mubr.bf16.gmra.mrb[0].mxu0 %v1621
    %v2583 = vpop.f32.mrb[0].mxu0
    %v2584 = vadd.f32 0.0, %v2583
    %v2585 = vpop.f32.mrb[0].mxu0
    %v2586 = vadd.f32 0.0, %v2585
    %v2587 = vpop.f32.mrb[0].mxu0
    %v2588 = vadd.f32 0.0, %v2587
    %v2589 = vpop.f32.mrb[0].mxu0
    %v2590 = vadd.f32 0.0, %v2589
    %2591 = vmatprep.mubr.bf16.mxu0 %v1661
    %2592 = vmatmul.mubr.bf16.gmra.mrb[0].mxu0 %v1653
    %v2593 = vpop.f32.mrb[0].mxu0
    %v2594 = vadd.f32 0.0, %v2593
    %v2595 = vpop.f32.mrb[0].mxu0
    %v2596 = vadd.f32 0.0, %v2595
    %v2597 = vpop.f32.mrb[0].mxu0
    %v2598 = vadd.f32 0.0, %v2597
    %v2599 = vpop.f32.mrb[0].mxu0
    %v2600 = vadd.f32 0.0, %v2599
    %2601 = vmatprep.mubr.bf16.mxu0 %v1685
    %2602 = vmatmul.mubr.bf16.gmra.mrb[0].mxu0 %v1677
    %v2603 = vpop.f32.mrb[0].mxu0
    %v2604 = vadd.f32 0.0, %v2603
    %v2605 = vpop.f32.mrb[0].mxu0
    %v2606 = vadd.f32 0.0, %v2605
    %v2607 = vpop.f32.mrb[0].mxu0
    %v2608 = vadd.f32 0.0, %v2607
    %v2609 = vpop.f32.mrb[0].mxu0
    %v2610 = vadd.f32 0.0, %v2609
    %2611 = vdwg.mxu0
    %2612 = vmatprep.subr.bf16.mxu0 %v2234
    %2613 = vmatpush1.bf16.msra.mxu0 %v2233
    %2614 = vmatprep.subr.bf16.mxu0 %v2240
    %2615 = vmatpush1.bf16.msra.mxu0 %v2239
    %2616 = vmatprep.subr.bf16.mxu0 %v2246
    %2617 = vmatpush1.bf16.msra.mxu0 %v2245
    %2618 = vmatprep.subr.bf16.mxu0 %v2252
    %2619 = vmatpush1.bf16.msra.mxu0 %v2251
    %2620 = vmatprep.subr.bf16.mxu0 %v2258
    %2621 = vmatpush1.bf16.msra.mxu0 %v2257
    %2622 = vmatprep.subr.bf16.mxu0 %v2264
    %2623 = vmatpush1.bf16.msra.mxu0 %v2263
    %2624 = vmatprep.subr.bf16.mxu0 %v2270
    %2625 = vmatpush1.bf16.msra.mxu0 %v2269
    %2626 = vmatprep.subr.bf16.mxu0 %v2276
    %2627 = vmatpush1.bf16.msra.mxu0 %v2275
    %2628 = vmatprep.subr.bf16.mxu0 0
    %2629 = vmatpush1.bf16.msra.mxu0 0
    %2630 = vmatprep.subr.bf16.mxu0 0
    %2631 = vmatpush1.bf16.msra.mxu0 0
    %2632 = vmatprep.subr.bf16.mxu0 0
    %2633 = vmatpush1.bf16.msra.mxu0 0
    %2634 = vmatprep.subr.bf16.mxu0 0
    %2635 = vmatpush1.bf16.msra.mxu0 0
    %2636 = vmatprep.subr.bf16.mxu0 0
    %2637 = vmatpush1.bf16.msra.mxu0 0
    %2638 = vmatprep.subr.bf16.mxu0 0
    %2639 = vmatpush1.bf16.msra.mxu0 0
    %2640 = vmatprep.subr.bf16.mxu0 0
    %2641 = vmatpush1.bf16.msra.mxu0 0
    %2642 = vmatprep.subr.bf16.mxu0 0
    %2643 = vmatpush1.bf16.msra.mxu0 0
    %2644 = vmatprep.mubr.bf16.mxu0 0
    %2645 = vmatmul.mubr.bf16.gmra.mrb[0].mxu0 %v1645
    %v2646 = vpop.f32.mrb[0].mxu0
    %v2647 = vadd.f32 %v2584, %v2646
    %v2648 = vpop.f32.mrb[0].mxu0
    %v2649 = vadd.f32 %v2586, %v2648
    %v2650 = vpop.f32.mrb[0].mxu0
    %v2651 = vadd.f32 %v2588, %v2650
    %v2652 = vpop.f32.mrb[0].mxu0
    %v2653 = vadd.f32 %v2590, %v2652
    %2654 = vmatprep.mubr.bf16.mxu0 0
    %2655 = vmatmul.mubr.bf16.gmra.mrb[0].mxu0 %v1669
    %v2656 = vpop.f32.mrb[0].mxu0
    %v2657 = vadd.f32 %v2594, %v2656
    %v2658 = vpop.f32.mrb[0].mxu0
    %v2659 = vadd.f32 %v2596, %v2658
    %v2660 = vpop.f32.mrb[0].mxu0
    %v2661 = vadd.f32 %v2598, %v2660
    %v2662 = vpop.f32.mrb[0].mxu0
    %v2663 = vadd.f32 %v2600, %v2662
    %2664 = vmatprep.mubr.bf16.mxu0 0
    %2665 = vmatmul.mubr.bf16.gmra.mrb[0].mxu0 %v1693
    %v2666 = vpop.f32.mrb[0].mxu0
    %v2667 = vadd.f32 %v2604, %v2666
    %v2668 = vpop.f32.mrb[0].mxu0
    %v2669 = vadd.f32 %v2606, %v2668
    %v2670 = vpop.f32.mrb[0].mxu0
    %v2671 = vadd.f32 %v2608, %v2670
    %v2672 = vpop.f32.mrb[0].mxu0
    %v2673 = vadd.f32 %v2610, %v2672
    %2674 = vdwg.mxu0
    %2675 = vmatprep.subr.bf16.mxu0 %v2140
    %2676 = vmatpush1.bf16.msra.mxu0 %v2139
    %2677 = vmatprep.subr.bf16.mxu0 %v2146
    %2678 = vmatpush1.bf16.msra.mxu0 %v2145
    %2679 = vmatprep.subr.bf16.mxu0 %v2152
    %2680 = vmatpush1.bf16.msra.mxu0 %v2151
    %2681 = vmatprep.subr.bf16.mxu0 %v2158
    %2682 = vmatpush1.bf16.msra.mxu0 %v2157
    %2683 = vmatprep.subr.bf16.mxu0 %v2164
    %2684 = vmatpush1.bf16.msra.mxu0 %v2163
    %2685 = vmatprep.subr.bf16.mxu0 %v2170
    %2686 = vmatpush1.bf16.msra.mxu0 %v2169
    %2687 = vmatprep.subr.bf16.mxu0 %v2176
    %2688 = vmatpush1.bf16.msra.mxu0 %v2175
    %2689 = vmatprep.subr.bf16.mxu0 %v2182
    %2690 = vmatpush1.bf16.msra.mxu0 %v2181
    %2691 = vmatprep.subr.bf16.mxu0 %v2188
    %2692 = vmatpush1.bf16.msra.mxu0 %v2187
    %2693 = vmatprep.subr.bf16.mxu0 %v2194
    %2694 = vmatpush1.bf16.msra.mxu0 %v2193
    %2695 = vmatprep.subr.bf16.mxu0 %v2200
    %2696 = vmatpush1.bf16.msra.mxu0 %v2199
    %2697 = vmatprep.subr.bf16.mxu0 %v2206
    %2698 = vmatpush1.bf16.msra.mxu0 %v2205
    %2699 = vmatprep.subr.bf16.mxu0 %v2212
    %2700 = vmatpush1.bf16.msra.mxu0 %v2211
    %2701 = vmatprep.subr.bf16.mxu0 %v2218
    %2702 = vmatpush1.bf16.msra.mxu0 %v2217
    %2703 = vmatprep.subr.bf16.mxu0 %v2224
    %2704 = vmatpush1.bf16.msra.mxu0 %v2223
    %2705 = vmatprep.subr.bf16.mxu0 %v2230
    %2706 = vmatpush1.bf16.msra.mxu0 %v2229
    %2707 = vmatprep.mubr.bf16.mxu0 %v1633
    %2708 = vmatmul.mubr.bf16.gmra.mrb[0].mxu0 %v1621
    %v2709 = vpop.f32.mrb[0].mxu0
    %v2710 = vadd.f32 0.0, %v2709
    %v2711 = vpop.f32.mrb[0].mxu0
    %v2712 = vadd.f32 0.0, %v2711
    %v2713 = vpop.f32.mrb[0].mxu0
    %v2714 = vadd.f32 0.0, %v2713
    %v2715 = vpop.f32.mrb[0].mxu0
    %v2716 = vadd.f32 0.0, %v2715
    %2717 = vmatprep.mubr.bf16.mxu0 %v1661
    %2718 = vmatmul.mubr.bf16.gmra.mrb[0].mxu0 %v1653
    %v2719 = vpop.f32.mrb[0].mxu0
    %v2720 = vadd.f32 0.0, %v2719
    %v2721 = vpop.f32.mrb[0].mxu0
    %v2722 = vadd.f32 0.0, %v2721
    %v2723 = vpop.f32.mrb[0].mxu0
    %v2724 = vadd.f32 0.0, %v2723
    %v2725 = vpop.f32.mrb[0].mxu0
    %v2726 = vadd.f32 0.0, %v2725
    %2727 = vmatprep.mubr.bf16.mxu0 %v1685
    %2728 = vmatmul.mubr.bf16.gmra.mrb[0].mxu0 %v1677
    %v2729 = vpop.f32.mrb[0].mxu0
    %v2730 = vadd.f32 0.0, %v2729
    %v2731 = vpop.f32.mrb[0].mxu0
    %v2732 = vadd.f32 0.0, %v2731
    %v2733 = vpop.f32.mrb[0].mxu0
    %v2734 = vadd.f32 0.0, %v2733
    %v2735 = vpop.f32.mrb[0].mxu0
    %v2736 = vadd.f32 0.0, %v2735
    %2737 = vdwg.mxu0
    %2738 = vmatprep.subr.bf16.mxu0 %v2236
    %2739 = vmatpush1.bf16.msra.mxu0 %v2235
    %2740 = vmatprep.subr.bf16.mxu0 %v2242
    %2741 = vmatpush1.bf16.msra.mxu0 %v2241
    %2742 = vmatprep.subr.bf16.mxu0 %v2248
    %2743 = vmatpush1.bf16.msra.mxu0 %v2247
    %2744 = vmatprep.subr.bf16.mxu0 %v2254
    %2745 = vmatpush1.bf16.msra.mxu0 %v2253
    %2746 = vmatprep.subr.bf16.mxu0 %v2260
    %2747 = vmatpush1.bf16.msra.mxu0 %v2259
    %2748 = vmatprep.subr.bf16.mxu0 %v2266
    %2749 = vmatpush1.bf16.msra.mxu0 %v2265
    %2750 = vmatprep.subr.bf16.mxu0 %v2272
    %2751 = vmatpush1.bf16.msra.mxu0 %v2271
    %2752 = vmatprep.subr.bf16.mxu0 %v2278
    %2753 = vmatpush1.bf16.msra.mxu0 %v2277
    %2754 = vmatprep.subr.bf16.mxu0 0
    %2755 = vmatpush1.bf16.msra.mxu0 0
    %2756 = vmatprep.subr.bf16.mxu0 0
    %2757 = vmatpush1.bf16.msra.mxu0 0
    %2758 = vmatprep.subr.bf16.mxu0 0
    %2759 = vmatpush1.bf16.msra.mxu0 0
    %2760 = vmatprep.subr.bf16.mxu0 0
    %2761 = vmatpush1.bf16.msra.mxu0 0
    %2762 = vmatprep.subr.bf16.mxu0 0
    %2763 = vmatpush1.bf16.msra.mxu0 0
    %2764 = vmatprep.subr.bf16.mxu0 0
    %2765 = vmatpush1.bf16.msra.mxu0 0
    %2766 = vmatprep.subr.bf16.mxu0 0
    %2767 = vmatpush1.bf16.msra.mxu0 0
    %2768 = vmatprep.subr.bf16.mxu0 0
    %2769 = vmatpush1.bf16.msra.mxu0 0
    %2770 = vmatprep.mubr.bf16.mxu0 0
    %2771 = vmatmul.mubr.bf16.gmra.mrb[0].mxu0 %v1645
    %v2772 = vpop.f32.mrb[0].mxu0
    %v2773 = vadd.f32 %v2710, %v2772
    %v2774 = vpop.f32.mrb[0].mxu0
    %v2775 = vadd.f32 %v2712, %v2774
    %v2776 = vpop.f32.mrb[0].mxu0
    %v2777 = vadd.f32 %v2714, %v2776
    %v2778 = vpop.f32.mrb[0].mxu0
    %v2779 = vadd.f32 %v2716, %v2778
    %2780 = vmatprep.mubr.bf16.mxu0 0
    %2781 = vmatmul.mubr.bf16.gmra.mrb[0].mxu0 %v1669
    %v2782 = vpop.f32.mrb[0].mxu0
    %v2783 = vadd.f32 %v2720, %v2782
    %v2784 = vpop.f32.mrb[0].mxu0
    %v2785 = vadd.f32 %v2722, %v2784
    %v2786 = vpop.f32.mrb[0].mxu0
    %v2787 = vadd.f32 %v2724, %v2786
    %v2788 = vpop.f32.mrb[0].mxu0
    %v2789 = vadd.f32 %v2726, %v2788
    %2790 = vmatprep.mubr.bf16.mxu0 0
    %2791 = vmatmul.mubr.bf16.gmra.mrb[0].mxu0 %v1693
    %v2792 = vpop.f32.mrb[0].mxu0
    %v2793 = vadd.f32 %v2730, %v2792
    %v2794 = vpop.f32.mrb[0].mxu0
    %v2795 = vadd.f32 %v2732, %v2794
    %v2796 = vpop.f32.mrb[0].mxu0
    %v2797 = vadd.f32 %v2734, %v2796
    %v2798 = vpop.f32.mrb[0].mxu0
    %v2799 = vadd.f32 %v2736, %v2798
    %2800 = vdwg.mxu0
    %v2813 = vunpack.c.l.b16 %v1248
    %v2814 = vunpack.c.h.b16 %v1248
    %v2815 = vunpack.c.l.b16 %v1249
    %v2816 = vunpack.c.l.b16 %v1250
    %v2817 = vunpack.c.h.b16 %v1250
    %v2818 = vunpack.c.l.b16 %v1251
    %v2819 = vunpack.c.l.b16 %v1252
    %v2820 = vunpack.c.h.b16 %v1252
    %v2821 = vunpack.c.l.b16 %v1253
    %v2822 = vunpack.c.l.b16 %v1254
    %v2823 = vunpack.c.h.b16 %v1254
    %v2824 = vunpack.c.l.b16 %v1255
    %v2825 = vunpack.c.l.b16 %v1256
    %v2826 = vunpack.c.h.b16 %v1256
    %v2827 = vunpack.c.l.b16 %v1257
    %v2828 = vunpack.c.l.b16 %v1258
    %v2829 = vunpack.c.h.b16 %v1258
    %v2830 = vunpack.c.l.b16 %v1259
    %v2831 = vpack.c.b16 %v2816, %v2813
    %v2832 = vpack.c.b16 %v2817, %v2814
    %v2833 = vpack.c.b16 %v2818, %v2815
    %v2834 = vpack.c.b16 %v2822, %v2819
    %v2835 = vpack.c.b16 %v2823, %v2820
    %v2836 = vpack.c.b16 %v2824, %v2821
    %v2837 = vpack.c.b16 %v2828, %v2825
    %v2838 = vpack.c.b16 %v2829, %v2826
    %v2839 = vpack.c.b16 %v2830, %v2827
    %v2993 = vunpack.c.l.b16 %v1260
    %v2994 = vunpack.c.h.b16 %v1260
    %v2995 = vunpack.c.l.b16 %v1261
    %v2996 = vunpack.c.h.b16 %v1261
    %v2997 = vunpack.c.l.b16 %v1262
    %v2998 = vunpack.c.h.b16 %v1262
    %v2999 = vunpack.c.l.b16 %v1263
    %v3000 = vunpack.c.h.b16 %v1263
    %v3001 = vunpack.c.l.b16 %v1264
    %v3002 = vunpack.c.h.b16 %v1264
    %v3003 = vunpack.c.l.b16 %v1265
    %v3004 = vunpack.c.h.b16 %v1265
    %v3005 = vunpack.c.l.b16 %v1266
    %v3006 = vunpack.c.h.b16 %v1266
    %v3007 = vunpack.c.l.b16 %v1267
    %v3008 = vunpack.c.h.b16 %v1267
    %v3009 = vunpack.c.l.b16 %v1268
    %v3010 = vunpack.c.h.b16 %v1268
    %v3011 = vunpack.c.l.b16 %v1269
    %v3012 = vunpack.c.h.b16 %v1269
    %v3013 = vunpack.c.l.b16 %v1270
    %v3014 = vunpack.c.h.b16 %v1270
    %v3015 = vunpack.c.l.b16 %v1271
    %v3016 = vunpack.c.h.b16 %v1271
    %v3017 = vunpack.c.l.b16 %v1272
    %v3018 = vunpack.c.h.b16 %v1272
    %v3019 = vunpack.c.l.b16 %v1273
    %v3020 = vunpack.c.h.b16 %v1273
    %v3021 = vunpack.c.l.b16 %v1274
    %v3022 = vunpack.c.h.b16 %v1274
    %v3023 = vunpack.c.l.b16 %v1275
    %v3024 = vunpack.c.h.b16 %v1275
    %v3025 = vunpack.c.l.b16 %v1276
    %v3026 = vunpack.c.h.b16 %v1276
    %v3027 = vunpack.c.l.b16 %v1277
    %v3028 = vunpack.c.h.b16 %v1277
    %v3029 = vunpack.c.l.b16 %v1278
    %v3030 = vunpack.c.h.b16 %v1278
    %v3031 = vunpack.c.l.b16 %v1279
    %v3032 = vunpack.c.h.b16 %v1279
    %v3033 = vunpack.c.l.b16 %v1280
    %v3034 = vunpack.c.h.b16 %v1280
    %v3035 = vunpack.c.l.b16 %v1281
    %v3036 = vunpack.c.h.b16 %v1281
    %v3037 = vunpack.c.l.b16 %v1282
    %v3038 = vunpack.c.h.b16 %v1282
    %v3039 = vunpack.c.l.b16 %v1283
    %v3040 = vunpack.c.h.b16 %v1283
    %v3041 = vunpack.c.l.b16 %v1284
    %v3042 = vunpack.c.h.b16 %v1284
    %v3043 = vunpack.c.l.b16 %v1285
    %v3044 = vunpack.c.h.b16 %v1285
    %v3045 = vunpack.c.l.b16 %v1286
    %v3046 = vunpack.c.h.b16 %v1286
    %v3047 = vunpack.c.l.b16 %v1287
    %v3048 = vunpack.c.h.b16 %v1287
    %v3049 = vunpack.c.l.b16 %v1288
    %v3050 = vunpack.c.h.b16 %v1288
    %v3051 = vunpack.c.l.b16 %v1289
    %v3052 = vunpack.c.h.b16 %v1289
    %v3053 = vunpack.c.l.b16 %v1290
    %v3054 = vunpack.c.h.b16 %v1290
    %v3055 = vunpack.c.l.b16 %v1291
    %v3056 = vunpack.c.h.b16 %v1291
    %v3057 = vunpack.c.l.b16 %v1292
    %v3058 = vunpack.c.h.b16 %v1292
    %v3059 = vunpack.c.l.b16 %v1293
    %v3060 = vunpack.c.h.b16 %v1293
    %v3061 = vunpack.c.l.b16 %v1294
    %v3062 = vunpack.c.h.b16 %v1294
    %v3063 = vunpack.c.l.b16 %v1295
    %v3064 = vunpack.c.h.b16 %v1295
    %v3065 = vunpack.c.l.b16 %v1296
    %v3066 = vunpack.c.h.b16 %v1296
    %v3067 = vunpack.c.l.b16 %v1297
    %v3068 = vunpack.c.h.b16 %v1297
    %v3069 = vunpack.c.l.b16 %v1298
    %v3070 = vunpack.c.h.b16 %v1298
    %v3071 = vunpack.c.l.b16 %v1299
    %v3072 = vunpack.c.h.b16 %v1299
    %v3073 = vunpack.c.l.b16 %v1300
    %v3074 = vunpack.c.h.b16 %v1300
    %v3075 = vunpack.c.l.b16 %v1301
    %v3076 = vunpack.c.h.b16 %v1301
    %v3077 = vunpack.c.l.b16 %v1302
    %v3078 = vunpack.c.h.b16 %v1302
    %v3079 = vunpack.c.l.b16 %v1303
    %v3080 = vunpack.c.h.b16 %v1303
    %v3081 = vunpack.c.l.b16 %v1304
    %v3082 = vunpack.c.h.b16 %v1304
    %v3083 = vunpack.c.l.b16 %v1305
    %v3084 = vunpack.c.h.b16 %v1305
    %v3085 = vunpack.c.l.b16 %v1306
    %v3086 = vunpack.c.h.b16 %v1306
    %v3087 = vunpack.c.l.b16 %v1307
    %v3088 = vunpack.c.h.b16 %v1307
    %v3089 = vunpack.c.l.b16 %v1308
    %v3090 = vunpack.c.h.b16 %v1308
    %v3091 = vunpack.c.l.b16 %v1309
    %v3092 = vunpack.c.h.b16 %v1309
    %v3093 = vunpack.c.l.b16 %v1310
    %v3094 = vunpack.c.h.b16 %v1310
    %v3095 = vunpack.c.l.b16 %v1311
    %v3096 = vunpack.c.h.b16 %v1311
    %v3097 = vunpack.c.l.b16 %v1312
    %v3098 = vunpack.c.h.b16 %v1312
    %v3099 = vunpack.c.l.b16 %v1313
    %v3100 = vunpack.c.h.b16 %v1313
    %v3101 = vunpack.c.l.b16 %v1314
    %v3102 = vunpack.c.h.b16 %v1314
    %v3103 = vunpack.c.l.b16 %v1315
    %v3104 = vunpack.c.h.b16 %v1315
    %v3105 = vunpack.c.l.b16 %v1316
    %v3106 = vunpack.c.h.b16 %v1316
    %v3107 = vunpack.c.l.b16 %v1317
    %v3108 = vunpack.c.h.b16 %v1317
    %v3109 = vunpack.c.l.b16 %v1318
    %v3110 = vunpack.c.h.b16 %v1318
    %v3111 = vunpack.c.l.b16 %v1319
    %v3112 = vunpack.c.h.b16 %v1319
    %v3113 = vunpack.c.l.b16 %v1320
    %v3114 = vunpack.c.h.b16 %v1320
    %v3115 = vunpack.c.l.b16 %v1321
    %v3116 = vunpack.c.h.b16 %v1321
    %v3117 = vunpack.c.l.b16 %v1322
    %v3118 = vunpack.c.h.b16 %v1322
    %v3119 = vunpack.c.l.b16 %v1323
    %v3120 = vunpack.c.h.b16 %v1323
    %v3121 = vunpack.c.l.b16 %v1324
    %v3122 = vunpack.c.h.b16 %v1324
    %v3123 = vunpack.c.l.b16 %v1325
    %v3124 = vunpack.c.h.b16 %v1325
    %v3125 = vunpack.c.l.b16 %v1326
    %v3126 = vunpack.c.h.b16 %v1326
    %v3127 = vunpack.c.l.b16 %v1327
    %v3128 = vunpack.c.h.b16 %v1327
    %v3129 = vunpack.c.l.b16 %v1328
    %v3130 = vunpack.c.h.b16 %v1328
    %v3131 = vunpack.c.l.b16 %v1329
    %v3132 = vunpack.c.h.b16 %v1329
    %v3133 = vunpack.c.l.b16 %v1330
    %v3134 = vunpack.c.h.b16 %v1330
    %v3135 = vunpack.c.l.b16 %v1331
    %v3136 = vunpack.c.h.b16 %v1331
    %v3137 = vunpack.c.l.b16 %v1332
    %v3138 = vunpack.c.h.b16 %v1332
    %v3139 = vunpack.c.l.b16 %v1333
    %v3140 = vunpack.c.h.b16 %v1333
    %v3141 = vunpack.c.l.b16 %v1334
    %v3142 = vunpack.c.h.b16 %v1334
    %v3143 = vunpack.c.l.b16 %v1335
    %v3144 = vunpack.c.h.b16 %v1335
    %v3145 = vunpack.c.l.b16 %v1336
    %v3146 = vunpack.c.h.b16 %v1336
    %v3147 = vunpack.c.l.b16 %v1337
    %v3148 = vunpack.c.h.b16 %v1337
    %v3149 = vunpack.c.l.b16 %v1338
    %v3150 = vunpack.c.h.b16 %v1338
    %v3151 = vunpack.c.l.b16 %v1339
    %v3152 = vunpack.c.h.b16 %v1339
    %v3153 = vunpack.c.l.b16 %v1340
    %v3154 = vunpack.c.h.b16 %v1340
    %v3155 = vunpack.c.l.b16 %v1341
    %v3156 = vunpack.c.h.b16 %v1341
    %v3157 = vunpack.c.l.b16 %v1342
    %v3158 = vunpack.c.h.b16 %v1342
    %v3159 = vunpack.c.l.b16 %v1343
    %v3160 = vunpack.c.h.b16 %v1343
    %v3161 = vunpack.c.l.b16 %v1344
    %v3162 = vunpack.c.h.b16 %v1344
    %v3163 = vunpack.c.l.b16 %v1345
    %v3164 = vunpack.c.h.b16 %v1345
    %v3165 = vunpack.c.l.b16 %v1346
    %v3166 = vunpack.c.h.b16 %v1346
    %v3167 = vunpack.c.l.b16 %v1347
    %v3168 = vunpack.c.h.b16 %v1347
    %v3169 = vunpack.c.l.b16 %v1348
    %v3170 = vunpack.c.h.b16 %v1348
    %v3171 = vunpack.c.l.b16 %v1349
    %v3172 = vunpack.c.h.b16 %v1349
    %v3173 = vunpack.c.l.b16 %v1350
    %v3174 = vunpack.c.h.b16 %v1350
    %v3175 = vunpack.c.l.b16 %v1351
    %v3176 = vunpack.c.h.b16 %v1351
    %v3177 = vunpack.c.l.b16 %v1352
    %v3178 = vunpack.c.h.b16 %v1352
    %v3179 = vunpack.c.l.b16 %v1353
    %v3180 = vunpack.c.h.b16 %v1353
    %v3181 = vunpack.c.l.b16 %v1354
    %v3182 = vunpack.c.h.b16 %v1354
    %v3183 = vunpack.c.l.b16 %v1355
    %v3184 = vunpack.c.h.b16 %v1355
    %v3185 = vunpack.c.l.b16 %v1356
    %v3186 = vunpack.c.h.b16 %v1356
    %v3187 = vunpack.c.l.b16 %v1357
    %v3188 = vunpack.c.h.b16 %v1357
    %v3189 = vunpack.c.l.b16 %v1358
    %v3190 = vunpack.c.h.b16 %v1358
    %v3191 = vunpack.c.l.b16 %v1359
    %v3192 = vunpack.c.h.b16 %v1359
    %v3193 = vunpack.c.l.b16 %v1360
    %v3194 = vunpack.c.h.b16 %v1360
    %v3195 = vunpack.c.l.b16 %v1361
    %v3196 = vunpack.c.h.b16 %v1361
    %v3197 = vunpack.c.l.b16 %v1362
    %v3198 = vunpack.c.h.b16 %v1362
    %v3199 = vunpack.c.l.b16 %v1363
    %v3200 = vunpack.c.h.b16 %v1363
    %v3201 = vunpack.c.l.b16 %v1364
    %v3202 = vunpack.c.h.b16 %v1364
    %v3203 = vunpack.c.l.b16 %v1365
    %v3204 = vunpack.c.h.b16 %v1365
    %v3205 = vunpack.c.l.b16 %v1366
    %v3206 = vunpack.c.h.b16 %v1366
    %v3207 = vunpack.c.l.b16 %v1367
    %v3208 = vunpack.c.h.b16 %v1367
    %v3209 = vunpack.c.l.b16 %v1368
    %v3210 = vunpack.c.h.b16 %v1368
    %v3211 = vunpack.c.l.b16 %v1369
    %v3212 = vunpack.c.h.b16 %v1369
    %v3213 = vunpack.c.l.b16 %v1370
    %v3214 = vunpack.c.h.b16 %v1370
    %v3215 = vunpack.c.l.b16 %v1371
    %v3216 = vunpack.c.h.b16 %v1371
    %v3217 = vunpack.c.l.b16 %v1372
    %v3218 = vunpack.c.h.b16 %v1372
    %v3219 = vunpack.c.l.b16 %v1373
    %v3220 = vunpack.c.h.b16 %v1373
    %v3221 = vunpack.c.l.b16 %v1374
    %v3222 = vunpack.c.h.b16 %v1374
    %v3223 = vunpack.c.l.b16 %v1375
    %v3224 = vunpack.c.h.b16 %v1375
    %v3225 = vunpack.c.l.b16 %v1376
    %v3226 = vunpack.c.h.b16 %v1376
    %v3227 = vunpack.c.l.b16 %v1377
    %v3228 = vunpack.c.h.b16 %v1377
    %v3229 = vunpack.c.l.b16 %v1378
    %v3230 = vunpack.c.h.b16 %v1378
    %v3231 = vunpack.c.l.b16 %v1379
    %v3232 = vunpack.c.h.b16 %v1379
    %v3233 = vunpack.c.l.b16 %v1380
    %v3234 = vunpack.c.h.b16 %v1380
    %v3235 = vunpack.c.l.b16 %v1381
    %v3236 = vunpack.c.h.b16 %v1381
    %v3237 = vunpack.c.l.b16 %v1382
    %v3238 = vunpack.c.h.b16 %v1382
    %v3239 = vunpack.c.l.b16 %v1383
    %v3240 = vunpack.c.h.b16 %v1383
    %v3241 = vunpack.c.l.b16 %v1384
    %v3242 = vunpack.c.h.b16 %v1384
    %v3243 = vunpack.c.l.b16 %v1385
    %v3244 = vunpack.c.h.b16 %v1385
    %v3245 = vunpack.c.l.b16 %v1386
    %v3246 = vunpack.c.h.b16 %v1386
    %v3247 = vunpack.c.l.b16 %v1387
    %v3248 = vunpack.c.h.b16 %v1387
    %v3249 = vunpack.c.l.b16 %v1388
    %v3250 = vunpack.c.h.b16 %v1388
    %v3251 = vunpack.c.l.b16 %v1389
    %v3252 = vunpack.c.h.b16 %v1389
    %v3253 = vunpack.c.l.b16 %v1390
    %v3254 = vunpack.c.h.b16 %v1390
    %v3255 = vunpack.c.l.b16 %v1391
    %v3256 = vunpack.c.h.b16 %v1391
    %v3257 = vunpack.c.l.b16 %v1392
    %v3258 = vunpack.c.h.b16 %v1392
    %v3259 = vunpack.c.l.b16 %v1393
    %v3260 = vunpack.c.h.b16 %v1393
    %v3261 = vunpack.c.l.b16 %v1394
    %v3262 = vunpack.c.h.b16 %v1394
    %v3263 = vunpack.c.l.b16 %v1395
    %v3264 = vunpack.c.h.b16 %v1395
    %v3265 = vunpack.c.l.b16 %v1396
    %v3266 = vunpack.c.h.b16 %v1396
    %v3267 = vunpack.c.l.b16 %v1397
    %v3268 = vunpack.c.h.b16 %v1397
    %v3269 = vunpack.c.l.b16 %v1398
    %v3270 = vunpack.c.h.b16 %v1398
    %v3271 = vunpack.c.l.b16 %v1399
    %v3272 = vunpack.c.h.b16 %v1399
    %v3273 = vunpack.c.l.b16 %v1400
    %v3274 = vunpack.c.h.b16 %v1400
    %v3275 = vunpack.c.l.b16 %v1401
    %v3276 = vunpack.c.h.b16 %v1401
    %v3277 = vunpack.c.l.b16 %v1402
    %v3278 = vunpack.c.h.b16 %v1402
    %v3279 = vunpack.c.l.b16 %v1403
    %v3280 = vunpack.c.h.b16 %v1403
    %v3281 = vpack.c.b16 %v2999, %v2993
    %v3282 = vpack.c.b16 %v3000, %v2994
    %v3283 = vpack.c.b16 %v3001, %v2995
    %v3284 = vpack.c.b16 %v3002, %v2996
    %v3285 = vpack.c.b16 %v3003, %v2997
    %v3286 = vpack.c.b16 %v3004, %v2998
    %v3287 = vpack.c.b16 %v3011, %v3005
    %v3288 = vpack.c.b16 %v3012, %v3006
    %v3289 = vpack.c.b16 %v3013, %v3007
    %v3290 = vpack.c.b16 %v3014, %v3008
    %v3291 = vpack.c.b16 %v3015, %v3009
    %v3292 = vpack.c.b16 %v3016, %v3010
    %v3293 = vpack.c.b16 %v3023, %v3017
    %v3294 = vpack.c.b16 %v3024, %v3018
    %v3295 = vpack.c.b16 %v3025, %v3019
    %v3296 = vpack.c.b16 %v3026, %v3020
    %v3297 = vpack.c.b16 %v3027, %v3021
    %v3298 = vpack.c.b16 %v3028, %v3022
    %v3299 = vpack.c.b16 %v3035, %v3029
    %v3300 = vpack.c.b16 %v3036, %v3030
    %v3301 = vpack.c.b16 %v3037, %v3031
    %v3302 = vpack.c.b16 %v3038, %v3032
    %v3303 = vpack.c.b16 %v3039, %v3033
    %v3304 = vpack.c.b16 %v3040, %v3034
    %v3305 = vpack.c.b16 %v3047, %v3041
    %v3306 = vpack.c.b16 %v3048, %v3042
    %v3307 = vpack.c.b16 %v3049, %v3043
    %v3308 = vpack.c.b16 %v3050, %v3044
    %v3309 = vpack.c.b16 %v3051, %v3045
    %v3310 = vpack.c.b16 %v3052, %v3046
    %v3311 = vpack.c.b16 %v3059, %v3053
    %v3312 = vpack.c.b16 %v3060, %v3054
    %v3313 = vpack.c.b16 %v3061, %v3055
    %v3314 = vpack.c.b16 %v3062, %v3056
    %v3315 = vpack.c.b16 %v3063, %v3057
    %v3316 = vpack.c.b16 %v3064, %v3058
    %v3317 = vpack.c.b16 %v3071, %v3065
    %v3318 = vpack.c.b16 %v3072, %v3066
    %v3319 = vpack.c.b16 %v3073, %v3067
    %v3320 = vpack.c.b16 %v3074, %v3068
    %v3321 = vpack.c.b16 %v3075, %v3069
    %v3322 = vpack.c.b16 %v3076, %v3070
    %v3323 = vpack.c.b16 %v3083, %v3077
    %v3324 = vpack.c.b16 %v3084, %v3078
    %v3325 = vpack.c.b16 %v3085, %v3079
    %v3326 = vpack.c.b16 %v3086, %v3080
    %v3327 = vpack.c.b16 %v3087, %v3081
    %v3328 = vpack.c.b16 %v3088, %v3082
    %v3329 = vpack.c.b16 %v3095, %v3089
    %v3330 = vpack.c.b16 %v3096, %v3090
    %v3331 = vpack.c.b16 %v3097, %v3091
    %v3332 = vpack.c.b16 %v3098, %v3092
    %v3333 = vpack.c.b16 %v3099, %v3093
    %v3334 = vpack.c.b16 %v3100, %v3094
    %v3335 = vpack.c.b16 %v3107, %v3101
    %v3336 = vpack.c.b16 %v3108, %v3102
    %v3337 = vpack.c.b16 %v3109, %v3103
    %v3338 = vpack.c.b16 %v3110, %v3104
    %v3339 = vpack.c.b16 %v3111, %v3105
    %v3340 = vpack.c.b16 %v3112, %v3106
    %v3341 = vpack.c.b16 %v3119, %v3113
    %v3342 = vpack.c.b16 %v3120, %v3114
    %v3343 = vpack.c.b16 %v3121, %v3115
    %v3344 = vpack.c.b16 %v3122, %v3116
    %v3345 = vpack.c.b16 %v3123, %v3117
    %v3346 = vpack.c.b16 %v3124, %v3118
    %v3347 = vpack.c.b16 %v3131, %v3125
    %v3348 = vpack.c.b16 %v3132, %v3126
    %v3349 = vpack.c.b16 %v3133, %v3127
    %v3350 = vpack.c.b16 %v3134, %v3128
    %v3351 = vpack.c.b16 %v3135, %v3129
    %v3352 = vpack.c.b16 %v3136, %v3130
    %v3353 = vpack.c.b16 %v3143, %v3137
    %v3354 = vpack.c.b16 %v3144, %v3138
    %v3355 = vpack.c.b16 %v3145, %v3139
    %v3356 = vpack.c.b16 %v3146, %v3140
    %v3357 = vpack.c.b16 %v3147, %v3141
    %v3358 = vpack.c.b16 %v3148, %v3142
    %v3359 = vpack.c.b16 %v3155, %v3149
    %v3360 = vpack.c.b16 %v3156, %v3150
    %v3361 = vpack.c.b16 %v3157, %v3151
    %v3362 = vpack.c.b16 %v3158, %v3152
    %v3363 = vpack.c.b16 %v3159, %v3153
    %v3364 = vpack.c.b16 %v3160, %v3154
    %v3365 = vpack.c.b16 %v3167, %v3161
    %v3366 = vpack.c.b16 %v3168, %v3162
    %v3367 = vpack.c.b16 %v3169, %v3163
    %v3368 = vpack.c.b16 %v3170, %v3164
    %v3369 = vpack.c.b16 %v3171, %v3165
    %v3370 = vpack.c.b16 %v3172, %v3166
    %v3371 = vpack.c.b16 %v3179, %v3173
    %v3372 = vpack.c.b16 %v3180, %v3174
    %v3373 = vpack.c.b16 %v3181, %v3175
    %v3374 = vpack.c.b16 %v3182, %v3176
    %v3375 = vpack.c.b16 %v3183, %v3177
    %v3376 = vpack.c.b16 %v3184, %v3178
    %v3377 = vpack.c.b16 %v3191, %v3185
    %v3378 = vpack.c.b16 %v3192, %v3186
    %v3379 = vpack.c.b16 %v3193, %v3187
    %v3380 = vpack.c.b16 %v3194, %v3188
    %v3381 = vpack.c.b16 %v3195, %v3189
    %v3382 = vpack.c.b16 %v3196, %v3190
    %v3383 = vpack.c.b16 %v3203, %v3197
    %v3384 = vpack.c.b16 %v3204, %v3198
    %v3385 = vpack.c.b16 %v3205, %v3199
    %v3386 = vpack.c.b16 %v3206, %v3200
    %v3387 = vpack.c.b16 %v3207, %v3201
    %v3388 = vpack.c.b16 %v3208, %v3202
    %v3389 = vpack.c.b16 %v3215, %v3209
    %v3390 = vpack.c.b16 %v3216, %v3210
    %v3391 = vpack.c.b16 %v3217, %v3211
    %v3392 = vpack.c.b16 %v3218, %v3212
    %v3393 = vpack.c.b16 %v3219, %v3213
    %v3394 = vpack.c.b16 %v3220, %v3214
    %v3395 = vpack.c.b16 %v3227, %v3221
    %v3396 = vpack.c.b16 %v3228, %v3222
    %v3397 = vpack.c.b16 %v3229, %v3223
    %v3398 = vpack.c.b16 %v3230, %v3224
    %v3399 = vpack.c.b16 %v3231, %v3225
    %v3400 = vpack.c.b16 %v3232, %v3226
    %v3401 = vpack.c.b16 %v3239, %v3233
    %v3402 = vpack.c.b16 %v3240, %v3234
    %v3403 = vpack.c.b16 %v3241, %v3235
    %v3404 = vpack.c.b16 %v3242, %v3236
    %v3405 = vpack.c.b16 %v3243, %v3237
    %v3406 = vpack.c.b16 %v3244, %v3238
    %v3407 = vpack.c.b16 %v3251, %v3245
    %v3408 = vpack.c.b16 %v3252, %v3246
    %v3409 = vpack.c.b16 %v3253, %v3247
    %v3410 = vpack.c.b16 %v3254, %v3248
    %v3411 = vpack.c.b16 %v3255, %v3249
    %v3412 = vpack.c.b16 %v3256, %v3250
    %v3413 = vpack.c.b16 %v3263, %v3257
    %v3414 = vpack.c.b16 %v3264, %v3258
    %v3415 = vpack.c.b16 %v3265, %v3259
    %v3416 = vpack.c.b16 %v3266, %v3260
    %v3417 = vpack.c.b16 %v3267, %v3261
    %v3418 = vpack.c.b16 %v3268, %v3262
    %v3419 = vpack.c.b16 %v3275, %v3269
    %v3420 = vpack.c.b16 %v3276, %v3270
    %v3421 = vpack.c.b16 %v3277, %v3271
    %v3422 = vpack.c.b16 %v3278, %v3272
    %v3423 = vpack.c.b16 %v3279, %v3273
    %v3424 = vpack.c.b16 %v3280, %v3274
    %3569 = vmatprep.subr.bf16.mxu0 %v3282
    %3570 = vmatpush1.bf16.msra.mxu0 %v3281
    %3571 = vmatprep.subr.bf16.mxu0 %v3288
    %3572 = vmatpush1.bf16.msra.mxu0 %v3287
    %3573 = vmatprep.subr.bf16.mxu0 %v3294
    %3574 = vmatpush1.bf16.msra.mxu0 %v3293
    %3575 = vmatprep.subr.bf16.mxu0 %v3300
    %3576 = vmatpush1.bf16.msra.mxu0 %v3299
    %3577 = vmatprep.subr.bf16.mxu0 %v3306
    %3578 = vmatpush1.bf16.msra.mxu0 %v3305
    %3579 = vmatprep.subr.bf16.mxu0 %v3312
    %3580 = vmatpush1.bf16.msra.mxu0 %v3311
    %3581 = vmatprep.subr.bf16.mxu0 %v3318
    %3582 = vmatpush1.bf16.msra.mxu0 %v3317
    %3583 = vmatprep.subr.bf16.mxu0 %v3324
    %3584 = vmatpush1.bf16.msra.mxu0 %v3323
    %3585 = vmatprep.subr.bf16.mxu0 %v3330
    %3586 = vmatpush1.bf16.msra.mxu0 %v3329
    %3587 = vmatprep.subr.bf16.mxu0 %v3336
    %3588 = vmatpush1.bf16.msra.mxu0 %v3335
    %3589 = vmatprep.subr.bf16.mxu0 %v3342
    %3590 = vmatpush1.bf16.msra.mxu0 %v3341
    %3591 = vmatprep.subr.bf16.mxu0 %v3348
    %3592 = vmatpush1.bf16.msra.mxu0 %v3347
    %3593 = vmatprep.subr.bf16.mxu0 %v3354
    %3594 = vmatpush1.bf16.msra.mxu0 %v3353
    %3595 = vmatprep.subr.bf16.mxu0 %v3360
    %3596 = vmatpush1.bf16.msra.mxu0 %v3359
    %3597 = vmatprep.subr.bf16.mxu0 %v3366
    %3598 = vmatpush1.bf16.msra.mxu0 %v3365
    %3599 = vmatprep.subr.bf16.mxu0 %v3372
    %3600 = vmatpush1.bf16.msra.mxu0 %v3371
    %3601 = vmatprep.mubr.bf16.mxu0 %v2832
    %3602 = vmatmul.mubr.bf16.gmra.mrb[0].mxu0 %v2831
    %v3603 = vpop.f32.mrb[0].mxu0
    %v3604 = vadd.f32 %v2521, %v3603
    %v3605 = vpop.f32.mrb[0].mxu0
    %v3606 = vadd.f32 %v2523, %v3605
    %v3607 = vpop.f32.mrb[0].mxu0
    %v3608 = vadd.f32 %v2525, %v3607
    %v3609 = vpop.f32.mrb[0].mxu0
    %v3610 = vadd.f32 %v2527, %v3609
    %3611 = vmatprep.mubr.bf16.mxu0 %v2835
    %3612 = vmatmul.mubr.bf16.gmra.mrb[0].mxu0 %v2834
    %v3613 = vpop.f32.mrb[0].mxu0
    %v3614 = vadd.f32 %v2531, %v3613
    %v3615 = vpop.f32.mrb[0].mxu0
    %v3616 = vadd.f32 %v2533, %v3615
    %v3617 = vpop.f32.mrb[0].mxu0
    %v3618 = vadd.f32 %v2535, %v3617
    %v3619 = vpop.f32.mrb[0].mxu0
    %v3620 = vadd.f32 %v2537, %v3619
    %3621 = vmatprep.mubr.bf16.mxu0 %v2838
    %3622 = vmatmul.mubr.bf16.gmra.mrb[0].mxu0 %v2837
    %v3623 = vpop.f32.mrb[0].mxu0
    %v3624 = vadd.f32 %v2541, %v3623
    %v3625 = vpop.f32.mrb[0].mxu0
    %v3626 = vadd.f32 %v2543, %v3625
    %v3627 = vpop.f32.mrb[0].mxu0
    %v3628 = vadd.f32 %v2545, %v3627
    %v3629 = vpop.f32.mrb[0].mxu0
    %v3630 = vadd.f32 %v2547, %v3629
    %3631 = vdwg.mxu0
    %3632 = vmatprep.subr.bf16.mxu0 %v3378
    %3633 = vmatpush1.bf16.msra.mxu0 %v3377
    %3634 = vmatprep.subr.bf16.mxu0 %v3384
    %3635 = vmatpush1.bf16.msra.mxu0 %v3383
    %3636 = vmatprep.subr.bf16.mxu0 %v3390
    %3637 = vmatpush1.bf16.msra.mxu0 %v3389
    %3638 = vmatprep.subr.bf16.mxu0 %v3396
    %3639 = vmatpush1.bf16.msra.mxu0 %v3395
    %3640 = vmatprep.subr.bf16.mxu0 %v3402
    %3641 = vmatpush1.bf16.msra.mxu0 %v3401
    %3642 = vmatprep.subr.bf16.mxu0 %v3408
    %3643 = vmatpush1.bf16.msra.mxu0 %v3407
    %3644 = vmatprep.subr.bf16.mxu0 %v3414
    %3645 = vmatpush1.bf16.msra.mxu0 %v3413
    %3646 = vmatprep.subr.bf16.mxu0 %v3420
    %3647 = vmatpush1.bf16.msra.mxu0 %v3419
    %3648 = vmatprep.subr.bf16.mxu0 0
    %3649 = vmatpush1.bf16.msra.mxu0 0
    %3650 = vmatprep.subr.bf16.mxu0 0
    %3651 = vmatpush1.bf16.msra.mxu0 0
    %3652 = vmatprep.subr.bf16.mxu0 0
    %3653 = vmatpush1.bf16.msra.mxu0 0
    %3654 = vmatprep.subr.bf16.mxu0 0
    %3655 = vmatpush1.bf16.msra.mxu0 0
    %3656 = vmatprep.subr.bf16.mxu0 0
    %3657 = vmatpush1.bf16.msra.mxu0 0
    %3658 = vmatprep.subr.bf16.mxu0 0
    %3659 = vmatpush1.bf16.msra.mxu0 0
    %3660 = vmatprep.subr.bf16.mxu0 0
    %3661 = vmatpush1.bf16.msra.mxu0 0
    %3662 = vmatprep.subr.bf16.mxu0 0
    %3663 = vmatpush1.bf16.msra.mxu0 0
    %3664 = vmatprep.mubr.bf16.mxu0 0
    %3665 = vmatmul.mubr.bf16.gmra.mrb[0].mxu0 %v2833
    %v3666 = vpop.f32.mrb[0].mxu0
    %v3667 = vadd.f32 %v3604, %v3666
    %v3668 = vpop.f32.mrb[0].mxu0
    %v3669 = vadd.f32 %v3606, %v3668
    %v3670 = vpop.f32.mrb[0].mxu0
    %v3671 = vadd.f32 %v3608, %v3670
    %v3672 = vpop.f32.mrb[0].mxu0
    %v3673 = vadd.f32 %v3610, %v3672
    %3674 = vmatprep.mubr.bf16.mxu0 0
    %3675 = vmatmul.mubr.bf16.gmra.mrb[0].mxu0 %v2836
    %v3676 = vpop.f32.mrb[0].mxu0
    %v3677 = vadd.f32 %v3614, %v3676
    %v3678 = vpop.f32.mrb[0].mxu0
    %v3679 = vadd.f32 %v3616, %v3678
    %v3680 = vpop.f32.mrb[0].mxu0
    %v3681 = vadd.f32 %v3618, %v3680
    %v3682 = vpop.f32.mrb[0].mxu0
    %v3683 = vadd.f32 %v3620, %v3682
    %3684 = vmatprep.mubr.bf16.mxu0 0
    %3685 = vmatmul.mubr.bf16.gmra.mrb[0].mxu0 %v2839
    %v3686 = vpop.f32.mrb[0].mxu0
    %v3687 = vadd.f32 %v3624, %v3686
    %v3688 = vpop.f32.mrb[0].mxu0
    %v3689 = vadd.f32 %v3626, %v3688
    %v3690 = vpop.f32.mrb[0].mxu0
    %v3691 = vadd.f32 %v3628, %v3690
    %v3692 = vpop.f32.mrb[0].mxu0
    %v3693 = vadd.f32 %v3630, %v3692
    %3694 = vdwg.mxu0
    %3695 = vmatprep.subr.bf16.mxu0 %v3284
    %3696 = vmatpush1.bf16.msra.mxu0 %v3283
    %3697 = vmatprep.subr.bf16.mxu0 %v3290
    %3698 = vmatpush1.bf16.msra.mxu0 %v3289
    %3699 = vmatprep.subr.bf16.mxu0 %v3296
    %3700 = vmatpush1.bf16.msra.mxu0 %v3295
    %3701 = vmatprep.subr.bf16.mxu0 %v3302
    %3702 = vmatpush1.bf16.msra.mxu0 %v3301
    %3703 = vmatprep.subr.bf16.mxu0 %v3308
    %3704 = vmatpush1.bf16.msra.mxu0 %v3307
    %3705 = vmatprep.subr.bf16.mxu0 %v3314
    %3706 = vmatpush1.bf16.msra.mxu0 %v3313
    %3707 = vmatprep.subr.bf16.mxu0 %v3320
    %3708 = vmatpush1.bf16.msra.mxu0 %v3319
    %3709 = vmatprep.subr.bf16.mxu0 %v3326
    %3710 = vmatpush1.bf16.msra.mxu0 %v3325
    %3711 = vmatprep.subr.bf16.mxu0 %v3332
    %3712 = vmatpush1.bf16.msra.mxu0 %v3331
    %3713 = vmatprep.subr.bf16.mxu0 %v3338
    %3714 = vmatpush1.bf16.msra.mxu0 %v3337
    %3715 = vmatprep.subr.bf16.mxu0 %v3344
    %3716 = vmatpush1.bf16.msra.mxu0 %v3343
    %3717 = vmatprep.subr.bf16.mxu0 %v3350
    %3718 = vmatpush1.bf16.msra.mxu0 %v3349
    %3719 = vmatprep.subr.bf16.mxu0 %v3356
    %3720 = vmatpush1.bf16.msra.mxu0 %v3355
    %3721 = vmatprep.subr.bf16.mxu0 %v3362
    %3722 = vmatpush1.bf16.msra.mxu0 %v3361
    %3723 = vmatprep.subr.bf16.mxu0 %v3368
    %3724 = vmatpush1.bf16.msra.mxu0 %v3367
    %3725 = vmatprep.subr.bf16.mxu0 %v3374
    %3726 = vmatpush1.bf16.msra.mxu0 %v3373
    %3727 = vmatprep.mubr.bf16.mxu0 %v2832
    %3728 = vmatmul.mubr.bf16.gmra.mrb[0].mxu0 %v2831
    %v3729 = vpop.f32.mrb[0].mxu0
    %v3730 = vadd.f32 %v2647, %v3729
    %v3731 = vpop.f32.mrb[0].mxu0
    %v3732 = vadd.f32 %v2649, %v3731
    %v3733 = vpop.f32.mrb[0].mxu0
    %v3734 = vadd.f32 %v2651, %v3733
    %v3735 = vpop.f32.mrb[0].mxu0
    %v3736 = vadd.f32 %v2653, %v3735
    %3737 = vmatprep.mubr.bf16.mxu0 %v2835
    %3738 = vmatmul.mubr.bf16.gmra.mrb[0].mxu0 %v2834
    %v3739 = vpop.f32.mrb[0].mxu0
    %v3740 = vadd.f32 %v2657, %v3739
    %v3741 = vpop.f32.mrb[0].mxu0
    %v3742 = vadd.f32 %v2659, %v3741
    %v3743 = vpop.f32.mrb[0].mxu0
    %v3744 = vadd.f32 %v2661, %v3743
    %v3745 = vpop.f32.mrb[0].mxu0
    %v3746 = vadd.f32 %v2663, %v3745
    %3747 = vmatprep.mubr.bf16.mxu0 %v2838
    %3748 = vmatmul.mubr.bf16.gmra.mrb[0].mxu0 %v2837
    %v3749 = vpop.f32.mrb[0].mxu0
    %v3750 = vadd.f32 %v2667, %v3749
    %v3751 = vpop.f32.mrb[0].mxu0
    %v3752 = vadd.f32 %v2669, %v3751
    %v3753 = vpop.f32.mrb[0].mxu0
    %v3754 = vadd.f32 %v2671, %v3753
    %v3755 = vpop.f32.mrb[0].mxu0
    %v3756 = vadd.f32 %v2673, %v3755
    %3757 = vdwg.mxu0
    %3758 = vmatprep.subr.bf16.mxu0 %v3380
    %3759 = vmatpush1.bf16.msra.mxu0 %v3379
    %3760 = vmatprep.subr.bf16.mxu0 %v3386
    %3761 = vmatpush1.bf16.msra.mxu0 %v3385
    %3762 = vmatprep.subr.bf16.mxu0 %v3392
    %3763 = vmatpush1.bf16.msra.mxu0 %v3391
    %3764 = vmatprep.subr.bf16.mxu0 %v3398
    %3765 = vmatpush1.bf16.msra.mxu0 %v3397
    %3766 = vmatprep.subr.bf16.mxu0 %v3404
    %3767 = vmatpush1.bf16.msra.mxu0 %v3403
    %3768 = vmatprep.subr.bf16.mxu0 %v3410
    %3769 = vmatpush1.bf16.msra.mxu0 %v3409
    %3770 = vmatprep.subr.bf16.mxu0 %v3416
    %3771 = vmatpush1.bf16.msra.mxu0 %v3415
    %3772 = vmatprep.subr.bf16.mxu0 %v3422
    %3773 = vmatpush1.bf16.msra.mxu0 %v3421
    %3774 = vmatprep.subr.bf16.mxu0 0
    %3775 = vmatpush1.bf16.msra.mxu0 0
    %3776 = vmatprep.subr.bf16.mxu0 0
    %3777 = vmatpush1.bf16.msra.mxu0 0
    %3778 = vmatprep.subr.bf16.mxu0 0
    %3779 = vmatpush1.bf16.msra.mxu0 0
    %3780 = vmatprep.subr.bf16.mxu0 0
    %3781 = vmatpush1.bf16.msra.mxu0 0
    %3782 = vmatprep.subr.bf16.mxu0 0
    %3783 = vmatpush1.bf16.msra.mxu0 0
    %3784 = vmatprep.subr.bf16.mxu0 0
    %3785 = vmatpush1.bf16.msra.mxu0 0
    %3786 = vmatprep.subr.bf16.mxu0 0
    %3787 = vmatpush1.bf16.msra.mxu0 0
    %3788 = vmatprep.subr.bf16.mxu0 0
    %3789 = vmatpush1.bf16.msra.mxu0 0
    %3790 = vmatprep.mubr.bf16.mxu0 0
    %3791 = vmatmul.mubr.bf16.gmra.mrb[0].mxu0 %v2833
    %v3792 = vpop.f32.mrb[0].mxu0
    %v3793 = vadd.f32 %v3730, %v3792
    %v3794 = vpop.f32.mrb[0].mxu0
    %v3795 = vadd.f32 %v3732, %v3794
    %v3796 = vpop.f32.mrb[0].mxu0
    %v3797 = vadd.f32 %v3734, %v3796
    %v3798 = vpop.f32.mrb[0].mxu0
    %v3799 = vadd.f32 %v3736, %v3798
    %3800 = vmatprep.mubr.bf16.mxu0 0
    %3801 = vmatmul.mubr.bf16.gmra.mrb[0].mxu0 %v2836
    %v3802 = vpop.f32.mrb[0].mxu0
    %v3803 = vadd.f32 %v3740, %v3802
    %v3804 = vpop.f32.mrb[0].mxu0
    %v3805 = vadd.f32 %v3742, %v3804
    %v3806 = vpop.f32.mrb[0].mxu0
    %v3807 = vadd.f32 %v3744, %v3806
    %v3808 = vpop.f32.mrb[0].mxu0
    %v3809 = vadd.f32 %v3746, %v3808
    %3810 = vmatprep.mubr.bf16.mxu0 0
    %3811 = vmatmul.mubr.bf16.gmra.mrb[0].mxu0 %v2839
    %v3812 = vpop.f32.mrb[0].mxu0
    %v3813 = vadd.f32 %v3750, %v3812
    %v3814 = vpop.f32.mrb[0].mxu0
    %v3815 = vadd.f32 %v3752, %v3814
    %v3816 = vpop.f32.mrb[0].mxu0
    %v3817 = vadd.f32 %v3754, %v3816
    %v3818 = vpop.f32.mrb[0].mxu0
    %v3819 = vadd.f32 %v3756, %v3818
    %3820 = vdwg.mxu0
    %3821 = vmatprep.subr.bf16.mxu0 %v3286
    %3822 = vmatpush1.bf16.msra.mxu0 %v3285
    %3823 = vmatprep.subr.bf16.mxu0 %v3292
    %3824 = vmatpush1.bf16.msra.mxu0 %v3291
    %3825 = vmatprep.subr.bf16.mxu0 %v3298
    %3826 = vmatpush1.bf16.msra.mxu0 %v3297
    %3827 = vmatprep.subr.bf16.mxu0 %v3304
    %3828 = vmatpush1.bf16.msra.mxu0 %v3303
    %3829 = vmatprep.subr.bf16.mxu0 %v3310
    %3830 = vmatpush1.bf16.msra.mxu0 %v3309
    %3831 = vmatprep.subr.bf16.mxu0 %v3316
    %3832 = vmatpush1.bf16.msra.mxu0 %v3315
    %3833 = vmatprep.subr.bf16.mxu0 %v3322
    %3834 = vmatpush1.bf16.msra.mxu0 %v3321
    %3835 = vmatprep.subr.bf16.mxu0 %v3328
    %3836 = vmatpush1.bf16.msra.mxu0 %v3327
    %3837 = vmatprep.subr.bf16.mxu0 %v3334
    %3838 = vmatpush1.bf16.msra.mxu0 %v3333
    %3839 = vmatprep.subr.bf16.mxu0 %v3340
    %3840 = vmatpush1.bf16.msra.mxu0 %v3339
    %3841 = vmatprep.subr.bf16.mxu0 %v3346
    %3842 = vmatpush1.bf16.msra.mxu0 %v3345
    %3843 = vmatprep.subr.bf16.mxu0 %v3352
    %3844 = vmatpush1.bf16.msra.mxu0 %v3351
    %3845 = vmatprep.subr.bf16.mxu0 %v3358
    %3846 = vmatpush1.bf16.msra.mxu0 %v3357
    %3847 = vmatprep.subr.bf16.mxu0 %v3364
    %3848 = vmatpush1.bf16.msra.mxu0 %v3363
    %3849 = vmatprep.subr.bf16.mxu0 %v3370
    %3850 = vmatpush1.bf16.msra.mxu0 %v3369
    %3851 = vmatprep.subr.bf16.mxu0 %v3376
    %3852 = vmatpush1.bf16.msra.mxu0 %v3375
    %3853 = vmatprep.mubr.bf16.mxu0 %v2832
    %3854 = vmatmul.mubr.bf16.gmra.mrb[0].mxu0 %v2831
    %v3855 = vpop.f32.mrb[0].mxu0
    %v3856 = vadd.f32 %v2773, %v3855
    %v3857 = vpop.f32.mrb[0].mxu0
    %v3858 = vadd.f32 %v2775, %v3857
    %v3859 = vpop.f32.mrb[0].mxu0
    %v3860 = vadd.f32 %v2777, %v3859
    %v3861 = vpop.f32.mrb[0].mxu0
    %v3862 = vadd.f32 %v2779, %v3861
    %3863 = vmatprep.mubr.bf16.mxu0 %v2835
    %3864 = vmatmul.mubr.bf16.gmra.mrb[0].mxu0 %v2834
    %v3865 = vpop.f32.mrb[0].mxu0
    %v3866 = vadd.f32 %v2783, %v3865
    %v3867 = vpop.f32.mrb[0].mxu0
    %v3868 = vadd.f32 %v2785, %v3867
    %v3869 = vpop.f32.mrb[0].mxu0
    %v3870 = vadd.f32 %v2787, %v3869
    %v3871 = vpop.f32.mrb[0].mxu0
    %v3872 = vadd.f32 %v2789, %v3871
    %3873 = vmatprep.mubr.bf16.mxu0 %v2838
    %3874 = vmatmul.mubr.bf16.gmra.mrb[0].mxu0 %v2837
    %v3875 = vpop.f32.mrb[0].mxu0
    %v3876 = vadd.f32 %v2793, %v3875
    %v3877 = vpop.f32.mrb[0].mxu0
    %v3878 = vadd.f32 %v2795, %v3877
    %v3879 = vpop.f32.mrb[0].mxu0
    %v3880 = vadd.f32 %v2797, %v3879
    %v3881 = vpop.f32.mrb[0].mxu0
    %v3882 = vadd.f32 %v2799, %v3881
    %3883 = vdwg.mxu0
    %3884 = vmatprep.subr.bf16.mxu0 %v3382
    %3885 = vmatpush1.bf16.msra.mxu0 %v3381
    %3886 = vmatprep.subr.bf16.mxu0 %v3388
    %3887 = vmatpush1.bf16.msra.mxu0 %v3387
    %3888 = vmatprep.subr.bf16.mxu0 %v3394
    %3889 = vmatpush1.bf16.msra.mxu0 %v3393
    %3890 = vmatprep.subr.bf16.mxu0 %v3400
    %3891 = vmatpush1.bf16.msra.mxu0 %v3399
    %3892 = vmatprep.subr.bf16.mxu0 %v3406
    %3893 = vmatpush1.bf16.msra.mxu0 %v3405
    %3894 = vmatprep.subr.bf16.mxu0 %v3412
    %3895 = vmatpush1.bf16.msra.mxu0 %v3411
    %3896 = vmatprep.subr.bf16.mxu0 %v3418
    %3897 = vmatpush1.bf16.msra.mxu0 %v3417
    %3898 = vmatprep.subr.bf16.mxu0 %v3424
    %3899 = vmatpush1.bf16.msra.mxu0 %v3423
    %3900 = vmatprep.subr.bf16.mxu0 0
    %3901 = vmatpush1.bf16.msra.mxu0 0
    %3902 = vmatprep.subr.bf16.mxu0 0
    %3903 = vmatpush1.bf16.msra.mxu0 0
    %3904 = vmatprep.subr.bf16.mxu0 0
    %3905 = vmatpush1.bf16.msra.mxu0 0
    %3906 = vmatprep.subr.bf16.mxu0 0
    %3907 = vmatpush1.bf16.msra.mxu0 0
    %3908 = vmatprep.subr.bf16.mxu0 0
    %3909 = vmatpush1.bf16.msra.mxu0 0
    %3910 = vmatprep.subr.bf16.mxu0 0
    %3911 = vmatpush1.bf16.msra.mxu0 0
    %3912 = vmatprep.subr.bf16.mxu0 0
    %3913 = vmatpush1.bf16.msra.mxu0 0
    %3914 = vmatprep.subr.bf16.mxu0 0
    %3915 = vmatpush1.bf16.msra.mxu0 0
    %3916 = vmatprep.mubr.bf16.mxu0 0
    %3917 = vmatmul.mubr.bf16.gmra.mrb[0].mxu0 %v2833
    %v3918 = vpop.f32.mrb[0].mxu0
    %v3919 = vadd.f32 %v3856, %v3918
    %v3920 = vpop.f32.mrb[0].mxu0
    %v3921 = vadd.f32 %v3858, %v3920
    %v3922 = vpop.f32.mrb[0].mxu0
    %v3923 = vadd.f32 %v3860, %v3922
    %v3924 = vpop.f32.mrb[0].mxu0
    %v3925 = vadd.f32 %v3862, %v3924
    %3926 = vmatprep.mubr.bf16.mxu0 0
    %3927 = vmatmul.mubr.bf16.gmra.mrb[0].mxu0 %v2836
    %v3928 = vpop.f32.mrb[0].mxu0
    %v3929 = vadd.f32 %v3866, %v3928
    %v3930 = vpop.f32.mrb[0].mxu0
    %v3931 = vadd.f32 %v3868, %v3930
    %v3932 = vpop.f32.mrb[0].mxu0
    %v3933 = vadd.f32 %v3870, %v3932
    %v3934 = vpop.f32.mrb[0].mxu0
    %v3935 = vadd.f32 %v3872, %v3934
    %3936 = vmatprep.mubr.bf16.mxu0 0
    %3937 = vmatmul.mubr.bf16.gmra.mrb[0].mxu0 %v2839
    %v3938 = vpop.f32.mrb[0].mxu0
    %v3939 = vadd.f32 %v3876, %v3938
    %v3940 = vpop.f32.mrb[0].mxu0
    %v3941 = vadd.f32 %v3878, %v3940
    %v3942 = vpop.f32.mrb[0].mxu0
    %v3943 = vadd.f32 %v3880, %v3942
    %v3944 = vpop.f32.mrb[0].mxu0
    %v3945 = vadd.f32 %v3882, %v3944
    %3946 = vdwg.mxu0
    %v3947 = vld [vmem:[%s0] sm:$0xee]
    %v3948 = vld [vmem:[%s0 + $0x8] sm:$0xe]
    %s3949 = scalar_lea.vmem [#allocation10], 2304
    %v3950 = vld [vmem:[%s3949] sm:$0xff]
    %v3951 = vld [vmem:[%s3949 + $0x8] sm:$0xff]
    %v3952 = vld [vmem:[%s3949 + $0x10] sm:$0xff]
    %v3953 = vld [vmem:[%s3949 + $0x18] sm:$0xff]
    %v3954 = vld [vmem:[%s3949 + $0x20] sm:$0xff]
    %v3955 = vld [vmem:[%s3949 + $0x28] sm:$0xff]
    %v3956 = vld [vmem:[%s3949 + $0x30] sm:$0xff]
    %v3957 = vld [vmem:[%s3949 + $0x38] sm:$0xff]
    %v3958 = vld [vmem:[%s3949 + $0x40] sm:$0xff]
    %v3959 = vld [vmem:[%s3949 + $0x48] sm:$0xff]
    %v3960 = vld [vmem:[%s3949 + $0x50] sm:$0xff]
    %v3961 = vld [vmem:[%s3949 + $0x58] sm:$0xff]
    %v3962 = vld [vmem:[%s3949 + $0x60] sm:$0xff]
    %v3963 = vld [vmem:[%s3949 + $0x68] sm:$0xff]
    %v3964 = vld [vmem:[%s3949 + $0x70] sm:$0xff]
    %v3965 = vld [vmem:[%s3949 + $0x78] sm:$0xff]
    %v3966 = vld [vmem:[%s3949 + $0x80] sm:$0xff]
    %v3967 = vld [vmem:[%s3949 + $0x88] sm:$0xff]
    %v3968 = vld [vmem:[%s3949 + $0x90] sm:$0xff]
    %v3969 = vld [vmem:[%s3949 + $0x98] sm:$0xff]
    %v3970 = vld [vmem:[%s3949 + $0xa0] sm:$0xff]
    %v3971 = vld [vmem:[%s3949 + $0xa8] sm:$0xff]
    %v3972 = vld [vmem:[%s3949 + $0xb0] sm:$0xff]
    %v3973 = vld [vmem:[%s3949 + $0xb8] sm:$0xff]
    %v3974 = vld [vmem:[%s3949 + $0xc0] sm:$0xff]
    %v3975 = vld [vmem:[%s3949 + $0xc8] sm:$0xff]
    %v3976 = vld [vmem:[%s3949 + $0xd0] sm:$0xff]
    %v3977 = vld [vmem:[%s3949 + $0xd8] sm:$0xff]
    %v3978 = vld [vmem:[%s3949 + $0xe0] sm:$0xff]
    %v3979 = vld [vmem:[%s3949 + $0xe8] sm:$0xff]
    %v3980 = vld [vmem:[%s3949 + $0xf0] sm:$0xff]
    %v3981 = vld [vmem:[%s3949 + $0xf8] sm:$0xff]
    %v3982 = vld [vmem:[%s3949 + $0x100] sm:$0xff]
    %v3983 = vld [vmem:[%s3949 + $0x108] sm:$0xff]
    %v3984 = vld [vmem:[%s3949 + $0x110] sm:$0xff]
    %v3985 = vld [vmem:[%s3949 + $0x118] sm:$0xff]
    %v3986 = vld [vmem:[%s3949 + $0x120] sm:$0xff]
    %v3987 = vld [vmem:[%s3949 + $0x128] sm:$0xff]
    %v3988 = vld [vmem:[%s3949 + $0x130] sm:$0xff]
    %v3989 = vld [vmem:[%s3949 + $0x138] sm:$0xff]
    %v3990 = vld [vmem:[%s3949 + $0x140] sm:$0xff]
    %v3991 = vld [vmem:[%s3949 + $0x148] sm:$0xff]
    %v3992 = vld [vmem:[%s3949 + $0x150] sm:$0xff]
    %v3993 = vld [vmem:[%s3949 + $0x158] sm:$0xff]
    %v3994 = vld [vmem:[%s3949 + $0x160] sm:$0xff]
    %v3995 = vld [vmem:[%s3949 + $0x168] sm:$0xff]
    %v3996 = vld [vmem:[%s3949 + $0x170] sm:$0xff]
    %v3997 = vld [vmem:[%s3949 + $0x178] sm:$0xff]
    %v3998 = vld [vmem:[%s3949 + $0x180] sm:$0xff]
    %v3999 = vld [vmem:[%s3949 + $0x188] sm:$0xff]
    %v4000 = vld [vmem:[%s3949 + $0x190] sm:$0xff]
    %v4001 = vld [vmem:[%s3949 + $0x198] sm:$0xff]
    %v4002 = vld [vmem:[%s3949 + $0x1a0] sm:$0xff]
    %v4003 = vld [vmem:[%s3949 + $0x1a8] sm:$0xff]
    %v4004 = vld [vmem:[%s3949 + $0x1b0] sm:$0xff]
    %v4005 = vld [vmem:[%s3949 + $0x1b8] sm:$0xff]
    %v4006 = vld [vmem:[%s3949 + $0x1c0] sm:$0xff]
    %v4007 = vld [vmem:[%s3949 + $0x1c8] sm:$0xff]
    %v4008 = vld [vmem:[%s3949 + $0x1d0] sm:$0xff]
    %v4009 = vld [vmem:[%s3949 + $0x1d8] sm:$0xff]
    %v4010 = vld [vmem:[%s3949 + $0x1e0] sm:$0xff]
    %v4011 = vld [vmem:[%s3949 + $0x1e8] sm:$0xff]
    %v4012 = vld [vmem:[%s3949 + $0x1f0] sm:$0xff]
    %v4013 = vld [vmem:[%s3949 + $0x1f8] sm:$0xff]
    %v4014 = vld [vmem:[%s3949 + $0x200] sm:$0xff]
    %v4015 = vld [vmem:[%s3949 + $0x208] sm:$0xff]
    %v4016 = vld [vmem:[%s3949 + $0x210] sm:$0xff]
    %v4017 = vld [vmem:[%s3949 + $0x218] sm:$0xff]
    %v4018 = vld [vmem:[%s3949 + $0x220] sm:$0xff]
    %v4019 = vld [vmem:[%s3949 + $0x228] sm:$0xff]
    %v4020 = vld [vmem:[%s3949 + $0x230] sm:$0xff]
    %v4021 = vld [vmem:[%s3949 + $0x238] sm:$0xff]
    %v4022 = vld [vmem:[%s3949 + $0x240] sm:$0xff]
    %v4023 = vld [vmem:[%s3949 + $0x248] sm:$0xff]
    %v4024 = vld [vmem:[%s3949 + $0x250] sm:$0xff]
    %v4025 = vld [vmem:[%s3949 + $0x258] sm:$0xff]
    %v4026 = vld [vmem:[%s3949 + $0x260] sm:$0xff]
    %v4027 = vld [vmem:[%s3949 + $0x268] sm:$0xff]
    %v4028 = vld [vmem:[%s3949 + $0x270] sm:$0xff]
    %v4029 = vld [vmem:[%s3949 + $0x278] sm:$0xff]
    %v4030 = vld [vmem:[%s3949 + $0x280] sm:$0xff]
    %v4031 = vld [vmem:[%s3949 + $0x288] sm:$0xff]
    %v4032 = vld [vmem:[%s3949 + $0x290] sm:$0xff]
    %v4033 = vld [vmem:[%s3949 + $0x298] sm:$0xff]
    %v4034 = vld [vmem:[%s3949 + $0x2a0] sm:$0xff]
    %v4035 = vld [vmem:[%s3949 + $0x2a8] sm:$0xff]
    %v4036 = vld [vmem:[%s3949 + $0x2b0] sm:$0xff]
    %v4037 = vld [vmem:[%s3949 + $0x2b8] sm:$0xff]
    %v4038 = vld [vmem:[%s3949 + $0x2c0] sm:$0xff]
    %v4039 = vld [vmem:[%s3949 + $0x2c8] sm:$0xff]
    %v4040 = vld [vmem:[%s3949 + $0x2d0] sm:$0xff]
    %v4041 = vld [vmem:[%s3949 + $0x2d8] sm:$0xff]
    %v4042 = vld [vmem:[%s3949 + $0x2e0] sm:$0xff]
    %v4043 = vld [vmem:[%s3949 + $0x2e8] sm:$0xff]
    %v4044 = vld [vmem:[%s3949 + $0x2f0] sm:$0xff]
    %v4045 = vld [vmem:[%s3949 + $0x2f8] sm:$0xff]
    %v4046 = vld [vmem:[%s3949 + $0x300] sm:$0xff]
    %v4047 = vld [vmem:[%s3949 + $0x308] sm:$0xff]
    %v4048 = vld [vmem:[%s3949 + $0x310] sm:$0xff]
    %v4049 = vld [vmem:[%s3949 + $0x318] sm:$0xff]
    %v4050 = vld [vmem:[%s3949 + $0x320] sm:$0xff]
    %v4051 = vld [vmem:[%s3949 + $0x328] sm:$0xff]
    %v4052 = vld [vmem:[%s3949 + $0x330] sm:$0xff]
    %v4053 = vld [vmem:[%s3949 + $0x338] sm:$0xff]
    %v4054 = vld [vmem:[%s3949 + $0x340] sm:$0xff]
    %v4055 = vld [vmem:[%s3949 + $0x348] sm:$0xff]
    %v4056 = vld [vmem:[%s3949 + $0x350] sm:$0xff]
    %v4057 = vld [vmem:[%s3949 + $0x358] sm:$0xff]
    %v4058 = vld [vmem:[%s3949 + $0x360] sm:$0xff]
    %v4059 = vld [vmem:[%s3949 + $0x368] sm:$0xff]
    %v4060 = vld [vmem:[%s3949 + $0x370] sm:$0xff]
    %v4061 = vld [vmem:[%s3949 + $0x378] sm:$0xff]
    %v4062 = vld [vmem:[%s3949 + $0x380] sm:$0xff]
    %v4063 = vld [vmem:[%s3949 + $0x388] sm:$0xff]
    %v4064 = vld [vmem:[%s3949 + $0x390] sm:$0xff]
    %v4065 = vld [vmem:[%s3949 + $0x398] sm:$0xff]
    %v4066 = vld [vmem:[%s3949 + $0x3a0] sm:$0xff]
    %v4067 = vld [vmem:[%s3949 + $0x3a8] sm:$0xff]
    %v4068 = vld [vmem:[%s3949 + $0x3b0] sm:$0xff]
    %v4069 = vld [vmem:[%s3949 + $0x3b8] sm:$0xff]
    %v4070 = vld [vmem:[%s3949 + $0x3c0] sm:$0xff]
    %v4071 = vld [vmem:[%s3949 + $0x3c8] sm:$0xff]
    %v4072 = vld [vmem:[%s3949 + $0x3d0] sm:$0xff]
    %v4073 = vld [vmem:[%s3949 + $0x3d8] sm:$0xff]
    %v4074 = vld [vmem:[%s3949 + $0x3e0] sm:$0xff]
    %v4075 = vld [vmem:[%s3949 + $0x3e8] sm:$0xff]
    %v4076 = vld [vmem:[%s3949 + $0x3f0] sm:$0xff]
    %v4077 = vld [vmem:[%s3949 + $0x3f8] sm:$0xff]
    %v4078 = vld [vmem:[%s3949 + $0x400] sm:$0xff]
    %v4079 = vld [vmem:[%s3949 + $0x408] sm:$0xff]
    %v4080 = vld [vmem:[%s3949 + $0x410] sm:$0xff]
    %v4081 = vld [vmem:[%s3949 + $0x418] sm:$0xff]
    %v4082 = vld [vmem:[%s3949 + $0x420] sm:$0xff]
    %v4083 = vld [vmem:[%s3949 + $0x428] sm:$0xff]
    %v4084 = vld [vmem:[%s3949 + $0x430] sm:$0xff]
    %v4085 = vld [vmem:[%s3949 + $0x438] sm:$0xff]
    %v4086 = vld [vmem:[%s3949 + $0x440] sm:$0xff]
    %v4087 = vld [vmem:[%s3949 + $0x448] sm:$0xff]
    %v4088 = vld [vmem:[%s3949 + $0x450] sm:$0xff]
    %v4089 = vld [vmem:[%s3949 + $0x458] sm:$0xff]
    %v4090 = vld [vmem:[%s3949 + $0x460] sm:$0xff]
    %v4091 = vld [vmem:[%s3949 + $0x468] sm:$0xff]
    %v4092 = vld [vmem:[%s3949 + $0x470] sm:$0xff]
    %v4093 = vld [vmem:[%s3949 + $0x478] sm:$0xff]
    %v4096 = vunpack.c.l.b16 %v3947
    %v4097 = vunpack.c.h.b16 %v3947
    %v4098 = vunpack.c.l.b16 %v3948
    %v4099 = vpack.c.b16 %v1580, %v4096
    %v4100 = vpack.c.b16 %v1581, %v4097
    %v4101 = vpack.c.b16 %v1582, %v4098
    %v4102 = vrot.slane %v4099, 1
    %v4103 = vrot.slane %v1601, 1
    %v4104 = vsel %vm833, %v4102, %v4103
    %v4105 = vrot.slane %v4100, 1
    %v4106 = vrot.slane %v1602, 1
    %v4107 = vsel %vm833, %v4105, %v4106
    %v4108 = vrot.slane %v4101, 1
    %v4109 = vrot.slane %v1603, 1
    %v4110 = vsel %vm833, %v4108, %v4109
    %v4111 = vrot.slane %v1604, 1
    %v4112 = vsel %vm833, %v4103, %v4111
    %v4113 = vrot.slane %v1605, 1
    %v4114 = vsel %vm833, %v4106, %v4113
    %v4115 = vrot.slane %v1606, 1
    %v4116 = vsel %vm833, %v4109, %v4115
    %v4117 = vrot.slane %v1607, 1
    %v4118 = vsel %vm833, %v4111, %v4117
    %v4119 = vrot.slane %v1608, 1
    %v4120 = vsel %vm833, %v4113, %v4119
    %v4121 = vrot.slane %v1609, 1
    %v4122 = vsel %vm833, %v4115, %v4121
    %v4276 = vunpack.c.l.b16 %v3950
    %v4277 = vunpack.c.h.b16 %v3950
    %v4278 = vunpack.c.l.b16 %v3951
    %v4279 = vunpack.c.h.b16 %v3951
    %v4280 = vunpack.c.l.b16 %v3952
    %v4281 = vunpack.c.h.b16 %v3952
    %v4282 = vunpack.c.l.b16 %v3953
    %v4283 = vunpack.c.h.b16 %v3953
    %v4284 = vunpack.c.l.b16 %v3954
    %v4285 = vunpack.c.h.b16 %v3954
    %v4286 = vunpack.c.l.b16 %v3955
    %v4287 = vunpack.c.h.b16 %v3955
    %v4288 = vunpack.c.l.b16 %v3956
    %v4289 = vunpack.c.h.b16 %v3956
    %v4290 = vunpack.c.l.b16 %v3957
    %v4291 = vunpack.c.h.b16 %v3957
    %v4292 = vunpack.c.l.b16 %v3958
    %v4293 = vunpack.c.h.b16 %v3958
    %v4294 = vunpack.c.l.b16 %v3959
    %v4295 = vunpack.c.h.b16 %v3959
    %v4296 = vunpack.c.l.b16 %v3960
    %v4297 = vunpack.c.h.b16 %v3960
    %v4298 = vunpack.c.l.b16 %v3961
    %v4299 = vunpack.c.h.b16 %v3961
    %v4300 = vunpack.c.l.b16 %v3962
    %v4301 = vunpack.c.h.b16 %v3962
    %v4302 = vunpack.c.l.b16 %v3963
    %v4303 = vunpack.c.h.b16 %v3963
    %v4304 = vunpack.c.l.b16 %v3964
    %v4305 = vunpack.c.h.b16 %v3964
    %v4306 = vunpack.c.l.b16 %v3965
    %v4307 = vunpack.c.h.b16 %v3965
    %v4308 = vunpack.c.l.b16 %v3966
    %v4309 = vunpack.c.h.b16 %v3966
    %v4310 = vunpack.c.l.b16 %v3967
    %v4311 = vunpack.c.h.b16 %v3967
    %v4312 = vunpack.c.l.b16 %v3968
    %v4313 = vunpack.c.h.b16 %v3968
    %v4314 = vunpack.c.l.b16 %v3969
    %v4315 = vunpack.c.h.b16 %v3969
    %v4316 = vunpack.c.l.b16 %v3970
    %v4317 = vunpack.c.h.b16 %v3970
    %v4318 = vunpack.c.l.b16 %v3971
    %v4319 = vunpack.c.h.b16 %v3971
    %v4320 = vunpack.c.l.b16 %v3972
    %v4321 = vunpack.c.h.b16 %v3972
    %v4322 = vunpack.c.l.b16 %v3973
    %v4323 = vunpack.c.h.b16 %v3973
    %v4324 = vunpack.c.l.b16 %v3974
    %v4325 = vunpack.c.h.b16 %v3974
    %v4326 = vunpack.c.l.b16 %v3975
    %v4327 = vunpack.c.h.b16 %v3975
    %v4328 = vunpack.c.l.b16 %v3976
    %v4329 = vunpack.c.h.b16 %v3976
    %v4330 = vunpack.c.l.b16 %v3977
    %v4331 = vunpack.c.h.b16 %v3977
    %v4332 = vunpack.c.l.b16 %v3978
    %v4333 = vunpack.c.h.b16 %v3978
    %v4334 = vunpack.c.l.b16 %v3979
    %v4335 = vunpack.c.h.b16 %v3979
    %v4336 = vunpack.c.l.b16 %v3980
    %v4337 = vunpack.c.h.b16 %v3980
    %v4338 = vunpack.c.l.b16 %v3981
    %v4339 = vunpack.c.h.b16 %v3981
    %v4340 = vunpack.c.l.b16 %v3982
    %v4341 = vunpack.c.h.b16 %v3982
    %v4342 = vunpack.c.l.b16 %v3983
    %v4343 = vunpack.c.h.b16 %v3983
    %v4344 = vunpack.c.l.b16 %v3984
    %v4345 = vunpack.c.h.b16 %v3984
    %v4346 = vunpack.c.l.b16 %v3985
    %v4347 = vunpack.c.h.b16 %v3985
    %v4348 = vunpack.c.l.b16 %v3986
    %v4349 = vunpack.c.h.b16 %v3986
    %v4350 = vunpack.c.l.b16 %v3987
    %v4351 = vunpack.c.h.b16 %v3987
    %v4352 = vunpack.c.l.b16 %v3988
    %v4353 = vunpack.c.h.b16 %v3988
    %v4354 = vunpack.c.l.b16 %v3989
    %v4355 = vunpack.c.h.b16 %v3989
    %v4356 = vunpack.c.l.b16 %v3990
    %v4357 = vunpack.c.h.b16 %v3990
    %v4358 = vunpack.c.l.b16 %v3991
    %v4359 = vunpack.c.h.b16 %v3991
    %v4360 = vunpack.c.l.b16 %v3992
    %v4361 = vunpack.c.h.b16 %v3992
    %v4362 = vunpack.c.l.b16 %v3993
    %v4363 = vunpack.c.h.b16 %v3993
    %v4364 = vunpack.c.l.b16 %v3994
    %v4365 = vunpack.c.h.b16 %v3994
    %v4366 = vunpack.c.l.b16 %v3995
    %v4367 = vunpack.c.h.b16 %v3995
    %v4368 = vunpack.c.l.b16 %v3996
    %v4369 = vunpack.c.h.b16 %v3996
    %v4370 = vunpack.c.l.b16 %v3997
    %v4371 = vunpack.c.h.b16 %v3997
    %v4372 = vunpack.c.l.b16 %v3998
    %v4373 = vunpack.c.h.b16 %v3998
    %v4374 = vunpack.c.l.b16 %v3999
    %v4375 = vunpack.c.h.b16 %v3999
    %v4376 = vunpack.c.l.b16 %v4000
    %v4377 = vunpack.c.h.b16 %v4000
    %v4378 = vunpack.c.l.b16 %v4001
    %v4379 = vunpack.c.h.b16 %v4001
    %v4380 = vunpack.c.l.b16 %v4002
    %v4381 = vunpack.c.h.b16 %v4002
    %v4382 = vunpack.c.l.b16 %v4003
    %v4383 = vunpack.c.h.b16 %v4003
    %v4384 = vunpack.c.l.b16 %v4004
    %v4385 = vunpack.c.h.b16 %v4004
    %v4386 = vunpack.c.l.b16 %v4005
    %v4387 = vunpack.c.h.b16 %v4005
    %v4388 = vunpack.c.l.b16 %v4006
    %v4389 = vunpack.c.h.b16 %v4006
    %v4390 = vunpack.c.l.b16 %v4007
    %v4391 = vunpack.c.h.b16 %v4007
    %v4392 = vunpack.c.l.b16 %v4008
    %v4393 = vunpack.c.h.b16 %v4008
    %v4394 = vunpack.c.l.b16 %v4009
    %v4395 = vunpack.c.h.b16 %v4009
    %v4396 = vunpack.c.l.b16 %v4010
    %v4397 = vunpack.c.h.b16 %v4010
    %v4398 = vunpack.c.l.b16 %v4011
    %v4399 = vunpack.c.h.b16 %v4011
    %v4400 = vunpack.c.l.b16 %v4012
    %v4401 = vunpack.c.h.b16 %v4012
    %v4402 = vunpack.c.l.b16 %v4013
    %v4403 = vunpack.c.h.b16 %v4013
    %v4404 = vunpack.c.l.b16 %v4014
    %v4405 = vunpack.c.h.b16 %v4014
    %v4406 = vunpack.c.l.b16 %v4015
    %v4407 = vunpack.c.h.b16 %v4015
    %v4408 = vunpack.c.l.b16 %v4016
    %v4409 = vunpack.c.h.b16 %v4016
    %v4410 = vunpack.c.l.b16 %v4017
    %v4411 = vunpack.c.h.b16 %v4017
    %v4412 = vunpack.c.l.b16 %v4018
    %v4413 = vunpack.c.h.b16 %v4018
    %v4414 = vunpack.c.l.b16 %v4019
    %v4415 = vunpack.c.h.b16 %v4019
    %v4416 = vunpack.c.l.b16 %v4020
    %v4417 = vunpack.c.h.b16 %v4020
    %v4418 = vunpack.c.l.b16 %v4021
    %v4419 = vunpack.c.h.b16 %v4021
    %v4420 = vunpack.c.l.b16 %v4022
    %v4421 = vunpack.c.h.b16 %v4022
    %v4422 = vunpack.c.l.b16 %v4023
    %v4423 = vunpack.c.h.b16 %v4023
    %v4424 = vunpack.c.l.b16 %v4024
    %v4425 = vunpack.c.h.b16 %v4024
    %v4426 = vunpack.c.l.b16 %v4025
    %v4427 = vunpack.c.h.b16 %v4025
    %v4428 = vunpack.c.l.b16 %v4026
    %v4429 = vunpack.c.h.b16 %v4026
    %v4430 = vunpack.c.l.b16 %v4027
    %v4431 = vunpack.c.h.b16 %v4027
    %v4432 = vunpack.c.l.b16 %v4028
    %v4433 = vunpack.c.h.b16 %v4028
    %v4434 = vunpack.c.l.b16 %v4029
    %v4435 = vunpack.c.h.b16 %v4029
    %v4436 = vunpack.c.l.b16 %v4030
    %v4437 = vunpack.c.h.b16 %v4030
    %v4438 = vunpack.c.l.b16 %v4031
    %v4439 = vunpack.c.h.b16 %v4031
    %v4440 = vunpack.c.l.b16 %v4032
    %v4441 = vunpack.c.h.b16 %v4032
    %v4442 = vunpack.c.l.b16 %v4033
    %v4443 = vunpack.c.h.b16 %v4033
    %v4444 = vunpack.c.l.b16 %v4034
    %v4445 = vunpack.c.h.b16 %v4034
    %v4446 = vunpack.c.l.b16 %v4035
    %v4447 = vunpack.c.h.b16 %v4035
    %v4448 = vunpack.c.l.b16 %v4036
    %v4449 = vunpack.c.h.b16 %v4036
    %v4450 = vunpack.c.l.b16 %v4037
    %v4451 = vunpack.c.h.b16 %v4037
    %v4452 = vunpack.c.l.b16 %v4038
    %v4453 = vunpack.c.h.b16 %v4038
    %v4454 = vunpack.c.l.b16 %v4039
    %v4455 = vunpack.c.h.b16 %v4039
    %v4456 = vunpack.c.l.b16 %v4040
    %v4457 = vunpack.c.h.b16 %v4040
    %v4458 = vunpack.c.l.b16 %v4041
    %v4459 = vunpack.c.h.b16 %v4041
    %v4460 = vunpack.c.l.b16 %v4042
    %v4461 = vunpack.c.h.b16 %v4042
    %v4462 = vunpack.c.l.b16 %v4043
    %v4463 = vunpack.c.h.b16 %v4043
    %v4464 = vunpack.c.l.b16 %v4044
    %v4465 = vunpack.c.h.b16 %v4044
    %v4466 = vunpack.c.l.b16 %v4045
    %v4467 = vunpack.c.h.b16 %v4045
    %v4468 = vunpack.c.l.b16 %v4046
    %v4469 = vunpack.c.h.b16 %v4046
    %v4470 = vunpack.c.l.b16 %v4047
    %v4471 = vunpack.c.h.b16 %v4047
    %v4472 = vunpack.c.l.b16 %v4048
    %v4473 = vunpack.c.h.b16 %v4048
    %v4474 = vunpack.c.l.b16 %v4049
    %v4475 = vunpack.c.h.b16 %v4049
    %v4476 = vunpack.c.l.b16 %v4050
    %v4477 = vunpack.c.h.b16 %v4050
    %v4478 = vunpack.c.l.b16 %v4051
    %v4479 = vunpack.c.h.b16 %v4051
    %v4480 = vunpack.c.l.b16 %v4052
    %v4481 = vunpack.c.h.b16 %v4052
    %v4482 = vunpack.c.l.b16 %v4053
    %v4483 = vunpack.c.h.b16 %v4053
    %v4484 = vunpack.c.l.b16 %v4054
    %v4485 = vunpack.c.h.b16 %v4054
    %v4486 = vunpack.c.l.b16 %v4055
    %v4487 = vunpack.c.h.b16 %v4055
    %v4488 = vunpack.c.l.b16 %v4056
    %v4489 = vunpack.c.h.b16 %v4056
    %v4490 = vunpack.c.l.b16 %v4057
    %v4491 = vunpack.c.h.b16 %v4057
    %v4492 = vunpack.c.l.b16 %v4058
    %v4493 = vunpack.c.h.b16 %v4058
    %v4494 = vunpack.c.l.b16 %v4059
    %v4495 = vunpack.c.h.b16 %v4059
    %v4496 = vunpack.c.l.b16 %v4060
    %v4497 = vunpack.c.h.b16 %v4060
    %v4498 = vunpack.c.l.b16 %v4061
    %v4499 = vunpack.c.h.b16 %v4061
    %v4500 = vunpack.c.l.b16 %v4062
    %v4501 = vunpack.c.h.b16 %v4062
    %v4502 = vunpack.c.l.b16 %v4063
    %v4503 = vunpack.c.h.b16 %v4063
    %v4504 = vunpack.c.l.b16 %v4064
    %v4505 = vunpack.c.h.b16 %v4064
    %v4506 = vunpack.c.l.b16 %v4065
    %v4507 = vunpack.c.h.b16 %v4065
    %v4508 = vunpack.c.l.b16 %v4066
    %v4509 = vunpack.c.h.b16 %v4066
    %v4510 = vunpack.c.l.b16 %v4067
    %v4511 = vunpack.c.h.b16 %v4067
    %v4512 = vunpack.c.l.b16 %v4068
    %v4513 = vunpack.c.h.b16 %v4068
    %v4514 = vunpack.c.l.b16 %v4069
    %v4515 = vunpack.c.h.b16 %v4069
    %v4516 = vunpack.c.l.b16 %v4070
    %v4517 = vunpack.c.h.b16 %v4070
    %v4518 = vunpack.c.l.b16 %v4071
    %v4519 = vunpack.c.h.b16 %v4071
    %v4520 = vunpack.c.l.b16 %v4072
    %v4521 = vunpack.c.h.b16 %v4072
    %v4522 = vunpack.c.l.b16 %v4073
    %v4523 = vunpack.c.h.b16 %v4073
    %v4524 = vunpack.c.l.b16 %v4074
    %v4525 = vunpack.c.h.b16 %v4074
    %v4526 = vunpack.c.l.b16 %v4075
    %v4527 = vunpack.c.h.b16 %v4075
    %v4528 = vunpack.c.l.b16 %v4076
    %v4529 = vunpack.c.h.b16 %v4076
    %v4530 = vunpack.c.l.b16 %v4077
    %v4531 = vunpack.c.h.b16 %v4077
    %v4532 = vunpack.c.l.b16 %v4078
    %v4533 = vunpack.c.h.b16 %v4078
    %v4534 = vunpack.c.l.b16 %v4079
    %v4535 = vunpack.c.h.b16 %v4079
    %v4536 = vunpack.c.l.b16 %v4080
    %v4537 = vunpack.c.h.b16 %v4080
    %v4538 = vunpack.c.l.b16 %v4081
    %v4539 = vunpack.c.h.b16 %v4081
    %v4540 = vunpack.c.l.b16 %v4082
    %v4541 = vunpack.c.h.b16 %v4082
    %v4542 = vunpack.c.l.b16 %v4083
    %v4543 = vunpack.c.h.b16 %v4083
    %v4544 = vunpack.c.l.b16 %v4084
    %v4545 = vunpack.c.h.b16 %v4084
    %v4546 = vunpack.c.l.b16 %v4085
    %v4547 = vunpack.c.h.b16 %v4085
    %v4548 = vunpack.c.l.b16 %v4086
    %v4549 = vunpack.c.h.b16 %v4086
    %v4550 = vunpack.c.l.b16 %v4087
    %v4551 = vunpack.c.h.b16 %v4087
    %v4552 = vunpack.c.l.b16 %v4088
    %v4553 = vunpack.c.h.b16 %v4088
    %v4554 = vunpack.c.l.b16 %v4089
    %v4555 = vunpack.c.h.b16 %v4089
    %v4556 = vunpack.c.l.b16 %v4090
    %v4557 = vunpack.c.h.b16 %v4090
    %v4558 = vunpack.c.l.b16 %v4091
    %v4559 = vunpack.c.h.b16 %v4091
    %v4560 = vunpack.c.l.b16 %v4092
    %v4561 = vunpack.c.h.b16 %v4092
    %v4562 = vunpack.c.l.b16 %v4093
    %v4563 = vunpack.c.h.b16 %v4093
    %v4564 = vpack.c.b16 %v4282, %v4276
    %v4565 = vpack.c.b16 %v4283, %v4277
    %v4566 = vpack.c.b16 %v4284, %v4278
    %v4567 = vpack.c.b16 %v4285, %v4279
    %v4568 = vpack.c.b16 %v4286, %v4280
    %v4569 = vpack.c.b16 %v4287, %v4281
    %v4570 = vpack.c.b16 %v4294, %v4288
    %v4571 = vpack.c.b16 %v4295, %v4289
    %v4572 = vpack.c.b16 %v4296, %v4290
    %v4573 = vpack.c.b16 %v4297, %v4291
    %v4574 = vpack.c.b16 %v4298, %v4292
    %v4575 = vpack.c.b16 %v4299, %v4293
    %v4576 = vpack.c.b16 %v4306, %v4300
    %v4577 = vpack.c.b16 %v4307, %v4301
    %v4578 = vpack.c.b16 %v4308, %v4302
    %v4579 = vpack.c.b16 %v4309, %v4303
    %v4580 = vpack.c.b16 %v4310, %v4304
    %v4581 = vpack.c.b16 %v4311, %v4305
    %v4582 = vpack.c.b16 %v4318, %v4312
    %v4583 = vpack.c.b16 %v4319, %v4313
    %v4584 = vpack.c.b16 %v4320, %v4314
    %v4585 = vpack.c.b16 %v4321, %v4315
    %v4586 = vpack.c.b16 %v4322, %v4316
    %v4587 = vpack.c.b16 %v4323, %v4317
    %v4588 = vpack.c.b16 %v4330, %v4324
    %v4589 = vpack.c.b16 %v4331, %v4325
    %v4590 = vpack.c.b16 %v4332, %v4326
    %v4591 = vpack.c.b16 %v4333, %v4327
    %v4592 = vpack.c.b16 %v4334, %v4328
    %v4593 = vpack.c.b16 %v4335, %v4329
    %v4594 = vpack.c.b16 %v4342, %v4336
    %v4595 = vpack.c.b16 %v4343, %v4337
    %v4596 = vpack.c.b16 %v4344, %v4338
    %v4597 = vpack.c.b16 %v4345, %v4339
    %v4598 = vpack.c.b16 %v4346, %v4340
    %v4599 = vpack.c.b16 %v4347, %v4341
    %v4600 = vpack.c.b16 %v4354, %v4348
    %v4601 = vpack.c.b16 %v4355, %v4349
    %v4602 = vpack.c.b16 %v4356, %v4350
    %v4603 = vpack.c.b16 %v4357, %v4351
    %v4604 = vpack.c.b16 %v4358, %v4352
    %v4605 = vpack.c.b16 %v4359, %v4353
    %v4606 = vpack.c.b16 %v4366, %v4360
    %v4607 = vpack.c.b16 %v4367, %v4361
    %v4608 = vpack.c.b16 %v4368, %v4362
    %v4609 = vpack.c.b16 %v4369, %v4363
    %v4610 = vpack.c.b16 %v4370, %v4364
    %v4611 = vpack.c.b16 %v4371, %v4365
    %v4612 = vpack.c.b16 %v4378, %v4372
    %v4613 = vpack.c.b16 %v4379, %v4373
    %v4614 = vpack.c.b16 %v4380, %v4374
    %v4615 = vpack.c.b16 %v4381, %v4375
    %v4616 = vpack.c.b16 %v4382, %v4376
    %v4617 = vpack.c.b16 %v4383, %v4377
    %v4618 = vpack.c.b16 %v4390, %v4384
    %v4619 = vpack.c.b16 %v4391, %v4385
    %v4620 = vpack.c.b16 %v4392, %v4386
    %v4621 = vpack.c.b16 %v4393, %v4387
    %v4622 = vpack.c.b16 %v4394, %v4388
    %v4623 = vpack.c.b16 %v4395, %v4389
    %v4624 = vpack.c.b16 %v4402, %v4396
    %v4625 = vpack.c.b16 %v4403, %v4397
    %v4626 = vpack.c.b16 %v4404, %v4398
    %v4627 = vpack.c.b16 %v4405, %v4399
    %v4628 = vpack.c.b16 %v4406, %v4400
    %v4629 = vpack.c.b16 %v4407, %v4401
    %v4630 = vpack.c.b16 %v4414, %v4408
    %v4631 = vpack.c.b16 %v4415, %v4409
    %v4632 = vpack.c.b16 %v4416, %v4410
    %v4633 = vpack.c.b16 %v4417, %v4411
    %v4634 = vpack.c.b16 %v4418, %v4412
    %v4635 = vpack.c.b16 %v4419, %v4413
    %v4636 = vpack.c.b16 %v4426, %v4420
    %v4637 = vpack.c.b16 %v4427, %v4421
    %v4638 = vpack.c.b16 %v4428, %v4422
    %v4639 = vpack.c.b16 %v4429, %v4423
    %v4640 = vpack.c.b16 %v4430, %v4424
    %v4641 = vpack.c.b16 %v4431, %v4425
    %v4642 = vpack.c.b16 %v4438, %v4432
    %v4643 = vpack.c.b16 %v4439, %v4433
    %v4644 = vpack.c.b16 %v4440, %v4434
    %v4645 = vpack.c.b16 %v4441, %v4435
    %v4646 = vpack.c.b16 %v4442, %v4436
    %v4647 = vpack.c.b16 %v4443, %v4437
    %v4648 = vpack.c.b16 %v4450, %v4444
    %v4649 = vpack.c.b16 %v4451, %v4445
    %v4650 = vpack.c.b16 %v4452, %v4446
    %v4651 = vpack.c.b16 %v4453, %v4447
    %v4652 = vpack.c.b16 %v4454, %v4448
    %v4653 = vpack.c.b16 %v4455, %v4449
    %v4654 = vpack.c.b16 %v4462, %v4456
    %v4655 = vpack.c.b16 %v4463, %v4457
    %v4656 = vpack.c.b16 %v4464, %v4458
    %v4657 = vpack.c.b16 %v4465, %v4459
    %v4658 = vpack.c.b16 %v4466, %v4460
    %v4659 = vpack.c.b16 %v4467, %v4461
    %v4660 = vpack.c.b16 %v4474, %v4468
    %v4661 = vpack.c.b16 %v4475, %v4469
    %v4662 = vpack.c.b16 %v4476, %v4470
    %v4663 = vpack.c.b16 %v4477, %v4471
    %v4664 = vpack.c.b16 %v4478, %v4472
    %v4665 = vpack.c.b16 %v4479, %v4473
    %v4666 = vpack.c.b16 %v4486, %v4480
    %v4667 = vpack.c.b16 %v4487, %v4481
    %v4668 = vpack.c.b16 %v4488, %v4482
    %v4669 = vpack.c.b16 %v4489, %v4483
    %v4670 = vpack.c.b16 %v4490, %v4484
    %v4671 = vpack.c.b16 %v4491, %v4485
    %v4672 = vpack.c.b16 %v4498, %v4492
    %v4673 = vpack.c.b16 %v4499, %v4493
    %v4674 = vpack.c.b16 %v4500, %v4494
    %v4675 = vpack.c.b16 %v4501, %v4495
    %v4676 = vpack.c.b16 %v4502, %v4496
    %v4677 = vpack.c.b16 %v4503, %v4497
    %v4678 = vpack.c.b16 %v4510, %v4504
    %v4679 = vpack.c.b16 %v4511, %v4505
    %v4680 = vpack.c.b16 %v4512, %v4506
    %v4681 = vpack.c.b16 %v4513, %v4507
    %v4682 = vpack.c.b16 %v4514, %v4508
    %v4683 = vpack.c.b16 %v4515, %v4509
    %v4684 = vpack.c.b16 %v4522, %v4516
    %v4685 = vpack.c.b16 %v4523, %v4517
    %v4686 = vpack.c.b16 %v4524, %v4518
    %v4687 = vpack.c.b16 %v4525, %v4519
    %v4688 = vpack.c.b16 %v4526, %v4520
    %v4689 = vpack.c.b16 %v4527, %v4521
    %v4690 = vpack.c.b16 %v4534, %v4528
    %v4691 = vpack.c.b16 %v4535, %v4529
    %v4692 = vpack.c.b16 %v4536, %v4530
    %v4693 = vpack.c.b16 %v4537, %v4531
    %v4694 = vpack.c.b16 %v4538, %v4532
    %v4695 = vpack.c.b16 %v4539, %v4533
    %v4696 = vpack.c.b16 %v4546, %v4540
    %v4697 = vpack.c.b16 %v4547, %v4541
    %v4698 = vpack.c.b16 %v4548, %v4542
    %v4699 = vpack.c.b16 %v4549, %v4543
    %v4700 = vpack.c.b16 %v4550, %v4544
    %v4701 = vpack.c.b16 %v4551, %v4545
    %v4702 = vpack.c.b16 %v4558, %v4552
    %v4703 = vpack.c.b16 %v4559, %v4553
    %v4704 = vpack.c.b16 %v4560, %v4554
    %v4705 = vpack.c.b16 %v4561, %v4555
    %v4706 = vpack.c.b16 %v4562, %v4556
    %v4707 = vpack.c.b16 %v4563, %v4557
    %4852 = vmatprep.subr.bf16.mxu0 %v4565
    %4853 = vmatpush1.bf16.msra.mxu0 %v4564
    %4854 = vmatprep.subr.bf16.mxu0 %v4571
    %4855 = vmatpush1.bf16.msra.mxu0 %v4570
    %4856 = vmatprep.subr.bf16.mxu0 %v4577
    %4857 = vmatpush1.bf16.msra.mxu0 %v4576
    %4858 = vmatprep.subr.bf16.mxu0 %v4583
    %4859 = vmatpush1.bf16.msra.mxu0 %v4582
    %4860 = vmatprep.subr.bf16.mxu0 %v4589
    %4861 = vmatpush1.bf16.msra.mxu0 %v4588
    %4862 = vmatprep.subr.bf16.mxu0 %v4595
    %4863 = vmatpush1.bf16.msra.mxu0 %v4594
    %4864 = vmatprep.subr.bf16.mxu0 %v4601
    %4865 = vmatpush1.bf16.msra.mxu0 %v4600
    %4866 = vmatprep.subr.bf16.mxu0 %v4607
    %4867 = vmatpush1.bf16.msra.mxu0 %v4606
    %4868 = vmatprep.subr.bf16.mxu0 %v4613
    %4869 = vmatpush1.bf16.msra.mxu0 %v4612
    %4870 = vmatprep.subr.bf16.mxu0 %v4619
    %4871 = vmatpush1.bf16.msra.mxu0 %v4618
    %4872 = vmatprep.subr.bf16.mxu0 %v4625
    %4873 = vmatpush1.bf16.msra.mxu0 %v4624
    %4874 = vmatprep.subr.bf16.mxu0 %v4631
    %4875 = vmatpush1.bf16.msra.mxu0 %v4630
    %4876 = vmatprep.subr.bf16.mxu0 %v4637
    %4877 = vmatpush1.bf16.msra.mxu0 %v4636
    %4878 = vmatprep.subr.bf16.mxu0 %v4643
    %4879 = vmatpush1.bf16.msra.mxu0 %v4642
    %4880 = vmatprep.subr.bf16.mxu0 %v4649
    %4881 = vmatpush1.bf16.msra.mxu0 %v4648
    %4882 = vmatprep.subr.bf16.mxu0 %v4655
    %4883 = vmatpush1.bf16.msra.mxu0 %v4654
    %4884 = vmatprep.mubr.bf16.mxu0 %v4107
    %4885 = vmatmul.mubr.bf16.gmra.mrb[0].mxu0 %v4104
    %v4886 = vpop.f32.mrb[0].mxu0
    %v4887 = vadd.f32 0.0, %v4886
    %v4888 = vpop.f32.mrb[0].mxu0
    %v4889 = vadd.f32 0.0, %v4888
    %v4890 = vpop.f32.mrb[0].mxu0
    %v4891 = vadd.f32 0.0, %v4890
    %v4892 = vpop.f32.mrb[0].mxu0
    %v4893 = vadd.f32 0.0, %v4892
    %4894 = vmatprep.mubr.bf16.mxu0 %v4114
    %4895 = vmatmul.mubr.bf16.gmra.mrb[0].mxu0 %v4112
    %v4896 = vpop.f32.mrb[0].mxu0
    %v4897 = vadd.f32 0.0, %v4896
    %v4898 = vpop.f32.mrb[0].mxu0
    %v4899 = vadd.f32 0.0, %v4898
    %v4900 = vpop.f32.mrb[0].mxu0
    %v4901 = vadd.f32 0.0, %v4900
    %v4902 = vpop.f32.mrb[0].mxu0
    %v4903 = vadd.f32 0.0, %v4902
    %4904 = vmatprep.mubr.bf16.mxu0 %v4120
    %4905 = vmatmul.mubr.bf16.gmra.mrb[0].mxu0 %v4118
    %v4906 = vpop.f32.mrb[0].mxu0
    %v4907 = vadd.f32 0.0, %v4906
    %v4908 = vpop.f32.mrb[0].mxu0
    %v4909 = vadd.f32 0.0, %v4908
    %v4910 = vpop.f32.mrb[0].mxu0
    %v4911 = vadd.f32 0.0, %v4910
    %v4912 = vpop.f32.mrb[0].mxu0
    %v4913 = vadd.f32 0.0, %v4912
    %4914 = vdwg.mxu0
    %4915 = vmatprep.subr.bf16.mxu0 %v4661
    %4916 = vmatpush1.bf16.msra.mxu0 %v4660
    %4917 = vmatprep.subr.bf16.mxu0 %v4667
    %4918 = vmatpush1.bf16.msra.mxu0 %v4666
    %4919 = vmatprep.subr.bf16.mxu0 %v4673
    %4920 = vmatpush1.bf16.msra.mxu0 %v4672
    %4921 = vmatprep.subr.bf16.mxu0 %v4679
    %4922 = vmatpush1.bf16.msra.mxu0 %v4678
    %4923 = vmatprep.subr.bf16.mxu0 %v4685
    %4924 = vmatpush1.bf16.msra.mxu0 %v4684
    %4925 = vmatprep.subr.bf16.mxu0 %v4691
    %4926 = vmatpush1.bf16.msra.mxu0 %v4690
    %4927 = vmatprep.subr.bf16.mxu0 %v4697
    %4928 = vmatpush1.bf16.msra.mxu0 %v4696
    %4929 = vmatprep.subr.bf16.mxu0 %v4703
    %4930 = vmatpush1.bf16.msra.mxu0 %v4702
    %4931 = vmatprep.subr.bf16.mxu0 0
    %4932 = vmatpush1.bf16.msra.mxu0 0
    %4933 = vmatprep.subr.bf16.mxu0 0
    %4934 = vmatpush1.bf16.msra.mxu0 0
    %4935 = vmatprep.subr.bf16.mxu0 0
    %4936 = vmatpush1.bf16.msra.mxu0 0
    %4937 = vmatprep.subr.bf16.mxu0 0
    %4938 = vmatpush1.bf16.msra.mxu0 0
    %4939 = vmatprep.subr.bf16.mxu0 0
    %4940 = vmatpush1.bf16.msra.mxu0 0
    %4941 = vmatprep.subr.bf16.mxu0 0
    %4942 = vmatpush1.bf16.msra.mxu0 0
    %4943 = vmatprep.subr.bf16.mxu0 0
    %4944 = vmatpush1.bf16.msra.mxu0 0
    %4945 = vmatprep.subr.bf16.mxu0 0
    %4946 = vmatpush1.bf16.msra.mxu0 0
    %4947 = vmatprep.mubr.bf16.mxu0 0
    %4948 = vmatmul.mubr.bf16.gmra.mrb[0].mxu0 %v4110
    %v4949 = vpop.f32.mrb[0].mxu0
    %v4950 = vadd.f32 %v4887, %v4949
    %v4951 = vpop.f32.mrb[0].mxu0
    %v4952 = vadd.f32 %v4889, %v4951
    %v4953 = vpop.f32.mrb[0].mxu0
    %v4954 = vadd.f32 %v4891, %v4953
    %v4955 = vpop.f32.mrb[0].mxu0
    %v4956 = vadd.f32 %v4893, %v4955
    %4957 = vmatprep.mubr.bf16.mxu0 0
    %4958 = vmatmul.mubr.bf16.gmra.mrb[0].mxu0 %v4116
    %v4959 = vpop.f32.mrb[0].mxu0
    %v4960 = vadd.f32 %v4897, %v4959
    %v4961 = vpop.f32.mrb[0].mxu0
    %v4962 = vadd.f32 %v4899, %v4961
    %v4963 = vpop.f32.mrb[0].mxu0
    %v4964 = vadd.f32 %v4901, %v4963
    %v4965 = vpop.f32.mrb[0].mxu0
    %v4966 = vadd.f32 %v4903, %v4965
    %4967 = vmatprep.mubr.bf16.mxu0 0
    %4968 = vmatmul.mubr.bf16.gmra.mrb[0].mxu0 %v4122
    %v4969 = vpop.f32.mrb[0].mxu0
    %v4970 = vadd.f32 %v4907, %v4969
    %v4971 = vpop.f32.mrb[0].mxu0
    %v4972 = vadd.f32 %v4909, %v4971
    %v4973 = vpop.f32.mrb[0].mxu0
    %v4974 = vadd.f32 %v4911, %v4973
    %v4975 = vpop.f32.mrb[0].mxu0
    %v4976 = vadd.f32 %v4913, %v4975
    %4977 = vdwg.mxu0
    %4978 = vmatprep.subr.bf16.mxu0 %v4567
    %4979 = vmatpush1.bf16.msra.mxu0 %v4566
    %4980 = vmatprep.subr.bf16.mxu0 %v4573
    %4981 = vmatpush1.bf16.msra.mxu0 %v4572
    %4982 = vmatprep.subr.bf16.mxu0 %v4579
    %4983 = vmatpush1.bf16.msra.mxu0 %v4578
    %4984 = vmatprep.subr.bf16.mxu0 %v4585
    %4985 = vmatpush1.bf16.msra.mxu0 %v4584
    %4986 = vmatprep.subr.bf16.mxu0 %v4591
    %4987 = vmatpush1.bf16.msra.mxu0 %v4590
    %4988 = vmatprep.subr.bf16.mxu0 %v4597
    %4989 = vmatpush1.bf16.msra.mxu0 %v4596
    %4990 = vmatprep.subr.bf16.mxu0 %v4603
    %4991 = vmatpush1.bf16.msra.mxu0 %v4602
    %4992 = vmatprep.subr.bf16.mxu0 %v4609
    %4993 = vmatpush1.bf16.msra.mxu0 %v4608
    %4994 = vmatprep.subr.bf16.mxu0 %v4615
    %4995 = vmatpush1.bf16.msra.mxu0 %v4614
    %4996 = vmatprep.subr.bf16.mxu0 %v4621
    %4997 = vmatpush1.bf16.msra.mxu0 %v4620
    %4998 = vmatprep.subr.bf16.mxu0 %v4627
    %4999 = vmatpush1.bf16.msra.mxu0 %v4626
    %5000 = vmatprep.subr.bf16.mxu0 %v4633
    %5001 = vmatpush1.bf16.msra.mxu0 %v4632
    %5002 = vmatprep.subr.bf16.mxu0 %v4639
    %5003 = vmatpush1.bf16.msra.mxu0 %v4638
    %5004 = vmatprep.subr.bf16.mxu0 %v4645
    %5005 = vmatpush1.bf16.msra.mxu0 %v4644
    %5006 = vmatprep.subr.bf16.mxu0 %v4651
    %5007 = vmatpush1.bf16.msra.mxu0 %v4650
    %5008 = vmatprep.subr.bf16.mxu0 %v4657
    %5009 = vmatpush1.bf16.msra.mxu0 %v4656
    %5010 = vmatprep.mubr.bf16.mxu0 %v4107
    %5011 = vmatmul.mubr.bf16.gmra.mrb[0].mxu0 %v4104
    %v5012 = vpop.f32.mrb[0].mxu0
    %v5013 = vadd.f32 0.0, %v5012
    %v5014 = vpop.f32.mrb[0].mxu0
    %v5015 = vadd.f32 0.0, %v5014
    %v5016 = vpop.f32.mrb[0].mxu0
    %v5017 = vadd.f32 0.0, %v5016
    %v5018 = vpop.f32.mrb[0].mxu0
    %v5019 = vadd.f32 0.0, %v5018
    %5020 = vmatprep.mubr.bf16.mxu0 %v4114
    %5021 = vmatmul.mubr.bf16.gmra.mrb[0].mxu0 %v4112
    %v5022 = vpop.f32.mrb[0].mxu0
    %v5023 = vadd.f32 0.0, %v5022
    %v5024 = vpop.f32.mrb[0].mxu0
    %v5025 = vadd.f32 0.0, %v5024
    %v5026 = vpop.f32.mrb[0].mxu0
    %v5027 = vadd.f32 0.0, %v5026
    %v5028 = vpop.f32.mrb[0].mxu0
    %v5029 = vadd.f32 0.0, %v5028
    %5030 = vmatprep.mubr.bf16.mxu0 %v4120
    %5031 = vmatmul.mubr.bf16.gmra.mrb[0].mxu0 %v4118
    %v5032 = vpop.f32.mrb[0].mxu0
    %v5033 = vadd.f32 0.0, %v5032
    %v5034 = vpop.f32.mrb[0].mxu0
    %v5035 = vadd.f32 0.0, %v5034
    %v5036 = vpop.f32.mrb[0].mxu0
    %v5037 = vadd.f32 0.0, %v5036
    %v5038 = vpop.f32.mrb[0].mxu0
    %v5039 = vadd.f32 0.0, %v5038
    %5040 = vdwg.mxu0
    %5041 = vmatprep.subr.bf16.mxu0 %v4663
    %5042 = vmatpush1.bf16.msra.mxu0 %v4662
    %5043 = vmatprep.subr.bf16.mxu0 %v4669
    %5044 = vmatpush1.bf16.msra.mxu0 %v4668
    %5045 = vmatprep.subr.bf16.mxu0 %v4675
    %5046 = vmatpush1.bf16.msra.mxu0 %v4674
    %5047 = vmatprep.subr.bf16.mxu0 %v4681
    %5048 = vmatpush1.bf16.msra.mxu0 %v4680
    %5049 = vmatprep.subr.bf16.mxu0 %v4687
    %5050 = vmatpush1.bf16.msra.mxu0 %v4686
    %5051 = vmatprep.subr.bf16.mxu0 %v4693
    %5052 = vmatpush1.bf16.msra.mxu0 %v4692
    %5053 = vmatprep.subr.bf16.mxu0 %v4699
    %5054 = vmatpush1.bf16.msra.mxu0 %v4698
    %5055 = vmatprep.subr.bf16.mxu0 %v4705
    %5056 = vmatpush1.bf16.msra.mxu0 %v4704
    %5057 = vmatprep.subr.bf16.mxu0 0
    %5058 = vmatpush1.bf16.msra.mxu0 0
    %5059 = vmatprep.subr.bf16.mxu0 0
    %5060 = vmatpush1.bf16.msra.mxu0 0
    %5061 = vmatprep.subr.bf16.mxu0 0
    %5062 = vmatpush1.bf16.msra.mxu0 0
    %5063 = vmatprep.subr.bf16.mxu0 0
    %5064 = vmatpush1.bf16.msra.mxu0 0
    %5065 = vmatprep.subr.bf16.mxu0 0
    %5066 = vmatpush1.bf16.msra.mxu0 0
    %5067 = vmatprep.subr.bf16.mxu0 0
    %5068 = vmatpush1.bf16.msra.mxu0 0
    %5069 = vmatprep.subr.bf16.mxu0 0
    %5070 = vmatpush1.bf16.msra.mxu0 0
    %5071 = vmatprep.subr.bf16.mxu0 0
    %5072 = vmatpush1.bf16.msra.mxu0 0
    %5073 = vmatprep.mubr.bf16.mxu0 0
    %5074 = vmatmul.mubr.bf16.gmra.mrb[0].mxu0 %v4110
    %v5075 = vpop.f32.mrb[0].mxu0
    %v5076 = vadd.f32 %v5013, %v5075
    %v5077 = vpop.f32.mrb[0].mxu0
    %v5078 = vadd.f32 %v5015, %v5077
    %v5079 = vpop.f32.mrb[0].mxu0
    %v5080 = vadd.f32 %v5017, %v5079
    %v5081 = vpop.f32.mrb[0].mxu0
    %v5082 = vadd.f32 %v5019, %v5081
    %5083 = vmatprep.mubr.bf16.mxu0 0
    %5084 = vmatmul.mubr.bf16.gmra.mrb[0].mxu0 %v4116
    %v5085 = vpop.f32.mrb[0].mxu0
    %v5086 = vadd.f32 %v5023, %v5085
    %v5087 = vpop.f32.mrb[0].mxu0
    %v5088 = vadd.f32 %v5025, %v5087
    %v5089 = vpop.f32.mrb[0].mxu0
    %v5090 = vadd.f32 %v5027, %v5089
    %v5091 = vpop.f32.mrb[0].mxu0
    %v5092 = vadd.f32 %v5029, %v5091
    %5093 = vmatprep.mubr.bf16.mxu0 0
    %5094 = vmatmul.mubr.bf16.gmra.mrb[0].mxu0 %v4122
    %v5095 = vpop.f32.mrb[0].mxu0
    %v5096 = vadd.f32 %v5033, %v5095
    %v5097 = vpop.f32.mrb[0].mxu0
    %v5098 = vadd.f32 %v5035, %v5097
    %v5099 = vpop.f32.mrb[0].mxu0
    %v5100 = vadd.f32 %v5037, %v5099
    %v5101 = vpop.f32.mrb[0].mxu0
    %v5102 = vadd.f32 %v5039, %v5101
    %5103 = vdwg.mxu0
    %5104 = vmatprep.subr.bf16.mxu0 %v4569
    %5105 = vmatpush1.bf16.msra.mxu0 %v4568
    %5106 = vmatprep.subr.bf16.mxu0 %v4575
    %5107 = vmatpush1.bf16.msra.mxu0 %v4574
    %5108 = vmatprep.subr.bf16.mxu0 %v4581
    %5109 = vmatpush1.bf16.msra.mxu0 %v4580
    %5110 = vmatprep.subr.bf16.mxu0 %v4587
    %5111 = vmatpush1.bf16.msra.mxu0 %v4586
    %5112 = vmatprep.subr.bf16.mxu0 %v4593
    %5113 = vmatpush1.bf16.msra.mxu0 %v4592
    %5114 = vmatprep.subr.bf16.mxu0 %v4599
    %5115 = vmatpush1.bf16.msra.mxu0 %v4598
    %5116 = vmatprep.subr.bf16.mxu0 %v4605
    %5117 = vmatpush1.bf16.msra.mxu0 %v4604
    %5118 = vmatprep.subr.bf16.mxu0 %v4611
    %5119 = vmatpush1.bf16.msra.mxu0 %v4610
    %5120 = vmatprep.subr.bf16.mxu0 %v4617
    %5121 = vmatpush1.bf16.msra.mxu0 %v4616
    %5122 = vmatprep.subr.bf16.mxu0 %v4623
    %5123 = vmatpush1.bf16.msra.mxu0 %v4622
    %5124 = vmatprep.subr.bf16.mxu0 %v4629
    %5125 = vmatpush1.bf16.msra.mxu0 %v4628
    %5126 = vmatprep.subr.bf16.mxu0 %v4635
    %5127 = vmatpush1.bf16.msra.mxu0 %v4634
    %5128 = vmatprep.subr.bf16.mxu0 %v4641
    %5129 = vmatpush1.bf16.msra.mxu0 %v4640
    %5130 = vmatprep.subr.bf16.mxu0 %v4647
    %5131 = vmatpush1.bf16.msra.mxu0 %v4646
    %5132 = vmatprep.subr.bf16.mxu0 %v4653
    %5133 = vmatpush1.bf16.msra.mxu0 %v4652
    %5134 = vmatprep.subr.bf16.mxu0 %v4659
    %5135 = vmatpush1.bf16.msra.mxu0 %v4658
    %5136 = vmatprep.mubr.bf16.mxu0 %v4107
    %5137 = vmatmul.mubr.bf16.gmra.mrb[0].mxu0 %v4104
    %v5138 = vpop.f32.mrb[0].mxu0
    %v5139 = vadd.f32 0.0, %v5138
    %v5140 = vpop.f32.mrb[0].mxu0
    %v5141 = vadd.f32 0.0, %v5140
    %v5142 = vpop.f32.mrb[0].mxu0
    %v5143 = vadd.f32 0.0, %v5142
    %v5144 = vpop.f32.mrb[0].mxu0
    %v5145 = vadd.f32 0.0, %v5144
    %5146 = vmatprep.mubr.bf16.mxu0 %v4114
    %5147 = vmatmul.mubr.bf16.gmra.mrb[0].mxu0 %v4112
    %v5148 = vpop.f32.mrb[0].mxu0
    %v5149 = vadd.f32 0.0, %v5148
    %v5150 = vpop.f32.mrb[0].mxu0
    %v5151 = vadd.f32 0.0, %v5150
    %v5152 = vpop.f32.mrb[0].mxu0
    %v5153 = vadd.f32 0.0, %v5152
    %v5154 = vpop.f32.mrb[0].mxu0
    %v5155 = vadd.f32 0.0, %v5154
    %5156 = vmatprep.mubr.bf16.mxu0 %v4120
    %5157 = vmatmul.mubr.bf16.gmra.mrb[0].mxu0 %v4118
    %v5158 = vpop.f32.mrb[0].mxu0
    %v5159 = vadd.f32 0.0, %v5158
    %v5160 = vpop.f32.mrb[0].mxu0
    %v5161 = vadd.f32 0.0, %v5160
    %v5162 = vpop.f32.mrb[0].mxu0
    %v5163 = vadd.f32 0.0, %v5162
    %v5164 = vpop.f32.mrb[0].mxu0
    %v5165 = vadd.f32 0.0, %v5164
    %5166 = vdwg.mxu0
    %5167 = vmatprep.subr.bf16.mxu0 %v4665
    %5168 = vmatpush1.bf16.msra.mxu0 %v4664
    %5169 = vmatprep.subr.bf16.mxu0 %v4671
    %5170 = vmatpush1.bf16.msra.mxu0 %v4670
    %5171 = vmatprep.subr.bf16.mxu0 %v4677
    %5172 = vmatpush1.bf16.msra.mxu0 %v4676
    %5173 = vmatprep.subr.bf16.mxu0 %v4683
    %5174 = vmatpush1.bf16.msra.mxu0 %v4682
    %5175 = vmatprep.subr.bf16.mxu0 %v4689
    %5176 = vmatpush1.bf16.msra.mxu0 %v4688
    %5177 = vmatprep.subr.bf16.mxu0 %v4695
    %5178 = vmatpush1.bf16.msra.mxu0 %v4694
    %5179 = vmatprep.subr.bf16.mxu0 %v4701
    %5180 = vmatpush1.bf16.msra.mxu0 %v4700
    %5181 = vmatprep.subr.bf16.mxu0 %v4707
    %5182 = vmatpush1.bf16.msra.mxu0 %v4706
    %5183 = vmatprep.subr.bf16.mxu0 0
    %5184 = vmatpush1.bf16.msra.mxu0 0
    %5185 = vmatprep.subr.bf16.mxu0 0
    %5186 = vmatpush1.bf16.msra.mxu0 0
    %5187 = vmatprep.subr.bf16.mxu0 0
    %5188 = vmatpush1.bf16.msra.mxu0 0
    %5189 = vmatprep.subr.bf16.mxu0 0
    %5190 = vmatpush1.bf16.msra.mxu0 0
    %5191 = vmatprep.subr.bf16.mxu0 0
    %5192 = vmatpush1.bf16.msra.mxu0 0
    %5193 = vmatprep.subr.bf16.mxu0 0
    %5194 = vmatpush1.bf16.msra.mxu0 0
    %5195 = vmatprep.subr.bf16.mxu0 0
    %5196 = vmatpush1.bf16.msra.mxu0 0
    %5197 = vmatprep.subr.bf16.mxu0 0
    %5198 = vmatpush1.bf16.msra.mxu0 0
    %5199 = vmatprep.mubr.bf16.mxu0 0
    %5200 = vmatmul.mubr.bf16.gmra.mrb[0].mxu0 %v4110
    %v5201 = vpop.f32.mrb[0].mxu0
    %v5202 = vadd.f32 %v5139, %v5201
    %v5203 = vpop.f32.mrb[0].mxu0
    %v5204 = vadd.f32 %v5141, %v5203
    %v5205 = vpop.f32.mrb[0].mxu0
    %v5206 = vadd.f32 %v5143, %v5205
    %v5207 = vpop.f32.mrb[0].mxu0
    %v5208 = vadd.f32 %v5145, %v5207
    %5209 = vmatprep.mubr.bf16.mxu0 0
    %5210 = vmatmul.mubr.bf16.gmra.mrb[0].mxu0 %v4116
    %v5211 = vpop.f32.mrb[0].mxu0
    %v5212 = vadd.f32 %v5149, %v5211
    %v5213 = vpop.f32.mrb[0].mxu0
    %v5214 = vadd.f32 %v5151, %v5213
    %v5215 = vpop.f32.mrb[0].mxu0
    %v5216 = vadd.f32 %v5153, %v5215
    %v5217 = vpop.f32.mrb[0].mxu0
    %v5218 = vadd.f32 %v5155, %v5217
    %5219 = vmatprep.mubr.bf16.mxu0 0
    %5220 = vmatmul.mubr.bf16.gmra.mrb[0].mxu0 %v4122
    %v5221 = vpop.f32.mrb[0].mxu0
    %v5222 = vadd.f32 %v5159, %v5221
    %v5223 = vpop.f32.mrb[0].mxu0
    %v5224 = vadd.f32 %v5161, %v5223
    %v5225 = vpop.f32.mrb[0].mxu0
    %v5226 = vadd.f32 %v5163, %v5225
    %v5227 = vpop.f32.mrb[0].mxu0
    %v5228 = vadd.f32 %v5165, %v5227
    %5229 = vdwg.mxu0
    %v5230 = vadd.f32 %v3667, %v4950
    %v5231 = vadd.f32 %v3669, %v4952
    %v5232 = vadd.f32 %v3793, %v5076
    %v5233 = vadd.f32 %v3795, %v5078
    %v5234 = vadd.f32 %v3919, %v5202
    %v5235 = vadd.f32 %v3921, %v5204
    %v5236 = vadd.f32 %v3671, %v4954
    %v5237 = vadd.f32 %v3673, %v4956
    %v5238 = vadd.f32 %v3797, %v5080
    %v5239 = vadd.f32 %v3799, %v5082
    %v5240 = vadd.f32 %v3923, %v5206
    %v5241 = vadd.f32 %v3925, %v5208
    %v5242 = vadd.f32 %v3677, %v4960
    %v5243 = vadd.f32 %v3679, %v4962
    %v5244 = vadd.f32 %v3803, %v5086
    %v5245 = vadd.f32 %v3805, %v5088
    %v5246 = vadd.f32 %v3929, %v5212
    %v5247 = vadd.f32 %v3931, %v5214
    %v5248 = vadd.f32 %v3681, %v4964
    %v5249 = vadd.f32 %v3683, %v4966
    %v5250 = vadd.f32 %v3807, %v5090
    %v5251 = vadd.f32 %v3809, %v5092
    %v5252 = vadd.f32 %v3933, %v5216
    %v5253 = vadd.f32 %v3935, %v5218
    %v5254 = vadd.f32 %v3687, %v4970
    %v5255 = vadd.f32 %v3689, %v4972
    %v5256 = vadd.f32 %v3813, %v5096
    %v5257 = vadd.f32 %v3815, %v5098
    %v5258 = vadd.f32 %v3939, %v5222
    %v5259 = vadd.f32 %v3941, %v5224
    %v5260 = vadd.f32 %v3691, %v4974
    %v5261 = vadd.f32 %v3693, %v4976
    %v5262 = vadd.f32 %v3817, %v5100
    %v5263 = vadd.f32 %v3819, %v5102
    %v5264 = vadd.f32 %v3943, %v5226
    %v5265 = vadd.f32 %v3945, %v5228
    %v5266 = vld [vmem:[%s0 + $0x48] sm:$0x33]
    %v5267 = vld [vmem:[%s0 + $0x50] sm:$0x3]
    %s5268 = scalar_lea.vmem [#allocation10], 3456
    %v5269 = vld [vmem:[%s5268] sm:$0xff]
    %v5270 = vld [vmem:[%s5268 + $0x8] sm:$0xff]
    %v5271 = vld [vmem:[%s5268 + $0x10] sm:$0xff]
    %v5272 = vld [vmem:[%s5268 + $0x18] sm:$0xff]
    %v5273 = vld [vmem:[%s5268 + $0x20] sm:$0xff]
    %v5274 = vld [vmem:[%s5268 + $0x28] sm:$0xff]
    %v5275 = vld [vmem:[%s5268 + $0x30] sm:$0xff]
    %v5276 = vld [vmem:[%s5268 + $0x38] sm:$0xff]
    %v5277 = vld [vmem:[%s5268 + $0x40] sm:$0xff]
    %v5278 = vld [vmem:[%s5268 + $0x48] sm:$0xff]
    %v5279 = vld [vmem:[%s5268 + $0x50] sm:$0xff]
    %v5280 = vld [vmem:[%s5268 + $0x58] sm:$0xff]
    %v5281 = vld [vmem:[%s5268 + $0x60] sm:$0xff]
    %v5282 = vld [vmem:[%s5268 + $0x68] sm:$0xff]
    %v5283 = vld [vmem:[%s5268 + $0x70] sm:$0xff]
    %v5284 = vld [vmem:[%s5268 + $0x78] sm:$0xff]
    %v5285 = vld [vmem:[%s5268 + $0x80] sm:$0xff]
    %v5286 = vld [vmem:[%s5268 + $0x88] sm:$0xff]
    %v5287 = vld [vmem:[%s5268 + $0x90] sm:$0xff]
    %v5288 = vld [vmem:[%s5268 + $0x98] sm:$0xff]
    %v5289 = vld [vmem:[%s5268 + $0xa0] sm:$0xff]
    %v5290 = vld [vmem:[%s5268 + $0xa8] sm:$0xff]
    %v5291 = vld [vmem:[%s5268 + $0xb0] sm:$0xff]
    %v5292 = vld [vmem:[%s5268 + $0xb8] sm:$0xff]
    %v5293 = vld [vmem:[%s5268 + $0xc0] sm:$0xff]
    %v5294 = vld [vmem:[%s5268 + $0xc8] sm:$0xff]
    %v5295 = vld [vmem:[%s5268 + $0xd0] sm:$0xff]
    %v5296 = vld [vmem:[%s5268 + $0xd8] sm:$0xff]
    %v5297 = vld [vmem:[%s5268 + $0xe0] sm:$0xff]
    %v5298 = vld [vmem:[%s5268 + $0xe8] sm:$0xff]
    %v5299 = vld [vmem:[%s5268 + $0xf0] sm:$0xff]
    %v5300 = vld [vmem:[%s5268 + $0xf8] sm:$0xff]
    %v5301 = vld [vmem:[%s5268 + $0x100] sm:$0xff]
    %v5302 = vld [vmem:[%s5268 + $0x108] sm:$0xff]
    %v5303 = vld [vmem:[%s5268 + $0x110] sm:$0xff]
    %v5304 = vld [vmem:[%s5268 + $0x118] sm:$0xff]
    %v5305 = vld [vmem:[%s5268 + $0x120] sm:$0xff]
    %v5306 = vld [vmem:[%s5268 + $0x128] sm:$0xff]
    %v5307 = vld [vmem:[%s5268 + $0x130] sm:$0xff]
    %v5308 = vld [vmem:[%s5268 + $0x138] sm:$0xff]
    %v5309 = vld [vmem:[%s5268 + $0x140] sm:$0xff]
    %v5310 = vld [vmem:[%s5268 + $0x148] sm:$0xff]
    %v5311 = vld [vmem:[%s5268 + $0x150] sm:$0xff]
    %v5312 = vld [vmem:[%s5268 + $0x158] sm:$0xff]
    %v5313 = vld [vmem:[%s5268 + $0x160] sm:$0xff]
    %v5314 = vld [vmem:[%s5268 + $0x168] sm:$0xff]
    %v5315 = vld [vmem:[%s5268 + $0x170] sm:$0xff]
    %v5316 = vld [vmem:[%s5268 + $0x178] sm:$0xff]
    %v5317 = vld [vmem:[%s5268 + $0x180] sm:$0xff]
    %v5318 = vld [vmem:[%s5268 + $0x188] sm:$0xff]
    %v5319 = vld [vmem:[%s5268 + $0x190] sm:$0xff]
    %v5320 = vld [vmem:[%s5268 + $0x198] sm:$0xff]
    %v5321 = vld [vmem:[%s5268 + $0x1a0] sm:$0xff]
    %v5322 = vld [vmem:[%s5268 + $0x1a8] sm:$0xff]
    %v5323 = vld [vmem:[%s5268 + $0x1b0] sm:$0xff]
    %v5324 = vld [vmem:[%s5268 + $0x1b8] sm:$0xff]
    %v5325 = vld [vmem:[%s5268 + $0x1c0] sm:$0xff]
    %v5326 = vld [vmem:[%s5268 + $0x1c8] sm:$0xff]
    %v5327 = vld [vmem:[%s5268 + $0x1d0] sm:$0xff]
    %v5328 = vld [vmem:[%s5268 + $0x1d8] sm:$0xff]
    %v5329 = vld [vmem:[%s5268 + $0x1e0] sm:$0xff]
    %v5330 = vld [vmem:[%s5268 + $0x1e8] sm:$0xff]
    %v5331 = vld [vmem:[%s5268 + $0x1f0] sm:$0xff]
    %v5332 = vld [vmem:[%s5268 + $0x1f8] sm:$0xff]
    %v5333 = vld [vmem:[%s5268 + $0x200] sm:$0xff]
    %v5334 = vld [vmem:[%s5268 + $0x208] sm:$0xff]
    %v5335 = vld [vmem:[%s5268 + $0x210] sm:$0xff]
    %v5336 = vld [vmem:[%s5268 + $0x218] sm:$0xff]
    %v5337 = vld [vmem:[%s5268 + $0x220] sm:$0xff]
    %v5338 = vld [vmem:[%s5268 + $0x228] sm:$0xff]
    %v5339 = vld [vmem:[%s5268 + $0x230] sm:$0xff]
    %v5340 = vld [vmem:[%s5268 + $0x238] sm:$0xff]
    %v5341 = vld [vmem:[%s5268 + $0x240] sm:$0xff]
    %v5342 = vld [vmem:[%s5268 + $0x248] sm:$0xff]
    %v5343 = vld [vmem:[%s5268 + $0x250] sm:$0xff]
    %v5344 = vld [vmem:[%s5268 + $0x258] sm:$0xff]
    %v5345 = vld [vmem:[%s5268 + $0x260] sm:$0xff]
    %v5346 = vld [vmem:[%s5268 + $0x268] sm:$0xff]
    %v5347 = vld [vmem:[%s5268 + $0x270] sm:$0xff]
    %v5348 = vld [vmem:[%s5268 + $0x278] sm:$0xff]
    %v5349 = vld [vmem:[%s5268 + $0x280] sm:$0xff]
    %v5350 = vld [vmem:[%s5268 + $0x288] sm:$0xff]
    %v5351 = vld [vmem:[%s5268 + $0x290] sm:$0xff]
    %v5352 = vld [vmem:[%s5268 + $0x298] sm:$0xff]
    %v5353 = vld [vmem:[%s5268 + $0x2a0] sm:$0xff]
    %v5354 = vld [vmem:[%s5268 + $0x2a8] sm:$0xff]
    %v5355 = vld [vmem:[%s5268 + $0x2b0] sm:$0xff]
    %v5356 = vld [vmem:[%s5268 + $0x2b8] sm:$0xff]
    %v5357 = vld [vmem:[%s5268 + $0x2c0] sm:$0xff]
    %v5358 = vld [vmem:[%s5268 + $0x2c8] sm:$0xff]
    %v5359 = vld [vmem:[%s5268 + $0x2d0] sm:$0xff]
    %v5360 = vld [vmem:[%s5268 + $0x2d8] sm:$0xff]
    %v5361 = vld [vmem:[%s5268 + $0x2e0] sm:$0xff]
    %v5362 = vld [vmem:[%s5268 + $0x2e8] sm:$0xff]
    %v5363 = vld [vmem:[%s5268 + $0x2f0] sm:$0xff]
    %v5364 = vld [vmem:[%s5268 + $0x2f8] sm:$0xff]
    %v5365 = vld [vmem:[%s5268 + $0x300] sm:$0xff]
    %v5366 = vld [vmem:[%s5268 + $0x308] sm:$0xff]
    %v5367 = vld [vmem:[%s5268 + $0x310] sm:$0xff]
    %v5368 = vld [vmem:[%s5268 + $0x318] sm:$0xff]
    %v5369 = vld [vmem:[%s5268 + $0x320] sm:$0xff]
    %v5370 = vld [vmem:[%s5268 + $0x328] sm:$0xff]
    %v5371 = vld [vmem:[%s5268 + $0x330] sm:$0xff]
    %v5372 = vld [vmem:[%s5268 + $0x338] sm:$0xff]
    %v5373 = vld [vmem:[%s5268 + $0x340] sm:$0xff]
    %v5374 = vld [vmem:[%s5268 + $0x348] sm:$0xff]
    %v5375 = vld [vmem:[%s5268 + $0x350] sm:$0xff]
    %v5376 = vld [vmem:[%s5268 + $0x358] sm:$0xff]
    %v5377 = vld [vmem:[%s5268 + $0x360] sm:$0xff]
    %v5378 = vld [vmem:[%s5268 + $0x368] sm:$0xff]
    %v5379 = vld [vmem:[%s5268 + $0x370] sm:$0xff]
    %v5380 = vld [vmem:[%s5268 + $0x378] sm:$0xff]
    %v5381 = vld [vmem:[%s5268 + $0x380] sm:$0xff]
    %v5382 = vld [vmem:[%s5268 + $0x388] sm:$0xff]
    %v5383 = vld [vmem:[%s5268 + $0x390] sm:$0xff]
    %v5384 = vld [vmem:[%s5268 + $0x398] sm:$0xff]
    %v5385 = vld [vmem:[%s5268 + $0x3a0] sm:$0xff]
    %v5386 = vld [vmem:[%s5268 + $0x3a8] sm:$0xff]
    %v5387 = vld [vmem:[%s5268 + $0x3b0] sm:$0xff]
    %v5388 = vld [vmem:[%s5268 + $0x3b8] sm:$0xff]
    %v5389 = vld [vmem:[%s5268 + $0x3c0] sm:$0xff]
    %v5390 = vld [vmem:[%s5268 + $0x3c8] sm:$0xff]
    %v5391 = vld [vmem:[%s5268 + $0x3d0] sm:$0xff]
    %v5392 = vld [vmem:[%s5268 + $0x3d8] sm:$0xff]
    %v5393 = vld [vmem:[%s5268 + $0x3e0] sm:$0xff]
    %v5394 = vld [vmem:[%s5268 + $0x3e8] sm:$0xff]
    %v5395 = vld [vmem:[%s5268 + $0x3f0] sm:$0xff]
    %v5396 = vld [vmem:[%s5268 + $0x3f8] sm:$0xff]
    %v5397 = vld [vmem:[%s5268 + $0x400] sm:$0xff]
    %v5398 = vld [vmem:[%s5268 + $0x408] sm:$0xff]
    %v5399 = vld [vmem:[%s5268 + $0x410] sm:$0xff]
    %v5400 = vld [vmem:[%s5268 + $0x418] sm:$0xff]
    %v5401 = vld [vmem:[%s5268 + $0x420] sm:$0xff]
    %v5402 = vld [vmem:[%s5268 + $0x428] sm:$0xff]
    %v5403 = vld [vmem:[%s5268 + $0x430] sm:$0xff]
    %v5404 = vld [vmem:[%s5268 + $0x438] sm:$0xff]
    %v5405 = vld [vmem:[%s5268 + $0x440] sm:$0xff]
    %v5406 = vld [vmem:[%s5268 + $0x448] sm:$0xff]
    %v5407 = vld [vmem:[%s5268 + $0x450] sm:$0xff]
    %v5408 = vld [vmem:[%s5268 + $0x458] sm:$0xff]
    %v5409 = vld [vmem:[%s5268 + $0x460] sm:$0xff]
    %v5410 = vld [vmem:[%s5268 + $0x468] sm:$0xff]
    %v5411 = vld [vmem:[%s5268 + $0x470] sm:$0xff]
    %v5412 = vld [vmem:[%s5268 + $0x478] sm:$0xff]
    %v5415 = vunpack.c.l.b16 %v5266
    %v5416 = vunpack.c.h.b16 %v5266
    %v5417 = vunpack.c.l.b16 %v5267
    %v5418 = vpack.c.b16 %v5415, %v5415
    %v5419 = vpack.c.b16 %v5416, %v5416
    %v5420 = vpack.c.b16 %v5417, %v5417
    %vm5421 = vsmask.f32 6400
    %v5423 = vshrl.u32 %v4099, 16
    %v5425 = vrot.slane %v5423, 1
    %v5426 = vshll.u32 %v4099, 16
    %v5428 = vrot.slane %v5426, 2
    %v5429 = vor.u32 %v5425, %v5428
    %v5430 = vrot.slane %v1646, 1
    %v5431 = vrot.slane %v1618, 2
    %v5432 = vor.u32 %v5430, %v5431
    %v5433 = vsel %vm5421, %v5429, %v5432
    %v5435 = vshrl.u32 %v4100, 16
    %v5437 = vrot.slane %v5435, 1
    %v5438 = vshll.u32 %v4100, 16
    %v5440 = vrot.slane %v5438, 2
    %v5441 = vor.u32 %v5437, %v5440
    %v5442 = vrot.slane %v1654, 1
    %v5443 = vrot.slane %v1630, 2
    %v5444 = vor.u32 %v5442, %v5443
    %v5445 = vsel %vm5421, %v5441, %v5444
    %v5447 = vshrl.u32 %v4101, 16
    %v5449 = vrot.slane %v5447, 1
    %v5450 = vshll.u32 %v4101, 16
    %v5452 = vrot.slane %v5450, 2
    %v5453 = vor.u32 %v5449, %v5452
    %v5454 = vrot.slane %v1662, 1
    %v5455 = vrot.slane %v1642, 2
    %v5456 = vor.u32 %v5454, %v5455
    %v5457 = vsel %vm5421, %v5453, %v5456
    %v5458 = vrot.slane %v1670, 1
    %v5459 = vrot.slane %v1650, 2
    %v5460 = vor.u32 %v5458, %v5459
    %v5461 = vsel %vm5421, %v5432, %v5460
    %v5462 = vrot.slane %v1678, 1
    %v5463 = vrot.slane %v1658, 2
    %v5464 = vor.u32 %v5462, %v5463
    %v5465 = vsel %vm5421, %v5444, %v5464
    %v5466 = vrot.slane %v1686, 1
    %v5467 = vrot.slane %v1666, 2
    %v5468 = vor.u32 %v5466, %v5467
    %v5469 = vsel %vm5421, %v5456, %v5468
    %v5471 = vshrl.u32 %v5418, 16
    %v5473 = vrot.slane %v5471, 1
    %v5474 = vshll.u32 %v5418, 16
    %v5476 = vrot.slane %v5474, 2
    %v5477 = vor.u32 %v5473, %v5476
    %v5478 = vsel %vm5421, %v5460, %v5477
    %v5480 = vshrl.u32 %v5419, 16
    %v5482 = vrot.slane %v5480, 1
    %v5483 = vshll.u32 %v5419, 16
    %v5485 = vrot.slane %v5483, 2
    %v5486 = vor.u32 %v5482, %v5485
    %v5487 = vsel %vm5421, %v5464, %v5486
    %v5489 = vshrl.u32 %v5420, 16
    %v5491 = vrot.slane %v5489, 1
    %v5492 = vshll.u32 %v5420, 16
    %v5494 = vrot.slane %v5492, 2
    %v5495 = vor.u32 %v5491, %v5494
    %v5496 = vsel %vm5421, %v5468, %v5495
    %v5650 = vunpack.c.l.b16 %v5269
    %v5651 = vunpack.c.h.b16 %v5269
    %v5652 = vunpack.c.l.b16 %v5270
    %v5653 = vunpack.c.h.b16 %v5270
    %v5654 = vunpack.c.l.b16 %v5271
    %v5655 = vunpack.c.h.b16 %v5271
    %v5656 = vunpack.c.l.b16 %v5272
    %v5657 = vunpack.c.h.b16 %v5272
    %v5658 = vunpack.c.l.b16 %v5273
    %v5659 = vunpack.c.h.b16 %v5273
    %v5660 = vunpack.c.l.b16 %v5274
    %v5661 = vunpack.c.h.b16 %v5274
    %v5662 = vunpack.c.l.b16 %v5275
    %v5663 = vunpack.c.h.b16 %v5275
    %v5664 = vunpack.c.l.b16 %v5276
    %v5665 = vunpack.c.h.b16 %v5276
    %v5666 = vunpack.c.l.b16 %v5277
    %v5667 = vunpack.c.h.b16 %v5277
    %v5668 = vunpack.c.l.b16 %v5278
    %v5669 = vunpack.c.h.b16 %v5278
    %v5670 = vunpack.c.l.b16 %v5279
    %v5671 = vunpack.c.h.b16 %v5279
    %v5672 = vunpack.c.l.b16 %v5280
    %v5673 = vunpack.c.h.b16 %v5280
    %v5674 = vunpack.c.l.b16 %v5281
    %v5675 = vunpack.c.h.b16 %v5281
    %v5676 = vunpack.c.l.b16 %v5282
    %v5677 = vunpack.c.h.b16 %v5282
    %v5678 = vunpack.c.l.b16 %v5283
    %v5679 = vunpack.c.h.b16 %v5283
    %v5680 = vunpack.c.l.b16 %v5284
    %v5681 = vunpack.c.h.b16 %v5284
    %v5682 = vunpack.c.l.b16 %v5285
    %v5683 = vunpack.c.h.b16 %v5285
    %v5684 = vunpack.c.l.b16 %v5286
    %v5685 = vunpack.c.h.b16 %v5286
    %v5686 = vunpack.c.l.b16 %v5287
    %v5687 = vunpack.c.h.b16 %v5287
    %v5688 = vunpack.c.l.b16 %v5288
    %v5689 = vunpack.c.h.b16 %v5288
    %v5690 = vunpack.c.l.b16 %v5289
    %v5691 = vunpack.c.h.b16 %v5289
    %v5692 = vunpack.c.l.b16 %v5290
    %v5693 = vunpack.c.h.b16 %v5290
    %v5694 = vunpack.c.l.b16 %v5291
    %v5695 = vunpack.c.h.b16 %v5291
    %v5696 = vunpack.c.l.b16 %v5292
    %v5697 = vunpack.c.h.b16 %v5292
    %v5698 = vunpack.c.l.b16 %v5293
    %v5699 = vunpack.c.h.b16 %v5293
    %v5700 = vunpack.c.l.b16 %v5294
    %v5701 = vunpack.c.h.b16 %v5294
    %v5702 = vunpack.c.l.b16 %v5295
    %v5703 = vunpack.c.h.b16 %v5295
    %v5704 = vunpack.c.l.b16 %v5296
    %v5705 = vunpack.c.h.b16 %v5296
    %v5706 = vunpack.c.l.b16 %v5297
    %v5707 = vunpack.c.h.b16 %v5297
    %v5708 = vunpack.c.l.b16 %v5298
    %v5709 = vunpack.c.h.b16 %v5298
    %v5710 = vunpack.c.l.b16 %v5299
    %v5711 = vunpack.c.h.b16 %v5299
    %v5712 = vunpack.c.l.b16 %v5300
    %v5713 = vunpack.c.h.b16 %v5300
    %v5714 = vunpack.c.l.b16 %v5301
    %v5715 = vunpack.c.h.b16 %v5301
    %v5716 = vunpack.c.l.b16 %v5302
    %v5717 = vunpack.c.h.b16 %v5302
    %v5718 = vunpack.c.l.b16 %v5303
    %v5719 = vunpack.c.h.b16 %v5303
    %v5720 = vunpack.c.l.b16 %v5304
    %v5721 = vunpack.c.h.b16 %v5304
    %v5722 = vunpack.c.l.b16 %v5305
    %v5723 = vunpack.c.h.b16 %v5305
    %v5724 = vunpack.c.l.b16 %v5306
    %v5725 = vunpack.c.h.b16 %v5306
    %v5726 = vunpack.c.l.b16 %v5307
    %v5727 = vunpack.c.h.b16 %v5307
    %v5728 = vunpack.c.l.b16 %v5308
    %v5729 = vunpack.c.h.b16 %v5308
    %v5730 = vunpack.c.l.b16 %v5309
    %v5731 = vunpack.c.h.b16 %v5309
    %v5732 = vunpack.c.l.b16 %v5310
    %v5733 = vunpack.c.h.b16 %v5310
    %v5734 = vunpack.c.l.b16 %v5311
    %v5735 = vunpack.c.h.b16 %v5311
    %v5736 = vunpack.c.l.b16 %v5312
    %v5737 = vunpack.c.h.b16 %v5312
    %v5738 = vunpack.c.l.b16 %v5313
    %v5739 = vunpack.c.h.b16 %v5313
    %v5740 = vunpack.c.l.b16 %v5314
    %v5741 = vunpack.c.h.b16 %v5314
    %v5742 = vunpack.c.l.b16 %v5315
    %v5743 = vunpack.c.h.b16 %v5315
    %v5744 = vunpack.c.l.b16 %v5316
    %v5745 = vunpack.c.h.b16 %v5316
    %v5746 = vunpack.c.l.b16 %v5317
    %v5747 = vunpack.c.h.b16 %v5317
    %v5748 = vunpack.c.l.b16 %v5318
    %v5749 = vunpack.c.h.b16 %v5318
    %v5750 = vunpack.c.l.b16 %v5319
    %v5751 = vunpack.c.h.b16 %v5319
    %v5752 = vunpack.c.l.b16 %v5320
    %v5753 = vunpack.c.h.b16 %v5320
    %v5754 = vunpack.c.l.b16 %v5321
    %v5755 = vunpack.c.h.b16 %v5321
    %v5756 = vunpack.c.l.b16 %v5322
    %v5757 = vunpack.c.h.b16 %v5322
    %v5758 = vunpack.c.l.b16 %v5323
    %v5759 = vunpack.c.h.b16 %v5323
    %v5760 = vunpack.c.l.b16 %v5324
    %v5761 = vunpack.c.h.b16 %v5324
    %v5762 = vunpack.c.l.b16 %v5325
    %v5763 = vunpack.c.h.b16 %v5325
    %v5764 = vunpack.c.l.b16 %v5326
    %v5765 = vunpack.c.h.b16 %v5326
    %v5766 = vunpack.c.l.b16 %v5327
    %v5767 = vunpack.c.h.b16 %v5327
    %v5768 = vunpack.c.l.b16 %v5328
    %v5769 = vunpack.c.h.b16 %v5328
    %v5770 = vunpack.c.l.b16 %v5329
    %v5771 = vunpack.c.h.b16 %v5329
    %v5772 = vunpack.c.l.b16 %v5330
    %v5773 = vunpack.c.h.b16 %v5330
    %v5774 = vunpack.c.l.b16 %v5331
    %v5775 = vunpack.c.h.b16 %v5331
    %v5776 = vunpack.c.l.b16 %v5332
    %v5777 = vunpack.c.h.b16 %v5332
    %v5778 = vunpack.c.l.b16 %v5333
    %v5779 = vunpack.c.h.b16 %v5333
    %v5780 = vunpack.c.l.b16 %v5334
    %v5781 = vunpack.c.h.b16 %v5334
    %v5782 = vunpack.c.l.b16 %v5335
    %v5783 = vunpack.c.h.b16 %v5335
    %v5784 = vunpack.c.l.b16 %v5336
    %v5785 = vunpack.c.h.b16 %v5336
    %v5786 = vunpack.c.l.b16 %v5337
    %v5787 = vunpack.c.h.b16 %v5337
    %v5788 = vunpack.c.l.b16 %v5338
    %v5789 = vunpack.c.h.b16 %v5338
    %v5790 = vunpack.c.l.b16 %v5339
    %v5791 = vunpack.c.h.b16 %v5339
    %v5792 = vunpack.c.l.b16 %v5340
    %v5793 = vunpack.c.h.b16 %v5340
    %v5794 = vunpack.c.l.b16 %v5341
    %v5795 = vunpack.c.h.b16 %v5341
    %v5796 = vunpack.c.l.b16 %v5342
    %v5797 = vunpack.c.h.b16 %v5342
    %v5798 = vunpack.c.l.b16 %v5343
    %v5799 = vunpack.c.h.b16 %v5343
    %v5800 = vunpack.c.l.b16 %v5344
    %v5801 = vunpack.c.h.b16 %v5344
    %v5802 = vunpack.c.l.b16 %v5345
    %v5803 = vunpack.c.h.b16 %v5345
    %v5804 = vunpack.c.l.b16 %v5346
    %v5805 = vunpack.c.h.b16 %v5346
    %v5806 = vunpack.c.l.b16 %v5347
    %v5807 = vunpack.c.h.b16 %v5347
    %v5808 = vunpack.c.l.b16 %v5348
    %v5809 = vunpack.c.h.b16 %v5348
    %v5810 = vunpack.c.l.b16 %v5349
    %v5811 = vunpack.c.h.b16 %v5349
    %v5812 = vunpack.c.l.b16 %v5350
    %v5813 = vunpack.c.h.b16 %v5350
    %v5814 = vunpack.c.l.b16 %v5351
    %v5815 = vunpack.c.h.b16 %v5351
    %v5816 = vunpack.c.l.b16 %v5352
    %v5817 = vunpack.c.h.b16 %v5352
    %v5818 = vunpack.c.l.b16 %v5353
    %v5819 = vunpack.c.h.b16 %v5353
    %v5820 = vunpack.c.l.b16 %v5354
    %v5821 = vunpack.c.h.b16 %v5354
    %v5822 = vunpack.c.l.b16 %v5355
    %v5823 = vunpack.c.h.b16 %v5355
    %v5824 = vunpack.c.l.b16 %v5356
    %v5825 = vunpack.c.h.b16 %v5356
    %v5826 = vunpack.c.l.b16 %v5357
    %v5827 = vunpack.c.h.b16 %v5357
    %v5828 = vunpack.c.l.b16 %v5358
    %v5829 = vunpack.c.h.b16 %v5358
    %v5830 = vunpack.c.l.b16 %v5359
    %v5831 = vunpack.c.h.b16 %v5359
    %v5832 = vunpack.c.l.b16 %v5360
    %v5833 = vunpack.c.h.b16 %v5360
    %v5834 = vunpack.c.l.b16 %v5361
    %v5835 = vunpack.c.h.b16 %v5361
    %v5836 = vunpack.c.l.b16 %v5362
    %v5837 = vunpack.c.h.b16 %v5362
    %v5838 = vunpack.c.l.b16 %v5363
    %v5839 = vunpack.c.h.b16 %v5363
    %v5840 = vunpack.c.l.b16 %v5364
    %v5841 = vunpack.c.h.b16 %v5364
    %v5842 = vunpack.c.l.b16 %v5365
    %v5843 = vunpack.c.h.b16 %v5365
    %v5844 = vunpack.c.l.b16 %v5366
    %v5845 = vunpack.c.h.b16 %v5366
    %v5846 = vunpack.c.l.b16 %v5367
    %v5847 = vunpack.c.h.b16 %v5367
    %v5848 = vunpack.c.l.b16 %v5368
    %v5849 = vunpack.c.h.b16 %v5368
    %v5850 = vunpack.c.l.b16 %v5369
    %v5851 = vunpack.c.h.b16 %v5369
    %v5852 = vunpack.c.l.b16 %v5370
    %v5853 = vunpack.c.h.b16 %v5370
    %v5854 = vunpack.c.l.b16 %v5371
    %v5855 = vunpack.c.h.b16 %v5371
    %v5856 = vunpack.c.l.b16 %v5372
    %v5857 = vunpack.c.h.b16 %v5372
    %v5858 = vunpack.c.l.b16 %v5373
    %v5859 = vunpack.c.h.b16 %v5373
    %v5860 = vunpack.c.l.b16 %v5374
    %v5861 = vunpack.c.h.b16 %v5374
    %v5862 = vunpack.c.l.b16 %v5375
    %v5863 = vunpack.c.h.b16 %v5375
    %v5864 = vunpack.c.l.b16 %v5376
    %v5865 = vunpack.c.h.b16 %v5376
    %v5866 = vunpack.c.l.b16 %v5377
    %v5867 = vunpack.c.h.b16 %v5377
    %v5868 = vunpack.c.l.b16 %v5378
    %v5869 = vunpack.c.h.b16 %v5378
    %v5870 = vunpack.c.l.b16 %v5379
    %v5871 = vunpack.c.h.b16 %v5379
    %v5872 = vunpack.c.l.b16 %v5380
    %v5873 = vunpack.c.h.b16 %v5380
    %v5874 = vunpack.c.l.b16 %v5381
    %v5875 = vunpack.c.h.b16 %v5381
    %v5876 = vunpack.c.l.b16 %v5382
    %v5877 = vunpack.c.h.b16 %v5382
    %v5878 = vunpack.c.l.b16 %v5383
    %v5879 = vunpack.c.h.b16 %v5383
    %v5880 = vunpack.c.l.b16 %v5384
    %v5881 = vunpack.c.h.b16 %v5384
    %v5882 = vunpack.c.l.b16 %v5385
    %v5883 = vunpack.c.h.b16 %v5385
    %v5884 = vunpack.c.l.b16 %v5386
    %v5885 = vunpack.c.h.b16 %v5386
    %v5886 = vunpack.c.l.b16 %v5387
    %v5887 = vunpack.c.h.b16 %v5387
    %v5888 = vunpack.c.l.b16 %v5388
    %v5889 = vunpack.c.h.b16 %v5388
    %v5890 = vunpack.c.l.b16 %v5389
    %v5891 = vunpack.c.h.b16 %v5389
    %v5892 = vunpack.c.l.b16 %v5390
    %v5893 = vunpack.c.h.b16 %v5390
    %v5894 = vunpack.c.l.b16 %v5391
    %v5895 = vunpack.c.h.b16 %v5391
    %v5896 = vunpack.c.l.b16 %v5392
    %v5897 = vunpack.c.h.b16 %v5392
    %v5898 = vunpack.c.l.b16 %v5393
    %v5899 = vunpack.c.h.b16 %v5393
    %v5900 = vunpack.c.l.b16 %v5394
    %v5901 = vunpack.c.h.b16 %v5394
    %v5902 = vunpack.c.l.b16 %v5395
    %v5903 = vunpack.c.h.b16 %v5395
    %v5904 = vunpack.c.l.b16 %v5396
    %v5905 = vunpack.c.h.b16 %v5396
    %v5906 = vunpack.c.l.b16 %v5397
    %v5907 = vunpack.c.h.b16 %v5397
    %v5908 = vunpack.c.l.b16 %v5398
    %v5909 = vunpack.c.h.b16 %v5398
    %v5910 = vunpack.c.l.b16 %v5399
    %v5911 = vunpack.c.h.b16 %v5399
    %v5912 = vunpack.c.l.b16 %v5400
    %v5913 = vunpack.c.h.b16 %v5400
    %v5914 = vunpack.c.l.b16 %v5401
    %v5915 = vunpack.c.h.b16 %v5401
    %v5916 = vunpack.c.l.b16 %v5402
    %v5917 = vunpack.c.h.b16 %v5402
    %v5918 = vunpack.c.l.b16 %v5403
    %v5919 = vunpack.c.h.b16 %v5403
    %v5920 = vunpack.c.l.b16 %v5404
    %v5921 = vunpack.c.h.b16 %v5404
    %v5922 = vunpack.c.l.b16 %v5405
    %v5923 = vunpack.c.h.b16 %v5405
    %v5924 = vunpack.c.l.b16 %v5406
    %v5925 = vunpack.c.h.b16 %v5406
    %v5926 = vunpack.c.l.b16 %v5407
    %v5927 = vunpack.c.h.b16 %v5407
    %v5928 = vunpack.c.l.b16 %v5408
    %v5929 = vunpack.c.h.b16 %v5408
    %v5930 = vunpack.c.l.b16 %v5409
    %v5931 = vunpack.c.h.b16 %v5409
    %v5932 = vunpack.c.l.b16 %v5410
    %v5933 = vunpack.c.h.b16 %v5410
    %v5934 = vunpack.c.l.b16 %v5411
    %v5935 = vunpack.c.h.b16 %v5411
    %v5936 = vunpack.c.l.b16 %v5412
    %v5937 = vunpack.c.h.b16 %v5412
    %v5938 = vpack.c.b16 %v5656, %v5650
    %v5939 = vpack.c.b16 %v5657, %v5651
    %v5940 = vpack.c.b16 %v5658, %v5652
    %v5941 = vpack.c.b16 %v5659, %v5653
    %v5942 = vpack.c.b16 %v5660, %v5654
    %v5943 = vpack.c.b16 %v5661, %v5655
    %v5944 = vpack.c.b16 %v5668, %v5662
    %v5945 = vpack.c.b16 %v5669, %v5663
    %v5946 = vpack.c.b16 %v5670, %v5664
    %v5947 = vpack.c.b16 %v5671, %v5665
    %v5948 = vpack.c.b16 %v5672, %v5666
    %v5949 = vpack.c.b16 %v5673, %v5667
    %v5950 = vpack.c.b16 %v5680, %v5674
    %v5951 = vpack.c.b16 %v5681, %v5675
    %v5952 = vpack.c.b16 %v5682, %v5676
    %v5953 = vpack.c.b16 %v5683, %v5677
    %v5954 = vpack.c.b16 %v5684, %v5678
    %v5955 = vpack.c.b16 %v5685, %v5679
    %v5956 = vpack.c.b16 %v5692, %v5686
    %v5957 = vpack.c.b16 %v5693, %v5687
    %v5958 = vpack.c.b16 %v5694, %v5688
    %v5959 = vpack.c.b16 %v5695, %v5689
    %v5960 = vpack.c.b16 %v5696, %v5690
    %v5961 = vpack.c.b16 %v5697, %v5691
    %v5962 = vpack.c.b16 %v5704, %v5698
    %v5963 = vpack.c.b16 %v5705, %v5699
    %v5964 = vpack.c.b16 %v5706, %v5700
    %v5965 = vpack.c.b16 %v5707, %v5701
    %v5966 = vpack.c.b16 %v5708, %v5702
    %v5967 = vpack.c.b16 %v5709, %v5703
    %v5968 = vpack.c.b16 %v5716, %v5710
    %v5969 = vpack.c.b16 %v5717, %v5711
    %v5970 = vpack.c.b16 %v5718, %v5712
    %v5971 = vpack.c.b16 %v5719, %v5713
    %v5972 = vpack.c.b16 %v5720, %v5714
    %v5973 = vpack.c.b16 %v5721, %v5715
    %v5974 = vpack.c.b16 %v5728, %v5722
    %v5975 = vpack.c.b16 %v5729, %v5723
    %v5976 = vpack.c.b16 %v5730, %v5724
    %v5977 = vpack.c.b16 %v5731, %v5725
    %v5978 = vpack.c.b16 %v5732, %v5726
    %v5979 = vpack.c.b16 %v5733, %v5727
    %v5980 = vpack.c.b16 %v5740, %v5734
    %v5981 = vpack.c.b16 %v5741, %v5735
    %v5982 = vpack.c.b16 %v5742, %v5736
    %v5983 = vpack.c.b16 %v5743, %v5737
    %v5984 = vpack.c.b16 %v5744, %v5738
    %v5985 = vpack.c.b16 %v5745, %v5739
    %v5986 = vpack.c.b16 %v5752, %v5746
    %v5987 = vpack.c.b16 %v5753, %v5747
    %v5988 = vpack.c.b16 %v5754, %v5748
    %v5989 = vpack.c.b16 %v5755, %v5749
    %v5990 = vpack.c.b16 %v5756, %v5750
    %v5991 = vpack.c.b16 %v5757, %v5751
    %v5992 = vpack.c.b16 %v5764, %v5758
    %v5993 = vpack.c.b16 %v5765, %v5759
    %v5994 = vpack.c.b16 %v5766, %v5760
    %v5995 = vpack.c.b16 %v5767, %v5761
    %v5996 = vpack.c.b16 %v5768, %v5762
    %v5997 = vpack.c.b16 %v5769, %v5763
    %v5998 = vpack.c.b16 %v5776, %v5770
    %v5999 = vpack.c.b16 %v5777, %v5771
    %v6000 = vpack.c.b16 %v5778, %v5772
    %v6001 = vpack.c.b16 %v5779, %v5773
    %v6002 = vpack.c.b16 %v5780, %v5774
    %v6003 = vpack.c.b16 %v5781, %v5775
    %v6004 = vpack.c.b16 %v5788, %v5782
    %v6005 = vpack.c.b16 %v5789, %v5783
    %v6006 = vpack.c.b16 %v5790, %v5784
    %v6007 = vpack.c.b16 %v5791, %v5785
    %v6008 = vpack.c.b16 %v5792, %v5786
    %v6009 = vpack.c.b16 %v5793, %v5787
    %v6010 = vpack.c.b16 %v5800, %v5794
    %v6011 = vpack.c.b16 %v5801, %v5795
    %v6012 = vpack.c.b16 %v5802, %v5796
    %v6013 = vpack.c.b16 %v5803, %v5797
    %v6014 = vpack.c.b16 %v5804, %v5798
    %v6015 = vpack.c.b16 %v5805, %v5799
    %v6016 = vpack.c.b16 %v5812, %v5806
    %v6017 = vpack.c.b16 %v5813, %v5807
    %v6018 = vpack.c.b16 %v5814, %v5808
    %v6019 = vpack.c.b16 %v5815, %v5809
    %v6020 = vpack.c.b16 %v5816, %v5810
    %v6021 = vpack.c.b16 %v5817, %v5811
    %v6022 = vpack.c.b16 %v5824, %v5818
    %v6023 = vpack.c.b16 %v5825, %v5819
    %v6024 = vpack.c.b16 %v5826, %v5820
    %v6025 = vpack.c.b16 %v5827, %v5821
    %v6026 = vpack.c.b16 %v5828, %v5822
    %v6027 = vpack.c.b16 %v5829, %v5823
    %v6028 = vpack.c.b16 %v5836, %v5830
    %v6029 = vpack.c.b16 %v5837, %v5831
    %v6030 = vpack.c.b16 %v5838, %v5832
    %v6031 = vpack.c.b16 %v5839, %v5833
    %v6032 = vpack.c.b16 %v5840, %v5834
    %v6033 = vpack.c.b16 %v5841, %v5835
    %v6034 = vpack.c.b16 %v5848, %v5842
    %v6035 = vpack.c.b16 %v5849, %v5843
    %v6036 = vpack.c.b16 %v5850, %v5844
    %v6037 = vpack.c.b16 %v5851, %v5845
    %v6038 = vpack.c.b16 %v5852, %v5846
    %v6039 = vpack.c.b16 %v5853, %v5847
    %v6040 = vpack.c.b16 %v5860, %v5854
    %v6041 = vpack.c.b16 %v5861, %v5855
    %v6042 = vpack.c.b16 %v5862, %v5856
    %v6043 = vpack.c.b16 %v5863, %v5857
    %v6044 = vpack.c.b16 %v5864, %v5858
    %v6045 = vpack.c.b16 %v5865, %v5859
    %v6046 = vpack.c.b16 %v5872, %v5866
    %v6047 = vpack.c.b16 %v5873, %v5867
    %v6048 = vpack.c.b16 %v5874, %v5868
    %v6049 = vpack.c.b16 %v5875, %v5869
    %v6050 = vpack.c.b16 %v5876, %v5870
    %v6051 = vpack.c.b16 %v5877, %v5871
    %v6052 = vpack.c.b16 %v5884, %v5878
    %v6053 = vpack.c.b16 %v5885, %v5879
    %v6054 = vpack.c.b16 %v5886, %v5880
    %v6055 = vpack.c.b16 %v5887, %v5881
    %v6056 = vpack.c.b16 %v5888, %v5882
    %v6057 = vpack.c.b16 %v5889, %v5883
    %v6058 = vpack.c.b16 %v5896, %v5890
    %v6059 = vpack.c.b16 %v5897, %v5891
    %v6060 = vpack.c.b16 %v5898, %v5892
    %v6061 = vpack.c.b16 %v5899, %v5893
    %v6062 = vpack.c.b16 %v5900, %v5894
    %v6063 = vpack.c.b16 %v5901, %v5895
    %v6064 = vpack.c.b16 %v5908, %v5902
    %v6065 = vpack.c.b16 %v5909, %v5903
    %v6066 = vpack.c.b16 %v5910, %v5904
    %v6067 = vpack.c.b16 %v5911, %v5905
    %v6068 = vpack.c.b16 %v5912, %v5906
    %v6069 = vpack.c.b16 %v5913, %v5907
    %v6070 = vpack.c.b16 %v5920, %v5914
    %v6071 = vpack.c.b16 %v5921, %v5915
    %v6072 = vpack.c.b16 %v5922, %v5916
    %v6073 = vpack.c.b16 %v5923, %v5917
    %v6074 = vpack.c.b16 %v5924, %v5918
    %v6075 = vpack.c.b16 %v5925, %v5919
    %v6076 = vpack.c.b16 %v5932, %v5926
    %v6077 = vpack.c.b16 %v5933, %v5927
    %v6078 = vpack.c.b16 %v5934, %v5928
    %v6079 = vpack.c.b16 %v5935, %v5929
    %v6080 = vpack.c.b16 %v5936, %v5930
    %v6081 = vpack.c.b16 %v5937, %v5931
    %6226 = vmatprep.subr.bf16.mxu0 %v5939
    %6227 = vmatpush1.bf16.msra.mxu0 %v5938
    %6228 = vmatprep.subr.bf16.mxu0 %v5945
    %6229 = vmatpush1.bf16.msra.mxu0 %v5944
    %6230 = vmatprep.subr.bf16.mxu0 %v5951
    %6231 = vmatpush1.bf16.msra.mxu0 %v5950
    %6232 = vmatprep.subr.bf16.mxu0 %v5957
    %6233 = vmatpush1.bf16.msra.mxu0 %v5956
    %6234 = vmatprep.subr.bf16.mxu0 %v5963
    %6235 = vmatpush1.bf16.msra.mxu0 %v5962
    %6236 = vmatprep.subr.bf16.mxu0 %v5969
    %6237 = vmatpush1.bf16.msra.mxu0 %v5968
    %6238 = vmatprep.subr.bf16.mxu0 %v5975
    %6239 = vmatpush1.bf16.msra.mxu0 %v5974
    %6240 = vmatprep.subr.bf16.mxu0 %v5981
    %6241 = vmatpush1.bf16.msra.mxu0 %v5980
    %6242 = vmatprep.subr.bf16.mxu0 %v5987
    %6243 = vmatpush1.bf16.msra.mxu0 %v5986
    %6244 = vmatprep.subr.bf16.mxu0 %v5993
    %6245 = vmatpush1.bf16.msra.mxu0 %v5992
    %6246 = vmatprep.subr.bf16.mxu0 %v5999
    %6247 = vmatpush1.bf16.msra.mxu0 %v5998
    %6248 = vmatprep.subr.bf16.mxu0 %v6005
    %6249 = vmatpush1.bf16.msra.mxu0 %v6004
    %6250 = vmatprep.subr.bf16.mxu0 %v6011
    %6251 = vmatpush1.bf16.msra.mxu0 %v6010
    %6252 = vmatprep.subr.bf16.mxu0 %v6017
    %6253 = vmatpush1.bf16.msra.mxu0 %v6016
    %6254 = vmatprep.subr.bf16.mxu0 %v6023
    %6255 = vmatpush1.bf16.msra.mxu0 %v6022
    %6256 = vmatprep.subr.bf16.mxu0 %v6029
    %6257 = vmatpush1.bf16.msra.mxu0 %v6028
    %6258 = vmatprep.mubr.bf16.mxu0 %v5445
    %6259 = vmatmul.mubr.bf16.gmra.mrb[0].mxu0 %v5433
    %v6260 = vpop.f32.mrb[0].mxu0
    %v6261 = vadd.f32 0.0, %v6260
    %v6262 = vpop.f32.mrb[0].mxu0
    %v6263 = vadd.f32 0.0, %v6262
    %v6264 = vpop.f32.mrb[0].mxu0
    %v6265 = vadd.f32 0.0, %v6264
    %v6266 = vpop.f32.mrb[0].mxu0
    %v6267 = vadd.f32 0.0, %v6266
    %6268 = vmatprep.mubr.bf16.mxu0 %v5465
    %6269 = vmatmul.mubr.bf16.gmra.mrb[0].mxu0 %v5461
    %v6270 = vpop.f32.mrb[0].mxu0
    %v6271 = vadd.f32 0.0, %v6270
    %v6272 = vpop.f32.mrb[0].mxu0
    %v6273 = vadd.f32 0.0, %v6272
    %v6274 = vpop.f32.mrb[0].mxu0
    %v6275 = vadd.f32 0.0, %v6274
    %v6276 = vpop.f32.mrb[0].mxu0
    %v6277 = vadd.f32 0.0, %v6276
    %6278 = vmatprep.mubr.bf16.mxu0 %v5487
    %6279 = vmatmul.mubr.bf16.gmra.mrb[0].mxu0 %v5478
    %v6280 = vpop.f32.mrb[0].mxu0
    %v6281 = vadd.f32 0.0, %v6280
    %v6282 = vpop.f32.mrb[0].mxu0
    %v6283 = vadd.f32 0.0, %v6282
    %v6284 = vpop.f32.mrb[0].mxu0
    %v6285 = vadd.f32 0.0, %v6284
    %v6286 = vpop.f32.mrb[0].mxu0
    %v6287 = vadd.f32 0.0, %v6286
    %6288 = vdwg.mxu0
    %6289 = vmatprep.subr.bf16.mxu0 %v6035
    %6290 = vmatpush1.bf16.msra.mxu0 %v6034
    %6291 = vmatprep.subr.bf16.mxu0 %v6041
    %6292 = vmatpush1.bf16.msra.mxu0 %v6040
    %6293 = vmatprep.subr.bf16.mxu0 %v6047
    %6294 = vmatpush1.bf16.msra.mxu0 %v6046
    %6295 = vmatprep.subr.bf16.mxu0 %v6053
    %6296 = vmatpush1.bf16.msra.mxu0 %v6052
    %6297 = vmatprep.subr.bf16.mxu0 %v6059
    %6298 = vmatpush1.bf16.msra.mxu0 %v6058
    %6299 = vmatprep.subr.bf16.mxu0 %v6065
    %6300 = vmatpush1.bf16.msra.mxu0 %v6064
    %6301 = vmatprep.subr.bf16.mxu0 %v6071
    %6302 = vmatpush1.bf16.msra.mxu0 %v6070
    %6303 = vmatprep.subr.bf16.mxu0 %v6077
    %6304 = vmatpush1.bf16.msra.mxu0 %v6076
    %6305 = vmatprep.subr.bf16.mxu0 0
    %6306 = vmatpush1.bf16.msra.mxu0 0
    %6307 = vmatprep.subr.bf16.mxu0 0
    %6308 = vmatpush1.bf16.msra.mxu0 0
    %6309 = vmatprep.subr.bf16.mxu0 0
    %6310 = vmatpush1.bf16.msra.mxu0 0
    %6311 = vmatprep.subr.bf16.mxu0 0
    %6312 = vmatpush1.bf16.msra.mxu0 0
    %6313 = vmatprep.subr.bf16.mxu0 0
    %6314 = vmatpush1.bf16.msra.mxu0 0
    %6315 = vmatprep.subr.bf16.mxu0 0
    %6316 = vmatpush1.bf16.msra.mxu0 0
    %6317 = vmatprep.subr.bf16.mxu0 0
    %6318 = vmatpush1.bf16.msra.mxu0 0
    %6319 = vmatprep.subr.bf16.mxu0 0
    %6320 = vmatpush1.bf16.msra.mxu0 0
    %6321 = vmatprep.mubr.bf16.mxu0 0
    %6322 = vmatmul.mubr.bf16.gmra.mrb[0].mxu0 %v5457
    %v6323 = vpop.f32.mrb[0].mxu0
    %v6324 = vadd.f32 %v6261, %v6323
    %v6325 = vpop.f32.mrb[0].mxu0
    %v6326 = vadd.f32 %v6263, %v6325
    %v6327 = vpop.f32.mrb[0].mxu0
    %v6328 = vadd.f32 %v6265, %v6327
    %v6329 = vpop.f32.mrb[0].mxu0
    %v6330 = vadd.f32 %v6267, %v6329
    %6331 = vmatprep.mubr.bf16.mxu0 0
    %6332 = vmatmul.mubr.bf16.gmra.mrb[0].mxu0 %v5469
    %v6333 = vpop.f32.mrb[0].mxu0
    %v6334 = vadd.f32 %v6271, %v6333
    %v6335 = vpop.f32.mrb[0].mxu0
    %v6336 = vadd.f32 %v6273, %v6335
    %v6337 = vpop.f32.mrb[0].mxu0
    %v6338 = vadd.f32 %v6275, %v6337
    %v6339 = vpop.f32.mrb[0].mxu0
    %v6340 = vadd.f32 %v6277, %v6339
    %6341 = vmatprep.mubr.bf16.mxu0 0
    %6342 = vmatmul.mubr.bf16.gmra.mrb[0].mxu0 %v5496
    %v6343 = vpop.f32.mrb[0].mxu0
    %v6344 = vadd.f32 %v6281, %v6343
    %v6345 = vpop.f32.mrb[0].mxu0
    %v6346 = vadd.f32 %v6283, %v6345
    %v6347 = vpop.f32.mrb[0].mxu0
    %v6348 = vadd.f32 %v6285, %v6347
    %v6349 = vpop.f32.mrb[0].mxu0
    %v6350 = vadd.f32 %v6287, %v6349
    %6351 = vdwg.mxu0
    %6352 = vmatprep.subr.bf16.mxu0 %v5941
    %6353 = vmatpush1.bf16.msra.mxu0 %v5940
    %6354 = vmatprep.subr.bf16.mxu0 %v5947
    %6355 = vmatpush1.bf16.msra.mxu0 %v5946
    %6356 = vmatprep.subr.bf16.mxu0 %v5953
    %6357 = vmatpush1.bf16.msra.mxu0 %v5952
    %6358 = vmatprep.subr.bf16.mxu0 %v5959
    %6359 = vmatpush1.bf16.msra.mxu0 %v5958
    %6360 = vmatprep.subr.bf16.mxu0 %v5965
    %6361 = vmatpush1.bf16.msra.mxu0 %v5964
    %6362 = vmatprep.subr.bf16.mxu0 %v5971
    %6363 = vmatpush1.bf16.msra.mxu0 %v5970
    %6364 = vmatprep.subr.bf16.mxu0 %v5977
    %6365 = vmatpush1.bf16.msra.mxu0 %v5976
    %6366 = vmatprep.subr.bf16.mxu0 %v5983
    %6367 = vmatpush1.bf16.msra.mxu0 %v5982
    %6368 = vmatprep.subr.bf16.mxu0 %v5989
    %6369 = vmatpush1.bf16.msra.mxu0 %v5988
    %6370 = vmatprep.subr.bf16.mxu0 %v5995
    %6371 = vmatpush1.bf16.msra.mxu0 %v5994
    %6372 = vmatprep.subr.bf16.mxu0 %v6001
    %6373 = vmatpush1.bf16.msra.mxu0 %v6000
    %6374 = vmatprep.subr.bf16.mxu0 %v6007
    %6375 = vmatpush1.bf16.msra.mxu0 %v6006
    %6376 = vmatprep.subr.bf16.mxu0 %v6013
    %6377 = vmatpush1.bf16.msra.mxu0 %v6012
    %6378 = vmatprep.subr.bf16.mxu0 %v6019
    %6379 = vmatpush1.bf16.msra.mxu0 %v6018
    %6380 = vmatprep.subr.bf16.mxu0 %v6025
    %6381 = vmatpush1.bf16.msra.mxu0 %v6024
    %6382 = vmatprep.subr.bf16.mxu0 %v6031
    %6383 = vmatpush1.bf16.msra.mxu0 %v6030
    %6384 = vmatprep.mubr.bf16.mxu0 %v5445
    %6385 = vmatmul.mubr.bf16.gmra.mrb[0].mxu0 %v5433
    %v6386 = vpop.f32.mrb[0].mxu0
    %v6387 = vadd.f32 0.0, %v6386
    %v6388 = vpop.f32.mrb[0].mxu0
    %v6389 = vadd.f32 0.0, %v6388
    %v6390 = vpop.f32.mrb[0].mxu0
    %v6391 = vadd.f32 0.0, %v6390
    %v6392 = vpop.f32.mrb[0].mxu0
    %v6393 = vadd.f32 0.0, %v6392
    %6394 = vmatprep.mubr.bf16.mxu0 %v5465
    %6395 = vmatmul.mubr.bf16.gmra.mrb[0].mxu0 %v5461
    %v6396 = vpop.f32.mrb[0].mxu0
    %v6397 = vadd.f32 0.0, %v6396
    %v6398 = vpop.f32.mrb[0].mxu0
    %v6399 = vadd.f32 0.0, %v6398
    %v6400 = vpop.f32.mrb[0].mxu0
    %v6401 = vadd.f32 0.0, %v6400
    %v6402 = vpop.f32.mrb[0].mxu0
    %v6403 = vadd.f32 0.0, %v6402
    %6404 = vmatprep.mubr.bf16.mxu0 %v5487
    %6405 = vmatmul.mubr.bf16.gmra.mrb[0].mxu0 %v5478
    %v6406 = vpop.f32.mrb[0].mxu0
    %v6407 = vadd.f32 0.0, %v6406
    %v6408 = vpop.f32.mrb[0].mxu0
    %v6409 = vadd.f32 0.0, %v6408
    %v6410 = vpop.f32.mrb[0].mxu0
    %v6411 = vadd.f32 0.0, %v6410
    %v6412 = vpop.f32.mrb[0].mxu0
    %v6413 = vadd.f32 0.0, %v6412
    %6414 = vdwg.mxu0
    %6415 = vmatprep.subr.bf16.mxu0 %v6037
    %6416 = vmatpush1.bf16.msra.mxu0 %v6036
    %6417 = vmatprep.subr.bf16.mxu0 %v6043
    %6418 = vmatpush1.bf16.msra.mxu0 %v6042
    %6419 = vmatprep.subr.bf16.mxu0 %v6049
    %6420 = vmatpush1.bf16.msra.mxu0 %v6048
    %6421 = vmatprep.subr.bf16.mxu0 %v6055
    %6422 = vmatpush1.bf16.msra.mxu0 %v6054
    %6423 = vmatprep.subr.bf16.mxu0 %v6061
    %6424 = vmatpush1.bf16.msra.mxu0 %v6060
    %6425 = vmatprep.subr.bf16.mxu0 %v6067
    %6426 = vmatpush1.bf16.msra.mxu0 %v6066
    %6427 = vmatprep.subr.bf16.mxu0 %v6073
    %6428 = vmatpush1.bf16.msra.mxu0 %v6072
    %6429 = vmatprep.subr.bf16.mxu0 %v6079
    %6430 = vmatpush1.bf16.msra.mxu0 %v6078
    %6431 = vmatprep.subr.bf16.mxu0 0
    %6432 = vmatpush1.bf16.msra.mxu0 0
    %6433 = vmatprep.subr.bf16.mxu0 0
    %6434 = vmatpush1.bf16.msra.mxu0 0
    %6435 = vmatprep.subr.bf16.mxu0 0
    %6436 = vmatpush1.bf16.msra.mxu0 0
    %6437 = vmatprep.subr.bf16.mxu0 0
    %6438 = vmatpush1.bf16.msra.mxu0 0
    %6439 = vmatprep.subr.bf16.mxu0 0
    %6440 = vmatpush1.bf16.msra.mxu0 0
    %6441 = vmatprep.subr.bf16.mxu0 0
    %6442 = vmatpush1.bf16.msra.mxu0 0
    %6443 = vmatprep.subr.bf16.mxu0 0
    %6444 = vmatpush1.bf16.msra.mxu0 0
    %6445 = vmatprep.subr.bf16.mxu0 0
    %6446 = vmatpush1.bf16.msra.mxu0 0
    %6447 = vmatprep.mubr.bf16.mxu0 0
    %6448 = vmatmul.mubr.bf16.gmra.mrb[0].mxu0 %v5457
    %v6449 = vpop.f32.mrb[0].mxu0
    %v6450 = vadd.f32 %v6387, %v6449
    %v6451 = vpop.f32.mrb[0].mxu0
    %v6452 = vadd.f32 %v6389, %v6451
    %v6453 = vpop.f32.mrb[0].mxu0
    %v6454 = vadd.f32 %v6391, %v6453
    %v6455 = vpop.f32.mrb[0].mxu0
    %v6456 = vadd.f32 %v6393, %v6455
    %6457 = vmatprep.mubr.bf16.mxu0 0
    %6458 = vmatmul.mubr.bf16.gmra.mrb[0].mxu0 %v5469
    %v6459 = vpop.f32.mrb[0].mxu0
    %v6460 = vadd.f32 %v6397, %v6459
    %v6461 = vpop.f32.mrb[0].mxu0
    %v6462 = vadd.f32 %v6399, %v6461
    %v6463 = vpop.f32.mrb[0].mxu0
    %v6464 = vadd.f32 %v6401, %v6463
    %v6465 = vpop.f32.mrb[0].mxu0
    %v6466 = vadd.f32 %v6403, %v6465
    %6467 = vmatprep.mubr.bf16.mxu0 0
    %6468 = vmatmul.mubr.bf16.gmra.mrb[0].mxu0 %v5496
    %v6469 = vpop.f32.mrb[0].mxu0
    %v6470 = vadd.f32 %v6407, %v6469
    %v6471 = vpop.f32.mrb[0].mxu0
    %v6472 = vadd.f32 %v6409, %v6471
    %v6473 = vpop.f32.mrb[0].mxu0
    %v6474 = vadd.f32 %v6411, %v6473
    %v6475 = vpop.f32.mrb[0].mxu0
    %v6476 = vadd.f32 %v6413, %v6475
    %6477 = vdwg.mxu0
    %6478 = vmatprep.subr.bf16.mxu0 %v5943
    %6479 = vmatpush1.bf16.msra.mxu0 %v5942
    %6480 = vmatprep.subr.bf16.mxu0 %v5949
    %6481 = vmatpush1.bf16.msra.mxu0 %v5948
    %6482 = vmatprep.subr.bf16.mxu0 %v5955
    %6483 = vmatpush1.bf16.msra.mxu0 %v5954
    %6484 = vmatprep.subr.bf16.mxu0 %v5961
    %6485 = vmatpush1.bf16.msra.mxu0 %v5960
    %6486 = vmatprep.subr.bf16.mxu0 %v5967
    %6487 = vmatpush1.bf16.msra.mxu0 %v5966
    %6488 = vmatprep.subr.bf16.mxu0 %v5973
    %6489 = vmatpush1.bf16.msra.mxu0 %v5972
    %6490 = vmatprep.subr.bf16.mxu0 %v5979
    %6491 = vmatpush1.bf16.msra.mxu0 %v5978
    %6492 = vmatprep.subr.bf16.mxu0 %v5985
    %6493 = vmatpush1.bf16.msra.mxu0 %v5984
    %6494 = vmatprep.subr.bf16.mxu0 %v5991
    %6495 = vmatpush1.bf16.msra.mxu0 %v5990
    %6496 = vmatprep.subr.bf16.mxu0 %v5997
    %6497 = vmatpush1.bf16.msra.mxu0 %v5996
    %6498 = vmatprep.subr.bf16.mxu0 %v6003
    %6499 = vmatpush1.bf16.msra.mxu0 %v6002
    %6500 = vmatprep.subr.bf16.mxu0 %v6009
    %6501 = vmatpush1.bf16.msra.mxu0 %v6008
    %6502 = vmatprep.subr.bf16.mxu0 %v6015
    %6503 = vmatpush1.bf16.msra.mxu0 %v6014
    %6504 = vmatprep.subr.bf16.mxu0 %v6021
    %6505 = vmatpush1.bf16.msra.mxu0 %v6020
    %6506 = vmatprep.subr.bf16.mxu0 %v6027
    %6507 = vmatpush1.bf16.msra.mxu0 %v6026
    %6508 = vmatprep.subr.bf16.mxu0 %v6033
    %6509 = vmatpush1.bf16.msra.mxu0 %v6032
    %6510 = vmatprep.mubr.bf16.mxu0 %v5445
    %6511 = vmatmul.mubr.bf16.gmra.mrb[0].mxu0 %v5433
    %v6512 = vpop.f32.mrb[0].mxu0
    %v6513 = vadd.f32 0.0, %v6512
    %v6514 = vpop.f32.mrb[0].mxu0
    %v6515 = vadd.f32 0.0, %v6514
    %v6516 = vpop.f32.mrb[0].mxu0
    %v6517 = vadd.f32 0.0, %v6516
    %v6518 = vpop.f32.mrb[0].mxu0
    %v6519 = vadd.f32 0.0, %v6518
    %6520 = vmatprep.mubr.bf16.mxu0 %v5465
    %6521 = vmatmul.mubr.bf16.gmra.mrb[0].mxu0 %v5461
    %v6522 = vpop.f32.mrb[0].mxu0
    %v6523 = vadd.f32 0.0, %v6522
    %v6524 = vpop.f32.mrb[0].mxu0
    %v6525 = vadd.f32 0.0, %v6524
    %v6526 = vpop.f32.mrb[0].mxu0
    %v6527 = vadd.f32 0.0, %v6526
    %v6528 = vpop.f32.mrb[0].mxu0
    %v6529 = vadd.f32 0.0, %v6528
    %6530 = vmatprep.mubr.bf16.mxu0 %v5487
    %6531 = vmatmul.mubr.bf16.gmra.mrb[0].mxu0 %v5478
    %v6532 = vpop.f32.mrb[0].mxu0
    %v6533 = vadd.f32 0.0, %v6532
    %v6534 = vpop.f32.mrb[0].mxu0
    %v6535 = vadd.f32 0.0, %v6534
    %v6536 = vpop.f32.mrb[0].mxu0
    %v6537 = vadd.f32 0.0, %v6536
    %v6538 = vpop.f32.mrb[0].mxu0
    %v6539 = vadd.f32 0.0, %v6538
    %6540 = vdwg.mxu0
    %6541 = vmatprep.subr.bf16.mxu0 %v6039
    %6542 = vmatpush1.bf16.msra.mxu0 %v6038
    %6543 = vmatprep.subr.bf16.mxu0 %v6045
    %6544 = vmatpush1.bf16.msra.mxu0 %v6044
    %6545 = vmatprep.subr.bf16.mxu0 %v6051
    %6546 = vmatpush1.bf16.msra.mxu0 %v6050
    %6547 = vmatprep.subr.bf16.mxu0 %v6057
    %6548 = vmatpush1.bf16.msra.mxu0 %v6056
    %6549 = vmatprep.subr.bf16.mxu0 %v6063
    %6550 = vmatpush1.bf16.msra.mxu0 %v6062
    %6551 = vmatprep.subr.bf16.mxu0 %v6069
    %6552 = vmatpush1.bf16.msra.mxu0 %v6068
    %6553 = vmatprep.subr.bf16.mxu0 %v6075
    %6554 = vmatpush1.bf16.msra.mxu0 %v6074
    %6555 = vmatprep.subr.bf16.mxu0 %v6081
    %6556 = vmatpush1.bf16.msra.mxu0 %v6080
    %6557 = vmatprep.subr.bf16.mxu0 0
    %6558 = vmatpush1.bf16.msra.mxu0 0
    %6559 = vmatprep.subr.bf16.mxu0 0
    %6560 = vmatpush1.bf16.msra.mxu0 0
    %6561 = vmatprep.subr.bf16.mxu0 0
    %6562 = vmatpush1.bf16.msra.mxu0 0
    %6563 = vmatprep.subr.bf16.mxu0 0
    %6564 = vmatpush1.bf16.msra.mxu0 0
    %6565 = vmatprep.subr.bf16.mxu0 0
    %6566 = vmatpush1.bf16.msra.mxu0 0
    %6567 = vmatprep.subr.bf16.mxu0 0
    %6568 = vmatpush1.bf16.msra.mxu0 0
    %6569 = vmatprep.subr.bf16.mxu0 0
    %6570 = vmatpush1.bf16.msra.mxu0 0
    %6571 = vmatprep.subr.bf16.mxu0 0
    %6572 = vmatpush1.bf16.msra.mxu0 0
    %6573 = vmatprep.mubr.bf16.mxu0 0
    %6574 = vmatmul.mubr.bf16.gmra.mrb[0].mxu0 %v5457
    %v6575 = vpop.f32.mrb[0].mxu0
    %v6576 = vadd.f32 %v6513, %v6575
    %v6577 = vpop.f32.mrb[0].mxu0
    %v6578 = vadd.f32 %v6515, %v6577
    %v6579 = vpop.f32.mrb[0].mxu0
    %v6580 = vadd.f32 %v6517, %v6579
    %v6581 = vpop.f32.mrb[0].mxu0
    %v6582 = vadd.f32 %v6519, %v6581
    %6583 = vmatprep.mubr.bf16.mxu0 0
    %6584 = vmatmul.mubr.bf16.gmra.mrb[0].mxu0 %v5469
    %v6585 = vpop.f32.mrb[0].mxu0
    %v6586 = vadd.f32 %v6523, %v6585
    %v6587 = vpop.f32.mrb[0].mxu0
    %v6588 = vadd.f32 %v6525, %v6587
    %v6589 = vpop.f32.mrb[0].mxu0
    %v6590 = vadd.f32 %v6527, %v6589
    %v6591 = vpop.f32.mrb[0].mxu0
    %v6592 = vadd.f32 %v6529, %v6591
    %6593 = vmatprep.mubr.bf16.mxu0 0
    %6594 = vmatmul.mubr.bf16.gmra.mrb[0].mxu0 %v5496
    %v6595 = vpop.f32.mrb[0].mxu0
    %v6596 = vadd.f32 %v6533, %v6595
    %v6597 = vpop.f32.mrb[0].mxu0
    %v6598 = vadd.f32 %v6535, %v6597
    %v6599 = vpop.f32.mrb[0].mxu0
    %v6600 = vadd.f32 %v6537, %v6599
    %v6601 = vpop.f32.mrb[0].mxu0
    %v6602 = vadd.f32 %v6539, %v6601
    %6603 = vdwg.mxu0
    %v6604 = vadd.f32 %v5230, %v6324
    %v6605 = vadd.f32 %v5231, %v6326
    %v6606 = vadd.f32 %v5232, %v6450
    %v6607 = vadd.f32 %v5233, %v6452
    %v6608 = vadd.f32 %v5234, %v6576
    %v6609 = vadd.f32 %v5235, %v6578
    %v6610 = vadd.f32 %v5236, %v6328
    %v6611 = vadd.f32 %v5237, %v6330
    %v6612 = vadd.f32 %v5238, %v6454
    %v6613 = vadd.f32 %v5239, %v6456
    %v6614 = vadd.f32 %v5240, %v6580
    %v6615 = vadd.f32 %v5241, %v6582
    %v6616 = vadd.f32 %v5242, %v6334
    %v6617 = vadd.f32 %v5243, %v6336
    %v6618 = vadd.f32 %v5244, %v6460
    %v6619 = vadd.f32 %v5245, %v6462
    %v6620 = vadd.f32 %v5246, %v6586
    %v6621 = vadd.f32 %v5247, %v6588
    %v6622 = vadd.f32 %v5248, %v6338
    %v6623 = vadd.f32 %v5249, %v6340
    %v6624 = vadd.f32 %v5250, %v6464
    %v6625 = vadd.f32 %v5251, %v6466
    %v6626 = vadd.f32 %v5252, %v6590
    %v6627 = vadd.f32 %v5253, %v6592
    %v6628 = vadd.f32 %v5254, %v6344
    %v6629 = vadd.f32 %v5255, %v6346
    %v6630 = vadd.f32 %v5256, %v6470
    %v6631 = vadd.f32 %v5257, %v6472
    %v6632 = vadd.f32 %v5258, %v6596
    %v6633 = vadd.f32 %v5259, %v6598
    %v6634 = vadd.f32 %v5260, %v6348
    %v6635 = vadd.f32 %v5261, %v6350
    %v6636 = vadd.f32 %v5262, %v6474
    %v6637 = vadd.f32 %v5263, %v6476
    %v6638 = vadd.f32 %v5264, %v6600
    %v6639 = vadd.f32 %v5265, %v6602
    %v6640 = vld [vmem:[%s0] sm:$0xcc]
    %v6641 = vld [vmem:[%s0 + $0x8] sm:$0xc]
    %s6642 = scalar_lea.vmem [#allocation10], 4608
    %v6643 = vld [vmem:[%s6642] sm:$0xff]
    %v6644 = vld [vmem:[%s6642 + $0x8] sm:$0xff]
    %v6645 = vld [vmem:[%s6642 + $0x10] sm:$0xff]
    %v6646 = vld [vmem:[%s6642 + $0x18] sm:$0xff]
    %v6647 = vld [vmem:[%s6642 + $0x20] sm:$0xff]
    %v6648 = vld [vmem:[%s6642 + $0x28] sm:$0xff]
    %v6649 = vld [vmem:[%s6642 + $0x30] sm:$0xff]
    %v6650 = vld [vmem:[%s6642 + $0x38] sm:$0xff]
    %v6651 = vld [vmem:[%s6642 + $0x40] sm:$0xff]
    %v6652 = vld [vmem:[%s6642 + $0x48] sm:$0xff]
    %v6653 = vld [vmem:[%s6642 + $0x50] sm:$0xff]
    %v6654 = vld [vmem:[%s6642 + $0x58] sm:$0xff]
    %v6655 = vld [vmem:[%s6642 + $0x60] sm:$0xff]
    %v6656 = vld [vmem:[%s6642 + $0x68] sm:$0xff]
    %v6657 = vld [vmem:[%s6642 + $0x70] sm:$0xff]
    %v6658 = vld [vmem:[%s6642 + $0x78] sm:$0xff]
    %v6659 = vld [vmem:[%s6642 + $0x80] sm:$0xff]
    %v6660 = vld [vmem:[%s6642 + $0x88] sm:$0xff]
    %v6661 = vld [vmem:[%s6642 + $0x90] sm:$0xff]
    %v6662 = vld [vmem:[%s6642 + $0x98] sm:$0xff]
    %v6663 = vld [vmem:[%s6642 + $0xa0] sm:$0xff]
    %v6664 = vld [vmem:[%s6642 + $0xa8] sm:$0xff]
    %v6665 = vld [vmem:[%s6642 + $0xb0] sm:$0xff]
    %v6666 = vld [vmem:[%s6642 + $0xb8] sm:$0xff]
    %v6667 = vld [vmem:[%s6642 + $0xc0] sm:$0xff]
    %v6668 = vld [vmem:[%s6642 + $0xc8] sm:$0xff]
    %v6669 = vld [vmem:[%s6642 + $0xd0] sm:$0xff]
    %v6670 = vld [vmem:[%s6642 + $0xd8] sm:$0xff]
    %v6671 = vld [vmem:[%s6642 + $0xe0] sm:$0xff]
    %v6672 = vld [vmem:[%s6642 + $0xe8] sm:$0xff]
    %v6673 = vld [vmem:[%s6642 + $0xf0] sm:$0xff]
    %v6674 = vld [vmem:[%s6642 + $0xf8] sm:$0xff]
    %v6675 = vld [vmem:[%s6642 + $0x100] sm:$0xff]
    %v6676 = vld [vmem:[%s6642 + $0x108] sm:$0xff]
    %v6677 = vld [vmem:[%s6642 + $0x110] sm:$0xff]
    %v6678 = vld [vmem:[%s6642 + $0x118] sm:$0xff]
    %v6679 = vld [vmem:[%s6642 + $0x120] sm:$0xff]
    %v6680 = vld [vmem:[%s6642 + $0x128] sm:$0xff]
    %v6681 = vld [vmem:[%s6642 + $0x130] sm:$0xff]
    %v6682 = vld [vmem:[%s6642 + $0x138] sm:$0xff]
    %v6683 = vld [vmem:[%s6642 + $0x140] sm:$0xff]
    %v6684 = vld [vmem:[%s6642 + $0x148] sm:$0xff]
    %v6685 = vld [vmem:[%s6642 + $0x150] sm:$0xff]
    %v6686 = vld [vmem:[%s6642 + $0x158] sm:$0xff]
    %v6687 = vld [vmem:[%s6642 + $0x160] sm:$0xff]
    %v6688 = vld [vmem:[%s6642 + $0x168] sm:$0xff]
    %v6689 = vld [vmem:[%s6642 + $0x170] sm:$0xff]
    %v6690 = vld [vmem:[%s6642 + $0x178] sm:$0xff]
    %v6691 = vld [vmem:[%s6642 + $0x180] sm:$0xff]
    %v6692 = vld [vmem:[%s6642 + $0x188] sm:$0xff]
    %v6693 = vld [vmem:[%s6642 + $0x190] sm:$0xff]
    %v6694 = vld [vmem:[%s6642 + $0x198] sm:$0xff]
    %v6695 = vld [vmem:[%s6642 + $0x1a0] sm:$0xff]
    %v6696 = vld [vmem:[%s6642 + $0x1a8] sm:$0xff]
    %v6697 = vld [vmem:[%s6642 + $0x1b0] sm:$0xff]
    %v6698 = vld [vmem:[%s6642 + $0x1b8] sm:$0xff]
    %v6699 = vld [vmem:[%s6642 + $0x1c0] sm:$0xff]
    %v6700 = vld [vmem:[%s6642 + $0x1c8] sm:$0xff]
    %v6701 = vld [vmem:[%s6642 + $0x1d0] sm:$0xff]
    %v6702 = vld [vmem:[%s6642 + $0x1d8] sm:$0xff]
    %v6703 = vld [vmem:[%s6642 + $0x1e0] sm:$0xff]
    %v6704 = vld [vmem:[%s6642 + $0x1e8] sm:$0xff]
    %v6705 = vld [vmem:[%s6642 + $0x1f0] sm:$0xff]
    %v6706 = vld [vmem:[%s6642 + $0x1f8] sm:$0xff]
    %v6707 = vld [vmem:[%s6642 + $0x200] sm:$0xff]
    %v6708 = vld [vmem:[%s6642 + $0x208] sm:$0xff]
    %v6709 = vld [vmem:[%s6642 + $0x210] sm:$0xff]
    %v6710 = vld [vmem:[%s6642 + $0x218] sm:$0xff]
    %v6711 = vld [vmem:[%s6642 + $0x220] sm:$0xff]
    %v6712 = vld [vmem:[%s6642 + $0x228] sm:$0xff]
    %v6713 = vld [vmem:[%s6642 + $0x230] sm:$0xff]
    %v6714 = vld [vmem:[%s6642 + $0x238] sm:$0xff]
    %v6715 = vld [vmem:[%s6642 + $0x240] sm:$0xff]
    %v6716 = vld [vmem:[%s6642 + $0x248] sm:$0xff]
    %v6717 = vld [vmem:[%s6642 + $0x250] sm:$0xff]
    %v6718 = vld [vmem:[%s6642 + $0x258] sm:$0xff]
    %v6719 = vld [vmem:[%s6642 + $0x260] sm:$0xff]
    %v6720 = vld [vmem:[%s6642 + $0x268] sm:$0xff]
    %v6721 = vld [vmem:[%s6642 + $0x270] sm:$0xff]
    %v6722 = vld [vmem:[%s6642 + $0x278] sm:$0xff]
    %v6723 = vld [vmem:[%s6642 + $0x280] sm:$0xff]
    %v6724 = vld [vmem:[%s6642 + $0x288] sm:$0xff]
    %v6725 = vld [vmem:[%s6642 + $0x290] sm:$0xff]
    %v6726 = vld [vmem:[%s6642 + $0x298] sm:$0xff]
    %v6727 = vld [vmem:[%s6642 + $0x2a0] sm:$0xff]
    %v6728 = vld [vmem:[%s6642 + $0x2a8] sm:$0xff]
    %v6729 = vld [vmem:[%s6642 + $0x2b0] sm:$0xff]
    %v6730 = vld [vmem:[%s6642 + $0x2b8] sm:$0xff]
    %v6731 = vld [vmem:[%s6642 + $0x2c0] sm:$0xff]
    %v6732 = vld [vmem:[%s6642 + $0x2c8] sm:$0xff]
    %v6733 = vld [vmem:[%s6642 + $0x2d0] sm:$0xff]
    %v6734 = vld [vmem:[%s6642 + $0x2d8] sm:$0xff]
    %v6735 = vld [vmem:[%s6642 + $0x2e0] sm:$0xff]
    %v6736 = vld [vmem:[%s6642 + $0x2e8] sm:$0xff]
    %v6737 = vld [vmem:[%s6642 + $0x2f0] sm:$0xff]
    %v6738 = vld [vmem:[%s6642 + $0x2f8] sm:$0xff]
    %v6739 = vld [vmem:[%s6642 + $0x300] sm:$0xff]
    %v6740 = vld [vmem:[%s6642 + $0x308] sm:$0xff]
    %v6741 = vld [vmem:[%s6642 + $0x310] sm:$0xff]
    %v6742 = vld [vmem:[%s6642 + $0x318] sm:$0xff]
    %v6743 = vld [vmem:[%s6642 + $0x320] sm:$0xff]
    %v6744 = vld [vmem:[%s6642 + $0x328] sm:$0xff]
    %v6745 = vld [vmem:[%s6642 + $0x330] sm:$0xff]
    %v6746 = vld [vmem:[%s6642 + $0x338] sm:$0xff]
    %v6747 = vld [vmem:[%s6642 + $0x340] sm:$0xff]
    %v6748 = vld [vmem:[%s6642 + $0x348] sm:$0xff]
    %v6749 = vld [vmem:[%s6642 + $0x350] sm:$0xff]
    %v6750 = vld [vmem:[%s6642 + $0x358] sm:$0xff]
    %v6751 = vld [vmem:[%s6642 + $0x360] sm:$0xff]
    %v6752 = vld [vmem:[%s6642 + $0x368] sm:$0xff]
    %v6753 = vld [vmem:[%s6642 + $0x370] sm:$0xff]
    %v6754 = vld [vmem:[%s6642 + $0x378] sm:$0xff]
    %v6755 = vld [vmem:[%s6642 + $0x380] sm:$0xff]
    %v6756 = vld [vmem:[%s6642 + $0x388] sm:$0xff]
    %v6757 = vld [vmem:[%s6642 + $0x390] sm:$0xff]
    %v6758 = vld [vmem:[%s6642 + $0x398] sm:$0xff]
    %v6759 = vld [vmem:[%s6642 + $0x3a0] sm:$0xff]
    %v6760 = vld [vmem:[%s6642 + $0x3a8] sm:$0xff]
    %v6761 = vld [vmem:[%s6642 + $0x3b0] sm:$0xff]
    %v6762 = vld [vmem:[%s6642 + $0x3b8] sm:$0xff]
    %v6763 = vld [vmem:[%s6642 + $0x3c0] sm:$0xff]
    %v6764 = vld [vmem:[%s6642 + $0x3c8] sm:$0xff]
    %v6765 = vld [vmem:[%s6642 + $0x3d0] sm:$0xff]
    %v6766 = vld [vmem:[%s6642 + $0x3d8] sm:$0xff]
    %v6767 = vld [vmem:[%s6642 + $0x3e0] sm:$0xff]
    %v6768 = vld [vmem:[%s6642 + $0x3e8] sm:$0xff]
    %v6769 = vld [vmem:[%s6642 + $0x3f0] sm:$0xff]
    %v6770 = vld [vmem:[%s6642 + $0x3f8] sm:$0xff]
    %v6771 = vld [vmem:[%s6642 + $0x400] sm:$0xff]
    %v6772 = vld [vmem:[%s6642 + $0x408] sm:$0xff]
    %v6773 = vld [vmem:[%s6642 + $0x410] sm:$0xff]
    %v6774 = vld [vmem:[%s6642 + $0x418] sm:$0xff]
    %v6775 = vld [vmem:[%s6642 + $0x420] sm:$0xff]
    %v6776 = vld [vmem:[%s6642 + $0x428] sm:$0xff]
    %v6777 = vld [vmem:[%s6642 + $0x430] sm:$0xff]
    %v6778 = vld [vmem:[%s6642 + $0x438] sm:$0xff]
    %v6779 = vld [vmem:[%s6642 + $0x440] sm:$0xff]
    %v6780 = vld [vmem:[%s6642 + $0x448] sm:$0xff]
    %v6781 = vld [vmem:[%s6642 + $0x450] sm:$0xff]
    %v6782 = vld [vmem:[%s6642 + $0x458] sm:$0xff]
    %v6783 = vld [vmem:[%s6642 + $0x460] sm:$0xff]
    %v6784 = vld [vmem:[%s6642 + $0x468] sm:$0xff]
    %v6785 = vld [vmem:[%s6642 + $0x470] sm:$0xff]
    %v6786 = vld [vmem:[%s6642 + $0x478] sm:$0xff]
    %v6789 = vunpack.c.l.b16 %v6640
    %v6790 = vunpack.c.h.b16 %v6640
    %v6791 = vunpack.c.l.b16 %v6641
    %v6792 = vpack.c.b16 %v1580, %v6789
    %v6793 = vpack.c.b16 %v1581, %v6790
    %v6794 = vpack.c.b16 %v1582, %v6791
    %vm6795 = vcmask 1045504
    %v6796 = vrot.slane %v6792, 2
    %v6797 = vrot.slane %v1601, 2
    %v6798 = vsel %vm6795, %v6796, %v6797
    %v6799 = vrot.slane %v6793, 2
    %v6800 = vrot.slane %v1602, 2
    %v6801 = vsel %vm6795, %v6799, %v6800
    %v6802 = vrot.slane %v6794, 2
    %v6803 = vrot.slane %v1603, 2
    %v6804 = vsel %vm6795, %v6802, %v6803
    %v6805 = vrot.slane %v1604, 2
    %v6806 = vsel %vm6795, %v6797, %v6805
    %v6807 = vrot.slane %v1605, 2
    %v6808 = vsel %vm6795, %v6800, %v6807
    %v6809 = vrot.slane %v1606, 2
    %v6810 = vsel %vm6795, %v6803, %v6809
    %v6811 = vrot.slane %v5418, 2
    %v6812 = vsel %vm6795, %v6805, %v6811
    %v6813 = vrot.slane %v5419, 2
    %v6814 = vsel %vm6795, %v6807, %v6813
    %v6815 = vrot.slane %v5420, 2
    %v6816 = vsel %vm6795, %v6809, %v6815
    %v6970 = vunpack.c.l.b16 %v6643
    %v6971 = vunpack.c.h.b16 %v6643
    %v6972 = vunpack.c.l.b16 %v6644
    %v6973 = vunpack.c.h.b16 %v6644
    %v6974 = vunpack.c.l.b16 %v6645
    %v6975 = vunpack.c.h.b16 %v6645
    %v6976 = vunpack.c.l.b16 %v6646
    %v6977 = vunpack.c.h.b16 %v6646
    %v6978 = vunpack.c.l.b16 %v6647
    %v6979 = vunpack.c.h.b16 %v6647
    %v6980 = vunpack.c.l.b16 %v6648
    %v6981 = vunpack.c.h.b16 %v6648
    %v6982 = vunpack.c.l.b16 %v6649
    %v6983 = vunpack.c.h.b16 %v6649
    %v6984 = vunpack.c.l.b16 %v6650
    %v6985 = vunpack.c.h.b16 %v6650
    %v6986 = vunpack.c.l.b16 %v6651
    %v6987 = vunpack.c.h.b16 %v6651
    %v6988 = vunpack.c.l.b16 %v6652
    %v6989 = vunpack.c.h.b16 %v6652
    %v6990 = vunpack.c.l.b16 %v6653
    %v6991 = vunpack.c.h.b16 %v6653
    %v6992 = vunpack.c.l.b16 %v6654
    %v6993 = vunpack.c.h.b16 %v6654
    %v6994 = vunpack.c.l.b16 %v6655
    %v6995 = vunpack.c.h.b16 %v6655
    %v6996 = vunpack.c.l.b16 %v6656
    %v6997 = vunpack.c.h.b16 %v6656
    %v6998 = vunpack.c.l.b16 %v6657
    %v6999 = vunpack.c.h.b16 %v6657
    %v7000 = vunpack.c.l.b16 %v6658
    %v7001 = vunpack.c.h.b16 %v6658
    %v7002 = vunpack.c.l.b16 %v6659
    %v7003 = vunpack.c.h.b16 %v6659
    %v7004 = vunpack.c.l.b16 %v6660
    %v7005 = vunpack.c.h.b16 %v6660
    %v7006 = vunpack.c.l.b16 %v6661
    %v7007 = vunpack.c.h.b16 %v6661
    %v7008 = vunpack.c.l.b16 %v6662
    %v7009 = vunpack.c.h.b16 %v6662
    %v7010 = vunpack.c.l.b16 %v6663
    %v7011 = vunpack.c.h.b16 %v6663
    %v7012 = vunpack.c.l.b16 %v6664
    %v7013 = vunpack.c.h.b16 %v6664
    %v7014 = vunpack.c.l.b16 %v6665
    %v7015 = vunpack.c.h.b16 %v6665
    %v7016 = vunpack.c.l.b16 %v6666
    %v7017 = vunpack.c.h.b16 %v6666
    %v7018 = vunpack.c.l.b16 %v6667
    %v7019 = vunpack.c.h.b16 %v6667
    %v7020 = vunpack.c.l.b16 %v6668
    %v7021 = vunpack.c.h.b16 %v6668
    %v7022 = vunpack.c.l.b16 %v6669
    %v7023 = vunpack.c.h.b16 %v6669
    %v7024 = vunpack.c.l.b16 %v6670
    %v7025 = vunpack.c.h.b16 %v6670
    %v7026 = vunpack.c.l.b16 %v6671
    %v7027 = vunpack.c.h.b16 %v6671
    %v7028 = vunpack.c.l.b16 %v6672
    %v7029 = vunpack.c.h.b16 %v6672
    %v7030 = vunpack.c.l.b16 %v6673
    %v7031 = vunpack.c.h.b16 %v6673
    %v7032 = vunpack.c.l.b16 %v6674
    %v7033 = vunpack.c.h.b16 %v6674
    %v7034 = vunpack.c.l.b16 %v6675
    %v7035 = vunpack.c.h.b16 %v6675
    %v7036 = vunpack.c.l.b16 %v6676
    %v7037 = vunpack.c.h.b16 %v6676
    %v7038 = vunpack.c.l.b16 %v6677
    %v7039 = vunpack.c.h.b16 %v6677
    %v7040 = vunpack.c.l.b16 %v6678
    %v7041 = vunpack.c.h.b16 %v6678
    %v7042 = vunpack.c.l.b16 %v6679
    %v7043 = vunpack.c.h.b16 %v6679
    %v7044 = vunpack.c.l.b16 %v6680
    %v7045 = vunpack.c.h.b16 %v6680
    %v7046 = vunpack.c.l.b16 %v6681
    %v7047 = vunpack.c.h.b16 %v6681
    %v7048 = vunpack.c.l.b16 %v6682
    %v7049 = vunpack.c.h.b16 %v6682
    %v7050 = vunpack.c.l.b16 %v6683
    %v7051 = vunpack.c.h.b16 %v6683
    %v7052 = vunpack.c.l.b16 %v6684
    %v7053 = vunpack.c.h.b16 %v6684
    %v7054 = vunpack.c.l.b16 %v6685
    %v7055 = vunpack.c.h.b16 %v6685
    %v7056 = vunpack.c.l.b16 %v6686
    %v7057 = vunpack.c.h.b16 %v6686
    %v7058 = vunpack.c.l.b16 %v6687
    %v7059 = vunpack.c.h.b16 %v6687
    %v7060 = vunpack.c.l.b16 %v6688
    %v7061 = vunpack.c.h.b16 %v6688
    %v7062 = vunpack.c.l.b16 %v6689
    %v7063 = vunpack.c.h.b16 %v6689
    %v7064 = vunpack.c.l.b16 %v6690
    %v7065 = vunpack.c.h.b16 %v6690
    %v7066 = vunpack.c.l.b16 %v6691
    %v7067 = vunpack.c.h.b16 %v6691
    %v7068 = vunpack.c.l.b16 %v6692
    %v7069 = vunpack.c.h.b16 %v6692
    %v7070 = vunpack.c.l.b16 %v6693
    %v7071 = vunpack.c.h.b16 %v6693
    %v7072 = vunpack.c.l.b16 %v6694
    %v7073 = vunpack.c.h.b16 %v6694
    %v7074 = vunpack.c.l.b16 %v6695
    %v7075 = vunpack.c.h.b16 %v6695
    %v7076 = vunpack.c.l.b16 %v6696
    %v7077 = vunpack.c.h.b16 %v6696
    %v7078 = vunpack.c.l.b16 %v6697
    %v7079 = vunpack.c.h.b16 %v6697
    %v7080 = vunpack.c.l.b16 %v6698
    %v7081 = vunpack.c.h.b16 %v6698
    %v7082 = vunpack.c.l.b16 %v6699
    %v7083 = vunpack.c.h.b16 %v6699
    %v7084 = vunpack.c.l.b16 %v6700
    %v7085 = vunpack.c.h.b16 %v6700
    %v7086 = vunpack.c.l.b16 %v6701
    %v7087 = vunpack.c.h.b16 %v6701
    %v7088 = vunpack.c.l.b16 %v6702
    %v7089 = vunpack.c.h.b16 %v6702
    %v7090 = vunpack.c.l.b16 %v6703
    %v7091 = vunpack.c.h.b16 %v6703
    %v7092 = vunpack.c.l.b16 %v6704
    %v7093 = vunpack.c.h.b16 %v6704
    %v7094 = vunpack.c.l.b16 %v6705
    %v7095 = vunpack.c.h.b16 %v6705
    %v7096 = vunpack.c.l.b16 %v6706
    %v7097 = vunpack.c.h.b16 %v6706
    %v7098 = vunpack.c.l.b16 %v6707
    %v7099 = vunpack.c.h.b16 %v6707
    %v7100 = vunpack.c.l.b16 %v6708
    %v7101 = vunpack.c.h.b16 %v6708
    %v7102 = vunpack.c.l.b16 %v6709
    %v7103 = vunpack.c.h.b16 %v6709
    %v7104 = vunpack.c.l.b16 %v6710
    %v7105 = vunpack.c.h.b16 %v6710
    %v7106 = vunpack.c.l.b16 %v6711
    %v7107 = vunpack.c.h.b16 %v6711
    %v7108 = vunpack.c.l.b16 %v6712
    %v7109 = vunpack.c.h.b16 %v6712
    %v7110 = vunpack.c.l.b16 %v6713
    %v7111 = vunpack.c.h.b16 %v6713
    %v7112 = vunpack.c.l.b16 %v6714
    %v7113 = vunpack.c.h.b16 %v6714
    %v7114 = vunpack.c.l.b16 %v6715
    %v7115 = vunpack.c.h.b16 %v6715
    %v7116 = vunpack.c.l.b16 %v6716
    %v7117 = vunpack.c.h.b16 %v6716
    %v7118 = vunpack.c.l.b16 %v6717
    %v7119 = vunpack.c.h.b16 %v6717
    %v7120 = vunpack.c.l.b16 %v6718
    %v7121 = vunpack.c.h.b16 %v6718
    %v7122 = vunpack.c.l.b16 %v6719
    %v7123 = vunpack.c.h.b16 %v6719
    %v7124 = vunpack.c.l.b16 %v6720
    %v7125 = vunpack.c.h.b16 %v6720
    %v7126 = vunpack.c.l.b16 %v6721
    %v7127 = vunpack.c.h.b16 %v6721
    %v7128 = vunpack.c.l.b16 %v6722
    %v7129 = vunpack.c.h.b16 %v6722
    %v7130 = vunpack.c.l.b16 %v6723
    %v7131 = vunpack.c.h.b16 %v6723
    %v7132 = vunpack.c.l.b16 %v6724
    %v7133 = vunpack.c.h.b16 %v6724
    %v7134 = vunpack.c.l.b16 %v6725
    %v7135 = vunpack.c.h.b16 %v6725
    %v7136 = vunpack.c.l.b16 %v6726
    %v7137 = vunpack.c.h.b16 %v6726
    %v7138 = vunpack.c.l.b16 %v6727
    %v7139 = vunpack.c.h.b16 %v6727
    %v7140 = vunpack.c.l.b16 %v6728
    %v7141 = vunpack.c.h.b16 %v6728
    %v7142 = vunpack.c.l.b16 %v6729
    %v7143 = vunpack.c.h.b16 %v6729
    %v7144 = vunpack.c.l.b16 %v6730
    %v7145 = vunpack.c.h.b16 %v6730
    %v7146 = vunpack.c.l.b16 %v6731
    %v7147 = vunpack.c.h.b16 %v6731
    %v7148 = vunpack.c.l.b16 %v6732
    %v7149 = vunpack.c.h.b16 %v6732
    %v7150 = vunpack.c.l.b16 %v6733
    %v7151 = vunpack.c.h.b16 %v6733
    %v7152 = vunpack.c.l.b16 %v6734
    %v7153 = vunpack.c.h.b16 %v6734
    %v7154 = vunpack.c.l.b16 %v6735
    %v7155 = vunpack.c.h.b16 %v6735
    %v7156 = vunpack.c.l.b16 %v6736
    %v7157 = vunpack.c.h.b16 %v6736
    %v7158 = vunpack.c.l.b16 %v6737
    %v7159 = vunpack.c.h.b16 %v6737
    %v7160 = vunpack.c.l.b16 %v6738
    %v7161 = vunpack.c.h.b16 %v6738
    %v7162 = vunpack.c.l.b16 %v6739
    %v7163 = vunpack.c.h.b16 %v6739
    %v7164 = vunpack.c.l.b16 %v6740
    %v7165 = vunpack.c.h.b16 %v6740
    %v7166 = vunpack.c.l.b16 %v6741
    %v7167 = vunpack.c.h.b16 %v6741
    %v7168 = vunpack.c.l.b16 %v6742
    %v7169 = vunpack.c.h.b16 %v6742
    %v7170 = vunpack.c.l.b16 %v6743
    %v7171 = vunpack.c.h.b16 %v6743
    %v7172 = vunpack.c.l.b16 %v6744
    %v7173 = vunpack.c.h.b16 %v6744
    %v7174 = vunpack.c.l.b16 %v6745
    %v7175 = vunpack.c.h.b16 %v6745
    %v7176 = vunpack.c.l.b16 %v6746
    %v7177 = vunpack.c.h.b16 %v6746
    %v7178 = vunpack.c.l.b16 %v6747
    %v7179 = vunpack.c.h.b16 %v6747
    %v7180 = vunpack.c.l.b16 %v6748
    %v7181 = vunpack.c.h.b16 %v6748
    %v7182 = vunpack.c.l.b16 %v6749
    %v7183 = vunpack.c.h.b16 %v6749
    %v7184 = vunpack.c.l.b16 %v6750
    %v7185 = vunpack.c.h.b16 %v6750
    %v7186 = vunpack.c.l.b16 %v6751
    %v7187 = vunpack.c.h.b16 %v6751
    %v7188 = vunpack.c.l.b16 %v6752
    %v7189 = vunpack.c.h.b16 %v6752
    %v7190 = vunpack.c.l.b16 %v6753
    %v7191 = vunpack.c.h.b16 %v6753
    %v7192 = vunpack.c.l.b16 %v6754
    %v7193 = vunpack.c.h.b16 %v6754
    %v7194 = vunpack.c.l.b16 %v6755
    %v7195 = vunpack.c.h.b16 %v6755
    %v7196 = vunpack.c.l.b16 %v6756
    %v7197 = vunpack.c.h.b16 %v6756
    %v7198 = vunpack.c.l.b16 %v6757
    %v7199 = vunpack.c.h.b16 %v6757
    %v7200 = vunpack.c.l.b16 %v6758
    %v7201 = vunpack.c.h.b16 %v6758
    %v7202 = vunpack.c.l.b16 %v6759
    %v7203 = vunpack.c.h.b16 %v6759
    %v7204 = vunpack.c.l.b16 %v6760
    %v7205 = vunpack.c.h.b16 %v6760
    %v7206 = vunpack.c.l.b16 %v6761
    %v7207 = vunpack.c.h.b16 %v6761
    %v7208 = vunpack.c.l.b16 %v6762
    %v7209 = vunpack.c.h.b16 %v6762
    %v7210 = vunpack.c.l.b16 %v6763
    %v7211 = vunpack.c.h.b16 %v6763
    %v7212 = vunpack.c.l.b16 %v6764
    %v7213 = vunpack.c.h.b16 %v6764
    %v7214 = vunpack.c.l.b16 %v6765
    %v7215 = vunpack.c.h.b16 %v6765
    %v7216 = vunpack.c.l.b16 %v6766
    %v7217 = vunpack.c.h.b16 %v6766
    %v7218 = vunpack.c.l.b16 %v6767
    %v7219 = vunpack.c.h.b16 %v6767
    %v7220 = vunpack.c.l.b16 %v6768
    %v7221 = vunpack.c.h.b16 %v6768
    %v7222 = vunpack.c.l.b16 %v6769
    %v7223 = vunpack.c.h.b16 %v6769
    %v7224 = vunpack.c.l.b16 %v6770
    %v7225 = vunpack.c.h.b16 %v6770
    %v7226 = vunpack.c.l.b16 %v6771
    %v7227 = vunpack.c.h.b16 %v6771
    %v7228 = vunpack.c.l.b16 %v6772
    %v7229 = vunpack.c.h.b16 %v6772
    %v7230 = vunpack.c.l.b16 %v6773
    %v7231 = vunpack.c.h.b16 %v6773
    %v7232 = vunpack.c.l.b16 %v6774
    %v7233 = vunpack.c.h.b16 %v6774
    %v7234 = vunpack.c.l.b16 %v6775
    %v7235 = vunpack.c.h.b16 %v6775
    %v7236 = vunpack.c.l.b16 %v6776
    %v7237 = vunpack.c.h.b16 %v6776
    %v7238 = vunpack.c.l.b16 %v6777
    %v7239 = vunpack.c.h.b16 %v6777
    %v7240 = vunpack.c.l.b16 %v6778
    %v7241 = vunpack.c.h.b16 %v6778
    %v7242 = vunpack.c.l.b16 %v6779
    %v7243 = vunpack.c.h.b16 %v6779
    %v7244 = vunpack.c.l.b16 %v6780
    %v7245 = vunpack.c.h.b16 %v6780
    %v7246 = vunpack.c.l.b16 %v6781
    %v7247 = vunpack.c.h.b16 %v6781
    %v7248 = vunpack.c.l.b16 %v6782
    %v7249 = vunpack.c.h.b16 %v6782
    %v7250 = vunpack.c.l.b16 %v6783
    %v7251 = vunpack.c.h.b16 %v6783
    %v7252 = vunpack.c.l.b16 %v6784
    %v7253 = vunpack.c.h.b16 %v6784
    %v7254 = vunpack.c.l.b16 %v6785
    %v7255 = vunpack.c.h.b16 %v6785
    %v7256 = vunpack.c.l.b16 %v6786
    %v7257 = vunpack.c.h.b16 %v6786
    %v7258 = vpack.c.b16 %v6976, %v6970
    %v7259 = vpack.c.b16 %v6977, %v6971
    %v7260 = vpack.c.b16 %v6978, %v6972
    %v7261 = vpack.c.b16 %v6979, %v6973
    %v7262 = vpack.c.b16 %v6980, %v6974
    %v7263 = vpack.c.b16 %v6981, %v6975
    %v7264 = vpack.c.b16 %v6988, %v6982
    %v7265 = vpack.c.b16 %v6989, %v6983
    %v7266 = vpack.c.b16 %v6990, %v6984
    %v7267 = vpack.c.b16 %v6991, %v6985
    %v7268 = vpack.c.b16 %v6992, %v6986
    %v7269 = vpack.c.b16 %v6993, %v6987
    %v7270 = vpack.c.b16 %v7000, %v6994
    %v7271 = vpack.c.b16 %v7001, %v6995
    %v7272 = vpack.c.b16 %v7002, %v6996
    %v7273 = vpack.c.b16 %v7003, %v6997
    %v7274 = vpack.c.b16 %v7004, %v6998
    %v7275 = vpack.c.b16 %v7005, %v6999
    %v7276 = vpack.c.b16 %v7012, %v7006
    %v7277 = vpack.c.b16 %v7013, %v7007
    %v7278 = vpack.c.b16 %v7014, %v7008
    %v7279 = vpack.c.b16 %v7015, %v7009
    %v7280 = vpack.c.b16 %v7016, %v7010
    %v7281 = vpack.c.b16 %v7017, %v7011
    %v7282 = vpack.c.b16 %v7024, %v7018
    %v7283 = vpack.c.b16 %v7025, %v7019
    %v7284 = vpack.c.b16 %v7026, %v7020
    %v7285 = vpack.c.b16 %v7027, %v7021
    %v7286 = vpack.c.b16 %v7028, %v7022
    %v7287 = vpack.c.b16 %v7029, %v7023
    %v7288 = vpack.c.b16 %v7036, %v7030
    %v7289 = vpack.c.b16 %v7037, %v7031
    %v7290 = vpack.c.b16 %v7038, %v7032
    %v7291 = vpack.c.b16 %v7039, %v7033
    %v7292 = vpack.c.b16 %v7040, %v7034
    %v7293 = vpack.c.b16 %v7041, %v7035
    %v7294 = vpack.c.b16 %v7048, %v7042
    %v7295 = vpack.c.b16 %v7049, %v7043
    %v7296 = vpack.c.b16 %v7050, %v7044
    %v7297 = vpack.c.b16 %v7051, %v7045
    %v7298 = vpack.c.b16 %v7052, %v7046
    %v7299 = vpack.c.b16 %v7053, %v7047
    %v7300 = vpack.c.b16 %v7060, %v7054
    %v7301 = vpack.c.b16 %v7061, %v7055
    %v7302 = vpack.c.b16 %v7062, %v7056
    %v7303 = vpack.c.b16 %v7063, %v7057
    %v7304 = vpack.c.b16 %v7064, %v7058
    %v7305 = vpack.c.b16 %v7065, %v7059
    %v7306 = vpack.c.b16 %v7072, %v7066
    %v7307 = vpack.c.b16 %v7073, %v7067
    %v7308 = vpack.c.b16 %v7074, %v7068
    %v7309 = vpack.c.b16 %v7075, %v7069
    %v7310 = vpack.c.b16 %v7076, %v7070
    %v7311 = vpack.c.b16 %v7077, %v7071
    %v7312 = vpack.c.b16 %v7084, %v7078
    %v7313 = vpack.c.b16 %v7085, %v7079
    %v7314 = vpack.c.b16 %v7086, %v7080
    %v7315 = vpack.c.b16 %v7087, %v7081
    %v7316 = vpack.c.b16 %v7088, %v7082
    %v7317 = vpack.c.b16 %v7089, %v7083
    %v7318 = vpack.c.b16 %v7096, %v7090
    %v7319 = vpack.c.b16 %v7097, %v7091
    %v7320 = vpack.c.b16 %v7098, %v7092
    %v7321 = vpack.c.b16 %v7099, %v7093
    %v7322 = vpack.c.b16 %v7100, %v7094
    %v7323 = vpack.c.b16 %v7101, %v7095
    %v7324 = vpack.c.b16 %v7108, %v7102
    %v7325 = vpack.c.b16 %v7109, %v7103
    %v7326 = vpack.c.b16 %v7110, %v7104
    %v7327 = vpack.c.b16 %v7111, %v7105
    %v7328 = vpack.c.b16 %v7112, %v7106
    %v7329 = vpack.c.b16 %v7113, %v7107
    %v7330 = vpack.c.b16 %v7120, %v7114
    %v7331 = vpack.c.b16 %v7121, %v7115
    %v7332 = vpack.c.b16 %v7122, %v7116
    %v7333 = vpack.c.b16 %v7123, %v7117
    %v7334 = vpack.c.b16 %v7124, %v7118
    %v7335 = vpack.c.b16 %v7125, %v7119
    %v7336 = vpack.c.b16 %v7132, %v7126
    %v7337 = vpack.c.b16 %v7133, %v7127
    %v7338 = vpack.c.b16 %v7134, %v7128
    %v7339 = vpack.c.b16 %v7135, %v7129
    %v7340 = vpack.c.b16 %v7136, %v7130
    %v7341 = vpack.c.b16 %v7137, %v7131
    %v7342 = vpack.c.b16 %v7144, %v7138
    %v7343 = vpack.c.b16 %v7145, %v7139
    %v7344 = vpack.c.b16 %v7146, %v7140
    %v7345 = vpack.c.b16 %v7147, %v7141
    %v7346 = vpack.c.b16 %v7148, %v7142
    %v7347 = vpack.c.b16 %v7149, %v7143
    %v7348 = vpack.c.b16 %v7156, %v7150
    %v7349 = vpack.c.b16 %v7157, %v7151
    %v7350 = vpack.c.b16 %v7158, %v7152
    %v7351 = vpack.c.b16 %v7159, %v7153
    %v7352 = vpack.c.b16 %v7160, %v7154
    %v7353 = vpack.c.b16 %v7161, %v7155
    %v7354 = vpack.c.b16 %v7168, %v7162
    %v7355 = vpack.c.b16 %v7169, %v7163
    %v7356 = vpack.c.b16 %v7170, %v7164
    %v7357 = vpack.c.b16 %v7171, %v7165
    %v7358 = vpack.c.b16 %v7172, %v7166
    %v7359 = vpack.c.b16 %v7173, %v7167
    %v7360 = vpack.c.b16 %v7180, %v7174
    %v7361 = vpack.c.b16 %v7181, %v7175
    %v7362 = vpack.c.b16 %v7182, %v7176
    %v7363 = vpack.c.b16 %v7183, %v7177
    %v7364 = vpack.c.b16 %v7184, %v7178
    %v7365 = vpack.c.b16 %v7185, %v7179
    %v7366 = vpack.c.b16 %v7192, %v7186
    %v7367 = vpack.c.b16 %v7193, %v7187
    %v7368 = vpack.c.b16 %v7194, %v7188
    %v7369 = vpack.c.b16 %v7195, %v7189
    %v7370 = vpack.c.b16 %v7196, %v7190
    %v7371 = vpack.c.b16 %v7197, %v7191
    %v7372 = vpack.c.b16 %v7204, %v7198
    %v7373 = vpack.c.b16 %v7205, %v7199
    %v7374 = vpack.c.b16 %v7206, %v7200
    %v7375 = vpack.c.b16 %v7207, %v7201
    %v7376 = vpack.c.b16 %v7208, %v7202
    %v7377 = vpack.c.b16 %v7209, %v7203
    %v7378 = vpack.c.b16 %v7216, %v7210
    %v7379 = vpack.c.b16 %v7217, %v7211
    %v7380 = vpack.c.b16 %v7218, %v7212
    %v7381 = vpack.c.b16 %v7219, %v7213
    %v7382 = vpack.c.b16 %v7220, %v7214
    %v7383 = vpack.c.b16 %v7221, %v7215
    %v7384 = vpack.c.b16 %v7228, %v7222
    %v7385 = vpack.c.b16 %v7229, %v7223
    %v7386 = vpack.c.b16 %v7230, %v7224
    %v7387 = vpack.c.b16 %v7231, %v7225
    %v7388 = vpack.c.b16 %v7232, %v7226
    %v7389 = vpack.c.b16 %v7233, %v7227
    %v7390 = vpack.c.b16 %v7240, %v7234
    %v7391 = vpack.c.b16 %v7241, %v7235
    %v7392 = vpack.c.b16 %v7242, %v7236
    %v7393 = vpack.c.b16 %v7243, %v7237
    %v7394 = vpack.c.b16 %v7244, %v7238
    %v7395 = vpack.c.b16 %v7245, %v7239
    %v7396 = vpack.c.b16 %v7252, %v7246
    %v7397 = vpack.c.b16 %v7253, %v7247
    %v7398 = vpack.c.b16 %v7254, %v7248
    %v7399 = vpack.c.b16 %v7255, %v7249
    %v7400 = vpack.c.b16 %v7256, %v7250
    %v7401 = vpack.c.b16 %v7257, %v7251
    %7546 = vmatprep.subr.bf16.mxu0 %v7259
    %7547 = vmatpush1.bf16.msra.mxu0 %v7258
    %7548 = vmatprep.subr.bf16.mxu0 %v7265
    %7549 = vmatpush1.bf16.msra.mxu0 %v7264
    %7550 = vmatprep.subr.bf16.mxu0 %v7271
    %7551 = vmatpush1.bf16.msra.mxu0 %v7270
    %7552 = vmatprep.subr.bf16.mxu0 %v7277
    %7553 = vmatpush1.bf16.msra.mxu0 %v7276
    %7554 = vmatprep.subr.bf16.mxu0 %v7283
    %7555 = vmatpush1.bf16.msra.mxu0 %v7282
    %7556 = vmatprep.subr.bf16.mxu0 %v7289
    %7557 = vmatpush1.bf16.msra.mxu0 %v7288
    %7558 = vmatprep.subr.bf16.mxu0 %v7295
    %7559 = vmatpush1.bf16.msra.mxu0 %v7294
    %7560 = vmatprep.subr.bf16.mxu0 %v7301
    %7561 = vmatpush1.bf16.msra.mxu0 %v7300
    %7562 = vmatprep.subr.bf16.mxu0 %v7307
    %7563 = vmatpush1.bf16.msra.mxu0 %v7306
    %7564 = vmatprep.subr.bf16.mxu0 %v7313
    %7565 = vmatpush1.bf16.msra.mxu0 %v7312
    %7566 = vmatprep.subr.bf16.mxu0 %v7319
    %7567 = vmatpush1.bf16.msra.mxu0 %v7318
    %7568 = vmatprep.subr.bf16.mxu0 %v7325
    %7569 = vmatpush1.bf16.msra.mxu0 %v7324
    %7570 = vmatprep.subr.bf16.mxu0 %v7331
    %7571 = vmatpush1.bf16.msra.mxu0 %v7330
    %7572 = vmatprep.subr.bf16.mxu0 %v7337
    %7573 = vmatpush1.bf16.msra.mxu0 %v7336
    %7574 = vmatprep.subr.bf16.mxu0 %v7343
    %7575 = vmatpush1.bf16.msra.mxu0 %v7342
    %7576 = vmatprep.subr.bf16.mxu0 %v7349
    %7577 = vmatpush1.bf16.msra.mxu0 %v7348
    %7578 = vmatprep.mubr.bf16.mxu0 %v6801
    %7579 = vmatmul.mubr.bf16.gmra.mrb[0].mxu0 %v6798
    %v7580 = vpop.f32.mrb[0].mxu0
    %v7581 = vadd.f32 0.0, %v7580
    %v7582 = vpop.f32.mrb[0].mxu0
    %v7583 = vadd.f32 0.0, %v7582
    %v7584 = vpop.f32.mrb[0].mxu0
    %v7585 = vadd.f32 0.0, %v7584
    %v7586 = vpop.f32.mrb[0].mxu0
    %v7587 = vadd.f32 0.0, %v7586
    %7588 = vmatprep.mubr.bf16.mxu0 %v6808
    %7589 = vmatmul.mubr.bf16.gmra.mrb[0].mxu0 %v6806
    %v7590 = vpop.f32.mrb[0].mxu0
    %v7591 = vadd.f32 0.0, %v7590
    %v7592 = vpop.f32.mrb[0].mxu0
    %v7593 = vadd.f32 0.0, %v7592
    %v7594 = vpop.f32.mrb[0].mxu0
    %v7595 = vadd.f32 0.0, %v7594
    %v7596 = vpop.f32.mrb[0].mxu0
    %v7597 = vadd.f32 0.0, %v7596
    %7598 = vmatprep.mubr.bf16.mxu0 %v6814
    %7599 = vmatmul.mubr.bf16.gmra.mrb[0].mxu0 %v6812
    %v7600 = vpop.f32.mrb[0].mxu0
    %v7601 = vadd.f32 0.0, %v7600
    %v7602 = vpop.f32.mrb[0].mxu0
    %v7603 = vadd.f32 0.0, %v7602
    %v7604 = vpop.f32.mrb[0].mxu0
    %v7605 = vadd.f32 0.0, %v7604
    %v7606 = vpop.f32.mrb[0].mxu0
    %v7607 = vadd.f32 0.0, %v7606
    %7608 = vdwg.mxu0
    %7609 = vmatprep.subr.bf16.mxu0 %v7355
    %7610 = vmatpush1.bf16.msra.mxu0 %v7354
    %7611 = vmatprep.subr.bf16.mxu0 %v7361
    %7612 = vmatpush1.bf16.msra.mxu0 %v7360
    %7613 = vmatprep.subr.bf16.mxu0 %v7367
    %7614 = vmatpush1.bf16.msra.mxu0 %v7366
    %7615 = vmatprep.subr.bf16.mxu0 %v7373
    %7616 = vmatpush1.bf16.msra.mxu0 %v7372
    %7617 = vmatprep.subr.bf16.mxu0 %v7379
    %7618 = vmatpush1.bf16.msra.mxu0 %v7378
    %7619 = vmatprep.subr.bf16.mxu0 %v7385
    %7620 = vmatpush1.bf16.msra.mxu0 %v7384
    %7621 = vmatprep.subr.bf16.mxu0 %v7391
    %7622 = vmatpush1.bf16.msra.mxu0 %v7390
    %7623 = vmatprep.subr.bf16.mxu0 %v7397
    %7624 = vmatpush1.bf16.msra.mxu0 %v7396
    %7625 = vmatprep.subr.bf16.mxu0 0
    %7626 = vmatpush1.bf16.msra.mxu0 0
    %7627 = vmatprep.subr.bf16.mxu0 0
    %7628 = vmatpush1.bf16.msra.mxu0 0
    %7629 = vmatprep.subr.bf16.mxu0 0
    %7630 = vmatpush1.bf16.msra.mxu0 0
    %7631 = vmatprep.subr.bf16.mxu0 0
    %7632 = vmatpush1.bf16.msra.mxu0 0
    %7633 = vmatprep.subr.bf16.mxu0 0
    %7634 = vmatpush1.bf16.msra.mxu0 0
    %7635 = vmatprep.subr.bf16.mxu0 0
    %7636 = vmatpush1.bf16.msra.mxu0 0
    %7637 = vmatprep.subr.bf16.mxu0 0
    %7638 = vmatpush1.bf16.msra.mxu0 0
    %7639 = vmatprep.subr.bf16.mxu0 0
    %7640 = vmatpush1.bf16.msra.mxu0 0
    %7641 = vmatprep.mubr.bf16.mxu0 0
    %7642 = vmatmul.mubr.bf16.gmra.mrb[0].mxu0 %v6804
    %v7643 = vpop.f32.mrb[0].mxu0
    %v7644 = vadd.f32 %v7581, %v7643
    %v7645 = vpop.f32.mrb[0].mxu0
    %v7646 = vadd.f32 %v7583, %v7645
    %v7647 = vpop.f32.mrb[0].mxu0
    %v7648 = vadd.f32 %v7585, %v7647
    %v7649 = vpop.f32.mrb[0].mxu0
    %v7650 = vadd.f32 %v7587, %v7649
    %7651 = vmatprep.mubr.bf16.mxu0 0
    %7652 = vmatmul.mubr.bf16.gmra.mrb[0].mxu0 %v6810
    %v7653 = vpop.f32.mrb[0].mxu0
    %v7654 = vadd.f32 %v7591, %v7653
    %v7655 = vpop.f32.mrb[0].mxu0
    %v7656 = vadd.f32 %v7593, %v7655
    %v7657 = vpop.f32.mrb[0].mxu0
    %v7658 = vadd.f32 %v7595, %v7657
    %v7659 = vpop.f32.mrb[0].mxu0
    %v7660 = vadd.f32 %v7597, %v7659
    %7661 = vmatprep.mubr.bf16.mxu0 0
    %7662 = vmatmul.mubr.bf16.gmra.mrb[0].mxu0 %v6816
    %v7663 = vpop.f32.mrb[0].mxu0
    %v7664 = vadd.f32 %v7601, %v7663
    %v7665 = vpop.f32.mrb[0].mxu0
    %v7666 = vadd.f32 %v7603, %v7665
    %v7667 = vpop.f32.mrb[0].mxu0
    %v7668 = vadd.f32 %v7605, %v7667
    %v7669 = vpop.f32.mrb[0].mxu0
    %v7670 = vadd.f32 %v7607, %v7669
    %7671 = vdwg.mxu0
    %7672 = vmatprep.subr.bf16.mxu0 %v7261
    %7673 = vmatpush1.bf16.msra.mxu0 %v7260
    %7674 = vmatprep.subr.bf16.mxu0 %v7267
    %7675 = vmatpush1.bf16.msra.mxu0 %v7266
    %7676 = vmatprep.subr.bf16.mxu0 %v7273
    %7677 = vmatpush1.bf16.msra.mxu0 %v7272
    %7678 = vmatprep.subr.bf16.mxu0 %v7279
    %7679 = vmatpush1.bf16.msra.mxu0 %v7278
    %7680 = vmatprep.subr.bf16.mxu0 %v7285
    %7681 = vmatpush1.bf16.msra.mxu0 %v7284
    %7682 = vmatprep.subr.bf16.mxu0 %v7291
    %7683 = vmatpush1.bf16.msra.mxu0 %v7290
    %7684 = vmatprep.subr.bf16.mxu0 %v7297
    %7685 = vmatpush1.bf16.msra.mxu0 %v7296
    %7686 = vmatprep.subr.bf16.mxu0 %v7303
    %7687 = vmatpush1.bf16.msra.mxu0 %v7302
    %7688 = vmatprep.subr.bf16.mxu0 %v7309
    %7689 = vmatpush1.bf16.msra.mxu0 %v7308
    %7690 = vmatprep.subr.bf16.mxu0 %v7315
    %7691 = vmatpush1.bf16.msra.mxu0 %v7314
    %7692 = vmatprep.subr.bf16.mxu0 %v7321
    %7693 = vmatpush1.bf16.msra.mxu0 %v7320
    %7694 = vmatprep.subr.bf16.mxu0 %v7327
    %7695 = vmatpush1.bf16.msra.mxu0 %v7326
    %7696 = vmatprep.subr.bf16.mxu0 %v7333
    %7697 = vmatpush1.bf16.msra.mxu0 %v7332
    %7698 = vmatprep.subr.bf16.mxu0 %v7339
    %7699 = vmatpush1.bf16.msra.mxu0 %v7338
    %7700 = vmatprep.subr.bf16.mxu0 %v7345
    %7701 = vmatpush1.bf16.msra.mxu0 %v7344
    %7702 = vmatprep.subr.bf16.mxu0 %v7351
    %7703 = vmatpush1.bf16.msra.mxu0 %v7350
    %7704 = vmatprep.mubr.bf16.mxu0 %v6801
    %7705 = vmatmul.mubr.bf16.gmra.mrb[0].mxu0 %v6798
    %v7706 = vpop.f32.mrb[0].mxu0
    %v7707 = vadd.f32 0.0, %v7706
    %v7708 = vpop.f32.mrb[0].mxu0
    %v7709 = vadd.f32 0.0, %v7708
    %v7710 = vpop.f32.mrb[0].mxu0
    %v7711 = vadd.f32 0.0, %v7710
    %v7712 = vpop.f32.mrb[0].mxu0
    %v7713 = vadd.f32 0.0, %v7712
    %7714 = vmatprep.mubr.bf16.mxu0 %v6808
    %7715 = vmatmul.mubr.bf16.gmra.mrb[0].mxu0 %v6806
    %v7716 = vpop.f32.mrb[0].mxu0
    %v7717 = vadd.f32 0.0, %v7716
    %v7718 = vpop.f32.mrb[0].mxu0
    %v7719 = vadd.f32 0.0, %v7718
    %v7720 = vpop.f32.mrb[0].mxu0
    %v7721 = vadd.f32 0.0, %v7720
    %v7722 = vpop.f32.mrb[0].mxu0
    %v7723 = vadd.f32 0.0, %v7722
    %7724 = vmatprep.mubr.bf16.mxu0 %v6814
    %7725 = vmatmul.mubr.bf16.gmra.mrb[0].mxu0 %v6812
    %v7726 = vpop.f32.mrb[0].mxu0
    %v7727 = vadd.f32 0.0, %v7726
    %v7728 = vpop.f32.mrb[0].mxu0
    %v7729 = vadd.f32 0.0, %v7728
    %v7730 = vpop.f32.mrb[0].mxu0
    %v7731 = vadd.f32 0.0, %v7730
    %v7732 = vpop.f32.mrb[0].mxu0
    %v7733 = vadd.f32 0.0, %v7732
    %7734 = vdwg.mxu0
    %7735 = vmatprep.subr.bf16.mxu0 %v7357
    %7736 = vmatpush1.bf16.msra.mxu0 %v7356
    %7737 = vmatprep.subr.bf16.mxu0 %v7363
    %7738 = vmatpush1.bf16.msra.mxu0 %v7362
    %7739 = vmatprep.subr.bf16.mxu0 %v7369
    %7740 = vmatpush1.bf16.msra.mxu0 %v7368
    %7741 = vmatprep.subr.bf16.mxu0 %v7375
    %7742 = vmatpush1.bf16.msra.mxu0 %v7374
    %7743 = vmatprep.subr.bf16.mxu0 %v7381
    %7744 = vmatpush1.bf16.msra.mxu0 %v7380
    %7745 = vmatprep.subr.bf16.mxu0 %v7387
    %7746 = vmatpush1.bf16.msra.mxu0 %v7386
    %7747 = vmatprep.subr.bf16.mxu0 %v7393
    %7748 = vmatpush1.bf16.msra.mxu0 %v7392
    %7749 = vmatprep.subr.bf16.mxu0 %v7399
    %7750 = vmatpush1.bf16.msra.mxu0 %v7398
    %7751 = vmatprep.subr.bf16.mxu0 0
    %7752 = vmatpush1.bf16.msra.mxu0 0
    %7753 = vmatprep.subr.bf16.mxu0 0
    %7754 = vmatpush1.bf16.msra.mxu0 0
    %7755 = vmatprep.subr.bf16.mxu0 0
    %7756 = vmatpush1.bf16.msra.mxu0 0
    %7757 = vmatprep.subr.bf16.mxu0 0
    %7758 = vmatpush1.bf16.msra.mxu0 0
    %7759 = vmatprep.subr.bf16.mxu0 0
    %7760 = vmatpush1.bf16.msra.mxu0 0
    %7761 = vmatprep.subr.bf16.mxu0 0
    %7762 = vmatpush1.bf16.msra.mxu0 0
    %7763 = vmatprep.subr.bf16.mxu0 0
    %7764 = vmatpush1.bf16.msra.mxu0 0
    %7765 = vmatprep.subr.bf16.mxu0 0
    %7766 = vmatpush1.bf16.msra.mxu0 0
    %7767 = vmatprep.mubr.bf16.mxu0 0
    %7768 = vmatmul.mubr.bf16.gmra.mrb[0].mxu0 %v6804
    %v7769 = vpop.f32.mrb[0].mxu0
    %v7770 = vadd.f32 %v7707, %v7769
    %v7771 = vpop.f32.mrb[0].mxu0
    %v7772 = vadd.f32 %v7709, %v7771
    %v7773 = vpop.f32.mrb[0].mxu0
    %v7774 = vadd.f32 %v7711, %v7773
    %v7775 = vpop.f32.mrb[0].mxu0
    %v7776 = vadd.f32 %v7713, %v7775
    %7777 = vmatprep.mubr.bf16.mxu0 0
    %7778 = vmatmul.mubr.bf16.gmra.mrb[0].mxu0 %v6810
    %v7779 = vpop.f32.mrb[0].mxu0
    %v7780 = vadd.f32 %v7717, %v7779
    %v7781 = vpop.f32.mrb[0].mxu0
    %v7782 = vadd.f32 %v7719, %v7781
    %v7783 = vpop.f32.mrb[0].mxu0
    %v7784 = vadd.f32 %v7721, %v7783
    %v7785 = vpop.f32.mrb[0].mxu0
    %v7786 = vadd.f32 %v7723, %v7785
    %7787 = vmatprep.mubr.bf16.mxu0 0
    %7788 = vmatmul.mubr.bf16.gmra.mrb[0].mxu0 %v6816
    %v7789 = vpop.f32.mrb[0].mxu0
    %v7790 = vadd.f32 %v7727, %v7789
    %v7791 = vpop.f32.mrb[0].mxu0
    %v7792 = vadd.f32 %v7729, %v7791
    %v7793 = vpop.f32.mrb[0].mxu0
    %v7794 = vadd.f32 %v7731, %v7793
    %v7795 = vpop.f32.mrb[0].mxu0
    %v7796 = vadd.f32 %v7733, %v7795
    %7797 = vdwg.mxu0
    %7798 = vmatprep.subr.bf16.mxu0 %v7263
    %7799 = vmatpush1.bf16.msra.mxu0 %v7262
    %7800 = vmatprep.subr.bf16.mxu0 %v7269
    %7801 = vmatpush1.bf16.msra.mxu0 %v7268
    %7802 = vmatprep.subr.bf16.mxu0 %v7275
    %7803 = vmatpush1.bf16.msra.mxu0 %v7274
    %7804 = vmatprep.subr.bf16.mxu0 %v7281
    %7805 = vmatpush1.bf16.msra.mxu0 %v7280
    %7806 = vmatprep.subr.bf16.mxu0 %v7287
    %7807 = vmatpush1.bf16.msra.mxu0 %v7286
    %7808 = vmatprep.subr.bf16.mxu0 %v7293
    %7809 = vmatpush1.bf16.msra.mxu0 %v7292
    %7810 = vmatprep.subr.bf16.mxu0 %v7299
    %7811 = vmatpush1.bf16.msra.mxu0 %v7298
    %7812 = vmatprep.subr.bf16.mxu0 %v7305
    %7813 = vmatpush1.bf16.msra.mxu0 %v7304
    %7814 = vmatprep.subr.bf16.mxu0 %v7311
    %7815 = vmatpush1.bf16.msra.mxu0 %v7310
    %7816 = vmatprep.subr.bf16.mxu0 %v7317
    %7817 = vmatpush1.bf16.msra.mxu0 %v7316
    %7818 = vmatprep.subr.bf16.mxu0 %v7323
    %7819 = vmatpush1.bf16.msra.mxu0 %v7322
    %7820 = vmatprep.subr.bf16.mxu0 %v7329
    %7821 = vmatpush1.bf16.msra.mxu0 %v7328
    %7822 = vmatprep.subr.bf16.mxu0 %v7335
    %7823 = vmatpush1.bf16.msra.mxu0 %v7334
    %7824 = vmatprep.subr.bf16.mxu0 %v7341
    %7825 = vmatpush1.bf16.msra.mxu0 %v7340
    %7826 = vmatprep.subr.bf16.mxu0 %v7347
    %7827 = vmatpush1.bf16.msra.mxu0 %v7346
    %7828 = vmatprep.subr.bf16.mxu0 %v7353
    %7829 = vmatpush1.bf16.msra.mxu0 %v7352
    %7830 = vmatprep.mubr.bf16.mxu0 %v6801
    %7831 = vmatmul.mubr.bf16.gmra.mrb[0].mxu0 %v6798
    %v7832 = vpop.f32.mrb[0].mxu0
    %v7833 = vadd.f32 0.0, %v7832
    %v7834 = vpop.f32.mrb[0].mxu0
    %v7835 = vadd.f32 0.0, %v7834
    %v7836 = vpop.f32.mrb[0].mxu0
    %v7837 = vadd.f32 0.0, %v7836
    %v7838 = vpop.f32.mrb[0].mxu0
    %v7839 = vadd.f32 0.0, %v7838
    %7840 = vmatprep.mubr.bf16.mxu0 %v6808
    %7841 = vmatmul.mubr.bf16.gmra.mrb[0].mxu0 %v6806
    %v7842 = vpop.f32.mrb[0].mxu0
    %v7843 = vadd.f32 0.0, %v7842
    %v7844 = vpop.f32.mrb[0].mxu0
    %v7845 = vadd.f32 0.0, %v7844
    %v7846 = vpop.f32.mrb[0].mxu0
    %v7847 = vadd.f32 0.0, %v7846
    %v7848 = vpop.f32.mrb[0].mxu0
    %v7849 = vadd.f32 0.0, %v7848
    %7850 = vmatprep.mubr.bf16.mxu0 %v6814
    %7851 = vmatmul.mubr.bf16.gmra.mrb[0].mxu0 %v6812
    %v7852 = vpop.f32.mrb[0].mxu0
    %v7853 = vadd.f32 0.0, %v7852
    %v7854 = vpop.f32.mrb[0].mxu0
    %v7855 = vadd.f32 0.0, %v7854
    %v7856 = vpop.f32.mrb[0].mxu0
    %v7857 = vadd.f32 0.0, %v7856
    %v7858 = vpop.f32.mrb[0].mxu0
    %v7859 = vadd.f32 0.0, %v7858
    %7860 = vdwg.mxu0
    %7861 = vmatprep.subr.bf16.mxu0 %v7359
    %7862 = vmatpush1.bf16.msra.mxu0 %v7358
    %7863 = vmatprep.subr.bf16.mxu0 %v7365
    %7864 = vmatpush1.bf16.msra.mxu0 %v7364
    %7865 = vmatprep.subr.bf16.mxu0 %v7371
    %7866 = vmatpush1.bf16.msra.mxu0 %v7370
    %7867 = vmatprep.subr.bf16.mxu0 %v7377
    %7868 = vmatpush1.bf16.msra.mxu0 %v7376
    %7869 = vmatprep.subr.bf16.mxu0 %v7383
    %7870 = vmatpush1.bf16.msra.mxu0 %v7382
    %7871 = vmatprep.subr.bf16.mxu0 %v7389
    %7872 = vmatpush1.bf16.msra.mxu0 %v7388
    %7873 = vmatprep.subr.bf16.mxu0 %v7395
    %7874 = vmatpush1.bf16.msra.mxu0 %v7394
    %7875 = vmatprep.subr.bf16.mxu0 %v7401
    %7876 = vmatpush1.bf16.msra.mxu0 %v7400
    %7877 = vmatprep.subr.bf16.mxu0 0
    %7878 = vmatpush1.bf16.msra.mxu0 0
    %7879 = vmatprep.subr.bf16.mxu0 0
    %7880 = vmatpush1.bf16.msra.mxu0 0
    %7881 = vmatprep.subr.bf16.mxu0 0
    %7882 = vmatpush1.bf16.msra.mxu0 0
    %7883 = vmatprep.subr.bf16.mxu0 0
    %7884 = vmatpush1.bf16.msra.mxu0 0
    %7885 = vmatprep.subr.bf16.mxu0 0
    %7886 = vmatpush1.bf16.msra.mxu0 0
    %7887 = vmatprep.subr.bf16.mxu0 0
    %7888 = vmatpush1.bf16.msra.mxu0 0
    %7889 = vmatprep.subr.bf16.mxu0 0
    %7890 = vmatpush1.bf16.msra.mxu0 0
    %7891 = vmatprep.subr.bf16.mxu0 0
    %7892 = vmatpush1.bf16.msra.mxu0 0
    %7893 = vmatprep.mubr.bf16.mxu0 0
    %7894 = vmatmul.mubr.bf16.gmra.mrb[0].mxu0 %v6804
    %v7895 = vpop.f32.mrb[0].mxu0
    %v7896 = vadd.f32 %v7833, %v7895
    %v7897 = vpop.f32.mrb[0].mxu0
    %v7898 = vadd.f32 %v7835, %v7897
    %v7899 = vpop.f32.mrb[0].mxu0
    %v7900 = vadd.f32 %v7837, %v7899
    %v7901 = vpop.f32.mrb[0].mxu0
    %v7902 = vadd.f32 %v7839, %v7901
    %7903 = vmatprep.mubr.bf16.mxu0 0
    %7904 = vmatmul.mubr.bf16.gmra.mrb[0].mxu0 %v6810
    %v7905 = vpop.f32.mrb[0].mxu0
    %v7906 = vadd.f32 %v7843, %v7905
    %v7907 = vpop.f32.mrb[0].mxu0
    %v7908 = vadd.f32 %v7845, %v7907
    %v7909 = vpop.f32.mrb[0].mxu0
    %v7910 = vadd.f32 %v7847, %v7909
    %v7911 = vpop.f32.mrb[0].mxu0
    %v7912 = vadd.f32 %v7849, %v7911
    %7913 = vmatprep.mubr.bf16.mxu0 0
    %7914 = vmatmul.mubr.bf16.gmra.mrb[0].mxu0 %v6816
    %v7915 = vpop.f32.mrb[0].mxu0
    %v7916 = vadd.f32 %v7853, %v7915
    %v7917 = vpop.f32.mrb[0].mxu0
    %v7918 = vadd.f32 %v7855, %v7917
    %v7919 = vpop.f32.mrb[0].mxu0
    %v7920 = vadd.f32 %v7857, %v7919
    %v7921 = vpop.f32.mrb[0].mxu0
    %v7922 = vadd.f32 %v7859, %v7921
    %7923 = vdwg.mxu0
    %v7924 = vadd.f32 %v6604, %v7644
    %v7925 = vadd.f32 %v6605, %v7646
    %v7926 = vadd.f32 %v6606, %v7770
    %v7927 = vadd.f32 %v6607, %v7772
    %v7928 = vadd.f32 %v6608, %v7896
    %v7929 = vadd.f32 %v6609, %v7898
    %v7930 = vadd.f32 %v6610, %v7648
    %v7931 = vadd.f32 %v6611, %v7650
    %v7932 = vadd.f32 %v6612, %v7774
    %v7933 = vadd.f32 %v6613, %v7776
    %v7934 = vadd.f32 %v6614, %v7900
    %v7935 = vadd.f32 %v6615, %v7902
    %v7936 = vadd.f32 %v6616, %v7654
    %v7937 = vadd.f32 %v6617, %v7656
    %v7938 = vadd.f32 %v6618, %v7780
    %v7939 = vadd.f32 %v6619, %v7782
    %v7940 = vadd.f32 %v6620, %v7906
    %v7941 = vadd.f32 %v6621, %v7908
    %v7942 = vadd.f32 %v6622, %v7658
    %v7943 = vadd.f32 %v6623, %v7660
    %v7944 = vadd.f32 %v6624, %v7784
    %v7945 = vadd.f32 %v6625, %v7786
    %v7946 = vadd.f32 %v6626, %v7910
    %v7947 = vadd.f32 %v6627, %v7912
    %v7948 = vadd.f32 %v6628, %v7664
    %v7949 = vadd.f32 %v6629, %v7666
    %v7950 = vadd.f32 %v6630, %v7790
    %v7951 = vadd.f32 %v6631, %v7792
    %v7952 = vadd.f32 %v6632, %v7916
    %v7953 = vadd.f32 %v6633, %v7918
    %v7954 = vadd.f32 %v6634, %v7668
    %v7955 = vadd.f32 %v6635, %v7670
    %v7956 = vadd.f32 %v6636, %v7794
    %v7957 = vadd.f32 %v6637, %v7796
    %v7958 = vadd.f32 %v6638, %v7920
    %v7959 = vadd.f32 %v6639, %v7922
    %v7960 = vld [vmem:[#allocation11] sm:$0x3f]
    %v7962 = vlaneseq
    %v7963 = vshrl.u32 %v7962, 7
    %v7964 = vsub.s32 0, %v7963
    %v7965 = vrot.slane %v7960, %v7964
    %v7966 = vlaneseq
    %v7967 = vshrl.u32 %v7966, 7
    %v7968 = vsub.s32 1, %v7967
    %v7969 = vrot.slane %v7960, %v7968
    %v7970 = vlaneseq
    %v7971 = vshrl.u32 %v7970, 7
    %v7972 = vsub.s32 2, %v7971
    %v7973 = vrot.slane %v7960, %v7972
    %v7974 = vlaneseq
    %v7975 = vshrl.u32 %v7974, 7
    %v7976 = vsub.s32 3, %v7975
    %v7977 = vrot.slane %v7960, %v7976
    %v7978 = vlaneseq
    %v7979 = vshrl.u32 %v7978, 7
    %v7980 = vsub.s32 4, %v7979
    %v7981 = vrot.slane %v7960, %v7980
    %v7982 = vlaneseq
    %v7983 = vshrl.u32 %v7982, 7
    %v7984 = vsub.s32 5, %v7983
    %v7985 = vrot.slane %v7960, %v7984
    %v7992 = vadd.f32 %v7924, %v7965
    %v7993 = vadd.f32 %v7925, %v7969
    %v7994 = vadd.f32 %v7926, %v7973
    %v7995 = vadd.f32 %v7927, %v7977
    %v7996 = vadd.f32 %v7928, %v7981
    %v7997 = vadd.f32 %v7929, %v7985
    %v7998 = vadd.f32 %v7930, %v7965
    %v7999 = vadd.f32 %v7931, %v7969
    %v8000 = vadd.f32 %v7932, %v7973
    %v8001 = vadd.f32 %v7933, %v7977
    %v8002 = vadd.f32 %v7934, %v7981
    %v8003 = vadd.f32 %v7935, %v7985
    %v8004 = vadd.f32 %v7936, %v7965
    %v8005 = vadd.f32 %v7937, %v7969
    %v8006 = vadd.f32 %v7938, %v7973
    %v8007 = vadd.f32 %v7939, %v7977
    %v8008 = vadd.f32 %v7940, %v7981
    %v8009 = vadd.f32 %v7941, %v7985
    %v8010 = vadd.f32 %v7942, %v7965
    %v8011 = vadd.f32 %v7943, %v7969
    %v8012 = vadd.f32 %v7944, %v7973
    %v8013 = vadd.f32 %v7945, %v7977
    %v8014 = vadd.f32 %v7946, %v7981
    %v8015 = vadd.f32 %v7947, %v7985
    %v8016 = vadd.f32 %v7948, %v7965
    %v8017 = vadd.f32 %v7949, %v7969
    %v8018 = vadd.f32 %v7950, %v7973
    %v8019 = vadd.f32 %v7951, %v7977
    %v8020 = vadd.f32 %v7952, %v7981
    %v8021 = vadd.f32 %v7953, %v7985
    %v8022 = vadd.f32 %v7954, %v7965
    %v8023 = vadd.f32 %v7955, %v7969
    %v8024 = vadd.f32 %v7956, %v7973
    %v8025 = vadd.f32 %v7957, %v7977
    %v8026 = vadd.f32 %v7958, %v7981
    %v8027 = vadd.f32 %v7959, %v7985
    %v8028 = vadd.s32 %v1086, 8
    %v8029 = vadd.s32 %v1086, 16
    %v8030 = vtanh.pop %v7992
    %v8031 = vtanh.pop %v7998
    %v8032 = vtanh.pop %v8004
    %v8033 = vtanh.pop %v8010
    %v8034 = vtanh.pop %v8016
    %v8035 = vtanh.pop %v8022
    %v8036 = vlaneseq
    %v8037 = vshrl.u32 %v8036, 7
    %v8038 = vsub.s32 0, %v8037
    %v8039 = vrot.slane %v1240, %v8038
    %v8040 = vlaneseq
    %v8041 = vshrl.u32 %v8040, 7
    %v8042 = vsub.s32 0, %v8041
    %v8043 = vrot.slane %v1247, %v8042
    %v8046 = vadd.f32 %v7993, %v8039
    %v8047 = vadd.f32 %v7999, %v8039
    %v8048 = vadd.f32 %v8005, %v8039
    %v8049 = vadd.f32 %v8011, %v8043
    %v8050 = vadd.f32 %v8017, %v8043
    %v8051 = vadd.f32 %v8023, %v8043
    %v8052 = vmax.f32 %v8046, 0.0
    %v8053 = vmax.f32 %v8047, 0.0
    %v8054 = vmax.f32 %v8048, 0.0
    %v8055 = vmax.f32 %v8049, 0.0
    %v8056 = vmax.f32 %v8050, 0.0
    %v8057 = vmax.f32 %v8051, 0.0
    %vm8058 = vcmp.lt.s32.totalorder %v1086, 16
    %vm8059 = vcmp.lt.s32.totalorder %v8028, 16
    %vm8060 = vcmp.lt.s32.totalorder %v8029, 16
    %v8061 = vmul.f32 %v8030, %v8052
    %v8062 = vmul.f32 %v8031, %v8053
    %v8063 = vmul.f32 %v8032, %v8054
    %v8064 = vmul.f32 %v8033, %v8055
    %v8065 = vmul.f32 %v8034, %v8056
    %v8066 = vmul.f32 %v8035, %v8057
    %v8067 = vsel %vm8058, 1, 0
    %v8068 = vsel %vm8059, 1, 0
    %v8069 = vsel %vm8060, 1, 0
    %vm8070 = vcmp.eq.s32.totalorder %v8067, 1
    %vm8071 = vcmp.eq.s32.totalorder %v8068, 1
    %vm8072 = vcmp.eq.s32.totalorder %v8069, 1
    %v8073 = vsel %vm8070, %v8061, -inf
    %v8074 = vsel %vm8071, %v8062, -inf
    %v8075 = vsel %vm8072, %v8063, -inf
    %v8076 = vsel %vm8070, %v8064, -inf
    %v8077 = vsel %vm8071, %v8065, -inf
    %v8078 = vsel %vm8072, %v8066, -inf
    %v8079 = vmax.f32 %v8073, %v8075
    %v8080 = vmax.f32 %v8079, %v8074
    %v8081 = vrot.slane %v8080, 4
    %v8082 = vmax.f32 %v8080, %v8081
    %v8083 = vrot.slane %v8082, 2
    %v8084 = vmax.f32 %v8082, %v8083
    %v8085 = vrot.slane %v8084, 1
    %v8086 = vmax.f32 %v8084, %v8085
    %v8087 = vmax.f32 %v8076, %v8078
    %v8088 = vmax.f32 %v8087, %v8077
    %v8089 = vrot.slane %v8088, 4
    %v8090 = vmax.f32 %v8088, %v8089
    %v8091 = vrot.slane %v8090, 2
    %v8092 = vmax.f32 %v8090, %v8091
    %v8093 = vrot.slane %v8092, 1
    %v8094 = vmax.f32 %v8092, %v8093
    %v8095 = vtanh.pop %v7994
    %v8096 = vtanh.pop %v8000
    %v8097 = vtanh.pop %v8006
    %v8098 = vtanh.pop %v8012
    %v8099 = vtanh.pop %v8018
    %v8100 = vtanh.pop %v8024
    %v8101 = vadd.f32 %v7995, %v8039
    %v8102 = vadd.f32 %v8001, %v8039
    %v8103 = vadd.f32 %v8007, %v8039
    %v8104 = vadd.f32 %v8013, %v8043
    %v8105 = vadd.f32 %v8019, %v8043
    %v8106 = vadd.f32 %v8025, %v8043
    %v8107 = vmax.f32 %v8101, 0.0
    %v8108 = vmax.f32 %v8102, 0.0
    %v8109 = vmax.f32 %v8103, 0.0
    %v8110 = vmax.f32 %v8104, 0.0
    %v8111 = vmax.f32 %v8105, 0.0
    %v8112 = vmax.f32 %v8106, 0.0
    %vm8113 = vcmp.lt.s32.totalorder %v1086, 17
    %vm8114 = vcmp.lt.s32.totalorder %v8028, 17
    %vm8115 = vcmp.lt.s32.totalorder %v8029, 17
    %v8116 = vmul.f32 %v8095, %v8107
    %v8117 = vmul.f32 %v8096, %v8108
    %v8118 = vmul.f32 %v8097, %v8109
    %v8119 = vmul.f32 %v8098, %v8110
    %v8120 = vmul.f32 %v8099, %v8111
    %v8121 = vmul.f32 %v8100, %v8112
    %v8122 = vsel %vm8113, 1, 0
    %v8123 = vsel %vm8114, 1, 0
    %v8124 = vsel %vm8115, 1, 0
    %vm8125 = vcmp.eq.s32.totalorder %v8122, 1
    %vm8126 = vcmp.eq.s32.totalorder %v8123, 1
    %vm8127 = vcmp.eq.s32.totalorder %v8124, 1
    %v8128 = vsel %vm8125, %v8116, -inf
    %v8129 = vsel %vm8126, %v8117, -inf
    %v8130 = vsel %vm8127, %v8118, -inf
    %v8131 = vsel %vm8125, %v8119, -inf
    %v8132 = vsel %vm8126, %v8120, -inf
    %v8133 = vsel %vm8127, %v8121, -inf
    %v8134 = vmax.f32 %v8128, %v8130
    %v8135 = vmax.f32 %v8134, %v8129
    %v8136 = vrot.slane %v8135, 4
    %v8137 = vmax.f32 %v8135, %v8136
    %v8138 = vrot.slane %v8137, 2
    %v8139 = vmax.f32 %v8137, %v8138
    %v8140 = vrot.slane %v8139, 1
    %v8141 = vmax.f32 %v8139, %v8140
    %v8142 = vmax.f32 %v8131, %v8133
    %v8143 = vmax.f32 %v8142, %v8132
    %v8144 = vrot.slane %v8143, 4
    %v8145 = vmax.f32 %v8143, %v8144
    %v8146 = vrot.slane %v8145, 2
    %v8147 = vmax.f32 %v8145, %v8146
    %v8148 = vrot.slane %v8147, 1
    %v8149 = vmax.f32 %v8147, %v8148
    %v8150 = vtanh.pop %v7996
    %v8151 = vtanh.pop %v8002
    %v8152 = vtanh.pop %v8008
    %v8153 = vtanh.pop %v8014
    %v8154 = vtanh.pop %v8020
    %v8155 = vtanh.pop %v8026
    %v8156 = vadd.f32 %v7997, %v8039
    %v8157 = vadd.f32 %v8003, %v8039
    %v8158 = vadd.f32 %v8009, %v8039
    %v8159 = vadd.f32 %v8015, %v8043
    %v8160 = vadd.f32 %v8021, %v8043
    %v8161 = vadd.f32 %v8027, %v8043
    %v8162 = vmax.f32 %v8156, 0.0
    %v8163 = vmax.f32 %v8157, 0.0
    %v8164 = vmax.f32 %v8158, 0.0
    %v8165 = vmax.f32 %v8159, 0.0
    %v8166 = vmax.f32 %v8160, 0.0
    %v8167 = vmax.f32 %v8161, 0.0
    %vm8168 = vcmp.lt.s32.totalorder %v1086, 18
    %vm8169 = vcmp.lt.s32.totalorder %v8028, 18
    %vm8170 = vcmp.lt.s32.totalorder %v8029, 18
    %v8171 = vmul.f32 %v8150, %v8162
    %v8172 = vmul.f32 %v8151, %v8163
    %v8173 = vmul.f32 %v8152, %v8164
    %v8174 = vmul.f32 %v8153, %v8165
    %v8175 = vmul.f32 %v8154, %v8166
    %v8176 = vmul.f32 %v8155, %v8167
    %v8177 = vsel %vm8168, 1, 0
    %v8178 = vsel %vm8169, 1, 0
    %v8179 = vsel %vm8170, 1, 0
    %vm8180 = vcmp.eq.s32.totalorder %v8177, 1
    %vm8181 = vcmp.eq.s32.totalorder %v8178, 1
    %vm8182 = vcmp.eq.s32.totalorder %v8179, 1
    %v8183 = vsel %vm8180, %v8171, -inf
    %v8184 = vsel %vm8181, %v8172, -inf
    %v8185 = vsel %vm8182, %v8173, -inf
    %v8186 = vsel %vm8180, %v8174, -inf
    %v8187 = vsel %vm8181, %v8175, -inf
    %v8188 = vsel %vm8182, %v8176, -inf
    %v8189 = vmax.f32 %v8183, %v8185
    %v8190 = vmax.f32 %v8189, %v8184
    %v8191 = vrot.slane %v8190, 4
    %v8192 = vmax.f32 %v8190, %v8191
    %v8193 = vrot.slane %v8192, 2
    %v8194 = vmax.f32 %v8192, %v8193
    %v8195 = vrot.slane %v8194, 1
    %v8196 = vmax.f32 %v8194, %v8195
    %v8197 = vmax.f32 %v8186, %v8188
    %v8198 = vmax.f32 %v8197, %v8187
    %v8199 = vrot.slane %v8198, 4
    %v8200 = vmax.f32 %v8198, %v8199
    %v8201 = vrot.slane %v8200, 2
    %v8202 = vmax.f32 %v8200, %v8201
    %v8203 = vrot.slane %v8202, 1
    %v8204 = vmax.f32 %v8202, %v8203
    %v8207 = vsel %vm1133, %v8094, %v8086
    %v8211 = vsel %vm1133, %v8149, %v8141
    %v8215 = vsel %vm1133, %v8204, %v8196
    %v8217 = vpack.c.bf16 %v8207, %v8207
    %v8218 = vpack.c.bf16 %v8211, %v8211
    %v8219 = vpack.c.bf16 %v8215, %v8215
    %v8220 = vld [vmem:[#allocation13] sm:$0xf]
    %v8221 = vld [vmem:[#allocation13 + $0x4] sm:$0xf]
    %v8222 = vld [vmem:[#allocation13 + $0x8] sm:$0xf]
    %v8223 = vld [vmem:[#allocation13 + $0xc] sm:$0xf]
    %v8224 = vld [vmem:[#allocation13 + $0x10] sm:$0xf]
    %v8225 = vld [vmem:[#allocation13 + $0x14] sm:$0xf]
    %v8226 = vld [vmem:[#allocation13 + $0x18] sm:$0xf]
    %v8227 = vld [vmem:[#allocation13 + $0x1c] sm:$0xf]
    %v8228 = vld [vmem:[#allocation13 + $0x20] sm:$0xf]
    %v8229 = vld [vmem:[#allocation13 + $0x24] sm:$0xf]
    %v8230 = vld [vmem:[#allocation13 + $0x28] sm:$0xf]
    %v8231 = vld [vmem:[#allocation13 + $0x2c] sm:$0xf]
    %v8232 = vld [vmem:[#allocation13 + $0x30] sm:$0xf]
    %v8233 = vld [vmem:[#allocation13 + $0x34] sm:$0xf]
    %v8234 = vld [vmem:[#allocation13 + $0x38] sm:$0xf]
    %v8235 = vld [vmem:[#allocation13 + $0x3c] sm:$0xf]
    %v8236 = vld [vmem:[#allocation13 + $0x40] sm:$0xf]
    %v8237 = vld [vmem:[#allocation13 + $0x44] sm:$0xf]
    %v8238 = vld [vmem:[#allocation13 + $0x48] sm:$0xf]
    %v8239 = vld [vmem:[#allocation13 + $0x4c] sm:$0xf]
    %v8240 = vld [vmem:[#allocation13 + $0x50] sm:$0xf]
    %v8241 = vld [vmem:[#allocation13 + $0x54] sm:$0xf]
    %v8242 = vld [vmem:[#allocation13 + $0x58] sm:$0xf]
    %v8243 = vld [vmem:[#allocation13 + $0x5c] sm:$0xf]
    %v8244 = vld [vmem:[#allocation13 + $0x60] sm:$0xf]
    %v8245 = vld [vmem:[#allocation13 + $0x64] sm:$0xf]
    %v8246 = vld [vmem:[#allocation13 + $0x68] sm:$0xf]
    %v8247 = vld [vmem:[#allocation13 + $0x6c] sm:$0xf]
    %v8248 = vld [vmem:[#allocation13 + $0x70] sm:$0xf]
    %v8249 = vld [vmem:[#allocation13 + $0x74] sm:$0xf]
    %v8250 = vld [vmem:[#allocation13 + $0x78] sm:$0xf]
    %v8251 = vld [vmem:[#allocation13 + $0x7c] sm:$0xf]
    %v8252 = vld [vmem:[#allocation13 + $0x80] sm:$0xf]
    %v8253 = vld [vmem:[#allocation13 + $0x84] sm:$0xf]
    %v8254 = vld [vmem:[#allocation13 + $0x88] sm:$0xf]
    %v8255 = vld [vmem:[#allocation13 + $0x8c] sm:$0xf]
    %v8256 = vld [vmem:[#allocation13 + $0x90] sm:$0xf]
    %v8257 = vld [vmem:[#allocation13 + $0x94] sm:$0xf]
    %v8258 = vld [vmem:[#allocation13 + $0x98] sm:$0xf]
    %v8259 = vld [vmem:[#allocation13 + $0x9c] sm:$0xf]
    %v8260 = vld [vmem:[#allocation13 + $0xa0] sm:$0xf]
    %v8261 = vld [vmem:[#allocation13 + $0xa4] sm:$0xf]
    %v8262 = vld [vmem:[#allocation13 + $0xa8] sm:$0xf]
    %v8263 = vld [vmem:[#allocation13 + $0xac] sm:$0xf]
    %v8264 = vld [vmem:[#allocation13 + $0xb0] sm:$0xf]
    %v8265 = vld [vmem:[#allocation13 + $0xb4] sm:$0xf]
    %v8266 = vld [vmem:[#allocation13 + $0xb8] sm:$0xf]
    %v8267 = vld [vmem:[#allocation13 + $0xbc] sm:$0xf]
    %v8268 = vld [vmem:[#allocation14] sm:$0x1]
    %v8270 = vlaneseq
    %v8271 = vshrl.u32 %v8270, 7
    %v8272 = vsub.s32 0, %v8271
    %v8273 = vrot.slane %v8268, %v8272
    %v8323 = vunpack.c.l.b16 %v8220
    %v8324 = vunpack.c.l.b16 %v8221
    %v8325 = vunpack.c.l.b16 %v8222
    %v8326 = vunpack.c.l.b16 %v8223
    %v8327 = vunpack.c.l.b16 %v8224
    %v8328 = vunpack.c.l.b16 %v8225
    %v8329 = vunpack.c.l.b16 %v8226
    %v8330 = vunpack.c.l.b16 %v8227
    %v8331 = vunpack.c.l.b16 %v8228
    %v8332 = vunpack.c.l.b16 %v8229
    %v8333 = vunpack.c.l.b16 %v8230
    %v8334 = vunpack.c.l.b16 %v8231
    %v8335 = vunpack.c.l.b16 %v8232
    %v8336 = vunpack.c.l.b16 %v8233
    %v8337 = vunpack.c.l.b16 %v8234
    %v8338 = vunpack.c.l.b16 %v8235
    %v8339 = vunpack.c.l.b16 %v8236
    %v8340 = vunpack.c.l.b16 %v8237
    %v8341 = vunpack.c.l.b16 %v8238
    %v8342 = vunpack.c.l.b16 %v8239
    %v8343 = vunpack.c.l.b16 %v8240
    %v8344 = vunpack.c.l.b16 %v8241
    %v8345 = vunpack.c.l.b16 %v8242
    %v8346 = vunpack.c.l.b16 %v8243
    %v8347 = vunpack.c.l.b16 %v8244
    %v8348 = vunpack.c.l.b16 %v8245
    %v8349 = vunpack.c.l.b16 %v8246
    %v8350 = vunpack.c.l.b16 %v8247
    %v8351 = vunpack.c.l.b16 %v8248
    %v8352 = vunpack.c.l.b16 %v8249
    %v8353 = vunpack.c.l.b16 %v8250
    %v8354 = vunpack.c.l.b16 %v8251
    %v8355 = vunpack.c.l.b16 %v8252
    %v8356 = vunpack.c.l.b16 %v8253
    %v8357 = vunpack.c.l.b16 %v8254
    %v8358 = vunpack.c.l.b16 %v8255
    %v8359 = vunpack.c.l.b16 %v8256
    %v8360 = vunpack.c.l.b16 %v8257
    %v8361 = vunpack.c.l.b16 %v8258
    %v8362 = vunpack.c.l.b16 %v8259
    %v8363 = vunpack.c.l.b16 %v8260
    %v8364 = vunpack.c.l.b16 %v8261
    %v8365 = vunpack.c.l.b16 %v8262
    %v8366 = vunpack.c.l.b16 %v8263
    %v8367 = vunpack.c.l.b16 %v8264
    %v8368 = vunpack.c.l.b16 %v8265
    %v8369 = vunpack.c.l.b16 %v8266
    %v8370 = vunpack.c.l.b16 %v8267
    %v8371 = vpack.c.b16 %v8324, %v8323
    %v8372 = vpack.c.b16 %v8326, %v8325
    %v8373 = vpack.c.b16 %v8328, %v8327
    %v8374 = vpack.c.b16 %v8330, %v8329
    %v8375 = vpack.c.b16 %v8332, %v8331
    %v8376 = vpack.c.b16 %v8334, %v8333
    %v8377 = vpack.c.b16 %v8336, %v8335
    %v8378 = vpack.c.b16 %v8338, %v8337
    %v8379 = vpack.c.b16 %v8340, %v8339
    %v8380 = vpack.c.b16 %v8342, %v8341
    %v8381 = vpack.c.b16 %v8344, %v8343
    %v8382 = vpack.c.b16 %v8346, %v8345
    %v8383 = vpack.c.b16 %v8348, %v8347
    %v8384 = vpack.c.b16 %v8350, %v8349
    %v8385 = vpack.c.b16 %v8352, %v8351
    %v8386 = vpack.c.b16 %v8354, %v8353
    %v8387 = vpack.c.b16 %v8356, %v8355
    %v8388 = vpack.c.b16 %v8358, %v8357
    %v8389 = vpack.c.b16 %v8360, %v8359
    %v8390 = vpack.c.b16 %v8362, %v8361
    %v8391 = vpack.c.b16 %v8364, %v8363
    %v8392 = vpack.c.b16 %v8366, %v8365
    %v8393 = vpack.c.b16 %v8368, %v8367
    %v8394 = vpack.c.b16 %v8370, %v8369
    %8419 = vmatprep.subr.bf16.mxu0 0
    %8420 = vmatpush1.bf16.msra.mxu0 %v8371
    %8421 = vmatprep.subr.bf16.mxu0 0
    %8422 = vmatpush1.bf16.msra.mxu0 %v8372
    %8423 = vmatprep.subr.bf16.mxu0 0
    %8424 = vmatpush1.bf16.msra.mxu0 %v8373
    %8425 = vmatprep.subr.bf16.mxu0 0
    %8426 = vmatpush1.bf16.msra.mxu0 %v8374
    %8427 = vmatprep.subr.bf16.mxu0 0
    %8428 = vmatpush1.bf16.msra.mxu0 %v8375
    %8429 = vmatprep.subr.bf16.mxu0 0
    %8430 = vmatpush1.bf16.msra.mxu0 %v8376
    %8431 = vmatprep.subr.bf16.mxu0 0
    %8432 = vmatpush1.bf16.msra.mxu0 %v8377
    %8433 = vmatprep.subr.bf16.mxu0 0
    %8434 = vmatpush1.bf16.msra.mxu0 %v8378
    %8435 = vmatprep.subr.bf16.mxu0 0
    %8436 = vmatpush1.bf16.msra.mxu0 %v8379
    %8437 = vmatprep.subr.bf16.mxu0 0
    %8438 = vmatpush1.bf16.msra.mxu0 %v8380
    %8439 = vmatprep.subr.bf16.mxu0 0
    %8440 = vmatpush1.bf16.msra.mxu0 %v8381
    %8441 = vmatprep.subr.bf16.mxu0 0
    %8442 = vmatpush1.bf16.msra.mxu0 %v8382
    %8443 = vmatprep.subr.bf16.mxu0 0
    %8444 = vmatpush1.bf16.msra.mxu0 %v8383
    %8445 = vmatprep.subr.bf16.mxu0 0
    %8446 = vmatpush1.bf16.msra.mxu0 %v8384
    %8447 = vmatprep.subr.bf16.mxu0 0
    %8448 = vmatpush1.bf16.msra.mxu0 %v8385
    %8449 = vmatprep.subr.bf16.mxu0 0
    %8450 = vmatpush1.bf16.msra.mxu0 %v8386
    %8451 = vmatprep.mubr.bf16.mxu0 %v8218
    %8452 = vmatmul.mubr.bf16.gmra.mrb[0].mxu0 %v8217
    %v8453 = vpop.f32.mrb[0].mxu0
    %v8454 = vadd.f32 %v8273, %v8453
    %v8455 = vpop.f32.mrb[0].mxu0
    %v8456 = vpop.f32.mrb[0].mxu0
    %v8457 = vpop.f32.mrb[0].mxu0
    %8458 = vdwg.mxu0
    %8459 = vmatprep.subr.bf16.mxu0 0
    %8460 = vmatpush1.bf16.msra.mxu0 %v8387
    %8461 = vmatprep.subr.bf16.mxu0 0
    %8462 = vmatpush1.bf16.msra.mxu0 %v8388
    %8463 = vmatprep.subr.bf16.mxu0 0
    %8464 = vmatpush1.bf16.msra.mxu0 %v8389
    %8465 = vmatprep.subr.bf16.mxu0 0
    %8466 = vmatpush1.bf16.msra.mxu0 %v8390
    %8467 = vmatprep.subr.bf16.mxu0 0
    %8468 = vmatpush1.bf16.msra.mxu0 %v8391
    %8469 = vmatprep.subr.bf16.mxu0 0
    %8470 = vmatpush1.bf16.msra.mxu0 %v8392
    %8471 = vmatprep.subr.bf16.mxu0 0
    %8472 = vmatpush1.bf16.msra.mxu0 %v8393
    %8473 = vmatprep.subr.bf16.mxu0 0
    %8474 = vmatpush1.bf16.msra.mxu0 %v8394
    %8475 = vmatprep.subr.bf16.mxu0 0
    %8476 = vmatpush1.bf16.msra.mxu0 0
    %8477 = vmatprep.subr.bf16.mxu0 0
    %8478 = vmatpush1.bf16.msra.mxu0 0
    %8479 = vmatprep.subr.bf16.mxu0 0
    %8480 = vmatpush1.bf16.msra.mxu0 0
    %8481 = vmatprep.subr.bf16.mxu0 0
    %8482 = vmatpush1.bf16.msra.mxu0 0
    %8483 = vmatprep.subr.bf16.mxu0 0
    %8484 = vmatpush1.bf16.msra.mxu0 0
    %8485 = vmatprep.subr.bf16.mxu0 0
    %8486 = vmatpush1.bf16.msra.mxu0 0
    %8487 = vmatprep.subr.bf16.mxu0 0
    %8488 = vmatpush1.bf16.msra.mxu0 0
    %8489 = vmatprep.subr.bf16.mxu0 0
    %8490 = vmatpush1.bf16.msra.mxu0 0
    %8491 = vmatprep.mubr.bf16.mxu0 0
    %8492 = vmatmul.mubr.bf16.gmra.mrb[0].mxu0 %v8219
    %v8493 = vpop.f32.mrb[0].mxu0
    %v8494 = vadd.f32 %v8454, %v8493
    %v8495 = vpop.f32.mrb[0].mxu0
    %v8496 = vpop.f32.mrb[0].mxu0
    %v8497 = vpop.f32.mrb[0].mxu0
    %8498 = vdwg.mxu0
    %8499 = vst [vmem:[#allocation16] sm:$0x3] %v8494
    // Predicated region
    $region74: #{gcae_pallas_forward.1} parent=1 // pred_check
      _
    $region75: #{gcae_pallas_forward.1} parent=1 // pred_check_branch
      %8501 = sbr.rel (0) target = $region77
    $region76: #{gcae_pallas_forward.1} parent=1 // pred_region
      %s8503 = ssub.s32 32, 32
      %8504 = vsyncadd [#allocation4], %s8503
      %s8506 = sshll.u32 [#allocation16], 4
      %s8507 = int_to_ptr.vmem [resolvable:$true] %s8506
      %8509 = dma.vmem_to_hbm [thread:$0]  %s8507, 32, %s10, [#allocation4]
    $region77: #{gcae_pallas_forward.1} parent=1 // pred_fallthru
      _
    // Predicated region
    $region78: #{gcae_pallas_forward.1} parent=1 // pred_check
      _
    $region79: #{gcae_pallas_forward.1} parent=1 // pred_check_branch
      %8511 = sbr.rel (0) target = $region81
    $region80: #{gcae_pallas_forward.1} parent=1 // pred_region
      %8512 = dma.done [#allocation4], 32
    $region81: #{gcae_pallas_forward.1} parent=1 // pred_fallthru
      _
    %8513 = vsyncpa [#allocation3], 1
    %8514 = vsyncpa [#allocation6], 1
    %8515 = vsyncpa [#allocation9], 1
    %8516 = vsyncpa [#allocation12], 1
    %8517 = vsyncpa [#allocation15], 1
    %8518 = vsyncpa [#allocation4], 1

</llo_original>
